<compile_context>
chip_gen: v7x
topology: tpu7x:2x2x1
jax: 0.10.0
libtpu: 0.0.40
codegen_flags: <defaults>
</compile_context>

<pallas_src>
import functools

import jax
import jax.numpy as jnp
from jax.experimental import pallas as pl
from jax.experimental.pallas import tpu as pltpu


def _round_up(x, m):
    return (x + m - 1) // m * m


# ----------------------------------------------------------------------------
# Tiled matmul + bias (+ optional ReLU) Pallas kernel.
# Accumulates directly into the resident f32 output block (no scratch).
# ----------------------------------------------------------------------------
def _mm_kernel(x_ref, w_ref, b_ref, o_ref, *, relu):
    k = pl.program_id(2)

    @pl.when(k == 0)
    def _init():
        o_ref[...] = jnp.zeros_like(o_ref)

    o_ref[...] += jnp.dot(x_ref[...], w_ref[...],
                          preferred_element_type=jnp.float32)

    @pl.when(k == pl.num_programs(2) - 1)
    def _finalize():
        r = o_ref[...] + b_ref[...]
        if relu:
            r = jnp.maximum(r, 0.0)
        o_ref[...] = r


def matmul_bias(x, w, b, *, relu):
    """y = x @ w + b (optional ReLU).  x:(M,K) w:(K,N) b:(N,).  bf16 MXU, f32 acc."""
    M, K = x.shape
    K2, N = w.shape
    assert K == K2

    Mp = _round_up(M, 8)
    Kp = _round_up(K, 128)
    Np = _round_up(N, 128)

    # Tight tiling: single block per axis when small; split M in two when it is
    # big enough to feed both TensorCores (v7x megacore) without extra padding.
    if Mp <= 256:
        tm = Mp
    else:
        tm = _round_up(Mp // 2, 8)
        Mp = _round_up(Mp, tm)
    tn = Np if Np <= 1024 else 512
    Np = _round_up(Np, tn)
    tk = Kp if Kp <= 2048 else 1024
    Kp = _round_up(Kp, tk)

    xp = jnp.pad(x, ((0, Mp - M), (0, Kp - K))).astype(jnp.bfloat16)
    wp = jnp.pad(w, ((0, Kp - K), (0, Np - N))).astype(jnp.bfloat16)
    bp = jnp.pad(b.astype(jnp.float32).reshape(1, N), ((0, 0), (0, Np - N)))

    out = pl.pallas_call(
        functools.partial(_mm_kernel, relu=relu),
        out_shape=jax.ShapeDtypeStruct((Mp, Np), jnp.float32),
        grid_spec=pltpu.PrefetchScalarGridSpec(
            num_scalar_prefetch=0,
            grid=(Mp // tm, Np // tn, Kp // tk),
            in_specs=[
                pl.BlockSpec((tm, tk), lambda i, j, k: (i, k)),
                pl.BlockSpec((tk, tn), lambda i, j, k: (k, j)),
                pl.BlockSpec((1, tn), lambda i, j, k: (0, j)),
            ],
            out_specs=pl.BlockSpec((tm, tn), lambda i, j, k: (i, j)),
        ),
        compiler_params=pltpu.CompilerParams(
            dimension_semantics=("parallel", "parallel", "arbitrary")),
    )(xp, wp, bp)
    return out[:M, :N]


# ----------------------------------------------------------------------------
# MaxPool2d(kernel_size=2, stride=2) — whole-block Pallas max reduction.
# Input is reshaped (layout-preserving, no HBM copy) to expose the 2x2 windows.
# ----------------------------------------------------------------------------
def _maxpool2x2_kernel(x_ref, o_ref):
    x = x_ref[...]                   # (R, 2, Wo, 2, C)
    a = jnp.max(x, axis=1)           # (R, Wo, 2, C)   pool over H pair
    o_ref[...] = jnp.max(a, axis=2)  # (R, Wo, C)      pool over W pair


def maxpool_2x2(x):
    # x: (N, H, W, C) NHWC, H and W even.
    N, H, W, C = x.shape
    Ho, Wo = H // 2, W // 2
    xr = x.reshape(N * Ho, 2, Wo, 2, C)   # free reshape (row-major split)
    out = pl.pallas_call(
        _maxpool2x2_kernel,
        out_shape=jax.ShapeDtypeStruct((N * Ho, Wo, C), x.dtype),
    )(xr)
    return out.reshape(N, Ho, Wo, C)


# ----------------------------------------------------------------------------
# Conv2d (stride 1, no padding) via im2col (glue) + Pallas GEMM.
# ----------------------------------------------------------------------------
def conv2d(x, w, b, *, relu):
    # x: (N, H, W, Cin)  w: (kh, kw, Cin, Cout)  b: (Cout,)
    kh, kw, Cin, Cout = w.shape
    N, H, W, _ = x.shape
    Ho = H - kh + 1
    Wo = W - kw + 1

    cols = []
    for di in range(kh):
        for dj in range(kw):
            cols.append(jax.lax.slice(
                x, (0, di, dj, 0), (N, di + Ho, dj + Wo, Cin)))
    patches = jnp.stack(cols, axis=3)                      # (N, Ho, Wo, kh*kw, Cin)
    patches = patches.reshape(N * Ho * Wo, kh * kw * Cin)
    wmat = w.reshape(kh * kw * Cin, Cout)

    out = matmul_bias(patches, wmat, b, relu=relu)
    return out.reshape(N, Ho, Wo, Cout)


# ----------------------------------------------------------------------------
# Full Linear_then_conv forward.
# ----------------------------------------------------------------------------
def linear_then_conv_forward(x_nchw, p):
    n = x_nchw.shape[0]

    # x = x.view(-1, 28*28); x = self.fc1(x)          (no ReLU)
    x = x_nchw.reshape(n, 28 * 28)
    x = matmul_bias(x, p["fc1_w"], p["fc1_b"], relu=False)

    # x = x.view(-1, 1, 28, 28)  (NCHW) -> NHWC for the conv kernels.
    x = x.reshape(n, 1, 28, 28).transpose(0, 2, 3, 1)       # (N, 28, 28, 1)

    # x = relu(conv2(x)); x = max_pool2d(x, 2, 2)
    x = conv2d(x, p["conv2_w"], p["conv2_b"], relu=True)    # (N, 24, 24, 20)
    x = maxpool_2x2(x)                                      # (N, 12, 12, 20)

    # x = relu(conv3(x)); x = max_pool2d(x, 2, 2)
    x = conv2d(x, p["conv3_w"], p["conv3_b"], relu=True)    # (N, 8, 8, 50)
    x = maxpool_2x2(x)                                      # (N, 4, 4, 50)

    # x = x.view(-1, 4*4*50) flattens NCHW order -> transpose back first.
    x = x.transpose(0, 3, 1, 2).reshape(n, 4 * 4 * 50)      # (N, 800)

    # x = relu(linear1(x)); x = linear2(x)
    x = matmul_bias(x, p["lin1_w"], p["lin1_b"], relu=True)
    x = matmul_bias(x, p["lin2_w"], p["lin2_b"], relu=False)
    return x


# ----------------------------------------------------------------------------
# Deterministic parameter initialization (shapes from Linear_then_conv.__init__).
# Weights are stored as (in, out) / (kh, kw, Cin, Cout) for direct GEMM use.
# ----------------------------------------------------------------------------
def init_params(key):
    def dense(k, fan_in, fan_out):
        bound = 1.0 / jnp.sqrt(jnp.float32(fan_in))
        kw_, kb_ = jax.random.split(k)
        w = jax.random.uniform(kw_, (fan_in, fan_out), jnp.float32, -bound, bound)
        b = jax.random.uniform(kb_, (fan_out,), jnp.float32, -bound, bound)
        return w, b

    def conv(k, kh, kw_, cin, cout):
        fan_in = kh * kw_ * cin
        bound = 1.0 / jnp.sqrt(jnp.float32(fan_in))
        ka, kb = jax.random.split(k)
        w = jax.random.uniform(ka, (kh, kw_, cin, cout), jnp.float32, -bound, bound)
        b = jax.random.uniform(kb, (cout,), jnp.float32, -bound, bound)
        return w, b

    ks = jax.random.split(key, 5)
    fc1_w, fc1_b = dense(ks[0], 28 * 28, 28 * 28)
    conv2_w, conv2_b = conv(ks[1], 5, 5, 1, 20)
    conv3_w, conv3_b = conv(ks[2], 5, 5, 20, 50)
    lin1_w, lin1_b = dense(ks[3], 4 * 4 * 50, 500)
    lin2_w, lin2_b = dense(ks[4], 500, 10)
    return {
        "fc1_w": fc1_w, "fc1_b": fc1_b,
        "conv2_w": conv2_w, "conv2_b": conv2_b,
        "conv3_w": conv3_w, "conv3_b": conv3_b,
        "lin1_w": lin1_w, "lin1_b": lin1_b,
        "lin2_w": lin2_w, "lin2_b": lin2_b,
    }


if __name__ == "__main__":
    key = jax.random.PRNGKey(0)
    k_params, k_x = jax.random.split(key)

    params = init_params(k_params)
    # Module hard-codes 28*28 / 4*4*50, so input must be (N, 1, 28, 28).
    x = jax.random.normal(k_x, (2, 1, 28, 28), jnp.float32)

    fwd = jax.jit(linear_then_conv_forward)
    out = fwd(x, params)
    jax.block_until_ready(out)

    assert out.shape == (2, 10), out.shape
    assert bool(jnp.all(jnp.isfinite(out)))
    print("KERNEL_OK")
</pallas_src>

<mosaic_0001>
module attributes {stable_mosaic.version = 11 : i64} {
  func.func @_mm_kernel(%arg0: i32, %arg1: i32, %arg2: i32, %arg3: memref<8x896xbf16, #tpu.memory_space<vmem>>, %arg4: memref<896x896xbf16, #tpu.memory_space<vmem>>, %arg5: memref<1x896xf32, #tpu.memory_space<vmem>>, %arg6: memref<8x896xf32, #tpu.memory_space<vmem>>) attributes {dimension_semantics = [#tpu.dimension_semantics<parallel>, #tpu.dimension_semantics<parallel>, #tpu.dimension_semantics<arbitrary>], iteration_bounds = array<i64: 1, 1, 1>, scalar_prefetch = 0 : i64, scratch_operands = 0 : i64, tpu.core_type = #tpu.core_type<tc>, window_params = [{transform_indices = @transform_0, window_bounds = array<i64: 8, 896>}, {transform_indices = @transform_1, window_bounds = array<i64: 896, 896>}, {transform_indices = @transform_2, window_bounds = array<i64: 1, 896>}, {transform_indices = @transform_3, window_bounds = array<i64: 8, 896>}]} {
    %c0_i32 = arith.constant 0 : i32
    %0 = arith.cmpi eq, %arg2, %c0_i32 : i32
    %1 = arith.extui %0 : i1 to i32
    %c0_i32_0 = arith.constant 0 : i32
    %2 = arith.cmpi ne, %1, %c0_i32_0 : i32
    scf.if %2 {
      %cst_10 = arith.constant 0.000000e+00 : f32
      %12 = vector.broadcast %cst_10 : f32 to vector<8x896xf32>
      %c0_11 = arith.constant 0 : index
      %c0_12 = arith.constant 0 : index
      %13 = vector.load %arg6[%c0_11, %c0_12] : memref<8x896xf32, #tpu.memory_space<vmem>>, vector<8x896xf32>
      tpu.vector_store %arg6[%c0_11, %c0_12], %12 {strides = array<i32>} : memref<8x896xf32, #tpu.memory_space<vmem>>, vector<8x896xf32>,
    } else {
    }
    %c0 = arith.constant 0 : index
    %c0_1 = arith.constant 0 : index
    %3 = vector.load %arg6[%c0, %c0_1] : memref<8x896xf32, #tpu.memory_space<vmem>>, vector<8x896xf32>
    %c0_2 = arith.constant 0 : index
    %c0_3 = arith.constant 0 : index
    %4 = vector.load %arg3[%c0_2, %c0_3] : memref<8x896xbf16, #tpu.memory_space<vmem>>, vector<8x896xbf16>
    %c0_4 = arith.constant 0 : index
    %c0_5 = arith.constant 0 : index
    %5 = vector.load %arg4[%c0_4, %c0_5] : memref<896x896xbf16, #tpu.memory_space<vmem>>, vector<896x896xbf16>
    %cst = arith.constant dense<0.000000e+00> : vector<8x896xf32>
    %6 = tpu.matmul %4, %5, %cst {dimension_numbers = #tpu.dot_dimension_numbers<[1], [0], [0], [1], [0, 0, 1, 1], [], []>} : vector<8x896xbf16>, vector<896x896xbf16>, vector<8x896xf32> -> vector<8x896xf32>
    %7 = arith.addf %3, %6 : vector<8x896xf32>
    %c0_6 = arith.constant 0 : index
    %c0_7 = arith.constant 0 : index
    %8 = vector.load %arg6[%c0_6, %c0_7] : memref<8x896xf32, #tpu.memory_space<vmem>>, vector<8x896xf32>
    tpu.vector_store %arg6[%c0_6, %c0_7], %7 {strides = array<i32>} : memref<8x896xf32, #tpu.memory_space<vmem>>, vector<8x896xf32>,
    %c0_i32_8 = arith.constant 0 : i32
    %9 = arith.cmpi eq, %arg2, %c0_i32_8 : i32
    %10 = arith.extui %9 : i1 to i32
    %c0_i32_9 = arith.constant 0 : i32
    %11 = arith.cmpi ne, %10, %c0_i32_9 : i32
    scf.if %11 {
      %c0_10 = arith.constant 0 : index
      %c0_11 = arith.constant 0 : index
      %12 = vector.load %arg6[%c0_10, %c0_11] : memref<8x896xf32, #tpu.memory_space<vmem>>, vector<8x896xf32>
      %c0_12 = arith.constant 0 : index
      %c0_13 = arith.constant 0 : index
      %13 = vector.load %arg5[%c0_12, %c0_13] : memref<1x896xf32, #tpu.memory_space<vmem>>, vector<1x896xf32>
      %14 = vector.broadcast %13 : vector<1x896xf32> to vector<8x896xf32>
      %15 = arith.addf %12, %14 : vector<8x896xf32>
      %c0_14 = arith.constant 0 : index
      %c0_15 = arith.constant 0 : index
      %16 = vector.load %arg6[%c0_14, %c0_15] : memref<8x896xf32, #tpu.memory_space<vmem>>, vector<8x896xf32>
      tpu.vector_store %arg6[%c0_14, %c0_15], %15 {strides = array<i32>} : memref<8x896xf32, #tpu.memory_space<vmem>>, vector<8x896xf32>,
    } else {
    }
    return
  }
  func.func @transform_0(%arg0: i32, %arg1: i32, %arg2: i32) -> (i32, i32) {
    %c0_i32 = arith.constant 0 : i32
    return %arg0, %arg2 : i32, i32
  }
  func.func @transform_1(%arg0: i32, %arg1: i32, %arg2: i32) -> (i32, i32) {
    %c0_i32 = arith.constant 0 : i32
    return %arg2, %arg1 : i32, i32
  }
  func.func @transform_2(%arg0: i32, %arg1: i32, %arg2: i32) -> (i32, i32) {
    %c0_i32 = arith.constant 0 : i32
    %c0_i32_0 = arith.constant 0 : i32
    return %c0_i32, %arg1 : i32, i32
  }
  func.func @transform_3(%arg0: i32, %arg1: i32, %arg2: i32) -> (i32, i32) {
    %c0_i32 = arith.constant 0 : i32
    return %arg0, %arg1 : i32, i32
  }
}

module attributes {stable_mosaic.version = 11 : i64} {
  func.func @_maxpool2x2_kernel(%arg0: memref<24x2x12x2x20xf32, #tpu.memory_space<vmem>>, %arg1: memref<24x12x20xf32, #tpu.memory_space<vmem>>) attributes {dimension_semantics = [], scalar_prefetch = 0 : i64, scratch_operands = 0 : i64, tpu.core_type = #tpu.core_type<tc>} {
    %c0 = arith.constant 0 : index
    %c0_0 = arith.constant 0 : index
    %c0_1 = arith.constant 0 : index
    %c0_2 = arith.constant 0 : index
    %c0_3 = arith.constant 0 : index
    %0 = vector.load %arg0[%c0, %c0_0, %c0_1, %c0_2, %c0_3] : memref<24x2x12x2x20xf32, #tpu.memory_space<vmem>>, vector<24x2x12x2x20xf32>
    %cst = arith.constant dense<0xFF800000> : vector<24x12x2x20xf32>
    %1 = vector.multi_reduction <maximumf>, %0, %cst [1] : vector<24x2x12x2x20xf32> to vector<24x12x2x20xf32>
    %cst_4 = arith.constant dense<0xFF800000> : vector<24x12x20xf32>
    %2 = vector.multi_reduction <maximumf>, %1, %cst_4 [2] : vector<24x12x2x20xf32> to vector<24x12x20xf32>
    %c0_5 = arith.constant 0 : index
    %c0_6 = arith.constant 0 : index
    %c0_7 = arith.constant 0 : index
    %3 = vector.load %arg1[%c0_5, %c0_6, %c0_7] : memref<24x12x20xf32, #tpu.memory_space<vmem>>, vector<24x12x20xf32>
    tpu.vector_store %arg1[%c0_5, %c0_6, %c0_7], %2 {strides = array<i32>} : memref<24x12x20xf32, #tpu.memory_space<vmem>>, vector<24x12x20xf32>,
    return
  }
}

module attributes {stable_mosaic.version = 11 : i64} {
  func.func @_mm_kernel(%arg0: i32, %arg1: i32, %arg2: i32, %arg3: memref<576x128xbf16, #tpu.memory_space<vmem>>, %arg4: memref<128x128xbf16, #tpu.memory_space<vmem>>, %arg5: memref<1x128xf32, #tpu.memory_space<vmem>>, %arg6: memref<576x128xf32, #tpu.memory_space<vmem>>) attributes {dimension_semantics = [#tpu.dimension_semantics<parallel>, #tpu.dimension_semantics<parallel>, #tpu.dimension_semantics<arbitrary>], iteration_bounds = array<i64: 2, 1, 1>, scalar_prefetch = 0 : i64, scratch_operands = 0 : i64, tpu.core_type = #tpu.core_type<tc>, window_params = [{transform_indices = @transform_0, window_bounds = array<i64: 576, 128>}, {transform_indices = @transform_1, window_bounds = array<i64: 128, 128>}, {transform_indices = @transform_2, window_bounds = array<i64: 1, 128>}, {transform_indices = @transform_3, window_bounds = array<i64: 576, 128>}]} {
    %c0_i32 = arith.constant 0 : i32
    %0 = arith.cmpi eq, %arg2, %c0_i32 : i32
    %1 = arith.extui %0 : i1 to i32
    %c0_i32_0 = arith.constant 0 : i32
    %2 = arith.cmpi ne, %1, %c0_i32_0 : i32
    scf.if %2 {
      %cst_10 = arith.constant 0.000000e+00 : f32
      %12 = vector.broadcast %cst_10 : f32 to vector<576x128xf32>
      %c0_11 = arith.constant 0 : index
      %c0_12 = arith.constant 0 : index
      %13 = vector.load %arg6[%c0_11, %c0_12] : memref<576x128xf32, #tpu.memory_space<vmem>>, vector<576x128xf32>
      tpu.vector_store %arg6[%c0_11, %c0_12], %12 {strides = array<i32>} : memref<576x128xf32, #tpu.memory_space<vmem>>, vector<576x128xf32>,
    } else {
    }
    %c0 = arith.constant 0 : index
    %c0_1 = arith.constant 0 : index
    %3 = vector.load %arg6[%c0, %c0_1] : memref<576x128xf32, #tpu.memory_space<vmem>>, vector<576x128xf32>
    %c0_2 = arith.constant 0 : index
    %c0_3 = arith.constant 0 : index
    %4 = vector.load %arg3[%c0_2, %c0_3] : memref<576x128xbf16, #tpu.memory_space<vmem>>, vector<576x128xbf16>
    %c0_4 = arith.constant 0 : index
    %c0_5 = arith.constant 0 : index
    %5 = vector.load %arg4[%c0_4, %c0_5] : memref<128x128xbf16, #tpu.memory_space<vmem>>, vector<128x128xbf16>
    %cst = arith.constant dense<0.000000e+00> : vector<576x128xf32>
    %6 = tpu.matmul %4, %5, %cst {dimension_numbers = #tpu.dot_dimension_numbers<[1], [0], [0], [1], [0, 0, 1, 1], [], []>} : vector<576x128xbf16>, vector<128x128xbf16>, vector<576x128xf32> -> vector<576x128xf32>
    %7 = arith.addf %3, %6 : vector<576x128xf32>
    %c0_6 = arith.constant 0 : index
    %c0_7 = arith.constant 0 : index
    %8 = vector.load %arg6[%c0_6, %c0_7] : memref<576x128xf32, #tpu.memory_space<vmem>>, vector<576x128xf32>
    tpu.vector_store %arg6[%c0_6, %c0_7], %7 {strides = array<i32>} : memref<576x128xf32, #tpu.memory_space<vmem>>, vector<576x128xf32>,
    %c0_i32_8 = arith.constant 0 : i32
    %9 = arith.cmpi eq, %arg2, %c0_i32_8 : i32
    %10 = arith.extui %9 : i1 to i32
    %c0_i32_9 = arith.constant 0 : i32
    %11 = arith.cmpi ne, %10, %c0_i32_9 : i32
    scf.if %11 {
      %c0_10 = arith.constant 0 : index
      %c0_11 = arith.constant 0 : index
      %12 = vector.load %arg6[%c0_10, %c0_11] : memref<576x128xf32, #tpu.memory_space<vmem>>, vector<576x128xf32>
      %c0_12 = arith.constant 0 : index
      %c0_13 = arith.constant 0 : index
      %13 = vector.load %arg5[%c0_12, %c0_13] : memref<1x128xf32, #tpu.memory_space<vmem>>, vector<1x128xf32>
      %14 = vector.broadcast %13 : vector<1x128xf32> to vector<576x128xf32>
      %15 = arith.addf %12, %14 : vector<576x128xf32>
      %cst_14 = arith.constant 0.000000e+00 : f32
      %16 = vector.broadcast %cst_14 : f32 to vector<576x128xf32>
      %17 = arith.maximumf %15, %16 : vector<576x128xf32>
      %c0_15 = arith.constant 0 : index
      %c0_16 = arith.constant 0 : index
      %18 = vector.load %arg6[%c0_15, %c0_16] : memref<576x128xf32, #tpu.memory_space<vmem>>, vector<576x128xf32>
      tpu.vector_store %arg6[%c0_15, %c0_16], %17 {strides = array<i32>} : memref<576x128xf32, #tpu.memory_space<vmem>>, vector<576x128xf32>,
    } else {
    }
    return
  }
  func.func @transform_0(%arg0: i32, %arg1: i32, %arg2: i32) -> (i32, i32) {
    %c0_i32 = arith.constant 0 : i32
    return %arg0, %arg2 : i32, i32
  }
  func.func @transform_1(%arg0: i32, %arg1: i32, %arg2: i32) -> (i32, i32) {
    %c0_i32 = arith.constant 0 : i32
    return %arg2, %arg1 : i32, i32
  }
  func.func @transform_2(%arg0: i32, %arg1: i32, %arg2: i32) -> (i32, i32) {
    %c0_i32 = arith.constant 0 : i32
    %c0_i32_0 = arith.constant 0 : i32
    return %c0_i32, %arg1 : i32, i32
  }
  func.func @transform_3(%arg0: i32, %arg1: i32, %arg2: i32) -> (i32, i32) {
    %c0_i32 = arith.constant 0 : i32
    return %arg0, %arg1 : i32, i32
  }
}

module attributes {stable_mosaic.version = 11 : i64} {
  func.func @_mm_kernel(%arg0: i32, %arg1: i32, %arg2: i32, %arg3: memref<128x512xbf16, #tpu.memory_space<vmem>>, %arg4: memref<512x128xbf16, #tpu.memory_space<vmem>>, %arg5: memref<1x128xf32, #tpu.memory_space<vmem>>, %arg6: memref<128x128xf32, #tpu.memory_space<vmem>>) attributes {dimension_semantics = [#tpu.dimension_semantics<parallel>, #tpu.dimension_semantics<parallel>, #tpu.dimension_semantics<arbitrary>], iteration_bounds = array<i64: 1, 1, 1>, scalar_prefetch = 0 : i64, scratch_operands = 0 : i64, tpu.core_type = #tpu.core_type<tc>, window_params = [{transform_indices = @transform_0, window_bounds = array<i64: 128, 512>}, {transform_indices = @transform_1, window_bounds = array<i64: 512, 128>}, {transform_indices = @transform_2, window_bounds = array<i64: 1, 128>}, {transform_indices = @transform_3, window_bounds = array<i64: 128, 128>}]} {
    %c0_i32 = arith.constant 0 : i32
    %0 = arith.cmpi eq, %arg2, %c0_i32 : i32
    %1 = arith.extui %0 : i1 to i32
    %c0_i32_0 = arith.constant 0 : i32
    %2 = arith.cmpi ne, %1, %c0_i32_0 : i32
    scf.if %2 {
      %cst_10 = arith.constant 0.000000e+00 : f32
      %12 = vector.broadcast %cst_10 : f32 to vector<128x128xf32>
      %c0_11 = arith.constant 0 : index
      %c0_12 = arith.constant 0 : index
      %13 = vector.load %arg6[%c0_11, %c0_12] : memref<128x128xf32, #tpu.memory_space<vmem>>, vector<128x128xf32>
      tpu.vector_store %arg6[%c0_11, %c0_12], %12 {strides = array<i32>} : memref<128x128xf32, #tpu.memory_space<vmem>>, vector<128x128xf32>,
    } else {
    }
    %c0 = arith.constant 0 : index
    %c0_1 = arith.constant 0 : index
    %3 = vector.load %arg6[%c0, %c0_1] : memref<128x128xf32, #tpu.memory_space<vmem>>, vector<128x128xf32>
    %c0_2 = arith.constant 0 : index
    %c0_3 = arith.constant 0 : index
    %4 = vector.load %arg3[%c0_2, %c0_3] : memref<128x512xbf16, #tpu.memory_space<vmem>>, vector<128x512xbf16>
    %c0_4 = arith.constant 0 : index
    %c0_5 = arith.constant 0 : index
    %5 = vector.load %arg4[%c0_4, %c0_5] : memref<512x128xbf16, #tpu.memory_space<vmem>>, vector<512x128xbf16>
    %cst = arith.constant dense<0.000000e+00> : vector<128x128xf32>
    %6 = tpu.matmul %4, %5, %cst {dimension_numbers = #tpu.dot_dimension_numbers<[1], [0], [0], [1], [0, 0, 1, 1], [], []>} : vector<128x512xbf16>, vector<512x128xbf16>, vector<128x128xf32> -> vector<128x128xf32>
    %7 = arith.addf %3, %6 : vector<128x128xf32>
    %c0_6 = arith.constant 0 : index
    %c0_7 = arith.constant 0 : index
    %8 = vector.load %arg6[%c0_6, %c0_7] : memref<128x128xf32, #tpu.memory_space<vmem>>, vector<128x128xf32>
    tpu.vector_store %arg6[%c0_6, %c0_7], %7 {strides = array<i32>} : memref<128x128xf32, #tpu.memory_space<vmem>>, vector<128x128xf32>,
    %c0_i32_8 = arith.constant 0 : i32
    %9 = arith.cmpi eq, %arg2, %c0_i32_8 : i32
    %10 = arith.extui %9 : i1 to i32
    %c0_i32_9 = arith.constant 0 : i32
    %11 = arith.cmpi ne, %10, %c0_i32_9 : i32
    scf.if %11 {
      %c0_10 = arith.constant 0 : index
      %c0_11 = arith.constant 0 : index
      %12 = vector.load %arg6[%c0_10, %c0_11] : memref<128x128xf32, #tpu.memory_space<vmem>>, vector<128x128xf32>
      %c0_12 = arith.constant 0 : index
      %c0_13 = arith.constant 0 : index
      %13 = vector.load %arg5[%c0_12, %c0_13] : memref<1x128xf32, #tpu.memory_space<vmem>>, vector<1x128xf32>
      %14 = vector.broadcast %13 : vector<1x128xf32> to vector<128x128xf32>
      %15 = arith.addf %12, %14 : vector<128x128xf32>
      %cst_14 = arith.constant 0.000000e+00 : f32
      %16 = vector.broadcast %cst_14 : f32 to vector<128x128xf32>
      %17 = arith.maximumf %15, %16 : vector<128x128xf32>
      %c0_15 = arith.constant 0 : index
      %c0_16 = arith.constant 0 : index
      %18 = vector.load %arg6[%c0_15, %c0_16] : memref<128x128xf32, #tpu.memory_space<vmem>>, vector<128x128xf32>
      tpu.vector_store %arg6[%c0_15, %c0_16], %17 {strides = array<i32>} : memref<128x128xf32, #tpu.memory_space<vmem>>, vector<128x128xf32>,
    } else {
    }
    return
  }
  func.func @transform_0(%arg0: i32, %arg1: i32, %arg2: i32) -> (i32, i32) {
    %c0_i32 = arith.constant 0 : i32
    return %arg0, %arg2 : i32, i32
  }
  func.func @transform_1(%arg0: i32, %arg1: i32, %arg2: i32) -> (i32, i32) {
    %c0_i32 = arith.constant 0 : i32
    return %arg2, %arg1 : i32, i32
  }
  func.func @transform_2(%arg0: i32, %arg1: i32, %arg2: i32) -> (i32, i32) {
    %c0_i32 = arith.constant 0 : i32
    %c0_i32_0 = arith.constant 0 : i32
    return %c0_i32, %arg1 : i32, i32
  }
  func.func @transform_3(%arg0: i32, %arg1: i32, %arg2: i32) -> (i32, i32) {
    %c0_i32 = arith.constant 0 : i32
    return %arg0, %arg1 : i32, i32
  }
}

module attributes {stable_mosaic.version = 11 : i64} {
  func.func @_maxpool2x2_kernel(%arg0: memref<8x2x4x2x50xf32, #tpu.memory_space<vmem>>, %arg1: memref<8x4x50xf32, #tpu.memory_space<vmem>>) attributes {dimension_semantics = [], scalar_prefetch = 0 : i64, scratch_operands = 0 : i64, tpu.core_type = #tpu.core_type<tc>} {
    %c0 = arith.constant 0 : index
    %c0_0 = arith.constant 0 : index
    %c0_1 = arith.constant 0 : index
    %c0_2 = arith.constant 0 : index
    %c0_3 = arith.constant 0 : index
    %0 = vector.load %arg0[%c0, %c0_0, %c0_1, %c0_2, %c0_3] : memref<8x2x4x2x50xf32, #tpu.memory_space<vmem>>, vector<8x2x4x2x50xf32>
    %cst = arith.constant dense<0xFF800000> : vector<8x4x2x50xf32>
    %1 = vector.multi_reduction <maximumf>, %0, %cst [1] : vector<8x2x4x2x50xf32> to vector<8x4x2x50xf32>
    %cst_4 = arith.constant dense<0xFF800000> : vector<8x4x50xf32>
    %2 = vector.multi_reduction <maximumf>, %1, %cst_4 [2] : vector<8x4x2x50xf32> to vector<8x4x50xf32>
    %c0_5 = arith.constant 0 : index
    %c0_6 = arith.constant 0 : index
    %c0_7 = arith.constant 0 : index
    %3 = vector.load %arg1[%c0_5, %c0_6, %c0_7] : memref<8x4x50xf32, #tpu.memory_space<vmem>>, vector<8x4x50xf32>
    tpu.vector_store %arg1[%c0_5, %c0_6, %c0_7], %2 {strides = array<i32>} : memref<8x4x50xf32, #tpu.memory_space<vmem>>, vector<8x4x50xf32>,
    return
  }
}

module attributes {stable_mosaic.version = 11 : i64} {
  func.func @_mm_kernel(%arg0: i32, %arg1: i32, %arg2: i32, %arg3: memref<8x896xbf16, #tpu.memory_space<vmem>>, %arg4: memref<896x512xbf16, #tpu.memory_space<vmem>>, %arg5: memref<1x512xf32, #tpu.memory_space<vmem>>, %arg6: memref<8x512xf32, #tpu.memory_space<vmem>>) attributes {dimension_semantics = [#tpu.dimension_semantics<parallel>, #tpu.dimension_semantics<parallel>, #tpu.dimension_semantics<arbitrary>], iteration_bounds = array<i64: 1, 1, 1>, scalar_prefetch = 0 : i64, scratch_operands = 0 : i64, tpu.core_type = #tpu.core_type<tc>, window_params = [{transform_indices = @transform_0, window_bounds = array<i64: 8, 896>}, {transform_indices = @transform_1, window_bounds = array<i64: 896, 512>}, {transform_indices = @transform_2, window_bounds = array<i64: 1, 512>}, {transform_indices = @transform_3, window_bounds = array<i64: 8, 512>}]} {
    %c0_i32 = arith.constant 0 : i32
    %0 = arith.cmpi eq, %arg2, %c0_i32 : i32
    %1 = arith.extui %0 : i1 to i32
    %c0_i32_0 = arith.constant 0 : i32
    %2 = arith.cmpi ne, %1, %c0_i32_0 : i32
    scf.if %2 {
      %cst_10 = arith.constant 0.000000e+00 : f32
      %12 = vector.broadcast %cst_10 : f32 to vector<8x512xf32>
      %c0_11 = arith.constant 0 : index
      %c0_12 = arith.constant 0 : index
      %13 = vector.load %arg6[%c0_11, %c0_12] : memref<8x512xf32, #tpu.memory_space<vmem>>, vector<8x512xf32>
      tpu.vector_store %arg6[%c0_11, %c0_12], %12 {strides = array<i32>} : memref<8x512xf32, #tpu.memory_space<vmem>>, vector<8x512xf32>,
    } else {
    }
    %c0 = arith.constant 0 : index
    %c0_1 = arith.constant 0 : index
    %3 = vector.load %arg6[%c0, %c0_1] : memref<8x512xf32, #tpu.memory_space<vmem>>, vector<8x512xf32>
    %c0_2 = arith.constant 0 : index
    %c0_3 = arith.constant 0 : index
    %4 = vector.load %arg3[%c0_2, %c0_3] : memref<8x896xbf16, #tpu.memory_space<vmem>>, vector<8x896xbf16>
    %c0_4 = arith.constant 0 : index
    %c0_5 = arith.constant 0 : index
    %5 = vector.load %arg4[%c0_4, %c0_5] : memref<896x512xbf16, #tpu.memory_space<vmem>>, vector<896x512xbf16>
    %cst = arith.constant dense<0.000000e+00> : vector<8x512xf32>
    %6 = tpu.matmul %4, %5, %cst {dimension_numbers = #tpu.dot_dimension_numbers<[1], [0], [0], [1], [0, 0, 1, 1], [], []>} : vector<8x896xbf16>, vector<896x512xbf16>, vector<8x512xf32> -> vector<8x512xf32>
    %7 = arith.addf %3, %6 : vector<8x512xf32>
    %c0_6 = arith.constant 0 : index
    %c0_7 = arith.constant 0 : index
    %8 = vector.load %arg6[%c0_6, %c0_7] : memref<8x512xf32, #tpu.memory_space<vmem>>, vector<8x512xf32>
    tpu.vector_store %arg6[%c0_6, %c0_7], %7 {strides = array<i32>} : memref<8x512xf32, #tpu.memory_space<vmem>>, vector<8x512xf32>,
    %c0_i32_8 = arith.constant 0 : i32
    %9 = arith.cmpi eq, %arg2, %c0_i32_8 : i32
    %10 = arith.extui %9 : i1 to i32
    %c0_i32_9 = arith.constant 0 : i32
    %11 = arith.cmpi ne, %10, %c0_i32_9 : i32
    scf.if %11 {
      %c0_10 = arith.constant 0 : index
      %c0_11 = arith.constant 0 : index
      %12 = vector.load %arg6[%c0_10, %c0_11] : memref<8x512xf32, #tpu.memory_space<vmem>>, vector<8x512xf32>
      %c0_12 = arith.constant 0 : index
      %c0_13 = arith.constant 0 : index
      %13 = vector.load %arg5[%c0_12, %c0_13] : memref<1x512xf32, #tpu.memory_space<vmem>>, vector<1x512xf32>
      %14 = vector.broadcast %13 : vector<1x512xf32> to vector<8x512xf32>
      %15 = arith.addf %12, %14 : vector<8x512xf32>
      %cst_14 = arith.constant 0.000000e+00 : f32
      %16 = vector.broadcast %cst_14 : f32 to vector<8x512xf32>
      %17 = arith.maximumf %15, %16 : vector<8x512xf32>
      %c0_15 = arith.constant 0 : index
      %c0_16 = arith.constant 0 : index
      %18 = vector.load %arg6[%c0_15, %c0_16] : memref<8x512xf32, #tpu.memory_space<vmem>>, vector<8x512xf32>
      tpu.vector_store %arg6[%c0_15, %c0_16], %17 {strides = array<i32>} : memref<8x512xf32, #tpu.memory_space<vmem>>, vector<8x512xf32>,
    } else {
    }
    return
  }
  func.func @transform_0(%arg0: i32, %arg1: i32, %arg2: i32) -> (i32, i32) {
    %c0_i32 = arith.constant 0 : i32
    return %arg0, %arg2 : i32, i32
  }
  func.func @transform_1(%arg0: i32, %arg1: i32, %arg2: i32) -> (i32, i32) {
    %c0_i32 = arith.constant 0 : i32
    return %arg2, %arg1 : i32, i32
  }
  func.func @transform_2(%arg0: i32, %arg1: i32, %arg2: i32) -> (i32, i32) {
    %c0_i32 = arith.constant 0 : i32
    %c0_i32_0 = arith.constant 0 : i32
    return %c0_i32, %arg1 : i32, i32
  }
  func.func @transform_3(%arg0: i32, %arg1: i32, %arg2: i32) -> (i32, i32) {
    %c0_i32 = arith.constant 0 : i32
    return %arg0, %arg1 : i32, i32
  }
}

module attributes {stable_mosaic.version = 11 : i64} {
  func.func @_mm_kernel(%arg0: i32, %arg1: i32, %arg2: i32, %arg3: memref<8x512xbf16, #tpu.memory_space<vmem>>, %arg4: memref<512x128xbf16, #tpu.memory_space<vmem>>, %arg5: memref<1x128xf32, #tpu.memory_space<vmem>>, %arg6: memref<8x128xf32, #tpu.memory_space<vmem>>) attributes {dimension_semantics = [#tpu.dimension_semantics<parallel>, #tpu.dimension_semantics<parallel>, #tpu.dimension_semantics<arbitrary>], iteration_bounds = array<i64: 1, 1, 1>, scalar_prefetch = 0 : i64, scratch_operands = 0 : i64, tpu.core_type = #tpu.core_type<tc>, window_params = [{transform_indices = @transform_0, window_bounds = array<i64: 8, 512>}, {transform_indices = @transform_1, window_bounds = array<i64: 512, 128>}, {transform_indices = @transform_2, window_bounds = array<i64: 1, 128>}, {transform_indices = @transform_3, window_bounds = array<i64: 8, 128>}]} {
    %c0_i32 = arith.constant 0 : i32
    %0 = arith.cmpi eq, %arg2, %c0_i32 : i32
    %1 = arith.extui %0 : i1 to i32
    %c0_i32_0 = arith.constant 0 : i32
    %2 = arith.cmpi ne, %1, %c0_i32_0 : i32
    scf.if %2 {
      %cst_10 = arith.constant 0.000000e+00 : f32
      %12 = vector.broadcast %cst_10 : f32 to vector<8x128xf32>
      %c0_11 = arith.constant 0 : index
      %c0_12 = arith.constant 0 : index
      %13 = vector.load %arg6[%c0_11, %c0_12] : memref<8x128xf32, #tpu.memory_space<vmem>>, vector<8x128xf32>
      tpu.vector_store %arg6[%c0_11, %c0_12], %12 {strides = array<i32>} : memref<8x128xf32, #tpu.memory_space<vmem>>, vector<8x128xf32>,
    } else {
    }
    %c0 = arith.constant 0 : index
    %c0_1 = arith.constant 0 : index
    %3 = vector.load %arg6[%c0, %c0_1] : memref<8x128xf32, #tpu.memory_space<vmem>>, vector<8x128xf32>
    %c0_2 = arith.constant 0 : index
    %c0_3 = arith.constant 0 : index
    %4 = vector.load %arg3[%c0_2, %c0_3] : memref<8x512xbf16, #tpu.memory_space<vmem>>, vector<8x512xbf16>
    %c0_4 = arith.constant 0 : index
    %c0_5 = arith.constant 0 : index
    %5 = vector.load %arg4[%c0_4, %c0_5] : memref<512x128xbf16, #tpu.memory_space<vmem>>, vector<512x128xbf16>
    %cst = arith.constant dense<0.000000e+00> : vector<8x128xf32>
    %6 = tpu.matmul %4, %5, %cst {dimension_numbers = #tpu.dot_dimension_numbers<[1], [0], [0], [1], [0, 0, 1, 1], [], []>} : vector<8x512xbf16>, vector<512x128xbf16>, vector<8x128xf32> -> vector<8x128xf32>
    %7 = arith.addf %3, %6 : vector<8x128xf32>
    %c0_6 = arith.constant 0 : index
    %c0_7 = arith.constant 0 : index
    %8 = vector.load %arg6[%c0_6, %c0_7] : memref<8x128xf32, #tpu.memory_space<vmem>>, vector<8x128xf32>
    tpu.vector_store %arg6[%c0_6, %c0_7], %7 {strides = array<i32>} : memref<8x128xf32, #tpu.memory_space<vmem>>, vector<8x128xf32>,
    %c0_i32_8 = arith.constant 0 : i32
    %9 = arith.cmpi eq, %arg2, %c0_i32_8 : i32
    %10 = arith.extui %9 : i1 to i32
    %c0_i32_9 = arith.constant 0 : i32
    %11 = arith.cmpi ne, %10, %c0_i32_9 : i32
    scf.if %11 {
      %c0_10 = arith.constant 0 : index
      %c0_11 = arith.constant 0 : index
      %12 = vector.load %arg6[%c0_10, %c0_11] : memref<8x128xf32, #tpu.memory_space<vmem>>, vector<8x128xf32>
      %c0_12 = arith.constant 0 : index
      %c0_13 = arith.constant 0 : index
      %13 = vector.load %arg5[%c0_12, %c0_13] : memref<1x128xf32, #tpu.memory_space<vmem>>, vector<1x128xf32>
      %14 = vector.broadcast %13 : vector<1x128xf32> to vector<8x128xf32>
      %15 = arith.addf %12, %14 : vector<8x128xf32>
      %c0_14 = arith.constant 0 : index
      %c0_15 = arith.constant 0 : index
      %16 = vector.load %arg6[%c0_14, %c0_15] : memref<8x128xf32, #tpu.memory_space<vmem>>, vector<8x128xf32>
      tpu.vector_store %arg6[%c0_14, %c0_15], %15 {strides = array<i32>} : memref<8x128xf32, #tpu.memory_space<vmem>>, vector<8x128xf32>,
    } else {
    }
    return
  }
  func.func @transform_0(%arg0: i32, %arg1: i32, %arg2: i32) -> (i32, i32) {
    %c0_i32 = arith.constant 0 : i32
    return %arg0, %arg2 : i32, i32
  }
  func.func @transform_1(%arg0: i32, %arg1: i32, %arg2: i32) -> (i32, i32) {
    %c0_i32 = arith.constant 0 : i32
    return %arg2, %arg1 : i32, i32
  }
  func.func @transform_2(%arg0: i32, %arg1: i32, %arg2: i32) -> (i32, i32) {
    %c0_i32 = arith.constant 0 : i32
    %c0_i32_0 = arith.constant 0 : i32
    return %c0_i32, %arg1 : i32, i32
  }
  func.func @transform_3(%arg0: i32, %arg1: i32, %arg2: i32) -> (i32, i32) {
    %c0_i32 = arith.constant 0 : i32
    return %arg0, %arg1 : i32, i32
  }
}

</mosaic_0001>

<llo_original>
// kernel: linear_then_conv_forward.7
$region0: #{linear_then_conv_forward.7}
  #allocation0 [shape = 'u32[]', space=smem, size = 0x4, offset = 0x4, fixed_abs, tag = 'smem constant byte address 0x4 - core index']
  #allocation1 [shape = 'u32[144,128]{1,0:T(1,128)}', space=vmem, size = 0x12000, scoped, tag = 'internal scratch']
  %s0 = inlined_call_operand.vmem [shape: bf16[8,896], index: 0, kind: input, shape index: {}]
  %s1 = inlined_call_operand.vmem [shape: bf16[896,896], index: 1, kind: input, shape index: {}]
  %s2 = inlined_call_operand.vmem [shape: f32[1,896], index: 2, kind: input, shape index: {}]
  %s3 = inlined_call_operand.vmem [shape: f32[8,896], index: 3, kind: output, shape index: {}]
  %s4 = sld [smem:[#allocation0]]
  $region30: #{linear_then_conv_forward.7} parent=0
    _
  %s6 = ssub.s32 1, %s4
  %s7 = scalar_select 0, %s6, %s4
  // Predicated region
  $region2: #{linear_then_conv_forward.7} parent=0 // pred_check
    _
  $region3: #{linear_then_conv_forward.7} parent=0 // pred_check_branch
    %9 = sbr.rel (0) target = $region5
  $region4: #{linear_then_conv_forward.7} parent=0 // pred_region
    _
  $region5: #{linear_then_conv_forward.7} parent=0 // pred_fallthru
    _
  // Predicated region
  $region6: #{linear_then_conv_forward.7} parent=0 // pred_check
    _
  $region7: #{linear_then_conv_forward.7} parent=0 // pred_check_branch
    %11 = sbr.rel (0) target = $region9
  $region8: #{linear_then_conv_forward.7} parent=0 // pred_region
    _
  $region9: #{linear_then_conv_forward.7} parent=0 // pred_fallthru
    _
  // Predicated region
  $region10: #{linear_then_conv_forward.7} parent=0 // pred_check
    _
  $region11: #{linear_then_conv_forward.7} parent=0 // pred_check_branch
    %13 = sbr.rel (0) target = $region13
  $region12: #{linear_then_conv_forward.7} parent=0 // pred_region
    _
  $region13: #{linear_then_conv_forward.7} parent=0 // pred_fallthru
    _
  %p15 = scmp.eq.s32.totalorder 0, 0
  // Predicated region
  $region14: #{linear_then_conv_forward.7} parent=0 // pred_check
    %p16 = pneg %p15
  $region15: #{linear_then_conv_forward.7} parent=0 // pred_check_branch
    %18 = sbr.rel (%p16) target = $region17
  $region16: #{linear_then_conv_forward.7} parent=0 // pred_region
    %19 = vst [vmem:[%s3] sm:$0xff] 0.0
    %20 = vst [vmem:[%s3 + $0x8] sm:$0xff] 0.0
    %21 = vst [vmem:[%s3 + $0x10] sm:$0xff] 0.0
    %22 = vst [vmem:[%s3 + $0x18] sm:$0xff] 0.0
    %23 = vst [vmem:[%s3 + $0x20] sm:$0xff] 0.0
    %24 = vst [vmem:[%s3 + $0x28] sm:$0xff] 0.0
    %25 = vst [vmem:[%s3 + $0x30] sm:$0xff] 0.0
  $region17: #{linear_then_conv_forward.7} parent=0 // pred_fallthru
    _
  %v26 = vld [vmem:[%s3] sm:$0xff]
  %v27 = vld [vmem:[%s3 + $0x8] sm:$0xff]
  %v28 = vld [vmem:[%s3 + $0x10] sm:$0xff]
  %v29 = vld [vmem:[%s3 + $0x18] sm:$0xff]
  %v30 = vld [vmem:[%s3 + $0x20] sm:$0xff]
  %v31 = vld [vmem:[%s3 + $0x28] sm:$0xff]
  %v32 = vld [vmem:[%s3 + $0x30] sm:$0xff]
  %v33 = vld [vmem:[%s0] sm:$0xff]
  %v34 = vld [vmem:[%s0 + $0x8] sm:$0xff]
  %v35 = vld [vmem:[%s0 + $0x10] sm:$0xff]
  %v36 = vld [vmem:[%s0 + $0x18] sm:$0xf]
  %v37 = vld [vmem:[%s1] sm:$0xff]
  %v38 = vld [vmem:[%s1 + $0x8] sm:$0xff]
  %v39 = vld [vmem:[%s1 + $0x10] sm:$0xff]
  %v40 = vld [vmem:[%s1 + $0x18] sm:$0xf]
  %v41 = vld [vmem:[%s1 + $0x1c] sm:$0xff]
  %v42 = vld [vmem:[%s1 + $0x24] sm:$0xff]
  %v43 = vld [vmem:[%s1 + $0x2c] sm:$0xff]
  %v44 = vld [vmem:[%s1 + $0x34] sm:$0xf]
  %v45 = vld [vmem:[%s1 + $0x38] sm:$0xff]
  %v46 = vld [vmem:[%s1 + $0x40] sm:$0xff]
  %v47 = vld [vmem:[%s1 + $0x48] sm:$0xff]
  %v48 = vld [vmem:[%s1 + $0x50] sm:$0xf]
  %v49 = vld [vmem:[%s1 + $0x54] sm:$0xff]
  %v50 = vld [vmem:[%s1 + $0x5c] sm:$0xff]
  %v51 = vld [vmem:[%s1 + $0x64] sm:$0xff]
  %v52 = vld [vmem:[%s1 + $0x6c] sm:$0xf]
  %v53 = vld [vmem:[%s1 + $0x70] sm:$0xff]
  %v54 = vld [vmem:[%s1 + $0x78] sm:$0xff]
  %v55 = vld [vmem:[%s1 + $0x80] sm:$0xff]
  %v56 = vld [vmem:[%s1 + $0x88] sm:$0xf]
  %v57 = vld [vmem:[%s1 + $0x8c] sm:$0xff]
  %v58 = vld [vmem:[%s1 + $0x94] sm:$0xff]
  %v59 = vld [vmem:[%s1 + $0x9c] sm:$0xff]
  %v60 = vld [vmem:[%s1 + $0xa4] sm:$0xf]
  %v61 = vld [vmem:[%s1 + $0xa8] sm:$0xff]
  %v62 = vld [vmem:[%s1 + $0xb0] sm:$0xff]
  %v63 = vld [vmem:[%s1 + $0xb8] sm:$0xff]
  %v64 = vld [vmem:[%s1 + $0xc0] sm:$0xf]
  %v65 = vld [vmem:[%s1 + $0xc4] sm:$0xff]
  %v66 = vld [vmem:[%s1 + $0xcc] sm:$0xff]
  %v67 = vld [vmem:[%s1 + $0xd4] sm:$0xff]
  %v68 = vld [vmem:[%s1 + $0xdc] sm:$0xf]
  %v69 = vld [vmem:[%s1 + $0xe0] sm:$0xff]
  %v70 = vld [vmem:[%s1 + $0xe8] sm:$0xff]
  %v71 = vld [vmem:[%s1 + $0xf0] sm:$0xff]
  %v72 = vld [vmem:[%s1 + $0xf8] sm:$0xf]
  %v73 = vld [vmem:[%s1 + $0xfc] sm:$0xff]
  %v74 = vld [vmem:[%s1 + $0x104] sm:$0xff]
  %v75 = vld [vmem:[%s1 + $0x10c] sm:$0xff]
  %v76 = vld [vmem:[%s1 + $0x114] sm:$0xf]
  %v77 = vld [vmem:[%s1 + $0x118] sm:$0xff]
  %v78 = vld [vmem:[%s1 + $0x120] sm:$0xff]
  %v79 = vld [vmem:[%s1 + $0x128] sm:$0xff]
  %v80 = vld [vmem:[%s1 + $0x130] sm:$0xf]
  %v81 = vld [vmem:[%s1 + $0x134] sm:$0xff]
  %v82 = vld [vmem:[%s1 + $0x13c] sm:$0xff]
  %v83 = vld [vmem:[%s1 + $0x144] sm:$0xff]
  %v84 = vld [vmem:[%s1 + $0x14c] sm:$0xf]
  %v85 = vld [vmem:[%s1 + $0x150] sm:$0xff]
  %v86 = vld [vmem:[%s1 + $0x158] sm:$0xff]
  %v87 = vld [vmem:[%s1 + $0x160] sm:$0xff]
  %v88 = vld [vmem:[%s1 + $0x168] sm:$0xf]
  %v89 = vld [vmem:[%s1 + $0x16c] sm:$0xff]
  %v90 = vld [vmem:[%s1 + $0x174] sm:$0xff]
  %v91 = vld [vmem:[%s1 + $0x17c] sm:$0xff]
  %v92 = vld [vmem:[%s1 + $0x184] sm:$0xf]
  %v93 = vld [vmem:[%s1 + $0x188] sm:$0xff]
  %v94 = vld [vmem:[%s1 + $0x190] sm:$0xff]
  %v95 = vld [vmem:[%s1 + $0x198] sm:$0xff]
  %v96 = vld [vmem:[%s1 + $0x1a0] sm:$0xf]
  %v97 = vld [vmem:[%s1 + $0x1a4] sm:$0xff]
  %v98 = vld [vmem:[%s1 + $0x1ac] sm:$0xff]
  %v99 = vld [vmem:[%s1 + $0x1b4] sm:$0xff]
  %v100 = vld [vmem:[%s1 + $0x1bc] sm:$0xf]
  %v101 = vld [vmem:[%s1 + $0x1c0] sm:$0xff]
  %v102 = vld [vmem:[%s1 + $0x1c8] sm:$0xff]
  %v103 = vld [vmem:[%s1 + $0x1d0] sm:$0xff]
  %v104 = vld [vmem:[%s1 + $0x1d8] sm:$0xf]
  %v105 = vld [vmem:[%s1 + $0x1dc] sm:$0xff]
  %v106 = vld [vmem:[%s1 + $0x1e4] sm:$0xff]
  %v107 = vld [vmem:[%s1 + $0x1ec] sm:$0xff]
  %v108 = vld [vmem:[%s1 + $0x1f4] sm:$0xf]
  %v109 = vld [vmem:[%s1 + $0x1f8] sm:$0xff]
  %v110 = vld [vmem:[%s1 + $0x200] sm:$0xff]
  %v111 = vld [vmem:[%s1 + $0x208] sm:$0xff]
  %v112 = vld [vmem:[%s1 + $0x210] sm:$0xf]
  %v113 = vld [vmem:[%s1 + $0x214] sm:$0xff]
  %v114 = vld [vmem:[%s1 + $0x21c] sm:$0xff]
  %v115 = vld [vmem:[%s1 + $0x224] sm:$0xff]
  %v116 = vld [vmem:[%s1 + $0x22c] sm:$0xf]
  %v117 = vld [vmem:[%s1 + $0x230] sm:$0xff]
  %v118 = vld [vmem:[%s1 + $0x238] sm:$0xff]
  %v119 = vld [vmem:[%s1 + $0x240] sm:$0xff]
  %v120 = vld [vmem:[%s1 + $0x248] sm:$0xf]
  %v121 = vld [vmem:[%s1 + $0x24c] sm:$0xff]
  %v122 = vld [vmem:[%s1 + $0x254] sm:$0xff]
  %v123 = vld [vmem:[%s1 + $0x25c] sm:$0xff]
  %v124 = vld [vmem:[%s1 + $0x264] sm:$0xf]
  %v125 = vld [vmem:[%s1 + $0x268] sm:$0xff]
  %v126 = vld [vmem:[%s1 + $0x270] sm:$0xff]
  %v127 = vld [vmem:[%s1 + $0x278] sm:$0xff]
  %v128 = vld [vmem:[%s1 + $0x280] sm:$0xf]
  %v129 = vld [vmem:[%s1 + $0x284] sm:$0xff]
  %v130 = vld [vmem:[%s1 + $0x28c] sm:$0xff]
  %v131 = vld [vmem:[%s1 + $0x294] sm:$0xff]
  %v132 = vld [vmem:[%s1 + $0x29c] sm:$0xf]
  %v133 = vld [vmem:[%s1 + $0x2a0] sm:$0xff]
  %v134 = vld [vmem:[%s1 + $0x2a8] sm:$0xff]
  %v135 = vld [vmem:[%s1 + $0x2b0] sm:$0xff]
  %v136 = vld [vmem:[%s1 + $0x2b8] sm:$0xf]
  %v137 = vld [vmem:[%s1 + $0x2bc] sm:$0xff]
  %v138 = vld [vmem:[%s1 + $0x2c4] sm:$0xff]
  %v139 = vld [vmem:[%s1 + $0x2cc] sm:$0xff]
  %v140 = vld [vmem:[%s1 + $0x2d4] sm:$0xf]
  %v141 = vld [vmem:[%s1 + $0x2d8] sm:$0xff]
  %v142 = vld [vmem:[%s1 + $0x2e0] sm:$0xff]
  %v143 = vld [vmem:[%s1 + $0x2e8] sm:$0xff]
  %v144 = vld [vmem:[%s1 + $0x2f0] sm:$0xf]
  %v145 = vld [vmem:[%s1 + $0x2f4] sm:$0xff]
  %v146 = vld [vmem:[%s1 + $0x2fc] sm:$0xff]
  %v147 = vld [vmem:[%s1 + $0x304] sm:$0xff]
  %v148 = vld [vmem:[%s1 + $0x30c] sm:$0xf]
  %v149 = vld [vmem:[%s1 + $0x310] sm:$0xff]
  %v150 = vld [vmem:[%s1 + $0x318] sm:$0xff]
  %v151 = vld [vmem:[%s1 + $0x320] sm:$0xff]
  %v152 = vld [vmem:[%s1 + $0x328] sm:$0xf]
  %v153 = vld [vmem:[%s1 + $0x32c] sm:$0xff]
  %v154 = vld [vmem:[%s1 + $0x334] sm:$0xff]
  %v155 = vld [vmem:[%s1 + $0x33c] sm:$0xff]
  %v156 = vld [vmem:[%s1 + $0x344] sm:$0xf]
  %v157 = vld [vmem:[%s1 + $0x348] sm:$0xff]
  %v158 = vld [vmem:[%s1 + $0x350] sm:$0xff]
  %v159 = vld [vmem:[%s1 + $0x358] sm:$0xff]
  %v160 = vld [vmem:[%s1 + $0x360] sm:$0xf]
  %v161 = vld [vmem:[%s1 + $0x364] sm:$0xff]
  %v162 = vld [vmem:[%s1 + $0x36c] sm:$0xff]
  %v163 = vld [vmem:[%s1 + $0x374] sm:$0xff]
  %v164 = vld [vmem:[%s1 + $0x37c] sm:$0xf]
  %v165 = vld [vmem:[%s1 + $0x380] sm:$0xff]
  %v166 = vld [vmem:[%s1 + $0x388] sm:$0xff]
  %v167 = vld [vmem:[%s1 + $0x390] sm:$0xff]
  %v168 = vld [vmem:[%s1 + $0x398] sm:$0xf]
  %v169 = vld [vmem:[%s1 + $0x39c] sm:$0xff]
  %v170 = vld [vmem:[%s1 + $0x3a4] sm:$0xff]
  %v171 = vld [vmem:[%s1 + $0x3ac] sm:$0xff]
  %v172 = vld [vmem:[%s1 + $0x3b4] sm:$0xf]
  %v173 = vld [vmem:[%s1 + $0x3b8] sm:$0xff]
  %v174 = vld [vmem:[%s1 + $0x3c0] sm:$0xff]
  %v175 = vld [vmem:[%s1 + $0x3c8] sm:$0xff]
  %v176 = vld [vmem:[%s1 + $0x3d0] sm:$0xf]
  %v177 = vld [vmem:[%s1 + $0x3d4] sm:$0xff]
  %v178 = vld [vmem:[%s1 + $0x3dc] sm:$0xff]
  %v179 = vld [vmem:[%s1 + $0x3e4] sm:$0xff]
  %v180 = vld [vmem:[%s1 + $0x3ec] sm:$0xf]
  %v181 = vld [vmem:[%s1 + $0x3f0] sm:$0xff]
  %v182 = vld [vmem:[%s1 + $0x3f8] sm:$0xff]
  %v183 = vld [vmem:[%s1 + $0x400] sm:$0xff]
  %v184 = vld [vmem:[%s1 + $0x408] sm:$0xf]
  %v185 = vld [vmem:[%s1 + $0x40c] sm:$0xff]
  %v186 = vld [vmem:[%s1 + $0x414] sm:$0xff]
  %v187 = vld [vmem:[%s1 + $0x41c] sm:$0xff]
  %v188 = vld [vmem:[%s1 + $0x424] sm:$0xf]
  %v189 = vld [vmem:[%s1 + $0x428] sm:$0xff]
  %v190 = vld [vmem:[%s1 + $0x430] sm:$0xff]
  %v191 = vld [vmem:[%s1 + $0x438] sm:$0xff]
  %v192 = vld [vmem:[%s1 + $0x440] sm:$0xf]
  %v193 = vld [vmem:[%s1 + $0x444] sm:$0xff]
  %v194 = vld [vmem:[%s1 + $0x44c] sm:$0xff]
  %v195 = vld [vmem:[%s1 + $0x454] sm:$0xff]
  %v196 = vld [vmem:[%s1 + $0x45c] sm:$0xf]
  %v197 = vld [vmem:[%s1 + $0x460] sm:$0xff]
  %v198 = vld [vmem:[%s1 + $0x468] sm:$0xff]
  %v199 = vld [vmem:[%s1 + $0x470] sm:$0xff]
  %v200 = vld [vmem:[%s1 + $0x478] sm:$0xf]
  %v201 = vld [vmem:[%s1 + $0x47c] sm:$0xff]
  %v202 = vld [vmem:[%s1 + $0x484] sm:$0xff]
  %v203 = vld [vmem:[%s1 + $0x48c] sm:$0xff]
  %v204 = vld [vmem:[%s1 + $0x494] sm:$0xf]
  %v205 = vld [vmem:[%s1 + $0x498] sm:$0xff]
  %v206 = vld [vmem:[%s1 + $0x4a0] sm:$0xff]
  %v207 = vld [vmem:[%s1 + $0x4a8] sm:$0xff]
  %v208 = vld [vmem:[%s1 + $0x4b0] sm:$0xf]
  %v209 = vld [vmem:[%s1 + $0x4b4] sm:$0xff]
  %v210 = vld [vmem:[%s1 + $0x4bc] sm:$0xff]
  %v211 = vld [vmem:[%s1 + $0x4c4] sm:$0xff]
  %v212 = vld [vmem:[%s1 + $0x4cc] sm:$0xf]
  %v213 = vld [vmem:[%s1 + $0x4d0] sm:$0xff]
  %v214 = vld [vmem:[%s1 + $0x4d8] sm:$0xff]
  %v215 = vld [vmem:[%s1 + $0x4e0] sm:$0xff]
  %v216 = vld [vmem:[%s1 + $0x4e8] sm:$0xf]
  %v217 = vld [vmem:[%s1 + $0x4ec] sm:$0xff]
  %v218 = vld [vmem:[%s1 + $0x4f4] sm:$0xff]
  %v219 = vld [vmem:[%s1 + $0x4fc] sm:$0xff]
  %v220 = vld [vmem:[%s1 + $0x504] sm:$0xf]
  %v221 = vld [vmem:[%s1 + $0x508] sm:$0xff]
  %v222 = vld [vmem:[%s1 + $0x510] sm:$0xff]
  %v223 = vld [vmem:[%s1 + $0x518] sm:$0xff]
  %v224 = vld [vmem:[%s1 + $0x520] sm:$0xf]
  %v225 = vld [vmem:[%s1 + $0x524] sm:$0xff]
  %v226 = vld [vmem:[%s1 + $0x52c] sm:$0xff]
  %v227 = vld [vmem:[%s1 + $0x534] sm:$0xff]
  %v228 = vld [vmem:[%s1 + $0x53c] sm:$0xf]
  %v229 = vld [vmem:[%s1 + $0x540] sm:$0xff]
  %v230 = vld [vmem:[%s1 + $0x548] sm:$0xff]
  %v231 = vld [vmem:[%s1 + $0x550] sm:$0xff]
  %v232 = vld [vmem:[%s1 + $0x558] sm:$0xf]
  %v233 = vld [vmem:[%s1 + $0x55c] sm:$0xff]
  %v234 = vld [vmem:[%s1 + $0x564] sm:$0xff]
  %v235 = vld [vmem:[%s1 + $0x56c] sm:$0xff]
  %v236 = vld [vmem:[%s1 + $0x574] sm:$0xf]
  %v237 = vld [vmem:[%s1 + $0x578] sm:$0xff]
  %v238 = vld [vmem:[%s1 + $0x580] sm:$0xff]
  %v239 = vld [vmem:[%s1 + $0x588] sm:$0xff]
  %v240 = vld [vmem:[%s1 + $0x590] sm:$0xf]
  %v241 = vld [vmem:[%s1 + $0x594] sm:$0xff]
  %v242 = vld [vmem:[%s1 + $0x59c] sm:$0xff]
  %v243 = vld [vmem:[%s1 + $0x5a4] sm:$0xff]
  %v244 = vld [vmem:[%s1 + $0x5ac] sm:$0xf]
  %v245 = vld [vmem:[%s1 + $0x5b0] sm:$0xff]
  %v246 = vld [vmem:[%s1 + $0x5b8] sm:$0xff]
  %v247 = vld [vmem:[%s1 + $0x5c0] sm:$0xff]
  %v248 = vld [vmem:[%s1 + $0x5c8] sm:$0xf]
  %v249 = vld [vmem:[%s1 + $0x5cc] sm:$0xff]
  %v250 = vld [vmem:[%s1 + $0x5d4] sm:$0xff]
  %v251 = vld [vmem:[%s1 + $0x5dc] sm:$0xff]
  %v252 = vld [vmem:[%s1 + $0x5e4] sm:$0xf]
  %v253 = vld [vmem:[%s1 + $0x5e8] sm:$0xff]
  %v254 = vld [vmem:[%s1 + $0x5f0] sm:$0xff]
  %v255 = vld [vmem:[%s1 + $0x5f8] sm:$0xff]
  %v256 = vld [vmem:[%s1 + $0x600] sm:$0xf]
  %v257 = vld [vmem:[%s1 + $0x604] sm:$0xff]
  %v258 = vld [vmem:[%s1 + $0x60c] sm:$0xff]
  %v259 = vld [vmem:[%s1 + $0x614] sm:$0xff]
  %v260 = vld [vmem:[%s1 + $0x61c] sm:$0xf]
  %v261 = vld [vmem:[%s1 + $0x620] sm:$0xff]
  %v262 = vld [vmem:[%s1 + $0x628] sm:$0xff]
  %v263 = vld [vmem:[%s1 + $0x630] sm:$0xff]
  %v264 = vld [vmem:[%s1 + $0x638] sm:$0xf]
  %v265 = vld [vmem:[%s1 + $0x63c] sm:$0xff]
  %v266 = vld [vmem:[%s1 + $0x644] sm:$0xff]
  %v267 = vld [vmem:[%s1 + $0x64c] sm:$0xff]
  %v268 = vld [vmem:[%s1 + $0x654] sm:$0xf]
  %v269 = vld [vmem:[%s1 + $0x658] sm:$0xff]
  %v270 = vld [vmem:[%s1 + $0x660] sm:$0xff]
  %v271 = vld [vmem:[%s1 + $0x668] sm:$0xff]
  %v272 = vld [vmem:[%s1 + $0x670] sm:$0xf]
  %v273 = vld [vmem:[%s1 + $0x674] sm:$0xff]
  %v274 = vld [vmem:[%s1 + $0x67c] sm:$0xff]
  %v275 = vld [vmem:[%s1 + $0x684] sm:$0xff]
  %v276 = vld [vmem:[%s1 + $0x68c] sm:$0xf]
  %v277 = vld [vmem:[%s1 + $0x690] sm:$0xff]
  %v278 = vld [vmem:[%s1 + $0x698] sm:$0xff]
  %v279 = vld [vmem:[%s1 + $0x6a0] sm:$0xff]
  %v280 = vld [vmem:[%s1 + $0x6a8] sm:$0xf]
  %v281 = vld [vmem:[%s1 + $0x6ac] sm:$0xff]
  %v282 = vld [vmem:[%s1 + $0x6b4] sm:$0xff]
  %v283 = vld [vmem:[%s1 + $0x6bc] sm:$0xff]
  %v284 = vld [vmem:[%s1 + $0x6c4] sm:$0xf]
  %v285 = vld [vmem:[%s1 + $0x6c8] sm:$0xff]
  %v286 = vld [vmem:[%s1 + $0x6d0] sm:$0xff]
  %v287 = vld [vmem:[%s1 + $0x6d8] sm:$0xff]
  %v288 = vld [vmem:[%s1 + $0x6e0] sm:$0xf]
  %v289 = vld [vmem:[%s1 + $0x6e4] sm:$0xff]
  %v290 = vld [vmem:[%s1 + $0x6ec] sm:$0xff]
  %v291 = vld [vmem:[%s1 + $0x6f4] sm:$0xff]
  %v292 = vld [vmem:[%s1 + $0x6fc] sm:$0xf]
  %v293 = vld [vmem:[%s1 + $0x700] sm:$0xff]
  %v294 = vld [vmem:[%s1 + $0x708] sm:$0xff]
  %v295 = vld [vmem:[%s1 + $0x710] sm:$0xff]
  %v296 = vld [vmem:[%s1 + $0x718] sm:$0xf]
  %v297 = vld [vmem:[%s1 + $0x71c] sm:$0xff]
  %v298 = vld [vmem:[%s1 + $0x724] sm:$0xff]
  %v299 = vld [vmem:[%s1 + $0x72c] sm:$0xff]
  %v300 = vld [vmem:[%s1 + $0x734] sm:$0xf]
  %v301 = vld [vmem:[%s1 + $0x738] sm:$0xff]
  %v302 = vld [vmem:[%s1 + $0x740] sm:$0xff]
  %v303 = vld [vmem:[%s1 + $0x748] sm:$0xff]
  %v304 = vld [vmem:[%s1 + $0x750] sm:$0xf]
  %v305 = vld [vmem:[%s1 + $0x754] sm:$0xff]
  %v306 = vld [vmem:[%s1 + $0x75c] sm:$0xff]
  %v307 = vld [vmem:[%s1 + $0x764] sm:$0xff]
  %v308 = vld [vmem:[%s1 + $0x76c] sm:$0xf]
  %v309 = vld [vmem:[%s1 + $0x770] sm:$0xff]
  %v310 = vld [vmem:[%s1 + $0x778] sm:$0xff]
  %v311 = vld [vmem:[%s1 + $0x780] sm:$0xff]
  %v312 = vld [vmem:[%s1 + $0x788] sm:$0xf]
  %v313 = vld [vmem:[%s1 + $0x78c] sm:$0xff]
  %v314 = vld [vmem:[%s1 + $0x794] sm:$0xff]
  %v315 = vld [vmem:[%s1 + $0x79c] sm:$0xff]
  %v316 = vld [vmem:[%s1 + $0x7a4] sm:$0xf]
  %v317 = vld [vmem:[%s1 + $0x7a8] sm:$0xff]
  %v318 = vld [vmem:[%s1 + $0x7b0] sm:$0xff]
  %v319 = vld [vmem:[%s1 + $0x7b8] sm:$0xff]
  %v320 = vld [vmem:[%s1 + $0x7c0] sm:$0xf]
  %v321 = vld [vmem:[%s1 + $0x7c4] sm:$0xff]
  %v322 = vld [vmem:[%s1 + $0x7cc] sm:$0xff]
  %v323 = vld [vmem:[%s1 + $0x7d4] sm:$0xff]
  %v324 = vld [vmem:[%s1 + $0x7dc] sm:$0xf]
  %v325 = vld [vmem:[%s1 + $0x7e0] sm:$0xff]
  %v326 = vld [vmem:[%s1 + $0x7e8] sm:$0xff]
  %v327 = vld [vmem:[%s1 + $0x7f0] sm:$0xff]
  %v328 = vld [vmem:[%s1 + $0x7f8] sm:$0xf]
  %v329 = vld [vmem:[%s1 + $0x7fc] sm:$0xff]
  %v330 = vld [vmem:[%s1 + $0x804] sm:$0xff]
  %v331 = vld [vmem:[%s1 + $0x80c] sm:$0xff]
  %v332 = vld [vmem:[%s1 + $0x814] sm:$0xf]
  %v333 = vld [vmem:[%s1 + $0x818] sm:$0xff]
  %v334 = vld [vmem:[%s1 + $0x820] sm:$0xff]
  %v335 = vld [vmem:[%s1 + $0x828] sm:$0xff]
  %v336 = vld [vmem:[%s1 + $0x830] sm:$0xf]
  %v337 = vld [vmem:[%s1 + $0x834] sm:$0xff]
  %v338 = vld [vmem:[%s1 + $0x83c] sm:$0xff]
  %v339 = vld [vmem:[%s1 + $0x844] sm:$0xff]
  %v340 = vld [vmem:[%s1 + $0x84c] sm:$0xf]
  %v341 = vld [vmem:[%s1 + $0x850] sm:$0xff]
  %v342 = vld [vmem:[%s1 + $0x858] sm:$0xff]
  %v343 = vld [vmem:[%s1 + $0x860] sm:$0xff]
  %v344 = vld [vmem:[%s1 + $0x868] sm:$0xf]
  %v345 = vld [vmem:[%s1 + $0x86c] sm:$0xff]
  %v346 = vld [vmem:[%s1 + $0x874] sm:$0xff]
  %v347 = vld [vmem:[%s1 + $0x87c] sm:$0xff]
  %v348 = vld [vmem:[%s1 + $0x884] sm:$0xf]
  %v349 = vld [vmem:[%s1 + $0x888] sm:$0xff]
  %v350 = vld [vmem:[%s1 + $0x890] sm:$0xff]
  %v351 = vld [vmem:[%s1 + $0x898] sm:$0xff]
  %v352 = vld [vmem:[%s1 + $0x8a0] sm:$0xf]
  %v353 = vld [vmem:[%s1 + $0x8a4] sm:$0xff]
  %v354 = vld [vmem:[%s1 + $0x8ac] sm:$0xff]
  %v355 = vld [vmem:[%s1 + $0x8b4] sm:$0xff]
  %v356 = vld [vmem:[%s1 + $0x8bc] sm:$0xf]
  %v357 = vld [vmem:[%s1 + $0x8c0] sm:$0xff]
  %v358 = vld [vmem:[%s1 + $0x8c8] sm:$0xff]
  %v359 = vld [vmem:[%s1 + $0x8d0] sm:$0xff]
  %v360 = vld [vmem:[%s1 + $0x8d8] sm:$0xf]
  %v361 = vld [vmem:[%s1 + $0x8dc] sm:$0xff]
  %v362 = vld [vmem:[%s1 + $0x8e4] sm:$0xff]
  %v363 = vld [vmem:[%s1 + $0x8ec] sm:$0xff]
  %v364 = vld [vmem:[%s1 + $0x8f4] sm:$0xf]
  %v365 = vld [vmem:[%s1 + $0x8f8] sm:$0xff]
  %v366 = vld [vmem:[%s1 + $0x900] sm:$0xff]
  %v367 = vld [vmem:[%s1 + $0x908] sm:$0xff]
  %v368 = vld [vmem:[%s1 + $0x910] sm:$0xf]
  %v369 = vld [vmem:[%s1 + $0x914] sm:$0xff]
  %v370 = vld [vmem:[%s1 + $0x91c] sm:$0xff]
  %v371 = vld [vmem:[%s1 + $0x924] sm:$0xff]
  %v372 = vld [vmem:[%s1 + $0x92c] sm:$0xf]
  %v373 = vld [vmem:[%s1 + $0x930] sm:$0xff]
  %v374 = vld [vmem:[%s1 + $0x938] sm:$0xff]
  %v375 = vld [vmem:[%s1 + $0x940] sm:$0xff]
  %v376 = vld [vmem:[%s1 + $0x948] sm:$0xf]
  %v377 = vld [vmem:[%s1 + $0x94c] sm:$0xff]
  %v378 = vld [vmem:[%s1 + $0x954] sm:$0xff]
  %v379 = vld [vmem:[%s1 + $0x95c] sm:$0xff]
  %v380 = vld [vmem:[%s1 + $0x964] sm:$0xf]
  %v381 = vld [vmem:[%s1 + $0x968] sm:$0xff]
  %v382 = vld [vmem:[%s1 + $0x970] sm:$0xff]
  %v383 = vld [vmem:[%s1 + $0x978] sm:$0xff]
  %v384 = vld [vmem:[%s1 + $0x980] sm:$0xf]
  %v385 = vld [vmem:[%s1 + $0x984] sm:$0xff]
  %v386 = vld [vmem:[%s1 + $0x98c] sm:$0xff]
  %v387 = vld [vmem:[%s1 + $0x994] sm:$0xff]
  %v388 = vld [vmem:[%s1 + $0x99c] sm:$0xf]
  %v389 = vld [vmem:[%s1 + $0x9a0] sm:$0xff]
  %v390 = vld [vmem:[%s1 + $0x9a8] sm:$0xff]
  %v391 = vld [vmem:[%s1 + $0x9b0] sm:$0xff]
  %v392 = vld [vmem:[%s1 + $0x9b8] sm:$0xf]
  %v393 = vld [vmem:[%s1 + $0x9bc] sm:$0xff]
  %v394 = vld [vmem:[%s1 + $0x9c4] sm:$0xff]
  %v395 = vld [vmem:[%s1 + $0x9cc] sm:$0xff]
  %v396 = vld [vmem:[%s1 + $0x9d4] sm:$0xf]
  %v397 = vld [vmem:[%s1 + $0x9d8] sm:$0xff]
  %v398 = vld [vmem:[%s1 + $0x9e0] sm:$0xff]
  %v399 = vld [vmem:[%s1 + $0x9e8] sm:$0xff]
  %v400 = vld [vmem:[%s1 + $0x9f0] sm:$0xf]
  %v401 = vld [vmem:[%s1 + $0x9f4] sm:$0xff]
  %v402 = vld [vmem:[%s1 + $0x9fc] sm:$0xff]
  %v403 = vld [vmem:[%s1 + $0xa04] sm:$0xff]
  %v404 = vld [vmem:[%s1 + $0xa0c] sm:$0xf]
  %v405 = vld [vmem:[%s1 + $0xa10] sm:$0xff]
  %v406 = vld [vmem:[%s1 + $0xa18] sm:$0xff]
  %v407 = vld [vmem:[%s1 + $0xa20] sm:$0xff]
  %v408 = vld [vmem:[%s1 + $0xa28] sm:$0xf]
  %v409 = vld [vmem:[%s1 + $0xa2c] sm:$0xff]
  %v410 = vld [vmem:[%s1 + $0xa34] sm:$0xff]
  %v411 = vld [vmem:[%s1 + $0xa3c] sm:$0xff]
  %v412 = vld [vmem:[%s1 + $0xa44] sm:$0xf]
  %v413 = vld [vmem:[%s1 + $0xa48] sm:$0xff]
  %v414 = vld [vmem:[%s1 + $0xa50] sm:$0xff]
  %v415 = vld [vmem:[%s1 + $0xa58] sm:$0xff]
  %v416 = vld [vmem:[%s1 + $0xa60] sm:$0xf]
  %v417 = vld [vmem:[%s1 + $0xa64] sm:$0xff]
  %v418 = vld [vmem:[%s1 + $0xa6c] sm:$0xff]
  %v419 = vld [vmem:[%s1 + $0xa74] sm:$0xff]
  %v420 = vld [vmem:[%s1 + $0xa7c] sm:$0xf]
  %v421 = vld [vmem:[%s1 + $0xa80] sm:$0xff]
  %v422 = vld [vmem:[%s1 + $0xa88] sm:$0xff]
  %v423 = vld [vmem:[%s1 + $0xa90] sm:$0xff]
  %v424 = vld [vmem:[%s1 + $0xa98] sm:$0xf]
  %v425 = vld [vmem:[%s1 + $0xa9c] sm:$0xff]
  %v426 = vld [vmem:[%s1 + $0xaa4] sm:$0xff]
  %v427 = vld [vmem:[%s1 + $0xaac] sm:$0xff]
  %v428 = vld [vmem:[%s1 + $0xab4] sm:$0xf]
  %v429 = vld [vmem:[%s1 + $0xab8] sm:$0xff]
  %v430 = vld [vmem:[%s1 + $0xac0] sm:$0xff]
  %v431 = vld [vmem:[%s1 + $0xac8] sm:$0xff]
  %v432 = vld [vmem:[%s1 + $0xad0] sm:$0xf]
  %v433 = vld [vmem:[%s1 + $0xad4] sm:$0xff]
  %v434 = vld [vmem:[%s1 + $0xadc] sm:$0xff]
  %v435 = vld [vmem:[%s1 + $0xae4] sm:$0xff]
  %v436 = vld [vmem:[%s1 + $0xaec] sm:$0xf]
  %v437 = vld [vmem:[%s1 + $0xaf0] sm:$0xff]
  %v438 = vld [vmem:[%s1 + $0xaf8] sm:$0xff]
  %v439 = vld [vmem:[%s1 + $0xb00] sm:$0xff]
  %v440 = vld [vmem:[%s1 + $0xb08] sm:$0xf]
  %v441 = vld [vmem:[%s1 + $0xb0c] sm:$0xff]
  %v442 = vld [vmem:[%s1 + $0xb14] sm:$0xff]
  %v443 = vld [vmem:[%s1 + $0xb1c] sm:$0xff]
  %v444 = vld [vmem:[%s1 + $0xb24] sm:$0xf]
  %v445 = vld [vmem:[%s1 + $0xb28] sm:$0xff]
  %v446 = vld [vmem:[%s1 + $0xb30] sm:$0xff]
  %v447 = vld [vmem:[%s1 + $0xb38] sm:$0xff]
  %v448 = vld [vmem:[%s1 + $0xb40] sm:$0xf]
  %v449 = vld [vmem:[%s1 + $0xb44] sm:$0xff]
  %v450 = vld [vmem:[%s1 + $0xb4c] sm:$0xff]
  %v451 = vld [vmem:[%s1 + $0xb54] sm:$0xff]
  %v452 = vld [vmem:[%s1 + $0xb5c] sm:$0xf]
  %v453 = vld [vmem:[%s1 + $0xb60] sm:$0xff]
  %v454 = vld [vmem:[%s1 + $0xb68] sm:$0xff]
  %v455 = vld [vmem:[%s1 + $0xb70] sm:$0xff]
  %v456 = vld [vmem:[%s1 + $0xb78] sm:$0xf]
  %v457 = vld [vmem:[%s1 + $0xb7c] sm:$0xff]
  %v458 = vld [vmem:[%s1 + $0xb84] sm:$0xff]
  %v459 = vld [vmem:[%s1 + $0xb8c] sm:$0xff]
  %v460 = vld [vmem:[%s1 + $0xb94] sm:$0xf]
  %v461 = vld [vmem:[%s1 + $0xb98] sm:$0xff]
  %v462 = vld [vmem:[%s1 + $0xba0] sm:$0xff]
  %v463 = vld [vmem:[%s1 + $0xba8] sm:$0xff]
  %v464 = vld [vmem:[%s1 + $0xbb0] sm:$0xf]
  %v465 = vld [vmem:[%s1 + $0xbb4] sm:$0xff]
  %v466 = vld [vmem:[%s1 + $0xbbc] sm:$0xff]
  %v467 = vld [vmem:[%s1 + $0xbc4] sm:$0xff]
  %v468 = vld [vmem:[%s1 + $0xbcc] sm:$0xf]
  %v469 = vld [vmem:[%s1 + $0xbd0] sm:$0xff]
  %v470 = vld [vmem:[%s1 + $0xbd8] sm:$0xff]
  %v471 = vld [vmem:[%s1 + $0xbe0] sm:$0xff]
  %v472 = vld [vmem:[%s1 + $0xbe8] sm:$0xf]
  %v473 = vld [vmem:[%s1 + $0xbec] sm:$0xff]
  %v474 = vld [vmem:[%s1 + $0xbf4] sm:$0xff]
  %v475 = vld [vmem:[%s1 + $0xbfc] sm:$0xff]
  %v476 = vld [vmem:[%s1 + $0xc04] sm:$0xf]
  %v477 = vld [vmem:[%s1 + $0xc08] sm:$0xff]
  %v478 = vld [vmem:[%s1 + $0xc10] sm:$0xff]
  %v479 = vld [vmem:[%s1 + $0xc18] sm:$0xff]
  %v480 = vld [vmem:[%s1 + $0xc20] sm:$0xf]
  %v481 = vld [vmem:[%s1 + $0xc24] sm:$0xff]
  %v482 = vld [vmem:[%s1 + $0xc2c] sm:$0xff]
  %v483 = vld [vmem:[%s1 + $0xc34] sm:$0xff]
  %v484 = vld [vmem:[%s1 + $0xc3c] sm:$0xf]
  %v489 = vunpack.c.l.b16 %v33
  %v490 = vunpack.c.h.b16 %v33
  %v491 = vunpack.c.l.b16 %v34
  %v492 = vunpack.c.h.b16 %v34
  %v493 = vunpack.c.l.b16 %v35
  %v494 = vunpack.c.h.b16 %v35
  %v495 = vunpack.c.l.b16 %v36
  %v496 = vpack.c.b16 %v489, %v489
  %v497 = vpack.c.b16 %v490, %v490
  %v498 = vpack.c.b16 %v491, %v491
  %v499 = vpack.c.b16 %v492, %v492
  %v500 = vpack.c.b16 %v493, %v493
  %v501 = vpack.c.b16 %v494, %v494
  %v502 = vpack.c.b16 %v495, %v495
  %v958 = vunpack.c.l.b16 %v37
  %v959 = vunpack.c.h.b16 %v37
  %v960 = vunpack.c.l.b16 %v38
  %v961 = vunpack.c.h.b16 %v38
  %v962 = vunpack.c.l.b16 %v39
  %v963 = vunpack.c.h.b16 %v39
  %v964 = vunpack.c.l.b16 %v40
  %v965 = vunpack.c.l.b16 %v41
  %v966 = vunpack.c.h.b16 %v41
  %v967 = vunpack.c.l.b16 %v42
  %v968 = vunpack.c.h.b16 %v42
  %v969 = vunpack.c.l.b16 %v43
  %v970 = vunpack.c.h.b16 %v43
  %v971 = vunpack.c.l.b16 %v44
  %v972 = vunpack.c.l.b16 %v45
  %v973 = vunpack.c.h.b16 %v45
  %v974 = vunpack.c.l.b16 %v46
  %v975 = vunpack.c.h.b16 %v46
  %v976 = vunpack.c.l.b16 %v47
  %v977 = vunpack.c.h.b16 %v47
  %v978 = vunpack.c.l.b16 %v48
  %v979 = vunpack.c.l.b16 %v49
  %v980 = vunpack.c.h.b16 %v49
  %v981 = vunpack.c.l.b16 %v50
  %v982 = vunpack.c.h.b16 %v50
  %v983 = vunpack.c.l.b16 %v51
  %v984 = vunpack.c.h.b16 %v51
  %v985 = vunpack.c.l.b16 %v52
  %v986 = vunpack.c.l.b16 %v53
  %v987 = vunpack.c.h.b16 %v53
  %v988 = vunpack.c.l.b16 %v54
  %v989 = vunpack.c.h.b16 %v54
  %v990 = vunpack.c.l.b16 %v55
  %v991 = vunpack.c.h.b16 %v55
  %v992 = vunpack.c.l.b16 %v56
  %v993 = vunpack.c.l.b16 %v57
  %v994 = vunpack.c.h.b16 %v57
  %v995 = vunpack.c.l.b16 %v58
  %v996 = vunpack.c.h.b16 %v58
  %v997 = vunpack.c.l.b16 %v59
  %v998 = vunpack.c.h.b16 %v59
  %v999 = vunpack.c.l.b16 %v60
  %v1000 = vunpack.c.l.b16 %v61
  %v1001 = vunpack.c.h.b16 %v61
  %v1002 = vunpack.c.l.b16 %v62
  %v1003 = vunpack.c.h.b16 %v62
  %v1004 = vunpack.c.l.b16 %v63
  %v1005 = vunpack.c.h.b16 %v63
  %v1006 = vunpack.c.l.b16 %v64
  %v1007 = vunpack.c.l.b16 %v65
  %v1008 = vunpack.c.h.b16 %v65
  %v1009 = vunpack.c.l.b16 %v66
  %v1010 = vunpack.c.h.b16 %v66
  %v1011 = vunpack.c.l.b16 %v67
  %v1012 = vunpack.c.h.b16 %v67
  %v1013 = vunpack.c.l.b16 %v68
  %v1014 = vunpack.c.l.b16 %v69
  %v1015 = vunpack.c.h.b16 %v69
  %v1016 = vunpack.c.l.b16 %v70
  %v1017 = vunpack.c.h.b16 %v70
  %v1018 = vunpack.c.l.b16 %v71
  %v1019 = vunpack.c.h.b16 %v71
  %v1020 = vunpack.c.l.b16 %v72
  %v1021 = vunpack.c.l.b16 %v73
  %v1022 = vunpack.c.h.b16 %v73
  %v1023 = vunpack.c.l.b16 %v74
  %v1024 = vunpack.c.h.b16 %v74
  %v1025 = vunpack.c.l.b16 %v75
  %v1026 = vunpack.c.h.b16 %v75
  %v1027 = vunpack.c.l.b16 %v76
  %v1028 = vunpack.c.l.b16 %v77
  %v1029 = vunpack.c.h.b16 %v77
  %v1030 = vunpack.c.l.b16 %v78
  %v1031 = vunpack.c.h.b16 %v78
  %v1032 = vunpack.c.l.b16 %v79
  %v1033 = vunpack.c.h.b16 %v79
  %v1034 = vunpack.c.l.b16 %v80
  %v1035 = vunpack.c.l.b16 %v81
  %v1036 = vunpack.c.h.b16 %v81
  %v1037 = vunpack.c.l.b16 %v82
  %v1038 = vunpack.c.h.b16 %v82
  %v1039 = vunpack.c.l.b16 %v83
  %v1040 = vunpack.c.h.b16 %v83
  %v1041 = vunpack.c.l.b16 %v84
  %v1042 = vunpack.c.l.b16 %v85
  %v1043 = vunpack.c.h.b16 %v85
  %v1044 = vunpack.c.l.b16 %v86
  %v1045 = vunpack.c.h.b16 %v86
  %v1046 = vunpack.c.l.b16 %v87
  %v1047 = vunpack.c.h.b16 %v87
  %v1048 = vunpack.c.l.b16 %v88
  %v1049 = vunpack.c.l.b16 %v89
  %v1050 = vunpack.c.h.b16 %v89
  %v1051 = vunpack.c.l.b16 %v90
  %v1052 = vunpack.c.h.b16 %v90
  %v1053 = vunpack.c.l.b16 %v91
  %v1054 = vunpack.c.h.b16 %v91
  %v1055 = vunpack.c.l.b16 %v92
  %v1056 = vunpack.c.l.b16 %v93
  %v1057 = vunpack.c.h.b16 %v93
  %v1058 = vunpack.c.l.b16 %v94
  %v1059 = vunpack.c.h.b16 %v94
  %v1060 = vunpack.c.l.b16 %v95
  %v1061 = vunpack.c.h.b16 %v95
  %v1062 = vunpack.c.l.b16 %v96
  %v1063 = vunpack.c.l.b16 %v97
  %v1064 = vunpack.c.h.b16 %v97
  %v1065 = vunpack.c.l.b16 %v98
  %v1066 = vunpack.c.h.b16 %v98
  %v1067 = vunpack.c.l.b16 %v99
  %v1068 = vunpack.c.h.b16 %v99
  %v1069 = vunpack.c.l.b16 %v100
  %v1070 = vunpack.c.l.b16 %v101
  %v1071 = vunpack.c.h.b16 %v101
  %v1072 = vunpack.c.l.b16 %v102
  %v1073 = vunpack.c.h.b16 %v102
  %v1074 = vunpack.c.l.b16 %v103
  %v1075 = vunpack.c.h.b16 %v103
  %v1076 = vunpack.c.l.b16 %v104
  %v1077 = vunpack.c.l.b16 %v105
  %v1078 = vunpack.c.h.b16 %v105
  %v1079 = vunpack.c.l.b16 %v106
  %v1080 = vunpack.c.h.b16 %v106
  %v1081 = vunpack.c.l.b16 %v107
  %v1082 = vunpack.c.h.b16 %v107
  %v1083 = vunpack.c.l.b16 %v108
  %v1084 = vunpack.c.l.b16 %v109
  %v1085 = vunpack.c.h.b16 %v109
  %v1086 = vunpack.c.l.b16 %v110
  %v1087 = vunpack.c.h.b16 %v110
  %v1088 = vunpack.c.l.b16 %v111
  %v1089 = vunpack.c.h.b16 %v111
  %v1090 = vunpack.c.l.b16 %v112
  %v1091 = vunpack.c.l.b16 %v113
  %v1092 = vunpack.c.h.b16 %v113
  %v1093 = vunpack.c.l.b16 %v114
  %v1094 = vunpack.c.h.b16 %v114
  %v1095 = vunpack.c.l.b16 %v115
  %v1096 = vunpack.c.h.b16 %v115
  %v1097 = vunpack.c.l.b16 %v116
  %v1098 = vunpack.c.l.b16 %v117
  %v1099 = vunpack.c.h.b16 %v117
  %v1100 = vunpack.c.l.b16 %v118
  %v1101 = vunpack.c.h.b16 %v118
  %v1102 = vunpack.c.l.b16 %v119
  %v1103 = vunpack.c.h.b16 %v119
  %v1104 = vunpack.c.l.b16 %v120
  %v1105 = vunpack.c.l.b16 %v121
  %v1106 = vunpack.c.h.b16 %v121
  %v1107 = vunpack.c.l.b16 %v122
  %v1108 = vunpack.c.h.b16 %v122
  %v1109 = vunpack.c.l.b16 %v123
  %v1110 = vunpack.c.h.b16 %v123
  %v1111 = vunpack.c.l.b16 %v124
  %v1112 = vunpack.c.l.b16 %v125
  %v1113 = vunpack.c.h.b16 %v125
  %v1114 = vunpack.c.l.b16 %v126
  %v1115 = vunpack.c.h.b16 %v126
  %v1116 = vunpack.c.l.b16 %v127
  %v1117 = vunpack.c.h.b16 %v127
  %v1118 = vunpack.c.l.b16 %v128
  %v1119 = vunpack.c.l.b16 %v129
  %v1120 = vunpack.c.h.b16 %v129
  %v1121 = vunpack.c.l.b16 %v130
  %v1122 = vunpack.c.h.b16 %v130
  %v1123 = vunpack.c.l.b16 %v131
  %v1124 = vunpack.c.h.b16 %v131
  %v1125 = vunpack.c.l.b16 %v132
  %v1126 = vunpack.c.l.b16 %v133
  %v1127 = vunpack.c.h.b16 %v133
  %v1128 = vunpack.c.l.b16 %v134
  %v1129 = vunpack.c.h.b16 %v134
  %v1130 = vunpack.c.l.b16 %v135
  %v1131 = vunpack.c.h.b16 %v135
  %v1132 = vunpack.c.l.b16 %v136
  %v1133 = vunpack.c.l.b16 %v137
  %v1134 = vunpack.c.h.b16 %v137
  %v1135 = vunpack.c.l.b16 %v138
  %v1136 = vunpack.c.h.b16 %v138
  %v1137 = vunpack.c.l.b16 %v139
  %v1138 = vunpack.c.h.b16 %v139
  %v1139 = vunpack.c.l.b16 %v140
  %v1140 = vunpack.c.l.b16 %v141
  %v1141 = vunpack.c.h.b16 %v141
  %v1142 = vunpack.c.l.b16 %v142
  %v1143 = vunpack.c.h.b16 %v142
  %v1144 = vunpack.c.l.b16 %v143
  %v1145 = vunpack.c.h.b16 %v143
  %v1146 = vunpack.c.l.b16 %v144
  %v1147 = vunpack.c.l.b16 %v145
  %v1148 = vunpack.c.h.b16 %v145
  %v1149 = vunpack.c.l.b16 %v146
  %v1150 = vunpack.c.h.b16 %v146
  %v1151 = vunpack.c.l.b16 %v147
  %v1152 = vunpack.c.h.b16 %v147
  %v1153 = vunpack.c.l.b16 %v148
  %v1154 = vunpack.c.l.b16 %v149
  %v1155 = vunpack.c.h.b16 %v149
  %v1156 = vunpack.c.l.b16 %v150
  %v1157 = vunpack.c.h.b16 %v150
  %v1158 = vunpack.c.l.b16 %v151
  %v1159 = vunpack.c.h.b16 %v151
  %v1160 = vunpack.c.l.b16 %v152
  %v1161 = vunpack.c.l.b16 %v153
  %v1162 = vunpack.c.h.b16 %v153
  %v1163 = vunpack.c.l.b16 %v154
  %v1164 = vunpack.c.h.b16 %v154
  %v1165 = vunpack.c.l.b16 %v155
  %v1166 = vunpack.c.h.b16 %v155
  %v1167 = vunpack.c.l.b16 %v156
  %v1168 = vunpack.c.l.b16 %v157
  %v1169 = vunpack.c.h.b16 %v157
  %v1170 = vunpack.c.l.b16 %v158
  %v1171 = vunpack.c.h.b16 %v158
  %v1172 = vunpack.c.l.b16 %v159
  %v1173 = vunpack.c.h.b16 %v159
  %v1174 = vunpack.c.l.b16 %v160
  %v1175 = vunpack.c.l.b16 %v161
  %v1176 = vunpack.c.h.b16 %v161
  %v1177 = vunpack.c.l.b16 %v162
  %v1178 = vunpack.c.h.b16 %v162
  %v1179 = vunpack.c.l.b16 %v163
  %v1180 = vunpack.c.h.b16 %v163
  %v1181 = vunpack.c.l.b16 %v164
  %v1182 = vunpack.c.l.b16 %v165
  %v1183 = vunpack.c.h.b16 %v165
  %v1184 = vunpack.c.l.b16 %v166
  %v1185 = vunpack.c.h.b16 %v166
  %v1186 = vunpack.c.l.b16 %v167
  %v1187 = vunpack.c.h.b16 %v167
  %v1188 = vunpack.c.l.b16 %v168
  %v1189 = vunpack.c.l.b16 %v169
  %v1190 = vunpack.c.h.b16 %v169
  %v1191 = vunpack.c.l.b16 %v170
  %v1192 = vunpack.c.h.b16 %v170
  %v1193 = vunpack.c.l.b16 %v171
  %v1194 = vunpack.c.h.b16 %v171
  %v1195 = vunpack.c.l.b16 %v172
  %v1196 = vunpack.c.l.b16 %v173
  %v1197 = vunpack.c.h.b16 %v173
  %v1198 = vunpack.c.l.b16 %v174
  %v1199 = vunpack.c.h.b16 %v174
  %v1200 = vunpack.c.l.b16 %v175
  %v1201 = vunpack.c.h.b16 %v175
  %v1202 = vunpack.c.l.b16 %v176
  %v1203 = vunpack.c.l.b16 %v177
  %v1204 = vunpack.c.h.b16 %v177
  %v1205 = vunpack.c.l.b16 %v178
  %v1206 = vunpack.c.h.b16 %v178
  %v1207 = vunpack.c.l.b16 %v179
  %v1208 = vunpack.c.h.b16 %v179
  %v1209 = vunpack.c.l.b16 %v180
  %v1210 = vunpack.c.l.b16 %v181
  %v1211 = vunpack.c.h.b16 %v181
  %v1212 = vunpack.c.l.b16 %v182
  %v1213 = vunpack.c.h.b16 %v182
  %v1214 = vunpack.c.l.b16 %v183
  %v1215 = vunpack.c.h.b16 %v183
  %v1216 = vunpack.c.l.b16 %v184
  %v1217 = vunpack.c.l.b16 %v185
  %v1218 = vunpack.c.h.b16 %v185
  %v1219 = vunpack.c.l.b16 %v186
  %v1220 = vunpack.c.h.b16 %v186
  %v1221 = vunpack.c.l.b16 %v187
  %v1222 = vunpack.c.h.b16 %v187
  %v1223 = vunpack.c.l.b16 %v188
  %v1224 = vunpack.c.l.b16 %v189
  %v1225 = vunpack.c.h.b16 %v189
  %v1226 = vunpack.c.l.b16 %v190
  %v1227 = vunpack.c.h.b16 %v190
  %v1228 = vunpack.c.l.b16 %v191
  %v1229 = vunpack.c.h.b16 %v191
  %v1230 = vunpack.c.l.b16 %v192
  %v1231 = vunpack.c.l.b16 %v193
  %v1232 = vunpack.c.h.b16 %v193
  %v1233 = vunpack.c.l.b16 %v194
  %v1234 = vunpack.c.h.b16 %v194
  %v1235 = vunpack.c.l.b16 %v195
  %v1236 = vunpack.c.h.b16 %v195
  %v1237 = vunpack.c.l.b16 %v196
  %v1238 = vunpack.c.l.b16 %v197
  %v1239 = vunpack.c.h.b16 %v197
  %v1240 = vunpack.c.l.b16 %v198
  %v1241 = vunpack.c.h.b16 %v198
  %v1242 = vunpack.c.l.b16 %v199
  %v1243 = vunpack.c.h.b16 %v199
  %v1244 = vunpack.c.l.b16 %v200
  %v1245 = vunpack.c.l.b16 %v201
  %v1246 = vunpack.c.h.b16 %v201
  %v1247 = vunpack.c.l.b16 %v202
  %v1248 = vunpack.c.h.b16 %v202
  %v1249 = vunpack.c.l.b16 %v203
  %v1250 = vunpack.c.h.b16 %v203
  %v1251 = vunpack.c.l.b16 %v204
  %v1252 = vunpack.c.l.b16 %v205
  %v1253 = vunpack.c.h.b16 %v205
  %v1254 = vunpack.c.l.b16 %v206
  %v1255 = vunpack.c.h.b16 %v206
  %v1256 = vunpack.c.l.b16 %v207
  %v1257 = vunpack.c.h.b16 %v207
  %v1258 = vunpack.c.l.b16 %v208
  %v1259 = vunpack.c.l.b16 %v209
  %v1260 = vunpack.c.h.b16 %v209
  %v1261 = vunpack.c.l.b16 %v210
  %v1262 = vunpack.c.h.b16 %v210
  %v1263 = vunpack.c.l.b16 %v211
  %v1264 = vunpack.c.h.b16 %v211
  %v1265 = vunpack.c.l.b16 %v212
  %v1266 = vunpack.c.l.b16 %v213
  %v1267 = vunpack.c.h.b16 %v213
  %v1268 = vunpack.c.l.b16 %v214
  %v1269 = vunpack.c.h.b16 %v214
  %v1270 = vunpack.c.l.b16 %v215
  %v1271 = vunpack.c.h.b16 %v215
  %v1272 = vunpack.c.l.b16 %v216
  %v1273 = vunpack.c.l.b16 %v217
  %v1274 = vunpack.c.h.b16 %v217
  %v1275 = vunpack.c.l.b16 %v218
  %v1276 = vunpack.c.h.b16 %v218
  %v1277 = vunpack.c.l.b16 %v219
  %v1278 = vunpack.c.h.b16 %v219
  %v1279 = vunpack.c.l.b16 %v220
  %v1280 = vunpack.c.l.b16 %v221
  %v1281 = vunpack.c.h.b16 %v221
  %v1282 = vunpack.c.l.b16 %v222
  %v1283 = vunpack.c.h.b16 %v222
  %v1284 = vunpack.c.l.b16 %v223
  %v1285 = vunpack.c.h.b16 %v223
  %v1286 = vunpack.c.l.b16 %v224
  %v1287 = vunpack.c.l.b16 %v225
  %v1288 = vunpack.c.h.b16 %v225
  %v1289 = vunpack.c.l.b16 %v226
  %v1290 = vunpack.c.h.b16 %v226
  %v1291 = vunpack.c.l.b16 %v227
  %v1292 = vunpack.c.h.b16 %v227
  %v1293 = vunpack.c.l.b16 %v228
  %v1294 = vunpack.c.l.b16 %v229
  %v1295 = vunpack.c.h.b16 %v229
  %v1296 = vunpack.c.l.b16 %v230
  %v1297 = vunpack.c.h.b16 %v230
  %v1298 = vunpack.c.l.b16 %v231
  %v1299 = vunpack.c.h.b16 %v231
  %v1300 = vunpack.c.l.b16 %v232
  %v1301 = vunpack.c.l.b16 %v233
  %v1302 = vunpack.c.h.b16 %v233
  %v1303 = vunpack.c.l.b16 %v234
  %v1304 = vunpack.c.h.b16 %v234
  %v1305 = vunpack.c.l.b16 %v235
  %v1306 = vunpack.c.h.b16 %v235
  %v1307 = vunpack.c.l.b16 %v236
  %v1308 = vunpack.c.l.b16 %v237
  %v1309 = vunpack.c.h.b16 %v237
  %v1310 = vunpack.c.l.b16 %v238
  %v1311 = vunpack.c.h.b16 %v238
  %v1312 = vunpack.c.l.b16 %v239
  %v1313 = vunpack.c.h.b16 %v239
  %v1314 = vunpack.c.l.b16 %v240
  %v1315 = vunpack.c.l.b16 %v241
  %v1316 = vunpack.c.h.b16 %v241
  %v1317 = vunpack.c.l.b16 %v242
  %v1318 = vunpack.c.h.b16 %v242
  %v1319 = vunpack.c.l.b16 %v243
  %v1320 = vunpack.c.h.b16 %v243
  %v1321 = vunpack.c.l.b16 %v244
  %v1322 = vunpack.c.l.b16 %v245
  %v1323 = vunpack.c.h.b16 %v245
  %v1324 = vunpack.c.l.b16 %v246
  %v1325 = vunpack.c.h.b16 %v246
  %v1326 = vunpack.c.l.b16 %v247
  %v1327 = vunpack.c.h.b16 %v247
  %v1328 = vunpack.c.l.b16 %v248
  %v1329 = vunpack.c.l.b16 %v249
  %v1330 = vunpack.c.h.b16 %v249
  %v1331 = vunpack.c.l.b16 %v250
  %v1332 = vunpack.c.h.b16 %v250
  %v1333 = vunpack.c.l.b16 %v251
  %v1334 = vunpack.c.h.b16 %v251
  %v1335 = vunpack.c.l.b16 %v252
  %v1336 = vunpack.c.l.b16 %v253
  %v1337 = vunpack.c.h.b16 %v253
  %v1338 = vunpack.c.l.b16 %v254
  %v1339 = vunpack.c.h.b16 %v254
  %v1340 = vunpack.c.l.b16 %v255
  %v1341 = vunpack.c.h.b16 %v255
  %v1342 = vunpack.c.l.b16 %v256
  %v1343 = vunpack.c.l.b16 %v257
  %v1344 = vunpack.c.h.b16 %v257
  %v1345 = vunpack.c.l.b16 %v258
  %v1346 = vunpack.c.h.b16 %v258
  %v1347 = vunpack.c.l.b16 %v259
  %v1348 = vunpack.c.h.b16 %v259
  %v1349 = vunpack.c.l.b16 %v260
  %v1350 = vunpack.c.l.b16 %v261
  %v1351 = vunpack.c.h.b16 %v261
  %v1352 = vunpack.c.l.b16 %v262
  %v1353 = vunpack.c.h.b16 %v262
  %v1354 = vunpack.c.l.b16 %v263
  %v1355 = vunpack.c.h.b16 %v263
  %v1356 = vunpack.c.l.b16 %v264
  %v1357 = vunpack.c.l.b16 %v265
  %v1358 = vunpack.c.h.b16 %v265
  %v1359 = vunpack.c.l.b16 %v266
  %v1360 = vunpack.c.h.b16 %v266
  %v1361 = vunpack.c.l.b16 %v267
  %v1362 = vunpack.c.h.b16 %v267
  %v1363 = vunpack.c.l.b16 %v268
  %v1364 = vunpack.c.l.b16 %v269
  %v1365 = vunpack.c.h.b16 %v269
  %v1366 = vunpack.c.l.b16 %v270
  %v1367 = vunpack.c.h.b16 %v270
  %v1368 = vunpack.c.l.b16 %v271
  %v1369 = vunpack.c.h.b16 %v271
  %v1370 = vunpack.c.l.b16 %v272
  %v1371 = vunpack.c.l.b16 %v273
  %v1372 = vunpack.c.h.b16 %v273
  %v1373 = vunpack.c.l.b16 %v274
  %v1374 = vunpack.c.h.b16 %v274
  %v1375 = vunpack.c.l.b16 %v275
  %v1376 = vunpack.c.h.b16 %v275
  %v1377 = vunpack.c.l.b16 %v276
  %v1378 = vunpack.c.l.b16 %v277
  %v1379 = vunpack.c.h.b16 %v277
  %v1380 = vunpack.c.l.b16 %v278
  %v1381 = vunpack.c.h.b16 %v278
  %v1382 = vunpack.c.l.b16 %v279
  %v1383 = vunpack.c.h.b16 %v279
  %v1384 = vunpack.c.l.b16 %v280
  %v1385 = vunpack.c.l.b16 %v281
  %v1386 = vunpack.c.h.b16 %v281
  %v1387 = vunpack.c.l.b16 %v282
  %v1388 = vunpack.c.h.b16 %v282
  %v1389 = vunpack.c.l.b16 %v283
  %v1390 = vunpack.c.h.b16 %v283
  %v1391 = vunpack.c.l.b16 %v284
  %v1392 = vunpack.c.l.b16 %v285
  %v1393 = vunpack.c.h.b16 %v285
  %v1394 = vunpack.c.l.b16 %v286
  %v1395 = vunpack.c.h.b16 %v286
  %v1396 = vunpack.c.l.b16 %v287
  %v1397 = vunpack.c.h.b16 %v287
  %v1398 = vunpack.c.l.b16 %v288
  %v1399 = vunpack.c.l.b16 %v289
  %v1400 = vunpack.c.h.b16 %v289
  %v1401 = vunpack.c.l.b16 %v290
  %v1402 = vunpack.c.h.b16 %v290
  %v1403 = vunpack.c.l.b16 %v291
  %v1404 = vunpack.c.h.b16 %v291
  %v1405 = vunpack.c.l.b16 %v292
  %v1406 = vunpack.c.l.b16 %v293
  %v1407 = vunpack.c.h.b16 %v293
  %v1408 = vunpack.c.l.b16 %v294
  %v1409 = vunpack.c.h.b16 %v294
  %v1410 = vunpack.c.l.b16 %v295
  %v1411 = vunpack.c.h.b16 %v295
  %v1412 = vunpack.c.l.b16 %v296
  %v1413 = vunpack.c.l.b16 %v297
  %v1414 = vunpack.c.h.b16 %v297
  %v1415 = vunpack.c.l.b16 %v298
  %v1416 = vunpack.c.h.b16 %v298
  %v1417 = vunpack.c.l.b16 %v299
  %v1418 = vunpack.c.h.b16 %v299
  %v1419 = vunpack.c.l.b16 %v300
  %v1420 = vunpack.c.l.b16 %v301
  %v1421 = vunpack.c.h.b16 %v301
  %v1422 = vunpack.c.l.b16 %v302
  %v1423 = vunpack.c.h.b16 %v302
  %v1424 = vunpack.c.l.b16 %v303
  %v1425 = vunpack.c.h.b16 %v303
  %v1426 = vunpack.c.l.b16 %v304
  %v1427 = vunpack.c.l.b16 %v305
  %v1428 = vunpack.c.h.b16 %v305
  %v1429 = vunpack.c.l.b16 %v306
  %v1430 = vunpack.c.h.b16 %v306
  %v1431 = vunpack.c.l.b16 %v307
  %v1432 = vunpack.c.h.b16 %v307
  %v1433 = vunpack.c.l.b16 %v308
  %v1434 = vunpack.c.l.b16 %v309
  %v1435 = vunpack.c.h.b16 %v309
  %v1436 = vunpack.c.l.b16 %v310
  %v1437 = vunpack.c.h.b16 %v310
  %v1438 = vunpack.c.l.b16 %v311
  %v1439 = vunpack.c.h.b16 %v311
  %v1440 = vunpack.c.l.b16 %v312
  %v1441 = vunpack.c.l.b16 %v313
  %v1442 = vunpack.c.h.b16 %v313
  %v1443 = vunpack.c.l.b16 %v314
  %v1444 = vunpack.c.h.b16 %v314
  %v1445 = vunpack.c.l.b16 %v315
  %v1446 = vunpack.c.h.b16 %v315
  %v1447 = vunpack.c.l.b16 %v316
  %v1448 = vunpack.c.l.b16 %v317
  %v1449 = vunpack.c.h.b16 %v317
  %v1450 = vunpack.c.l.b16 %v318
  %v1451 = vunpack.c.h.b16 %v318
  %v1452 = vunpack.c.l.b16 %v319
  %v1453 = vunpack.c.h.b16 %v319
  %v1454 = vunpack.c.l.b16 %v320
  %v1455 = vunpack.c.l.b16 %v321
  %v1456 = vunpack.c.h.b16 %v321
  %v1457 = vunpack.c.l.b16 %v322
  %v1458 = vunpack.c.h.b16 %v322
  %v1459 = vunpack.c.l.b16 %v323
  %v1460 = vunpack.c.h.b16 %v323
  %v1461 = vunpack.c.l.b16 %v324
  %v1462 = vunpack.c.l.b16 %v325
  %v1463 = vunpack.c.h.b16 %v325
  %v1464 = vunpack.c.l.b16 %v326
  %v1465 = vunpack.c.h.b16 %v326
  %v1466 = vunpack.c.l.b16 %v327
  %v1467 = vunpack.c.h.b16 %v327
  %v1468 = vunpack.c.l.b16 %v328
  %v1469 = vunpack.c.l.b16 %v329
  %v1470 = vunpack.c.h.b16 %v329
  %v1471 = vunpack.c.l.b16 %v330
  %v1472 = vunpack.c.h.b16 %v330
  %v1473 = vunpack.c.l.b16 %v331
  %v1474 = vunpack.c.h.b16 %v331
  %v1475 = vunpack.c.l.b16 %v332
  %v1476 = vunpack.c.l.b16 %v333
  %v1477 = vunpack.c.h.b16 %v333
  %v1478 = vunpack.c.l.b16 %v334
  %v1479 = vunpack.c.h.b16 %v334
  %v1480 = vunpack.c.l.b16 %v335
  %v1481 = vunpack.c.h.b16 %v335
  %v1482 = vunpack.c.l.b16 %v336
  %v1483 = vunpack.c.l.b16 %v337
  %v1484 = vunpack.c.h.b16 %v337
  %v1485 = vunpack.c.l.b16 %v338
  %v1486 = vunpack.c.h.b16 %v338
  %v1487 = vunpack.c.l.b16 %v339
  %v1488 = vunpack.c.h.b16 %v339
  %v1489 = vunpack.c.l.b16 %v340
  %v1490 = vunpack.c.l.b16 %v341
  %v1491 = vunpack.c.h.b16 %v341
  %v1492 = vunpack.c.l.b16 %v342
  %v1493 = vunpack.c.h.b16 %v342
  %v1494 = vunpack.c.l.b16 %v343
  %v1495 = vunpack.c.h.b16 %v343
  %v1496 = vunpack.c.l.b16 %v344
  %v1497 = vunpack.c.l.b16 %v345
  %v1498 = vunpack.c.h.b16 %v345
  %v1499 = vunpack.c.l.b16 %v346
  %v1500 = vunpack.c.h.b16 %v346
  %v1501 = vunpack.c.l.b16 %v347
  %v1502 = vunpack.c.h.b16 %v347
  %v1503 = vunpack.c.l.b16 %v348
  %v1504 = vunpack.c.l.b16 %v349
  %v1505 = vunpack.c.h.b16 %v349
  %v1506 = vunpack.c.l.b16 %v350
  %v1507 = vunpack.c.h.b16 %v350
  %v1508 = vunpack.c.l.b16 %v351
  %v1509 = vunpack.c.h.b16 %v351
  %v1510 = vunpack.c.l.b16 %v352
  %v1511 = vunpack.c.l.b16 %v353
  %v1512 = vunpack.c.h.b16 %v353
  %v1513 = vunpack.c.l.b16 %v354
  %v1514 = vunpack.c.h.b16 %v354
  %v1515 = vunpack.c.l.b16 %v355
  %v1516 = vunpack.c.h.b16 %v355
  %v1517 = vunpack.c.l.b16 %v356
  %v1518 = vunpack.c.l.b16 %v357
  %v1519 = vunpack.c.h.b16 %v357
  %v1520 = vunpack.c.l.b16 %v358
  %v1521 = vunpack.c.h.b16 %v358
  %v1522 = vunpack.c.l.b16 %v359
  %v1523 = vunpack.c.h.b16 %v359
  %v1524 = vunpack.c.l.b16 %v360
  %v1525 = vunpack.c.l.b16 %v361
  %v1526 = vunpack.c.h.b16 %v361
  %v1527 = vunpack.c.l.b16 %v362
  %v1528 = vunpack.c.h.b16 %v362
  %v1529 = vunpack.c.l.b16 %v363
  %v1530 = vunpack.c.h.b16 %v363
  %v1531 = vunpack.c.l.b16 %v364
  %v1532 = vunpack.c.l.b16 %v365
  %v1533 = vunpack.c.h.b16 %v365
  %v1534 = vunpack.c.l.b16 %v366
  %v1535 = vunpack.c.h.b16 %v366
  %v1536 = vunpack.c.l.b16 %v367
  %v1537 = vunpack.c.h.b16 %v367
  %v1538 = vunpack.c.l.b16 %v368
  %v1539 = vunpack.c.l.b16 %v369
  %v1540 = vunpack.c.h.b16 %v369
  %v1541 = vunpack.c.l.b16 %v370
  %v1542 = vunpack.c.h.b16 %v370
  %v1543 = vunpack.c.l.b16 %v371
  %v1544 = vunpack.c.h.b16 %v371
  %v1545 = vunpack.c.l.b16 %v372
  %v1546 = vunpack.c.l.b16 %v373
  %v1547 = vunpack.c.h.b16 %v373
  %v1548 = vunpack.c.l.b16 %v374
  %v1549 = vunpack.c.h.b16 %v374
  %v1550 = vunpack.c.l.b16 %v375
  %v1551 = vunpack.c.h.b16 %v375
  %v1552 = vunpack.c.l.b16 %v376
  %v1553 = vunpack.c.l.b16 %v377
  %v1554 = vunpack.c.h.b16 %v377
  %v1555 = vunpack.c.l.b16 %v378
  %v1556 = vunpack.c.h.b16 %v378
  %v1557 = vunpack.c.l.b16 %v379
  %v1558 = vunpack.c.h.b16 %v379
  %v1559 = vunpack.c.l.b16 %v380
  %v1560 = vunpack.c.l.b16 %v381
  %v1561 = vunpack.c.h.b16 %v381
  %v1562 = vunpack.c.l.b16 %v382
  %v1563 = vunpack.c.h.b16 %v382
  %v1564 = vunpack.c.l.b16 %v383
  %v1565 = vunpack.c.h.b16 %v383
  %v1566 = vunpack.c.l.b16 %v384
  %v1567 = vunpack.c.l.b16 %v385
  %v1568 = vunpack.c.h.b16 %v385
  %v1569 = vunpack.c.l.b16 %v386
  %v1570 = vunpack.c.h.b16 %v386
  %v1571 = vunpack.c.l.b16 %v387
  %v1572 = vunpack.c.h.b16 %v387
  %v1573 = vunpack.c.l.b16 %v388
  %v1574 = vunpack.c.l.b16 %v389
  %v1575 = vunpack.c.h.b16 %v389
  %v1576 = vunpack.c.l.b16 %v390
  %v1577 = vunpack.c.h.b16 %v390
  %v1578 = vunpack.c.l.b16 %v391
  %v1579 = vunpack.c.h.b16 %v391
  %v1580 = vunpack.c.l.b16 %v392
  %v1581 = vunpack.c.l.b16 %v393
  %v1582 = vunpack.c.h.b16 %v393
  %v1583 = vunpack.c.l.b16 %v394
  %v1584 = vunpack.c.h.b16 %v394
  %v1585 = vunpack.c.l.b16 %v395
  %v1586 = vunpack.c.h.b16 %v395
  %v1587 = vunpack.c.l.b16 %v396
  %v1588 = vunpack.c.l.b16 %v397
  %v1589 = vunpack.c.h.b16 %v397
  %v1590 = vunpack.c.l.b16 %v398
  %v1591 = vunpack.c.h.b16 %v398
  %v1592 = vunpack.c.l.b16 %v399
  %v1593 = vunpack.c.h.b16 %v399
  %v1594 = vunpack.c.l.b16 %v400
  %v1595 = vunpack.c.l.b16 %v401
  %v1596 = vunpack.c.h.b16 %v401
  %v1597 = vunpack.c.l.b16 %v402
  %v1598 = vunpack.c.h.b16 %v402
  %v1599 = vunpack.c.l.b16 %v403
  %v1600 = vunpack.c.h.b16 %v403
  %v1601 = vunpack.c.l.b16 %v404
  %v1602 = vunpack.c.l.b16 %v405
  %v1603 = vunpack.c.h.b16 %v405
  %v1604 = vunpack.c.l.b16 %v406
  %v1605 = vunpack.c.h.b16 %v406
  %v1606 = vunpack.c.l.b16 %v407
  %v1607 = vunpack.c.h.b16 %v407
  %v1608 = vunpack.c.l.b16 %v408
  %v1609 = vunpack.c.l.b16 %v409
  %v1610 = vunpack.c.h.b16 %v409
  %v1611 = vunpack.c.l.b16 %v410
  %v1612 = vunpack.c.h.b16 %v410
  %v1613 = vunpack.c.l.b16 %v411
  %v1614 = vunpack.c.h.b16 %v411
  %v1615 = vunpack.c.l.b16 %v412
  %v1616 = vunpack.c.l.b16 %v413
  %v1617 = vunpack.c.h.b16 %v413
  %v1618 = vunpack.c.l.b16 %v414
  %v1619 = vunpack.c.h.b16 %v414
  %v1620 = vunpack.c.l.b16 %v415
  %v1621 = vunpack.c.h.b16 %v415
  %v1622 = vunpack.c.l.b16 %v416
  %v1623 = vunpack.c.l.b16 %v417
  %v1624 = vunpack.c.h.b16 %v417
  %v1625 = vunpack.c.l.b16 %v418
  %v1626 = vunpack.c.h.b16 %v418
  %v1627 = vunpack.c.l.b16 %v419
  %v1628 = vunpack.c.h.b16 %v419
  %v1629 = vunpack.c.l.b16 %v420
  %v1630 = vunpack.c.l.b16 %v421
  %v1631 = vunpack.c.h.b16 %v421
  %v1632 = vunpack.c.l.b16 %v422
  %v1633 = vunpack.c.h.b16 %v422
  %v1634 = vunpack.c.l.b16 %v423
  %v1635 = vunpack.c.h.b16 %v423
  %v1636 = vunpack.c.l.b16 %v424
  %v1637 = vunpack.c.l.b16 %v425
  %v1638 = vunpack.c.h.b16 %v425
  %v1639 = vunpack.c.l.b16 %v426
  %v1640 = vunpack.c.h.b16 %v426
  %v1641 = vunpack.c.l.b16 %v427
  %v1642 = vunpack.c.h.b16 %v427
  %v1643 = vunpack.c.l.b16 %v428
  %v1644 = vunpack.c.l.b16 %v429
  %v1645 = vunpack.c.h.b16 %v429
  %v1646 = vunpack.c.l.b16 %v430
  %v1647 = vunpack.c.h.b16 %v430
  %v1648 = vunpack.c.l.b16 %v431
  %v1649 = vunpack.c.h.b16 %v431
  %v1650 = vunpack.c.l.b16 %v432
  %v1651 = vunpack.c.l.b16 %v433
  %v1652 = vunpack.c.h.b16 %v433
  %v1653 = vunpack.c.l.b16 %v434
  %v1654 = vunpack.c.h.b16 %v434
  %v1655 = vunpack.c.l.b16 %v435
  %v1656 = vunpack.c.h.b16 %v435
  %v1657 = vunpack.c.l.b16 %v436
  %v1658 = vunpack.c.l.b16 %v437
  %v1659 = vunpack.c.h.b16 %v437
  %v1660 = vunpack.c.l.b16 %v438
  %v1661 = vunpack.c.h.b16 %v438
  %v1662 = vunpack.c.l.b16 %v439
  %v1663 = vunpack.c.h.b16 %v439
  %v1664 = vunpack.c.l.b16 %v440
  %v1665 = vunpack.c.l.b16 %v441
  %v1666 = vunpack.c.h.b16 %v441
  %v1667 = vunpack.c.l.b16 %v442
  %v1668 = vunpack.c.h.b16 %v442
  %v1669 = vunpack.c.l.b16 %v443
  %v1670 = vunpack.c.h.b16 %v443
  %v1671 = vunpack.c.l.b16 %v444
  %v1672 = vunpack.c.l.b16 %v445
  %v1673 = vunpack.c.h.b16 %v445
  %v1674 = vunpack.c.l.b16 %v446
  %v1675 = vunpack.c.h.b16 %v446
  %v1676 = vunpack.c.l.b16 %v447
  %v1677 = vunpack.c.h.b16 %v447
  %v1678 = vunpack.c.l.b16 %v448
  %v1679 = vunpack.c.l.b16 %v449
  %v1680 = vunpack.c.h.b16 %v449
  %v1681 = vunpack.c.l.b16 %v450
  %v1682 = vunpack.c.h.b16 %v450
  %v1683 = vunpack.c.l.b16 %v451
  %v1684 = vunpack.c.h.b16 %v451
  %v1685 = vunpack.c.l.b16 %v452
  %v1686 = vunpack.c.l.b16 %v453
  %v1687 = vunpack.c.h.b16 %v453
  %v1688 = vunpack.c.l.b16 %v454
  %v1689 = vunpack.c.h.b16 %v454
  %v1690 = vunpack.c.l.b16 %v455
  %v1691 = vunpack.c.h.b16 %v455
  %v1692 = vunpack.c.l.b16 %v456
  %v1693 = vunpack.c.l.b16 %v457
  %v1694 = vunpack.c.h.b16 %v457
  %v1695 = vunpack.c.l.b16 %v458
  %v1696 = vunpack.c.h.b16 %v458
  %v1697 = vunpack.c.l.b16 %v459
  %v1698 = vunpack.c.h.b16 %v459
  %v1699 = vunpack.c.l.b16 %v460
  %v1700 = vunpack.c.l.b16 %v461
  %v1701 = vunpack.c.h.b16 %v461
  %v1702 = vunpack.c.l.b16 %v462
  %v1703 = vunpack.c.h.b16 %v462
  %v1704 = vunpack.c.l.b16 %v463
  %v1705 = vunpack.c.h.b16 %v463
  %v1706 = vunpack.c.l.b16 %v464
  %v1707 = vunpack.c.l.b16 %v465
  %v1708 = vunpack.c.h.b16 %v465
  %v1709 = vunpack.c.l.b16 %v466
  %v1710 = vunpack.c.h.b16 %v466
  %v1711 = vunpack.c.l.b16 %v467
  %v1712 = vunpack.c.h.b16 %v467
  %v1713 = vunpack.c.l.b16 %v468
  %v1714 = vunpack.c.l.b16 %v469
  %v1715 = vunpack.c.h.b16 %v469
  %v1716 = vunpack.c.l.b16 %v470
  %v1717 = vunpack.c.h.b16 %v470
  %v1718 = vunpack.c.l.b16 %v471
  %v1719 = vunpack.c.h.b16 %v471
  %v1720 = vunpack.c.l.b16 %v472
  %v1721 = vunpack.c.l.b16 %v473
  %v1722 = vunpack.c.h.b16 %v473
  %v1723 = vunpack.c.l.b16 %v474
  %v1724 = vunpack.c.h.b16 %v474
  %v1725 = vunpack.c.l.b16 %v475
  %v1726 = vunpack.c.h.b16 %v475
  %v1727 = vunpack.c.l.b16 %v476
  %v1728 = vunpack.c.l.b16 %v477
  %v1729 = vunpack.c.h.b16 %v477
  %v1730 = vunpack.c.l.b16 %v478
  %v1731 = vunpack.c.h.b16 %v478
  %v1732 = vunpack.c.l.b16 %v479
  %v1733 = vunpack.c.h.b16 %v479
  %v1734 = vunpack.c.l.b16 %v480
  %v1735 = vunpack.c.l.b16 %v481
  %v1736 = vunpack.c.h.b16 %v481
  %v1737 = vunpack.c.l.b16 %v482
  %v1738 = vunpack.c.h.b16 %v482
  %v1739 = vunpack.c.l.b16 %v483
  %v1740 = vunpack.c.h.b16 %v483
  %v1741 = vunpack.c.l.b16 %v484
  %v1742 = vpack.c.b16 %v965, %v958
  %v1743 = vpack.c.b16 %v966, %v959
  %v1744 = vpack.c.b16 %v967, %v960
  %v1745 = vpack.c.b16 %v968, %v961
  %v1746 = vpack.c.b16 %v969, %v962
  %v1747 = vpack.c.b16 %v970, %v963
  %v1748 = vpack.c.b16 %v971, %v964
  %v1749 = vpack.c.b16 %v979, %v972
  %v1750 = vpack.c.b16 %v980, %v973
  %v1751 = vpack.c.b16 %v981, %v974
  %v1752 = vpack.c.b16 %v982, %v975
  %v1753 = vpack.c.b16 %v983, %v976
  %v1754 = vpack.c.b16 %v984, %v977
  %v1755 = vpack.c.b16 %v985, %v978
  %v1756 = vpack.c.b16 %v993, %v986
  %v1757 = vpack.c.b16 %v994, %v987
  %v1758 = vpack.c.b16 %v995, %v988
  %v1759 = vpack.c.b16 %v996, %v989
  %v1760 = vpack.c.b16 %v997, %v990
  %v1761 = vpack.c.b16 %v998, %v991
  %v1762 = vpack.c.b16 %v999, %v992
  %v1763 = vpack.c.b16 %v1007, %v1000
  %v1764 = vpack.c.b16 %v1008, %v1001
  %v1765 = vpack.c.b16 %v1009, %v1002
  %v1766 = vpack.c.b16 %v1010, %v1003
  %v1767 = vpack.c.b16 %v1011, %v1004
  %v1768 = vpack.c.b16 %v1012, %v1005
  %v1769 = vpack.c.b16 %v1013, %v1006
  %v1770 = vpack.c.b16 %v1021, %v1014
  %v1771 = vpack.c.b16 %v1022, %v1015
  %v1772 = vpack.c.b16 %v1023, %v1016
  %v1773 = vpack.c.b16 %v1024, %v1017
  %v1774 = vpack.c.b16 %v1025, %v1018
  %v1775 = vpack.c.b16 %v1026, %v1019
  %v1776 = vpack.c.b16 %v1027, %v1020
  %v1777 = vpack.c.b16 %v1035, %v1028
  %v1778 = vpack.c.b16 %v1036, %v1029
  %v1779 = vpack.c.b16 %v1037, %v1030
  %v1780 = vpack.c.b16 %v1038, %v1031
  %v1781 = vpack.c.b16 %v1039, %v1032
  %v1782 = vpack.c.b16 %v1040, %v1033
  %v1783 = vpack.c.b16 %v1041, %v1034
  %v1784 = vpack.c.b16 %v1049, %v1042
  %v1785 = vpack.c.b16 %v1050, %v1043
  %v1786 = vpack.c.b16 %v1051, %v1044
  %v1787 = vpack.c.b16 %v1052, %v1045
  %v1788 = vpack.c.b16 %v1053, %v1046
  %v1789 = vpack.c.b16 %v1054, %v1047
  %v1790 = vpack.c.b16 %v1055, %v1048
  %v1791 = vpack.c.b16 %v1063, %v1056
  %v1792 = vpack.c.b16 %v1064, %v1057
  %v1793 = vpack.c.b16 %v1065, %v1058
  %v1794 = vpack.c.b16 %v1066, %v1059
  %v1795 = vpack.c.b16 %v1067, %v1060
  %v1796 = vpack.c.b16 %v1068, %v1061
  %v1797 = vpack.c.b16 %v1069, %v1062
  %v1798 = vpack.c.b16 %v1077, %v1070
  %v1799 = vpack.c.b16 %v1078, %v1071
  %v1800 = vpack.c.b16 %v1079, %v1072
  %v1801 = vpack.c.b16 %v1080, %v1073
  %v1802 = vpack.c.b16 %v1081, %v1074
  %v1803 = vpack.c.b16 %v1082, %v1075
  %v1804 = vpack.c.b16 %v1083, %v1076
  %v1805 = vpack.c.b16 %v1091, %v1084
  %v1806 = vpack.c.b16 %v1092, %v1085
  %v1807 = vpack.c.b16 %v1093, %v1086
  %v1808 = vpack.c.b16 %v1094, %v1087
  %v1809 = vpack.c.b16 %v1095, %v1088
  %v1810 = vpack.c.b16 %v1096, %v1089
  %v1811 = vpack.c.b16 %v1097, %v1090
  %v1812 = vpack.c.b16 %v1105, %v1098
  %v1813 = vpack.c.b16 %v1106, %v1099
  %v1814 = vpack.c.b16 %v1107, %v1100
  %v1815 = vpack.c.b16 %v1108, %v1101
  %v1816 = vpack.c.b16 %v1109, %v1102
  %v1817 = vpack.c.b16 %v1110, %v1103
  %v1818 = vpack.c.b16 %v1111, %v1104
  %v1819 = vpack.c.b16 %v1119, %v1112
  %v1820 = vpack.c.b16 %v1120, %v1113
  %v1821 = vpack.c.b16 %v1121, %v1114
  %v1822 = vpack.c.b16 %v1122, %v1115
  %v1823 = vpack.c.b16 %v1123, %v1116
  %v1824 = vpack.c.b16 %v1124, %v1117
  %v1825 = vpack.c.b16 %v1125, %v1118
  %v1826 = vpack.c.b16 %v1133, %v1126
  %v1827 = vpack.c.b16 %v1134, %v1127
  %v1828 = vpack.c.b16 %v1135, %v1128
  %v1829 = vpack.c.b16 %v1136, %v1129
  %v1830 = vpack.c.b16 %v1137, %v1130
  %v1831 = vpack.c.b16 %v1138, %v1131
  %v1832 = vpack.c.b16 %v1139, %v1132
  %v1833 = vpack.c.b16 %v1147, %v1140
  %v1834 = vpack.c.b16 %v1148, %v1141
  %v1835 = vpack.c.b16 %v1149, %v1142
  %v1836 = vpack.c.b16 %v1150, %v1143
  %v1837 = vpack.c.b16 %v1151, %v1144
  %v1838 = vpack.c.b16 %v1152, %v1145
  %v1839 = vpack.c.b16 %v1153, %v1146
  %v1840 = vpack.c.b16 %v1161, %v1154
  %v1841 = vpack.c.b16 %v1162, %v1155
  %v1842 = vpack.c.b16 %v1163, %v1156
  %v1843 = vpack.c.b16 %v1164, %v1157
  %v1844 = vpack.c.b16 %v1165, %v1158
  %v1845 = vpack.c.b16 %v1166, %v1159
  %v1846 = vpack.c.b16 %v1167, %v1160
  %v1847 = vpack.c.b16 %v1175, %v1168
  %v1848 = vpack.c.b16 %v1176, %v1169
  %v1849 = vpack.c.b16 %v1177, %v1170
  %v1850 = vpack.c.b16 %v1178, %v1171
  %v1851 = vpack.c.b16 %v1179, %v1172
  %v1852 = vpack.c.b16 %v1180, %v1173
  %v1853 = vpack.c.b16 %v1181, %v1174
  %v1854 = vpack.c.b16 %v1189, %v1182
  %v1855 = vpack.c.b16 %v1190, %v1183
  %v1856 = vpack.c.b16 %v1191, %v1184
  %v1857 = vpack.c.b16 %v1192, %v1185
  %v1858 = vpack.c.b16 %v1193, %v1186
  %v1859 = vpack.c.b16 %v1194, %v1187
  %v1860 = vpack.c.b16 %v1195, %v1188
  %v1861 = vpack.c.b16 %v1203, %v1196
  %v1862 = vpack.c.b16 %v1204, %v1197
  %v1863 = vpack.c.b16 %v1205, %v1198
  %v1864 = vpack.c.b16 %v1206, %v1199
  %v1865 = vpack.c.b16 %v1207, %v1200
  %v1866 = vpack.c.b16 %v1208, %v1201
  %v1867 = vpack.c.b16 %v1209, %v1202
  %v1868 = vpack.c.b16 %v1217, %v1210
  %v1869 = vpack.c.b16 %v1218, %v1211
  %v1870 = vpack.c.b16 %v1219, %v1212
  %v1871 = vpack.c.b16 %v1220, %v1213
  %v1872 = vpack.c.b16 %v1221, %v1214
  %v1873 = vpack.c.b16 %v1222, %v1215
  %v1874 = vpack.c.b16 %v1223, %v1216
  %v1875 = vpack.c.b16 %v1231, %v1224
  %v1876 = vpack.c.b16 %v1232, %v1225
  %v1877 = vpack.c.b16 %v1233, %v1226
  %v1878 = vpack.c.b16 %v1234, %v1227
  %v1879 = vpack.c.b16 %v1235, %v1228
  %v1880 = vpack.c.b16 %v1236, %v1229
  %v1881 = vpack.c.b16 %v1237, %v1230
  %v1882 = vpack.c.b16 %v1245, %v1238
  %v1883 = vpack.c.b16 %v1246, %v1239
  %v1884 = vpack.c.b16 %v1247, %v1240
  %v1885 = vpack.c.b16 %v1248, %v1241
  %v1886 = vpack.c.b16 %v1249, %v1242
  %v1887 = vpack.c.b16 %v1250, %v1243
  %v1888 = vpack.c.b16 %v1251, %v1244
  %v1889 = vpack.c.b16 %v1259, %v1252
  %v1890 = vpack.c.b16 %v1260, %v1253
  %v1891 = vpack.c.b16 %v1261, %v1254
  %v1892 = vpack.c.b16 %v1262, %v1255
  %v1893 = vpack.c.b16 %v1263, %v1256
  %v1894 = vpack.c.b16 %v1264, %v1257
  %v1895 = vpack.c.b16 %v1265, %v1258
  %v1896 = vpack.c.b16 %v1273, %v1266
  %v1897 = vpack.c.b16 %v1274, %v1267
  %v1898 = vpack.c.b16 %v1275, %v1268
  %v1899 = vpack.c.b16 %v1276, %v1269
  %v1900 = vpack.c.b16 %v1277, %v1270
  %v1901 = vpack.c.b16 %v1278, %v1271
  %v1902 = vpack.c.b16 %v1279, %v1272
  %v1903 = vpack.c.b16 %v1287, %v1280
  %v1904 = vpack.c.b16 %v1288, %v1281
  %v1905 = vpack.c.b16 %v1289, %v1282
  %v1906 = vpack.c.b16 %v1290, %v1283
  %v1907 = vpack.c.b16 %v1291, %v1284
  %v1908 = vpack.c.b16 %v1292, %v1285
  %v1909 = vpack.c.b16 %v1293, %v1286
  %v1910 = vpack.c.b16 %v1301, %v1294
  %v1911 = vpack.c.b16 %v1302, %v1295
  %v1912 = vpack.c.b16 %v1303, %v1296
  %v1913 = vpack.c.b16 %v1304, %v1297
  %v1914 = vpack.c.b16 %v1305, %v1298
  %v1915 = vpack.c.b16 %v1306, %v1299
  %v1916 = vpack.c.b16 %v1307, %v1300
  %v1917 = vpack.c.b16 %v1315, %v1308
  %v1918 = vpack.c.b16 %v1316, %v1309
  %v1919 = vpack.c.b16 %v1317, %v1310
  %v1920 = vpack.c.b16 %v1318, %v1311
  %v1921 = vpack.c.b16 %v1319, %v1312
  %v1922 = vpack.c.b16 %v1320, %v1313
  %v1923 = vpack.c.b16 %v1321, %v1314
  %v1924 = vpack.c.b16 %v1329, %v1322
  %v1925 = vpack.c.b16 %v1330, %v1323
  %v1926 = vpack.c.b16 %v1331, %v1324
  %v1927 = vpack.c.b16 %v1332, %v1325
  %v1928 = vpack.c.b16 %v1333, %v1326
  %v1929 = vpack.c.b16 %v1334, %v1327
  %v1930 = vpack.c.b16 %v1335, %v1328
  %v1931 = vpack.c.b16 %v1343, %v1336
  %v1932 = vpack.c.b16 %v1344, %v1337
  %v1933 = vpack.c.b16 %v1345, %v1338
  %v1934 = vpack.c.b16 %v1346, %v1339
  %v1935 = vpack.c.b16 %v1347, %v1340
  %v1936 = vpack.c.b16 %v1348, %v1341
  %v1937 = vpack.c.b16 %v1349, %v1342
  %v1938 = vpack.c.b16 %v1357, %v1350
  %v1939 = vpack.c.b16 %v1358, %v1351
  %v1940 = vpack.c.b16 %v1359, %v1352
  %v1941 = vpack.c.b16 %v1360, %v1353
  %v1942 = vpack.c.b16 %v1361, %v1354
  %v1943 = vpack.c.b16 %v1362, %v1355
  %v1944 = vpack.c.b16 %v1363, %v1356
  %v1945 = vpack.c.b16 %v1371, %v1364
  %v1946 = vpack.c.b16 %v1372, %v1365
  %v1947 = vpack.c.b16 %v1373, %v1366
  %v1948 = vpack.c.b16 %v1374, %v1367
  %v1949 = vpack.c.b16 %v1375, %v1368
  %v1950 = vpack.c.b16 %v1376, %v1369
  %v1951 = vpack.c.b16 %v1377, %v1370
  %v1952 = vpack.c.b16 %v1385, %v1378
  %v1953 = vpack.c.b16 %v1386, %v1379
  %v1954 = vpack.c.b16 %v1387, %v1380
  %v1955 = vpack.c.b16 %v1388, %v1381
  %v1956 = vpack.c.b16 %v1389, %v1382
  %v1957 = vpack.c.b16 %v1390, %v1383
  %v1958 = vpack.c.b16 %v1391, %v1384
  %v1959 = vpack.c.b16 %v1399, %v1392
  %v1960 = vpack.c.b16 %v1400, %v1393
  %v1961 = vpack.c.b16 %v1401, %v1394
  %v1962 = vpack.c.b16 %v1402, %v1395
  %v1963 = vpack.c.b16 %v1403, %v1396
  %v1964 = vpack.c.b16 %v1404, %v1397
  %v1965 = vpack.c.b16 %v1405, %v1398
  %v1966 = vpack.c.b16 %v1413, %v1406
  %v1967 = vpack.c.b16 %v1414, %v1407
  %v1968 = vpack.c.b16 %v1415, %v1408
  %v1969 = vpack.c.b16 %v1416, %v1409
  %v1970 = vpack.c.b16 %v1417, %v1410
  %v1971 = vpack.c.b16 %v1418, %v1411
  %v1972 = vpack.c.b16 %v1419, %v1412
  %v1973 = vpack.c.b16 %v1427, %v1420
  %v1974 = vpack.c.b16 %v1428, %v1421
  %v1975 = vpack.c.b16 %v1429, %v1422
  %v1976 = vpack.c.b16 %v1430, %v1423
  %v1977 = vpack.c.b16 %v1431, %v1424
  %v1978 = vpack.c.b16 %v1432, %v1425
  %v1979 = vpack.c.b16 %v1433, %v1426
  %v1980 = vpack.c.b16 %v1441, %v1434
  %v1981 = vpack.c.b16 %v1442, %v1435
  %v1982 = vpack.c.b16 %v1443, %v1436
  %v1983 = vpack.c.b16 %v1444, %v1437
  %v1984 = vpack.c.b16 %v1445, %v1438
  %v1985 = vpack.c.b16 %v1446, %v1439
  %v1986 = vpack.c.b16 %v1447, %v1440
  %v1987 = vpack.c.b16 %v1455, %v1448
  %v1988 = vpack.c.b16 %v1456, %v1449
  %v1989 = vpack.c.b16 %v1457, %v1450
  %v1990 = vpack.c.b16 %v1458, %v1451
  %v1991 = vpack.c.b16 %v1459, %v1452
  %v1992 = vpack.c.b16 %v1460, %v1453
  %v1993 = vpack.c.b16 %v1461, %v1454
  %v1994 = vpack.c.b16 %v1469, %v1462
  %v1995 = vpack.c.b16 %v1470, %v1463
  %v1996 = vpack.c.b16 %v1471, %v1464
  %v1997 = vpack.c.b16 %v1472, %v1465
  %v1998 = vpack.c.b16 %v1473, %v1466
  %v1999 = vpack.c.b16 %v1474, %v1467
  %v2000 = vpack.c.b16 %v1475, %v1468
  %v2001 = vpack.c.b16 %v1483, %v1476
  %v2002 = vpack.c.b16 %v1484, %v1477
  %v2003 = vpack.c.b16 %v1485, %v1478
  %v2004 = vpack.c.b16 %v1486, %v1479
  %v2005 = vpack.c.b16 %v1487, %v1480
  %v2006 = vpack.c.b16 %v1488, %v1481
  %v2007 = vpack.c.b16 %v1489, %v1482
  %v2008 = vpack.c.b16 %v1497, %v1490
  %v2009 = vpack.c.b16 %v1498, %v1491
  %v2010 = vpack.c.b16 %v1499, %v1492
  %v2011 = vpack.c.b16 %v1500, %v1493
  %v2012 = vpack.c.b16 %v1501, %v1494
  %v2013 = vpack.c.b16 %v1502, %v1495
  %v2014 = vpack.c.b16 %v1503, %v1496
  %v2015 = vpack.c.b16 %v1511, %v1504
  %v2016 = vpack.c.b16 %v1512, %v1505
  %v2017 = vpack.c.b16 %v1513, %v1506
  %v2018 = vpack.c.b16 %v1514, %v1507
  %v2019 = vpack.c.b16 %v1515, %v1508
  %v2020 = vpack.c.b16 %v1516, %v1509
  %v2021 = vpack.c.b16 %v1517, %v1510
  %v2022 = vpack.c.b16 %v1525, %v1518
  %v2023 = vpack.c.b16 %v1526, %v1519
  %v2024 = vpack.c.b16 %v1527, %v1520
  %v2025 = vpack.c.b16 %v1528, %v1521
  %v2026 = vpack.c.b16 %v1529, %v1522
  %v2027 = vpack.c.b16 %v1530, %v1523
  %v2028 = vpack.c.b16 %v1531, %v1524
  %v2029 = vpack.c.b16 %v1539, %v1532
  %v2030 = vpack.c.b16 %v1540, %v1533
  %v2031 = vpack.c.b16 %v1541, %v1534
  %v2032 = vpack.c.b16 %v1542, %v1535
  %v2033 = vpack.c.b16 %v1543, %v1536
  %v2034 = vpack.c.b16 %v1544, %v1537
  %v2035 = vpack.c.b16 %v1545, %v1538
  %v2036 = vpack.c.b16 %v1553, %v1546
  %v2037 = vpack.c.b16 %v1554, %v1547
  %v2038 = vpack.c.b16 %v1555, %v1548
  %v2039 = vpack.c.b16 %v1556, %v1549
  %v2040 = vpack.c.b16 %v1557, %v1550
  %v2041 = vpack.c.b16 %v1558, %v1551
  %v2042 = vpack.c.b16 %v1559, %v1552
  %v2043 = vpack.c.b16 %v1567, %v1560
  %v2044 = vpack.c.b16 %v1568, %v1561
  %v2045 = vpack.c.b16 %v1569, %v1562
  %v2046 = vpack.c.b16 %v1570, %v1563
  %v2047 = vpack.c.b16 %v1571, %v1564
  %v2048 = vpack.c.b16 %v1572, %v1565
  %v2049 = vpack.c.b16 %v1573, %v1566
  %v2050 = vpack.c.b16 %v1581, %v1574
  %v2051 = vpack.c.b16 %v1582, %v1575
  %v2052 = vpack.c.b16 %v1583, %v1576
  %v2053 = vpack.c.b16 %v1584, %v1577
  %v2054 = vpack.c.b16 %v1585, %v1578
  %v2055 = vpack.c.b16 %v1586, %v1579
  %v2056 = vpack.c.b16 %v1587, %v1580
  %v2057 = vpack.c.b16 %v1595, %v1588
  %v2058 = vpack.c.b16 %v1596, %v1589
  %v2059 = vpack.c.b16 %v1597, %v1590
  %v2060 = vpack.c.b16 %v1598, %v1591
  %v2061 = vpack.c.b16 %v1599, %v1592
  %v2062 = vpack.c.b16 %v1600, %v1593
  %v2063 = vpack.c.b16 %v1601, %v1594
  %v2064 = vpack.c.b16 %v1609, %v1602
  %v2065 = vpack.c.b16 %v1610, %v1603
  %v2066 = vpack.c.b16 %v1611, %v1604
  %v2067 = vpack.c.b16 %v1612, %v1605
  %v2068 = vpack.c.b16 %v1613, %v1606
  %v2069 = vpack.c.b16 %v1614, %v1607
  %v2070 = vpack.c.b16 %v1615, %v1608
  %v2071 = vpack.c.b16 %v1623, %v1616
  %v2072 = vpack.c.b16 %v1624, %v1617
  %v2073 = vpack.c.b16 %v1625, %v1618
  %v2074 = vpack.c.b16 %v1626, %v1619
  %v2075 = vpack.c.b16 %v1627, %v1620
  %v2076 = vpack.c.b16 %v1628, %v1621
  %v2077 = vpack.c.b16 %v1629, %v1622
  %v2078 = vpack.c.b16 %v1637, %v1630
  %v2079 = vpack.c.b16 %v1638, %v1631
  %v2080 = vpack.c.b16 %v1639, %v1632
  %v2081 = vpack.c.b16 %v1640, %v1633
  %v2082 = vpack.c.b16 %v1641, %v1634
  %v2083 = vpack.c.b16 %v1642, %v1635
  %v2084 = vpack.c.b16 %v1643, %v1636
  %v2085 = vpack.c.b16 %v1651, %v1644
  %v2086 = vpack.c.b16 %v1652, %v1645
  %v2087 = vpack.c.b16 %v1653, %v1646
  %v2088 = vpack.c.b16 %v1654, %v1647
  %v2089 = vpack.c.b16 %v1655, %v1648
  %v2090 = vpack.c.b16 %v1656, %v1649
  %v2091 = vpack.c.b16 %v1657, %v1650
  %v2092 = vpack.c.b16 %v1665, %v1658
  %v2093 = vpack.c.b16 %v1666, %v1659
  %v2094 = vpack.c.b16 %v1667, %v1660
  %v2095 = vpack.c.b16 %v1668, %v1661
  %v2096 = vpack.c.b16 %v1669, %v1662
  %v2097 = vpack.c.b16 %v1670, %v1663
  %v2098 = vpack.c.b16 %v1671, %v1664
  %v2099 = vpack.c.b16 %v1679, %v1672
  %v2100 = vpack.c.b16 %v1680, %v1673
  %v2101 = vpack.c.b16 %v1681, %v1674
  %v2102 = vpack.c.b16 %v1682, %v1675
  %v2103 = vpack.c.b16 %v1683, %v1676
  %v2104 = vpack.c.b16 %v1684, %v1677
  %v2105 = vpack.c.b16 %v1685, %v1678
  %v2106 = vpack.c.b16 %v1693, %v1686
  %v2107 = vpack.c.b16 %v1694, %v1687
  %v2108 = vpack.c.b16 %v1695, %v1688
  %v2109 = vpack.c.b16 %v1696, %v1689
  %v2110 = vpack.c.b16 %v1697, %v1690
  %v2111 = vpack.c.b16 %v1698, %v1691
  %v2112 = vpack.c.b16 %v1699, %v1692
  %v2113 = vpack.c.b16 %v1707, %v1700
  %v2114 = vpack.c.b16 %v1708, %v1701
  %v2115 = vpack.c.b16 %v1709, %v1702
  %v2116 = vpack.c.b16 %v1710, %v1703
  %v2117 = vpack.c.b16 %v1711, %v1704
  %v2118 = vpack.c.b16 %v1712, %v1705
  %v2119 = vpack.c.b16 %v1713, %v1706
  %v2120 = vpack.c.b16 %v1721, %v1714
  %v2121 = vpack.c.b16 %v1722, %v1715
  %v2122 = vpack.c.b16 %v1723, %v1716
  %v2123 = vpack.c.b16 %v1724, %v1717
  %v2124 = vpack.c.b16 %v1725, %v1718
  %v2125 = vpack.c.b16 %v1726, %v1719
  %v2126 = vpack.c.b16 %v1727, %v1720
  %v2127 = vpack.c.b16 %v1735, %v1728
  %v2128 = vpack.c.b16 %v1736, %v1729
  %v2129 = vpack.c.b16 %v1737, %v1730
  %v2130 = vpack.c.b16 %v1738, %v1731
  %v2131 = vpack.c.b16 %v1739, %v1732
  %v2132 = vpack.c.b16 %v1740, %v1733
  %v2133 = vpack.c.b16 %v1741, %v1734
  %2526 = vmatprep.subr.bf16.mxu0 %v1743
  %2527 = vmatpush1.bf16.msra.mxu0 %v1742
  %2528 = vmatprep.subr.bf16.mxu0 %v1750
  %2529 = vmatpush1.bf16.msra.mxu0 %v1749
  %2530 = vmatprep.subr.bf16.mxu0 %v1757
  %2531 = vmatpush1.bf16.msra.mxu0 %v1756
  %2532 = vmatprep.subr.bf16.mxu0 %v1764
  %2533 = vmatpush1.bf16.msra.mxu0 %v1763
  %2534 = vmatprep.subr.bf16.mxu0 %v1771
  %2535 = vmatpush1.bf16.msra.mxu0 %v1770
  %2536 = vmatprep.subr.bf16.mxu0 %v1778
  %2537 = vmatpush1.bf16.msra.mxu0 %v1777
  %2538 = vmatprep.subr.bf16.mxu0 %v1785
  %2539 = vmatpush1.bf16.msra.mxu0 %v1784
  %2540 = vmatprep.subr.bf16.mxu0 %v1792
  %2541 = vmatpush1.bf16.msra.mxu0 %v1791
  %2542 = vmatprep.subr.bf16.mxu0 %v1799
  %2543 = vmatpush1.bf16.msra.mxu0 %v1798
  %2544 = vmatprep.subr.bf16.mxu0 %v1806
  %2545 = vmatpush1.bf16.msra.mxu0 %v1805
  %2546 = vmatprep.subr.bf16.mxu0 %v1813
  %2547 = vmatpush1.bf16.msra.mxu0 %v1812
  %2548 = vmatprep.subr.bf16.mxu0 %v1820
  %2549 = vmatpush1.bf16.msra.mxu0 %v1819
  %2550 = vmatprep.subr.bf16.mxu0 %v1827
  %2551 = vmatpush1.bf16.msra.mxu0 %v1826
  %2552 = vmatprep.subr.bf16.mxu0 %v1834
  %2553 = vmatpush1.bf16.msra.mxu0 %v1833
  %2554 = vmatprep.subr.bf16.mxu0 %v1841
  %2555 = vmatpush1.bf16.msra.mxu0 %v1840
  %2556 = vmatprep.subr.bf16.mxu0 %v1848
  %2557 = vmatpush1.bf16.msra.mxu0 %v1847
  %2558 = vmatprep.mubr.bf16.mxu0 %v497
  %2559 = vmatmul.mubr.bf16.gmra.mrb[0].mxu0 %v496
  %v2560 = vpop.f32.mrb[0].mxu0
  %v2561 = vadd.f32 0.0, %v2560
  %v2562 = vpop.f32.mrb[0].mxu0
  %v2563 = vadd.f32 0.0, %v2562
  %v2564 = vpop.f32.mrb[0].mxu0
  %v2565 = vpop.f32.mrb[0].mxu0
  %2566 = vdwg.mxu0
  %2567 = vmatprep.subr.bf16.mxu0 %v1855
  %2568 = vmatpush1.bf16.msra.mxu0 %v1854
  %2569 = vmatprep.subr.bf16.mxu0 %v1862
  %2570 = vmatpush1.bf16.msra.mxu0 %v1861
  %2571 = vmatprep.subr.bf16.mxu0 %v1869
  %2572 = vmatpush1.bf16.msra.mxu0 %v1868
  %2573 = vmatprep.subr.bf16.mxu0 %v1876
  %2574 = vmatpush1.bf16.msra.mxu0 %v1875
  %2575 = vmatprep.subr.bf16.mxu0 %v1883
  %2576 = vmatpush1.bf16.msra.mxu0 %v1882
  %2577 = vmatprep.subr.bf16.mxu0 %v1890
  %2578 = vmatpush1.bf16.msra.mxu0 %v1889
  %2579 = vmatprep.subr.bf16.mxu0 %v1897
  %2580 = vmatpush1.bf16.msra.mxu0 %v1896
  %2581 = vmatprep.subr.bf16.mxu0 %v1904
  %2582 = vmatpush1.bf16.msra.mxu0 %v1903
  %2583 = vmatprep.subr.bf16.mxu0 %v1911
  %2584 = vmatpush1.bf16.msra.mxu0 %v1910
  %2585 = vmatprep.subr.bf16.mxu0 %v1918
  %2586 = vmatpush1.bf16.msra.mxu0 %v1917
  %2587 = vmatprep.subr.bf16.mxu0 %v1925
  %2588 = vmatpush1.bf16.msra.mxu0 %v1924
  %2589 = vmatprep.subr.bf16.mxu0 %v1932
  %2590 = vmatpush1.bf16.msra.mxu0 %v1931
  %2591 = vmatprep.subr.bf16.mxu0 %v1939
  %2592 = vmatpush1.bf16.msra.mxu0 %v1938
  %2593 = vmatprep.subr.bf16.mxu0 %v1946
  %2594 = vmatpush1.bf16.msra.mxu0 %v1945
  %2595 = vmatprep.subr.bf16.mxu0 %v1953
  %2596 = vmatpush1.bf16.msra.mxu0 %v1952
  %2597 = vmatprep.subr.bf16.mxu0 %v1960
  %2598 = vmatpush1.bf16.msra.mxu0 %v1959
  %2599 = vmatprep.mubr.bf16.mxu0 %v499
  %2600 = vmatmul.mubr.bf16.gmra.mrb[0].mxu0 %v498
  %v2601 = vpop.f32.mrb[0].mxu0
  %v2602 = vadd.f32 %v2561, %v2601
  %v2603 = vpop.f32.mrb[0].mxu0
  %v2604 = vadd.f32 %v2563, %v2603
  %v2605 = vpop.f32.mrb[0].mxu0
  %v2606 = vpop.f32.mrb[0].mxu0
  %2607 = vdwg.mxu0
  %2608 = vmatprep.subr.bf16.mxu0 %v1967
  %2609 = vmatpush1.bf16.msra.mxu0 %v1966
  %2610 = vmatprep.subr.bf16.mxu0 %v1974
  %2611 = vmatpush1.bf16.msra.mxu0 %v1973
  %2612 = vmatprep.subr.bf16.mxu0 %v1981
  %2613 = vmatpush1.bf16.msra.mxu0 %v1980
  %2614 = vmatprep.subr.bf16.mxu0 %v1988
  %2615 = vmatpush1.bf16.msra.mxu0 %v1987
  %2616 = vmatprep.subr.bf16.mxu0 %v1995
  %2617 = vmatpush1.bf16.msra.mxu0 %v1994
  %2618 = vmatprep.subr.bf16.mxu0 %v2002
  %2619 = vmatpush1.bf16.msra.mxu0 %v2001
  %2620 = vmatprep.subr.bf16.mxu0 %v2009
  %2621 = vmatpush1.bf16.msra.mxu0 %v2008
  %2622 = vmatprep.subr.bf16.mxu0 %v2016
  %2623 = vmatpush1.bf16.msra.mxu0 %v2015
  %2624 = vmatprep.subr.bf16.mxu0 %v2023
  %2625 = vmatpush1.bf16.msra.mxu0 %v2022
  %2626 = vmatprep.subr.bf16.mxu0 %v2030
  %2627 = vmatpush1.bf16.msra.mxu0 %v2029
  %2628 = vmatprep.subr.bf16.mxu0 %v2037
  %2629 = vmatpush1.bf16.msra.mxu0 %v2036
  %2630 = vmatprep.subr.bf16.mxu0 %v2044
  %2631 = vmatpush1.bf16.msra.mxu0 %v2043
  %2632 = vmatprep.subr.bf16.mxu0 %v2051
  %2633 = vmatpush1.bf16.msra.mxu0 %v2050
  %2634 = vmatprep.subr.bf16.mxu0 %v2058
  %2635 = vmatpush1.bf16.msra.mxu0 %v2057
  %2636 = vmatprep.subr.bf16.mxu0 %v2065
  %2637 = vmatpush1.bf16.msra.mxu0 %v2064
  %2638 = vmatprep.subr.bf16.mxu0 %v2072
  %2639 = vmatpush1.bf16.msra.mxu0 %v2071
  %2640 = vmatprep.mubr.bf16.mxu0 %v501
  %2641 = vmatmul.mubr.bf16.gmra.mrb[0].mxu0 %v500
  %v2642 = vpop.f32.mrb[0].mxu0
  %v2643 = vadd.f32 %v2602, %v2642
  %v2644 = vpop.f32.mrb[0].mxu0
  %v2645 = vadd.f32 %v2604, %v2644
  %v2646 = vpop.f32.mrb[0].mxu0
  %v2647 = vpop.f32.mrb[0].mxu0
  %2648 = vdwg.mxu0
  %2649 = vmatprep.subr.bf16.mxu0 %v2079
  %2650 = vmatpush1.bf16.msra.mxu0 %v2078
  %2651 = vmatprep.subr.bf16.mxu0 %v2086
  %2652 = vmatpush1.bf16.msra.mxu0 %v2085
  %2653 = vmatprep.subr.bf16.mxu0 %v2093
  %2654 = vmatpush1.bf16.msra.mxu0 %v2092
  %2655 = vmatprep.subr.bf16.mxu0 %v2100
  %2656 = vmatpush1.bf16.msra.mxu0 %v2099
  %2657 = vmatprep.subr.bf16.mxu0 %v2107
  %2658 = vmatpush1.bf16.msra.mxu0 %v2106
  %2659 = vmatprep.subr.bf16.mxu0 %v2114
  %2660 = vmatpush1.bf16.msra.mxu0 %v2113
  %2661 = vmatprep.subr.bf16.mxu0 %v2121
  %2662 = vmatpush1.bf16.msra.mxu0 %v2120
  %2663 = vmatprep.subr.bf16.mxu0 %v2128
  %2664 = vmatpush1.bf16.msra.mxu0 %v2127
  %2665 = vmatprep.subr.bf16.mxu0 0
  %2666 = vmatpush1.bf16.msra.mxu0 0
  %2667 = vmatprep.subr.bf16.mxu0 0
  %2668 = vmatpush1.bf16.msra.mxu0 0
  %2669 = vmatprep.subr.bf16.mxu0 0
  %2670 = vmatpush1.bf16.msra.mxu0 0
  %2671 = vmatprep.subr.bf16.mxu0 0
  %2672 = vmatpush1.bf16.msra.mxu0 0
  %2673 = vmatprep.subr.bf16.mxu0 0
  %2674 = vmatpush1.bf16.msra.mxu0 0
  %2675 = vmatprep.subr.bf16.mxu0 0
  %2676 = vmatpush1.bf16.msra.mxu0 0
  %2677 = vmatprep.subr.bf16.mxu0 0
  %2678 = vmatpush1.bf16.msra.mxu0 0
  %2679 = vmatprep.subr.bf16.mxu0 0
  %2680 = vmatpush1.bf16.msra.mxu0 0
  %2681 = vmatprep.mubr.bf16.mxu0 0
  %2682 = vmatmul.mubr.bf16.gmra.mrb[0].mxu0 %v502
  %v2683 = vpop.f32.mrb[0].mxu0
  %v2684 = vadd.f32 %v2643, %v2683
  %v2685 = vpop.f32.mrb[0].mxu0
  %v2686 = vadd.f32 %v2645, %v2685
  %v2687 = vpop.f32.mrb[0].mxu0
  %v2688 = vpop.f32.mrb[0].mxu0
  %2689 = vdwg.mxu0
  %2690 = vmatprep.subr.bf16.mxu0 %v1745
  %2691 = vmatpush1.bf16.msra.mxu0 %v1744
  %2692 = vmatprep.subr.bf16.mxu0 %v1752
  %2693 = vmatpush1.bf16.msra.mxu0 %v1751
  %2694 = vmatprep.subr.bf16.mxu0 %v1759
  %2695 = vmatpush1.bf16.msra.mxu0 %v1758
  %2696 = vmatprep.subr.bf16.mxu0 %v1766
  %2697 = vmatpush1.bf16.msra.mxu0 %v1765
  %2698 = vmatprep.subr.bf16.mxu0 %v1773
  %2699 = vmatpush1.bf16.msra.mxu0 %v1772
  %2700 = vmatprep.subr.bf16.mxu0 %v1780
  %2701 = vmatpush1.bf16.msra.mxu0 %v1779
  %2702 = vmatprep.subr.bf16.mxu0 %v1787
  %2703 = vmatpush1.bf16.msra.mxu0 %v1786
  %2704 = vmatprep.subr.bf16.mxu0 %v1794
  %2705 = vmatpush1.bf16.msra.mxu0 %v1793
  %2706 = vmatprep.subr.bf16.mxu0 %v1801
  %2707 = vmatpush1.bf16.msra.mxu0 %v1800
  %2708 = vmatprep.subr.bf16.mxu0 %v1808
  %2709 = vmatpush1.bf16.msra.mxu0 %v1807
  %2710 = vmatprep.subr.bf16.mxu0 %v1815
  %2711 = vmatpush1.bf16.msra.mxu0 %v1814
  %2712 = vmatprep.subr.bf16.mxu0 %v1822
  %2713 = vmatpush1.bf16.msra.mxu0 %v1821
  %2714 = vmatprep.subr.bf16.mxu0 %v1829
  %2715 = vmatpush1.bf16.msra.mxu0 %v1828
  %2716 = vmatprep.subr.bf16.mxu0 %v1836
  %2717 = vmatpush1.bf16.msra.mxu0 %v1835
  %2718 = vmatprep.subr.bf16.mxu0 %v1843
  %2719 = vmatpush1.bf16.msra.mxu0 %v1842
  %2720 = vmatprep.subr.bf16.mxu0 %v1850
  %2721 = vmatpush1.bf16.msra.mxu0 %v1849
  %2722 = vmatprep.mubr.bf16.mxu0 %v497
  %2723 = vmatmul.mubr.bf16.gmra.mrb[0].mxu0 %v496
  %v2724 = vpop.f32.mrb[0].mxu0
  %v2725 = vadd.f32 0.0, %v2724
  %v2726 = vpop.f32.mrb[0].mxu0
  %v2727 = vadd.f32 0.0, %v2726
  %v2728 = vpop.f32.mrb[0].mxu0
  %v2729 = vpop.f32.mrb[0].mxu0
  %2730 = vdwg.mxu0
  %2731 = vmatprep.subr.bf16.mxu0 %v1857
  %2732 = vmatpush1.bf16.msra.mxu0 %v1856
  %2733 = vmatprep.subr.bf16.mxu0 %v1864
  %2734 = vmatpush1.bf16.msra.mxu0 %v1863
  %2735 = vmatprep.subr.bf16.mxu0 %v1871
  %2736 = vmatpush1.bf16.msra.mxu0 %v1870
  %2737 = vmatprep.subr.bf16.mxu0 %v1878
  %2738 = vmatpush1.bf16.msra.mxu0 %v1877
  %2739 = vmatprep.subr.bf16.mxu0 %v1885
  %2740 = vmatpush1.bf16.msra.mxu0 %v1884
  %2741 = vmatprep.subr.bf16.mxu0 %v1892
  %2742 = vmatpush1.bf16.msra.mxu0 %v1891
  %2743 = vmatprep.subr.bf16.mxu0 %v1899
  %2744 = vmatpush1.bf16.msra.mxu0 %v1898
  %2745 = vmatprep.subr.bf16.mxu0 %v1906
  %2746 = vmatpush1.bf16.msra.mxu0 %v1905
  %2747 = vmatprep.subr.bf16.mxu0 %v1913
  %2748 = vmatpush1.bf16.msra.mxu0 %v1912
  %2749 = vmatprep.subr.bf16.mxu0 %v1920
  %2750 = vmatpush1.bf16.msra.mxu0 %v1919
  %2751 = vmatprep.subr.bf16.mxu0 %v1927
  %2752 = vmatpush1.bf16.msra.mxu0 %v1926
  %2753 = vmatprep.subr.bf16.mxu0 %v1934
  %2754 = vmatpush1.bf16.msra.mxu0 %v1933
  %2755 = vmatprep.subr.bf16.mxu0 %v1941
  %2756 = vmatpush1.bf16.msra.mxu0 %v1940
  %2757 = vmatprep.subr.bf16.mxu0 %v1948
  %2758 = vmatpush1.bf16.msra.mxu0 %v1947
  %2759 = vmatprep.subr.bf16.mxu0 %v1955
  %2760 = vmatpush1.bf16.msra.mxu0 %v1954
  %2761 = vmatprep.subr.bf16.mxu0 %v1962
  %2762 = vmatpush1.bf16.msra.mxu0 %v1961
  %2763 = vmatprep.mubr.bf16.mxu0 %v499
  %2764 = vmatmul.mubr.bf16.gmra.mrb[0].mxu0 %v498
  %v2765 = vpop.f32.mrb[0].mxu0
  %v2766 = vadd.f32 %v2725, %v2765
  %v2767 = vpop.f32.mrb[0].mxu0
  %v2768 = vadd.f32 %v2727, %v2767
  %v2769 = vpop.f32.mrb[0].mxu0
  %v2770 = vpop.f32.mrb[0].mxu0
  %2771 = vdwg.mxu0
  %2772 = vmatprep.subr.bf16.mxu0 %v1969
  %2773 = vmatpush1.bf16.msra.mxu0 %v1968
  %2774 = vmatprep.subr.bf16.mxu0 %v1976
  %2775 = vmatpush1.bf16.msra.mxu0 %v1975
  %2776 = vmatprep.subr.bf16.mxu0 %v1983
  %2777 = vmatpush1.bf16.msra.mxu0 %v1982
  %2778 = vmatprep.subr.bf16.mxu0 %v1990
  %2779 = vmatpush1.bf16.msra.mxu0 %v1989
  %2780 = vmatprep.subr.bf16.mxu0 %v1997
  %2781 = vmatpush1.bf16.msra.mxu0 %v1996
  %2782 = vmatprep.subr.bf16.mxu0 %v2004
  %2783 = vmatpush1.bf16.msra.mxu0 %v2003
  %2784 = vmatprep.subr.bf16.mxu0 %v2011
  %2785 = vmatpush1.bf16.msra.mxu0 %v2010
  %2786 = vmatprep.subr.bf16.mxu0 %v2018
  %2787 = vmatpush1.bf16.msra.mxu0 %v2017
  %2788 = vmatprep.subr.bf16.mxu0 %v2025
  %2789 = vmatpush1.bf16.msra.mxu0 %v2024
  %2790 = vmatprep.subr.bf16.mxu0 %v2032
  %2791 = vmatpush1.bf16.msra.mxu0 %v2031
  %2792 = vmatprep.subr.bf16.mxu0 %v2039
  %2793 = vmatpush1.bf16.msra.mxu0 %v2038
  %2794 = vmatprep.subr.bf16.mxu0 %v2046
  %2795 = vmatpush1.bf16.msra.mxu0 %v2045
  %2796 = vmatprep.subr.bf16.mxu0 %v2053
  %2797 = vmatpush1.bf16.msra.mxu0 %v2052
  %2798 = vmatprep.subr.bf16.mxu0 %v2060
  %2799 = vmatpush1.bf16.msra.mxu0 %v2059
  %2800 = vmatprep.subr.bf16.mxu0 %v2067
  %2801 = vmatpush1.bf16.msra.mxu0 %v2066
  %2802 = vmatprep.subr.bf16.mxu0 %v2074
  %2803 = vmatpush1.bf16.msra.mxu0 %v2073
  %2804 = vmatprep.mubr.bf16.mxu0 %v501
  %2805 = vmatmul.mubr.bf16.gmra.mrb[0].mxu0 %v500
  %v2806 = vpop.f32.mrb[0].mxu0
  %v2807 = vadd.f32 %v2766, %v2806
  %v2808 = vpop.f32.mrb[0].mxu0
  %v2809 = vadd.f32 %v2768, %v2808
  %v2810 = vpop.f32.mrb[0].mxu0
  %v2811 = vpop.f32.mrb[0].mxu0
  %2812 = vdwg.mxu0
  %2813 = vmatprep.subr.bf16.mxu0 %v2081
  %2814 = vmatpush1.bf16.msra.mxu0 %v2080
  %2815 = vmatprep.subr.bf16.mxu0 %v2088
  %2816 = vmatpush1.bf16.msra.mxu0 %v2087
  %2817 = vmatprep.subr.bf16.mxu0 %v2095
  %2818 = vmatpush1.bf16.msra.mxu0 %v2094
  %2819 = vmatprep.subr.bf16.mxu0 %v2102
  %2820 = vmatpush1.bf16.msra.mxu0 %v2101
  %2821 = vmatprep.subr.bf16.mxu0 %v2109
  %2822 = vmatpush1.bf16.msra.mxu0 %v2108
  %2823 = vmatprep.subr.bf16.mxu0 %v2116
  %2824 = vmatpush1.bf16.msra.mxu0 %v2115
  %2825 = vmatprep.subr.bf16.mxu0 %v2123
  %2826 = vmatpush1.bf16.msra.mxu0 %v2122
  %2827 = vmatprep.subr.bf16.mxu0 %v2130
  %2828 = vmatpush1.bf16.msra.mxu0 %v2129
  %2829 = vmatprep.subr.bf16.mxu0 0
  %2830 = vmatpush1.bf16.msra.mxu0 0
  %2831 = vmatprep.subr.bf16.mxu0 0
  %2832 = vmatpush1.bf16.msra.mxu0 0
  %2833 = vmatprep.subr.bf16.mxu0 0
  %2834 = vmatpush1.bf16.msra.mxu0 0
  %2835 = vmatprep.subr.bf16.mxu0 0
  %2836 = vmatpush1.bf16.msra.mxu0 0
  %2837 = vmatprep.subr.bf16.mxu0 0
  %2838 = vmatpush1.bf16.msra.mxu0 0
  %2839 = vmatprep.subr.bf16.mxu0 0
  %2840 = vmatpush1.bf16.msra.mxu0 0
  %2841 = vmatprep.subr.bf16.mxu0 0
  %2842 = vmatpush1.bf16.msra.mxu0 0
  %2843 = vmatprep.subr.bf16.mxu0 0
  %2844 = vmatpush1.bf16.msra.mxu0 0
  %2845 = vmatprep.mubr.bf16.mxu0 0
  %2846 = vmatmul.mubr.bf16.gmra.mrb[0].mxu0 %v502
  %v2847 = vpop.f32.mrb[0].mxu0
  %v2848 = vadd.f32 %v2807, %v2847
  %v2849 = vpop.f32.mrb[0].mxu0
  %v2850 = vadd.f32 %v2809, %v2849
  %v2851 = vpop.f32.mrb[0].mxu0
  %v2852 = vpop.f32.mrb[0].mxu0
  %2853 = vdwg.mxu0
  %2854 = vmatprep.subr.bf16.mxu0 %v1747
  %2855 = vmatpush1.bf16.msra.mxu0 %v1746
  %2856 = vmatprep.subr.bf16.mxu0 %v1754
  %2857 = vmatpush1.bf16.msra.mxu0 %v1753
  %2858 = vmatprep.subr.bf16.mxu0 %v1761
  %2859 = vmatpush1.bf16.msra.mxu0 %v1760
  %2860 = vmatprep.subr.bf16.mxu0 %v1768
  %2861 = vmatpush1.bf16.msra.mxu0 %v1767
  %2862 = vmatprep.subr.bf16.mxu0 %v1775
  %2863 = vmatpush1.bf16.msra.mxu0 %v1774
  %2864 = vmatprep.subr.bf16.mxu0 %v1782
  %2865 = vmatpush1.bf16.msra.mxu0 %v1781
  %2866 = vmatprep.subr.bf16.mxu0 %v1789
  %2867 = vmatpush1.bf16.msra.mxu0 %v1788
  %2868 = vmatprep.subr.bf16.mxu0 %v1796
  %2869 = vmatpush1.bf16.msra.mxu0 %v1795
  %2870 = vmatprep.subr.bf16.mxu0 %v1803
  %2871 = vmatpush1.bf16.msra.mxu0 %v1802
  %2872 = vmatprep.subr.bf16.mxu0 %v1810
  %2873 = vmatpush1.bf16.msra.mxu0 %v1809
  %2874 = vmatprep.subr.bf16.mxu0 %v1817
  %2875 = vmatpush1.bf16.msra.mxu0 %v1816
  %2876 = vmatprep.subr.bf16.mxu0 %v1824
  %2877 = vmatpush1.bf16.msra.mxu0 %v1823
  %2878 = vmatprep.subr.bf16.mxu0 %v1831
  %2879 = vmatpush1.bf16.msra.mxu0 %v1830
  %2880 = vmatprep.subr.bf16.mxu0 %v1838
  %2881 = vmatpush1.bf16.msra.mxu0 %v1837
  %2882 = vmatprep.subr.bf16.mxu0 %v1845
  %2883 = vmatpush1.bf16.msra.mxu0 %v1844
  %2884 = vmatprep.subr.bf16.mxu0 %v1852
  %2885 = vmatpush1.bf16.msra.mxu0 %v1851
  %2886 = vmatprep.mubr.bf16.mxu0 %v497
  %2887 = vmatmul.mubr.bf16.gmra.mrb[0].mxu0 %v496
  %v2888 = vpop.f32.mrb[0].mxu0
  %v2889 = vadd.f32 0.0, %v2888
  %v2890 = vpop.f32.mrb[0].mxu0
  %v2891 = vadd.f32 0.0, %v2890
  %v2892 = vpop.f32.mrb[0].mxu0
  %v2893 = vpop.f32.mrb[0].mxu0
  %2894 = vdwg.mxu0
  %2895 = vmatprep.subr.bf16.mxu0 %v1859
  %2896 = vmatpush1.bf16.msra.mxu0 %v1858
  %2897 = vmatprep.subr.bf16.mxu0 %v1866
  %2898 = vmatpush1.bf16.msra.mxu0 %v1865
  %2899 = vmatprep.subr.bf16.mxu0 %v1873
  %2900 = vmatpush1.bf16.msra.mxu0 %v1872
  %2901 = vmatprep.subr.bf16.mxu0 %v1880
  %2902 = vmatpush1.bf16.msra.mxu0 %v1879
  %2903 = vmatprep.subr.bf16.mxu0 %v1887
  %2904 = vmatpush1.bf16.msra.mxu0 %v1886
  %2905 = vmatprep.subr.bf16.mxu0 %v1894
  %2906 = vmatpush1.bf16.msra.mxu0 %v1893
  %2907 = vmatprep.subr.bf16.mxu0 %v1901
  %2908 = vmatpush1.bf16.msra.mxu0 %v1900
  %2909 = vmatprep.subr.bf16.mxu0 %v1908
  %2910 = vmatpush1.bf16.msra.mxu0 %v1907
  %2911 = vmatprep.subr.bf16.mxu0 %v1915
  %2912 = vmatpush1.bf16.msra.mxu0 %v1914
  %2913 = vmatprep.subr.bf16.mxu0 %v1922
  %2914 = vmatpush1.bf16.msra.mxu0 %v1921
  %2915 = vmatprep.subr.bf16.mxu0 %v1929
  %2916 = vmatpush1.bf16.msra.mxu0 %v1928
  %2917 = vmatprep.subr.bf16.mxu0 %v1936
  %2918 = vmatpush1.bf16.msra.mxu0 %v1935
  %2919 = vmatprep.subr.bf16.mxu0 %v1943
  %2920 = vmatpush1.bf16.msra.mxu0 %v1942
  %2921 = vmatprep.subr.bf16.mxu0 %v1950
  %2922 = vmatpush1.bf16.msra.mxu0 %v1949
  %2923 = vmatprep.subr.bf16.mxu0 %v1957
  %2924 = vmatpush1.bf16.msra.mxu0 %v1956
  %2925 = vmatprep.subr.bf16.mxu0 %v1964
  %2926 = vmatpush1.bf16.msra.mxu0 %v1963
  %2927 = vmatprep.mubr.bf16.mxu0 %v499
  %2928 = vmatmul.mubr.bf16.gmra.mrb[0].mxu0 %v498
  %v2929 = vpop.f32.mrb[0].mxu0
  %v2930 = vadd.f32 %v2889, %v2929
  %v2931 = vpop.f32.mrb[0].mxu0
  %v2932 = vadd.f32 %v2891, %v2931
  %v2933 = vpop.f32.mrb[0].mxu0
  %v2934 = vpop.f32.mrb[0].mxu0
  %2935 = vdwg.mxu0
  %2936 = vmatprep.subr.bf16.mxu0 %v1971
  %2937 = vmatpush1.bf16.msra.mxu0 %v1970
  %2938 = vmatprep.subr.bf16.mxu0 %v1978
  %2939 = vmatpush1.bf16.msra.mxu0 %v1977
  %2940 = vmatprep.subr.bf16.mxu0 %v1985
  %2941 = vmatpush1.bf16.msra.mxu0 %v1984
  %2942 = vmatprep.subr.bf16.mxu0 %v1992
  %2943 = vmatpush1.bf16.msra.mxu0 %v1991
  %2944 = vmatprep.subr.bf16.mxu0 %v1999
  %2945 = vmatpush1.bf16.msra.mxu0 %v1998
  %2946 = vmatprep.subr.bf16.mxu0 %v2006
  %2947 = vmatpush1.bf16.msra.mxu0 %v2005
  %2948 = vmatprep.subr.bf16.mxu0 %v2013
  %2949 = vmatpush1.bf16.msra.mxu0 %v2012
  %2950 = vmatprep.subr.bf16.mxu0 %v2020
  %2951 = vmatpush1.bf16.msra.mxu0 %v2019
  %2952 = vmatprep.subr.bf16.mxu0 %v2027
  %2953 = vmatpush1.bf16.msra.mxu0 %v2026
  %2954 = vmatprep.subr.bf16.mxu0 %v2034
  %2955 = vmatpush1.bf16.msra.mxu0 %v2033
  %2956 = vmatprep.subr.bf16.mxu0 %v2041
  %2957 = vmatpush1.bf16.msra.mxu0 %v2040
  %2958 = vmatprep.subr.bf16.mxu0 %v2048
  %2959 = vmatpush1.bf16.msra.mxu0 %v2047
  %2960 = vmatprep.subr.bf16.mxu0 %v2055
  %2961 = vmatpush1.bf16.msra.mxu0 %v2054
  %2962 = vmatprep.subr.bf16.mxu0 %v2062
  %2963 = vmatpush1.bf16.msra.mxu0 %v2061
  %2964 = vmatprep.subr.bf16.mxu0 %v2069
  %2965 = vmatpush1.bf16.msra.mxu0 %v2068
  %2966 = vmatprep.subr.bf16.mxu0 %v2076
  %2967 = vmatpush1.bf16.msra.mxu0 %v2075
  %2968 = vmatprep.mubr.bf16.mxu0 %v501
  %2969 = vmatmul.mubr.bf16.gmra.mrb[0].mxu0 %v500
  %v2970 = vpop.f32.mrb[0].mxu0
  %v2971 = vadd.f32 %v2930, %v2970
  %v2972 = vpop.f32.mrb[0].mxu0
  %v2973 = vadd.f32 %v2932, %v2972
  %v2974 = vpop.f32.mrb[0].mxu0
  %v2975 = vpop.f32.mrb[0].mxu0
  %2976 = vdwg.mxu0
  %2977 = vmatprep.subr.bf16.mxu0 %v2083
  %2978 = vmatpush1.bf16.msra.mxu0 %v2082
  %2979 = vmatprep.subr.bf16.mxu0 %v2090
  %2980 = vmatpush1.bf16.msra.mxu0 %v2089
  %2981 = vmatprep.subr.bf16.mxu0 %v2097
  %2982 = vmatpush1.bf16.msra.mxu0 %v2096
  %2983 = vmatprep.subr.bf16.mxu0 %v2104
  %2984 = vmatpush1.bf16.msra.mxu0 %v2103
  %2985 = vmatprep.subr.bf16.mxu0 %v2111
  %2986 = vmatpush1.bf16.msra.mxu0 %v2110
  %2987 = vmatprep.subr.bf16.mxu0 %v2118
  %2988 = vmatpush1.bf16.msra.mxu0 %v2117
  %2989 = vmatprep.subr.bf16.mxu0 %v2125
  %2990 = vmatpush1.bf16.msra.mxu0 %v2124
  %2991 = vmatprep.subr.bf16.mxu0 %v2132
  %2992 = vmatpush1.bf16.msra.mxu0 %v2131
  %2993 = vmatprep.subr.bf16.mxu0 0
  %2994 = vmatpush1.bf16.msra.mxu0 0
  %2995 = vmatprep.subr.bf16.mxu0 0
  %2996 = vmatpush1.bf16.msra.mxu0 0
  %2997 = vmatprep.subr.bf16.mxu0 0
  %2998 = vmatpush1.bf16.msra.mxu0 0
  %2999 = vmatprep.subr.bf16.mxu0 0
  %3000 = vmatpush1.bf16.msra.mxu0 0
  %3001 = vmatprep.subr.bf16.mxu0 0
  %3002 = vmatpush1.bf16.msra.mxu0 0
  %3003 = vmatprep.subr.bf16.mxu0 0
  %3004 = vmatpush1.bf16.msra.mxu0 0
  %3005 = vmatprep.subr.bf16.mxu0 0
  %3006 = vmatpush1.bf16.msra.mxu0 0
  %3007 = vmatprep.subr.bf16.mxu0 0
  %3008 = vmatpush1.bf16.msra.mxu0 0
  %3009 = vmatprep.mubr.bf16.mxu0 0
  %3010 = vmatmul.mubr.bf16.gmra.mrb[0].mxu0 %v502
  %v3011 = vpop.f32.mrb[0].mxu0
  %v3012 = vadd.f32 %v2971, %v3011
  %v3013 = vpop.f32.mrb[0].mxu0
  %v3014 = vadd.f32 %v2973, %v3013
  %v3015 = vpop.f32.mrb[0].mxu0
  %v3016 = vpop.f32.mrb[0].mxu0
  %3017 = vdwg.mxu0
  %3018 = vmatprep.subr.bf16.mxu0 0
  %3019 = vmatpush1.bf16.msra.mxu0 %v1748
  %3020 = vmatprep.subr.bf16.mxu0 0
  %3021 = vmatpush1.bf16.msra.mxu0 %v1755
  %3022 = vmatprep.subr.bf16.mxu0 0
  %3023 = vmatpush1.bf16.msra.mxu0 %v1762
  %3024 = vmatprep.subr.bf16.mxu0 0
  %3025 = vmatpush1.bf16.msra.mxu0 %v1769
  %3026 = vmatprep.subr.bf16.mxu0 0
  %3027 = vmatpush1.bf16.msra.mxu0 %v1776
  %3028 = vmatprep.subr.bf16.mxu0 0
  %3029 = vmatpush1.bf16.msra.mxu0 %v1783
  %3030 = vmatprep.subr.bf16.mxu0 0
  %3031 = vmatpush1.bf16.msra.mxu0 %v1790
  %3032 = vmatprep.subr.bf16.mxu0 0
  %3033 = vmatpush1.bf16.msra.mxu0 %v1797
  %3034 = vmatprep.subr.bf16.mxu0 0
  %3035 = vmatpush1.bf16.msra.mxu0 %v1804
  %3036 = vmatprep.subr.bf16.mxu0 0
  %3037 = vmatpush1.bf16.msra.mxu0 %v1811
  %3038 = vmatprep.subr.bf16.mxu0 0
  %3039 = vmatpush1.bf16.msra.mxu0 %v1818
  %3040 = vmatprep.subr.bf16.mxu0 0
  %3041 = vmatpush1.bf16.msra.mxu0 %v1825
  %3042 = vmatprep.subr.bf16.mxu0 0
  %3043 = vmatpush1.bf16.msra.mxu0 %v1832
  %3044 = vmatprep.subr.bf16.mxu0 0
  %3045 = vmatpush1.bf16.msra.mxu0 %v1839
  %3046 = vmatprep.subr.bf16.mxu0 0
  %3047 = vmatpush1.bf16.msra.mxu0 %v1846
  %3048 = vmatprep.subr.bf16.mxu0 0
  %3049 = vmatpush1.bf16.msra.mxu0 %v1853
  %3050 = vmatprep.mubr.bf16.mxu0 %v497
  %3051 = vmatmul.mubr.bf16.gmra.mrb[0].mxu0 %v496
  %v3052 = vpop.f32.mrb[0].mxu0
  %v3053 = vadd.f32 0.0, %v3052
  %v3054 = vpop.f32.mrb[0].mxu0
  %v3055 = vpop.f32.mrb[0].mxu0
  %v3056 = vpop.f32.mrb[0].mxu0
  %3057 = vdwg.mxu0
  %3058 = vmatprep.subr.bf16.mxu0 0
  %3059 = vmatpush1.bf16.msra.mxu0 %v1860
  %3060 = vmatprep.subr.bf16.mxu0 0
  %3061 = vmatpush1.bf16.msra.mxu0 %v1867
  %3062 = vmatprep.subr.bf16.mxu0 0
  %3063 = vmatpush1.bf16.msra.mxu0 %v1874
  %3064 = vmatprep.subr.bf16.mxu0 0
  %3065 = vmatpush1.bf16.msra.mxu0 %v1881
  %3066 = vmatprep.subr.bf16.mxu0 0
  %3067 = vmatpush1.bf16.msra.mxu0 %v1888
  %3068 = vmatprep.subr.bf16.mxu0 0
  %3069 = vmatpush1.bf16.msra.mxu0 %v1895
  %3070 = vmatprep.subr.bf16.mxu0 0
  %3071 = vmatpush1.bf16.msra.mxu0 %v1902
  %3072 = vmatprep.subr.bf16.mxu0 0
  %3073 = vmatpush1.bf16.msra.mxu0 %v1909
  %3074 = vmatprep.subr.bf16.mxu0 0
  %3075 = vmatpush1.bf16.msra.mxu0 %v1916
  %3076 = vmatprep.subr.bf16.mxu0 0
  %3077 = vmatpush1.bf16.msra.mxu0 %v1923
  %3078 = vmatprep.subr.bf16.mxu0 0
  %3079 = vmatpush1.bf16.msra.mxu0 %v1930
  %3080 = vmatprep.subr.bf16.mxu0 0
  %3081 = vmatpush1.bf16.msra.mxu0 %v1937
  %3082 = vmatprep.subr.bf16.mxu0 0
  %3083 = vmatpush1.bf16.msra.mxu0 %v1944
  %3084 = vmatprep.subr.bf16.mxu0 0
  %3085 = vmatpush1.bf16.msra.mxu0 %v1951
  %3086 = vmatprep.subr.bf16.mxu0 0
  %3087 = vmatpush1.bf16.msra.mxu0 %v1958
  %3088 = vmatprep.subr.bf16.mxu0 0
  %3089 = vmatpush1.bf16.msra.mxu0 %v1965
  %3090 = vmatprep.mubr.bf16.mxu0 %v499
  %3091 = vmatmul.mubr.bf16.gmra.mrb[0].mxu0 %v498
  %v3092 = vpop.f32.mrb[0].mxu0
  %v3093 = vadd.f32 %v3053, %v3092
  %v3094 = vpop.f32.mrb[0].mxu0
  %v3095 = vpop.f32.mrb[0].mxu0
  %v3096 = vpop.f32.mrb[0].mxu0
  %3097 = vdwg.mxu0
  %3098 = vmatprep.subr.bf16.mxu0 0
  %3099 = vmatpush1.bf16.msra.mxu0 %v1972
  %3100 = vmatprep.subr.bf16.mxu0 0
  %3101 = vmatpush1.bf16.msra.mxu0 %v1979
  %3102 = vmatprep.subr.bf16.mxu0 0
  %3103 = vmatpush1.bf16.msra.mxu0 %v1986
  %3104 = vmatprep.subr.bf16.mxu0 0
  %3105 = vmatpush1.bf16.msra.mxu0 %v1993
  %3106 = vmatprep.subr.bf16.mxu0 0
  %3107 = vmatpush1.bf16.msra.mxu0 %v2000
  %3108 = vmatprep.subr.bf16.mxu0 0
  %3109 = vmatpush1.bf16.msra.mxu0 %v2007
  %3110 = vmatprep.subr.bf16.mxu0 0
  %3111 = vmatpush1.bf16.msra.mxu0 %v2014
  %3112 = vmatprep.subr.bf16.mxu0 0
  %3113 = vmatpush1.bf16.msra.mxu0 %v2021
  %3114 = vmatprep.subr.bf16.mxu0 0
  %3115 = vmatpush1.bf16.msra.mxu0 %v2028
  %3116 = vmatprep.subr.bf16.mxu0 0
  %3117 = vmatpush1.bf16.msra.mxu0 %v2035
  %3118 = vmatprep.subr.bf16.mxu0 0
  %3119 = vmatpush1.bf16.msra.mxu0 %v2042
  %3120 = vmatprep.subr.bf16.mxu0 0
  %3121 = vmatpush1.bf16.msra.mxu0 %v2049
  %3122 = vmatprep.subr.bf16.mxu0 0
  %3123 = vmatpush1.bf16.msra.mxu0 %v2056
  %3124 = vmatprep.subr.bf16.mxu0 0
  %3125 = vmatpush1.bf16.msra.mxu0 %v2063
  %3126 = vmatprep.subr.bf16.mxu0 0
  %3127 = vmatpush1.bf16.msra.mxu0 %v2070
  %3128 = vmatprep.subr.bf16.mxu0 0
  %3129 = vmatpush1.bf16.msra.mxu0 %v2077
  %3130 = vmatprep.mubr.bf16.mxu0 %v501
  %3131 = vmatmul.mubr.bf16.gmra.mrb[0].mxu0 %v500
  %v3132 = vpop.f32.mrb[0].mxu0
  %v3133 = vadd.f32 %v3093, %v3132
  %v3134 = vpop.f32.mrb[0].mxu0
  %v3135 = vpop.f32.mrb[0].mxu0
  %v3136 = vpop.f32.mrb[0].mxu0
  %3137 = vdwg.mxu0
  %3138 = vmatprep.subr.bf16.mxu0 0
  %3139 = vmatpush1.bf16.msra.mxu0 %v2084
  %3140 = vmatprep.subr.bf16.mxu0 0
  %3141 = vmatpush1.bf16.msra.mxu0 %v2091
  %3142 = vmatprep.subr.bf16.mxu0 0
  %3143 = vmatpush1.bf16.msra.mxu0 %v2098
  %3144 = vmatprep.subr.bf16.mxu0 0
  %3145 = vmatpush1.bf16.msra.mxu0 %v2105
  %3146 = vmatprep.subr.bf16.mxu0 0
  %3147 = vmatpush1.bf16.msra.mxu0 %v2112
  %3148 = vmatprep.subr.bf16.mxu0 0
  %3149 = vmatpush1.bf16.msra.mxu0 %v2119
  %3150 = vmatprep.subr.bf16.mxu0 0
  %3151 = vmatpush1.bf16.msra.mxu0 %v2126
  %3152 = vmatprep.subr.bf16.mxu0 0
  %3153 = vmatpush1.bf16.msra.mxu0 %v2133
  %3154 = vmatprep.subr.bf16.mxu0 0
  %3155 = vmatpush1.bf16.msra.mxu0 0
  %3156 = vmatprep.subr.bf16.mxu0 0
  %3157 = vmatpush1.bf16.msra.mxu0 0
  %3158 = vmatprep.subr.bf16.mxu0 0
  %3159 = vmatpush1.bf16.msra.mxu0 0
  %3160 = vmatprep.subr.bf16.mxu0 0
  %3161 = vmatpush1.bf16.msra.mxu0 0
  %3162 = vmatprep.subr.bf16.mxu0 0
  %3163 = vmatpush1.bf16.msra.mxu0 0
  %3164 = vmatprep.subr.bf16.mxu0 0
  %3165 = vmatpush1.bf16.msra.mxu0 0
  %3166 = vmatprep.subr.bf16.mxu0 0
  %3167 = vmatpush1.bf16.msra.mxu0 0
  %3168 = vmatprep.subr.bf16.mxu0 0
  %3169 = vmatpush1.bf16.msra.mxu0 0
  %3170 = vmatprep.mubr.bf16.mxu0 0
  %3171 = vmatmul.mubr.bf16.gmra.mrb[0].mxu0 %v502
  %v3172 = vpop.f32.mrb[0].mxu0
  %v3173 = vadd.f32 %v3133, %v3172
  %v3174 = vpop.f32.mrb[0].mxu0
  %v3175 = vpop.f32.mrb[0].mxu0
  %v3176 = vpop.f32.mrb[0].mxu0
  %3177 = vdwg.mxu0
  %v3178 = vadd.f32 %v26, %v2684
  %v3179 = vadd.f32 %v27, %v2686
  %v3180 = vadd.f32 %v28, %v2848
  %v3181 = vadd.f32 %v29, %v2850
  %v3182 = vadd.f32 %v30, %v3012
  %v3183 = vadd.f32 %v31, %v3014
  %v3184 = vadd.f32 %v32, %v3173
  %3185 = vst [vmem:[%s3] sm:$0xff] %v3178
  %3186 = vst [vmem:[%s3 + $0x8] sm:$0xff] %v3179
  %3187 = vst [vmem:[%s3 + $0x10] sm:$0xff] %v3180
  %3188 = vst [vmem:[%s3 + $0x18] sm:$0xff] %v3181
  %3189 = vst [vmem:[%s3 + $0x20] sm:$0xff] %v3182
  %3190 = vst [vmem:[%s3 + $0x28] sm:$0xff] %v3183
  %3191 = vst [vmem:[%s3 + $0x30] sm:$0xff] %v3184
  // Predicated region
  $region18: #{linear_then_conv_forward.7} parent=0 // pred_check
    %p3192 = pneg %p15
  $region19: #{linear_then_conv_forward.7} parent=0 // pred_check_branch
    %3194 = sbr.rel (%p3192) target = $region21
  $region20: #{linear_then_conv_forward.7} parent=0 // pred_region
    %v3195 = vld [vmem:[%s3] sm:$0xff]
    %v3196 = vld [vmem:[%s3 + $0x8] sm:$0xff]
    %v3197 = vld [vmem:[%s3 + $0x10] sm:$0xff]
    %v3198 = vld [vmem:[%s3 + $0x18] sm:$0xff]
    %v3199 = vld [vmem:[%s3 + $0x20] sm:$0xff]
    %v3200 = vld [vmem:[%s3 + $0x28] sm:$0xff]
    %v3201 = vld [vmem:[%s3 + $0x30] sm:$0xff]
    %v3202 = vld [vmem:[%s2] sm:$0xff]
    %v3204 = vlaneseq
    %v3205 = vshrl.u32 %v3204, 7
    %v3206 = vsub.s32 0, %v3205
    %v3207 = vrot.slane %v3202, %v3206
    %v3208 = vlaneseq
    %v3209 = vshrl.u32 %v3208, 7
    %v3210 = vsub.s32 1, %v3209
    %v3211 = vrot.slane %v3202, %v3210
    %v3212 = vlaneseq
    %v3213 = vshrl.u32 %v3212, 7
    %v3214 = vsub.s32 2, %v3213
    %v3215 = vrot.slane %v3202, %v3214
    %v3216 = vlaneseq
    %v3217 = vshrl.u32 %v3216, 7
    %v3218 = vsub.s32 3, %v3217
    %v3219 = vrot.slane %v3202, %v3218
    %v3220 = vlaneseq
    %v3221 = vshrl.u32 %v3220, 7
    %v3222 = vsub.s32 4, %v3221
    %v3223 = vrot.slane %v3202, %v3222
    %v3224 = vlaneseq
    %v3225 = vshrl.u32 %v3224, 7
    %v3226 = vsub.s32 5, %v3225
    %v3227 = vrot.slane %v3202, %v3226
    %v3228 = vlaneseq
    %v3229 = vshrl.u32 %v3228, 7
    %v3230 = vsub.s32 6, %v3229
    %v3231 = vrot.slane %v3202, %v3230
    %v3239 = vadd.f32 %v3195, %v3207
    %v3240 = vadd.f32 %v3196, %v3211
    %v3241 = vadd.f32 %v3197, %v3215
    %v3242 = vadd.f32 %v3198, %v3219
    %v3243 = vadd.f32 %v3199, %v3223
    %v3244 = vadd.f32 %v3200, %v3227
    %v3245 = vadd.f32 %v3201, %v3231
    %3246 = vst [vmem:[%s3] sm:$0xff] %v3239
    %3247 = vst [vmem:[%s3 + $0x8] sm:$0xff] %v3240
    %3248 = vst [vmem:[%s3 + $0x10] sm:$0xff] %v3241
    %3249 = vst [vmem:[%s3 + $0x18] sm:$0xff] %v3242
    %3250 = vst [vmem:[%s3 + $0x20] sm:$0xff] %v3243
    %3251 = vst [vmem:[%s3 + $0x28] sm:$0xff] %v3244
    %3252 = vst [vmem:[%s3 + $0x30] sm:$0xff] %v3245
  $region21: #{linear_then_conv_forward.7} parent=0 // pred_fallthru
    _
  // Predicated region
  $region22: #{linear_then_conv_forward.7} parent=0 // pred_check
    _
  $region23: #{linear_then_conv_forward.7} parent=0 // pred_check_branch
    %3254 = sbr.rel (0) target = $region25
  $region24: #{linear_then_conv_forward.7} parent=0 // pred_region
    _
  $region25: #{linear_then_conv_forward.7} parent=0 // pred_fallthru
    _
  // Predicated region
  $region26: #{linear_then_conv_forward.7} parent=0 // pred_check
    _
  $region27: #{linear_then_conv_forward.7} parent=0 // pred_check_branch
    %3256 = sbr.rel (0) target = $region29
  $region28: #{linear_then_conv_forward.7} parent=0 // pred_region
    _
  $region29: #{linear_then_conv_forward.7} parent=0 // pred_fallthru
    _

// kernel: linear_then_conv_forward.8
$region0: #{linear_then_conv_forward.8}
  #allocation0 [shape = 'u32[]', space=smem, size = 0x4, offset = 0x4, fixed_abs, tag = 'smem constant byte address 0x4 - core index']
  #allocation1 [shape = 'u32[144,128]{1,0:T(1,128)}', space=vmem, size = 0x12000, scoped, tag = 'internal scratch']
  %s0 = inlined_call_operand.vmem [shape: bf16[1152,128], index: 0, kind: input, shape index: {}]
  %s1 = inlined_call_operand.vmem [shape: bf16[128,128], index: 1, kind: input, shape index: {}]
  %s2 = inlined_call_operand.vmem [shape: f32[1,128], index: 2, kind: input, shape index: {}]
  %s3 = inlined_call_operand.vmem [shape: f32[1152,128], index: 3, kind: output, shape index: {}]
  %s4 = sld [smem:[#allocation0]]
  $region53: #{linear_then_conv_forward.8} parent=0
    _
  %s6 = ssub.s32 1, %s4
  %s7 = scalar_select 0, %s6, %s4
  loop: start=0, step=1, limit=4
  $region2: #{linear_then_conv_forward.8} parent=0 // loop_pre_header
    _
  $region3: #{linear_then_conv_forward.8} parent=0 // loop_header
    %s9 = sphi 0, %s13
    %p10 = scmp.ge.s32.totalorder %s9, 4
    %s16 = sphi 0, %s35
    %s17 = sphi 0, %s31
    %s18 = sphi 0, %s27
    %s19 = sphi 0, %s16
    %s20 = sphi 0, %s17
    %s21 = sphi 0, %s18
    %s22 = sphi 0, %s19
    %s23 = sphi 0, %s20
    %s24 = sphi 0, %s21
    %s40 = sphi 0, %s42
    %s43 = sphi 0, %s40
    %s44 = sphi 0, %s43
    %s60 = sphi 0, %s44
    %s68 = sphi 0, %s70
    %s71 = sphi 0, %s68
    %s72 = sphi 0, %s71
    %s88 = sphi 0, %s72
    %s94 = sphi 0, %s96
    %s97 = sphi 0, %s94
    %s98 = sphi 0, %s97
    %s114 = sphi 0, %s98
    %s122 = sphi 0, %s124
    %s125 = sphi 0, %s122
    %s126 = sphi 0, %s125
    %s142 = sphi 0, %s126
  $region4: #{linear_then_conv_forward.8} parent=0 // loop_header_branch
    %12 = sbr.rel (%p10) target = $region8
  $region5: #{linear_then_conv_forward.8} parent=0 // loop_body
    %s14 = ssub.s32 %s9, 1
    %s15 = ssub.s32 %s9, 2
    %s25 = sadd.s32 1, %s18
    %p26 = scmp.ge.s32.totalorder %s25, 1
    %s27 = scalar_select %p26, 0, %s25
    %s28 = sadd.s32 1, %s17
    %s29 = scalar_select %p26, %s28, %s17
    %p30 = scmp.ge.s32.totalorder %s29, 1
    %s31 = scalar_select %p30, 0, %s29
    %s32 = sadd.s32 1, %s16
    %s33 = scalar_select %p30, %s32, %s16
    %p34 = scmp.ge.s32.totalorder %s33, 2
    %s35 = scalar_select %p34, 0, %s33
    %s36 = ssub.s32 %s16, %s35
    %s37 = ssub.s32 %s18, %s27
    %s38 = sor.u32 %s36, %s37
    %p39 = scmp.eq.s32.totalorder %s38, 0
    %s41 = sadd.s32 %s40, 1
    %s42 = scalar_select %p39, %s40, %s41
    %p45 = pneg %p39
    %p46 = scmp.eq.s32.totalorder %s9, 1
    %p47 = por %p45, %p46
    %p48 = scmp.ne.s32.totalorder %s40, %s43
    %p49 = scmp.eq.s32.totalorder %s9, 0
    %p50 = por %p48, %p49
    %p51 = scmp.ne.s32.totalorder %s40, %s43
    %p52 = scmp.eq.s32.totalorder %s14, 1
    %p53 = por %p51, %p52
    %p54 = scmp.ne.s32.totalorder %s43, %s44
    %p55 = scmp.eq.s32.totalorder %s14, 0
    %p56 = por %p54, %p55
    %p57 = scmp.ne.s32.totalorder %s43, %s44
    %p58 = scmp.eq.s32.totalorder %s15, 1
    %p59 = por %p57, %p58
    %p61 = scmp.ne.s32.totalorder %s44, %s60
    %p62 = scmp.eq.s32.totalorder %s15, 0
    %p63 = por %p61, %p62
    %s64 = ssub.s32 %s18, %s27
    %s65 = ssub.s32 %s17, %s31
    %s66 = sor.u32 %s64, %s65
    %p67 = scmp.eq.s32.totalorder %s66, 0
    %s69 = sadd.s32 %s68, 1
    %s70 = scalar_select %p67, %s68, %s69
    %p73 = pneg %p67
    %p74 = scmp.eq.s32.totalorder %s9, 1
    %p75 = por %p73, %p74
    %p76 = scmp.ne.s32.totalorder %s68, %s71
    %p77 = scmp.eq.s32.totalorder %s9, 0
    %p78 = por %p76, %p77
    %p79 = scmp.ne.s32.totalorder %s68, %s71
    %p80 = scmp.eq.s32.totalorder %s14, 1
    %p81 = por %p79, %p80
    %p82 = scmp.ne.s32.totalorder %s71, %s72
    %p83 = scmp.eq.s32.totalorder %s14, 0
    %p84 = por %p82, %p83
    %p85 = scmp.ne.s32.totalorder %s71, %s72
    %p86 = scmp.eq.s32.totalorder %s15, 1
    %p87 = por %p85, %p86
    %p89 = scmp.ne.s32.totalorder %s72, %s88
    %p90 = scmp.eq.s32.totalorder %s15, 0
    %p91 = por %p89, %p90
    %s92 = ssub.s32 %s17, %s31
    %p93 = scmp.eq.s32.totalorder %s92, 0
    %s95 = sadd.s32 %s94, 1
    %s96 = scalar_select %p93, %s94, %s95
    %p99 = pneg %p93
    %p100 = scmp.eq.s32.totalorder %s9, 1
    %p101 = por %p99, %p100
    %p102 = scmp.ne.s32.totalorder %s94, %s97
    %p103 = scmp.eq.s32.totalorder %s9, 0
    %p104 = por %p102, %p103
    %p105 = scmp.ne.s32.totalorder %s94, %s97
    %p106 = scmp.eq.s32.totalorder %s14, 1
    %p107 = por %p105, %p106
    %p108 = scmp.ne.s32.totalorder %s97, %s98
    %p109 = scmp.eq.s32.totalorder %s14, 0
    %p110 = por %p108, %p109
    %p111 = scmp.ne.s32.totalorder %s97, %s98
    %p112 = scmp.eq.s32.totalorder %s15, 1
    %p113 = por %p111, %p112
    %p115 = scmp.ne.s32.totalorder %s98, %s114
    %p116 = scmp.eq.s32.totalorder %s15, 0
    %p117 = por %p115, %p116
    %s118 = ssub.s32 %s16, %s35
    %s119 = ssub.s32 %s17, %s31
    %s120 = sor.u32 %s118, %s119
    %p121 = scmp.eq.s32.totalorder %s120, 0
    %s123 = sadd.s32 %s122, 1
    %s124 = scalar_select %p121, %s122, %s123
    %p127 = pneg %p121
    %p128 = scmp.eq.s32.totalorder %s9, 1
    %p129 = por %p127, %p128
    %p130 = scmp.ne.s32.totalorder %s122, %s125
    %p131 = scmp.eq.s32.totalorder %s9, 0
    %p132 = por %p130, %p131
    %p133 = scmp.ne.s32.totalorder %s122, %s125
    %p134 = scmp.eq.s32.totalorder %s14, 1
    %p135 = por %p133, %p134
    %p136 = scmp.ne.s32.totalorder %s125, %s126
    %p137 = scmp.eq.s32.totalorder %s14, 0
    %p138 = por %p136, %p137
    %p139 = scmp.ne.s32.totalorder %s125, %s126
    %p140 = scmp.eq.s32.totalorder %s15, 1
    %p141 = por %p139, %p140
    %p143 = scmp.ne.s32.totalorder %s126, %s142
    %p144 = scmp.eq.s32.totalorder %s15, 0
    %p145 = por %p143, %p144
    %p146 = scmp.le.s32.totalorder 1, %s9
    %p147 = scmp.lt.s32.totalorder %s9, 3
    %p148 = pnand %p146, %p147
    %p149 = pneg %p148
    // Predicated region
    $region9: #{linear_then_conv_forward.8} parent=5 // pred_check
      _
    $region10: #{linear_then_conv_forward.8} parent=5 // pred_check_branch
      %151 = sbr.rel (%p148) target = $region12
    $region11: #{linear_then_conv_forward.8} parent=5 // pred_region
      %s152 = ssub.s32 %s9, 1
      // Predicated region
      $region13: #{linear_then_conv_forward.8} parent=11 // pred_check
        %p153 = pneg %p84
      $region14: #{linear_then_conv_forward.8} parent=11 // pred_check_branch
        %155 = sbr.rel (%p153) target = $region16
      $region15: #{linear_then_conv_forward.8} parent=11 // pred_region
        %s156 = smul.u32 16, %s21
        %p157 = scmp.lt.s32.totalorder %s156, 15
        %s158 = scalar_select %p157, %s156, 15
        %p159 = scmp.lt.s32.totalorder %s20, 0
        %s160 = scalar_select %p159, %s20, 0
        %s161 = sadd.s32 %s160, %s158
        %s162 = smul.addr %s161, 4
        %s163 = scalar_lea.vmem %s1, %s162
        %s164 = smul.u32 16, %s21
      $region16: #{linear_then_conv_forward.8} parent=11 // pred_fallthru
        _
      // Predicated region
      $region17: #{linear_then_conv_forward.8} parent=11 // pred_check
        %p165 = pneg %p110
      $region18: #{linear_then_conv_forward.8} parent=11 // pred_check_branch
        %167 = sbr.rel (%p165) target = $region20
      $region19: #{linear_then_conv_forward.8} parent=11 // pred_region
        %p168 = scmp.lt.s32.totalorder %s20, 0
        %s169 = scalar_select %p168, %s20, 0
        %s170 = scalar_lea.vmem %s2, %s169
      $region20: #{linear_then_conv_forward.8} parent=11 // pred_fallthru
        _
    $region12: #{linear_then_conv_forward.8} parent=5 // pred_fallthru
      _
    %p171 = scmp.lt.s32.totalorder %s9, 2
    // Predicated region
    $region21: #{linear_then_conv_forward.8} parent=5 // pred_check
      %p172 = pneg %p171
    $region22: #{linear_then_conv_forward.8} parent=5 // pred_check_branch
      %174 = sbr.rel (%p172) target = $region24
    $region23: #{linear_then_conv_forward.8} parent=5 // pred_region
      // Predicated region
      $region25: #{linear_then_conv_forward.8} parent=23 // pred_check
        %p175 = pneg %p50
      $region26: #{linear_then_conv_forward.8} parent=23 // pred_check_branch
        %177 = sbr.rel (%p175) target = $region28
      $region27: #{linear_then_conv_forward.8} parent=23 // pred_region
        %s178 = smul.u32 72, %s16
        %p179 = scmp.lt.s32.totalorder %s178, 143
        %s180 = scalar_select %p179, %s178, 143
        %p181 = scmp.lt.s32.totalorder %s18, 0
        %s182 = scalar_select %p181, %s18, 0
        %s183 = sadd.s32 %s182, %s180
        %s184 = smul.addr %s183, 4
        %s185 = scalar_lea.vmem %s0, %s184
        %s186 = smul.u32 72, %s16
      $region28: #{linear_then_conv_forward.8} parent=23 // pred_fallthru
        _
    $region24: #{linear_then_conv_forward.8} parent=5 // pred_fallthru
      _
    %p187 = scmp.le.s32.totalorder 1, %s9
    %p188 = scmp.lt.s32.totalorder %s9, 3
    %p189 = pnand %p187, %p188
    %p190 = pneg %p189
    // Predicated region
    $region29: #{linear_then_conv_forward.8} parent=5 // pred_check
      _
    $region30: #{linear_then_conv_forward.8} parent=5 // pred_check_branch
      %192 = sbr.rel (%p189) target = $region32
    $region31: #{linear_then_conv_forward.8} parent=5 // pred_region
      %s193 = ssub.s32 %s9, 1
      %s194 = smul.u32 72, %s19
      %p195 = scmp.lt.s32.totalorder %s194, 143
      %s196 = scalar_select %p195, %s194, 143
      %p197 = scmp.lt.s32.totalorder %s21, 0
      %s198 = scalar_select %p197, %s21, 0
      %s199 = sadd.s32 %s198, %s196
      %s200 = smul.addr %s199, 4
      %s201 = scalar_lea.vmem %s0, %s200
      %p202 = pneg %p56
      %p203 = pneg %p53
      %s204 = smul.u32 16, %s21
      %p205 = scmp.lt.s32.totalorder %s204, 15
      %s206 = scalar_select %p205, %s204, 15
      %p207 = scmp.lt.s32.totalorder %s20, 0
      %s208 = scalar_select %p207, %s20, 0
      %s209 = sadd.s32 %s208, %s206
      %s210 = smul.addr %s209, 4
      %s211 = scalar_lea.vmem %s1, %s210
      %p212 = pneg %p84
      %p213 = pneg %p81
      %p214 = scmp.lt.s32.totalorder %s20, 0
      %s215 = scalar_select %p214, %s20, 0
      %s216 = scalar_lea.vmem %s2, %s215
      %p217 = pneg %p110
      %p218 = pneg %p107
      %p219 = pneg %p138
      %p220 = pneg %p135
      %s221 = smul.u32 72, %s19
      %p222 = scmp.lt.s32.totalorder %s221, 143
      %s223 = scalar_select %p222, %s221, 143
      %p224 = scmp.lt.s32.totalorder %s20, 0
      %s225 = scalar_select %p224, %s20, 0
      %s226 = sadd.s32 %s225, %s223
      %s227 = smul.addr %s226, 8
      %s228 = scalar_lea.vmem %s3, %s227
      %s229 = smul.u32 72, %s19
      %p230 = scmp.lt.s32.totalorder %s229, 143
      %s231 = scalar_select %p230, %s229, 143
      %p232 = scmp.lt.s32.totalorder %s21, 0
      %s233 = scalar_select %p232, %s21, 0
      %s234 = sadd.s32 %s233, %s231
      %s235 = smul.addr %s234, 4
      %s236 = scalar_lea.vmem %s0, %s235
      %s237 = smul.u32 72, %s19
      %s238 = smul.u32 16, %s21
      %p239 = scmp.lt.s32.totalorder %s238, 15
      %s240 = scalar_select %p239, %s238, 15
      %p241 = scmp.lt.s32.totalorder %s20, 0
      %s242 = scalar_select %p241, %s20, 0
      %s243 = sadd.s32 %s242, %s240
      %s244 = smul.addr %s243, 4
      %s245 = scalar_lea.vmem %s1, %s244
      %s246 = smul.u32 16, %s21
      %p247 = scmp.lt.s32.totalorder %s20, 0
      %s248 = scalar_select %p247, %s20, 0
      %s249 = scalar_lea.vmem %s2, %s248
      %s250 = smul.u32 72, %s19
      %p251 = scmp.lt.s32.totalorder %s250, 143
      %s252 = scalar_select %p251, %s250, 143
      %p253 = scmp.lt.s32.totalorder %s20, 0
      %s254 = scalar_select %p253, %s20, 0
      %s255 = sadd.s32 %s254, %s252
      %s256 = smul.addr %s255, 8
      %s257 = scalar_lea.vmem %s3, %s256
      %s258 = smul.u32 72, %s19
      %p260 = scmp.eq.s32.totalorder %s21, 0
      // Predicated region
      $region33: #{linear_then_conv_forward.8} parent=31 // pred_check
        %p261 = pneg %p260
      $region34: #{linear_then_conv_forward.8} parent=31 // pred_check_branch
        %263 = sbr.rel (%p261) target = $region36
      $region35: #{linear_then_conv_forward.8} parent=31 // pred_region
        %264 = vst [vmem:[%s257] sm:$0xff] 0.0
        %265 = vst [vmem:[%s257 + $0x8] sm:$0xff] 0.0
        %266 = vst [vmem:[%s257 + $0x10] sm:$0xff] 0.0
        %267 = vst [vmem:[%s257 + $0x18] sm:$0xff] 0.0
        %268 = vst [vmem:[%s257 + $0x20] sm:$0xff] 0.0
        %269 = vst [vmem:[%s257 + $0x28] sm:$0xff] 0.0
        %270 = vst [vmem:[%s257 + $0x30] sm:$0xff] 0.0
        %271 = vst [vmem:[%s257 + $0x38] sm:$0xff] 0.0
        %272 = vst [vmem:[%s257 + $0x40] sm:$0xff] 0.0
        %273 = vst [vmem:[%s257 + $0x48] sm:$0xff] 0.0
        %274 = vst [vmem:[%s257 + $0x50] sm:$0xff] 0.0
        %275 = vst [vmem:[%s257 + $0x58] sm:$0xff] 0.0
        %276 = vst [vmem:[%s257 + $0x60] sm:$0xff] 0.0
        %277 = vst [vmem:[%s257 + $0x68] sm:$0xff] 0.0
        %278 = vst [vmem:[%s257 + $0x70] sm:$0xff] 0.0
        %279 = vst [vmem:[%s257 + $0x78] sm:$0xff] 0.0
        %280 = vst [vmem:[%s257 + $0x80] sm:$0xff] 0.0
        %281 = vst [vmem:[%s257 + $0x88] sm:$0xff] 0.0
        %282 = vst [vmem:[%s257 + $0x90] sm:$0xff] 0.0
        %283 = vst [vmem:[%s257 + $0x98] sm:$0xff] 0.0
        %284 = vst [vmem:[%s257 + $0xa0] sm:$0xff] 0.0
        %285 = vst [vmem:[%s257 + $0xa8] sm:$0xff] 0.0
        %286 = vst [vmem:[%s257 + $0xb0] sm:$0xff] 0.0
        %287 = vst [vmem:[%s257 + $0xb8] sm:$0xff] 0.0
        %288 = vst [vmem:[%s257 + $0xc0] sm:$0xff] 0.0
        %289 = vst [vmem:[%s257 + $0xc8] sm:$0xff] 0.0
        %290 = vst [vmem:[%s257 + $0xd0] sm:$0xff] 0.0
        %291 = vst [vmem:[%s257 + $0xd8] sm:$0xff] 0.0
        %292 = vst [vmem:[%s257 + $0xe0] sm:$0xff] 0.0
        %293 = vst [vmem:[%s257 + $0xe8] sm:$0xff] 0.0
        %294 = vst [vmem:[%s257 + $0xf0] sm:$0xff] 0.0
        %295 = vst [vmem:[%s257 + $0xf8] sm:$0xff] 0.0
        %296 = vst [vmem:[%s257 + $0x100] sm:$0xff] 0.0
        %297 = vst [vmem:[%s257 + $0x108] sm:$0xff] 0.0
        %298 = vst [vmem:[%s257 + $0x110] sm:$0xff] 0.0
        %299 = vst [vmem:[%s257 + $0x118] sm:$0xff] 0.0
        %300 = vst [vmem:[%s257 + $0x120] sm:$0xff] 0.0
        %301 = vst [vmem:[%s257 + $0x128] sm:$0xff] 0.0
        %302 = vst [vmem:[%s257 + $0x130] sm:$0xff] 0.0
        %303 = vst [vmem:[%s257 + $0x138] sm:$0xff] 0.0
        %304 = vst [vmem:[%s257 + $0x140] sm:$0xff] 0.0
        %305 = vst [vmem:[%s257 + $0x148] sm:$0xff] 0.0
        %306 = vst [vmem:[%s257 + $0x150] sm:$0xff] 0.0
        %307 = vst [vmem:[%s257 + $0x158] sm:$0xff] 0.0
        %308 = vst [vmem:[%s257 + $0x160] sm:$0xff] 0.0
        %309 = vst [vmem:[%s257 + $0x168] sm:$0xff] 0.0
        %310 = vst [vmem:[%s257 + $0x170] sm:$0xff] 0.0
        %311 = vst [vmem:[%s257 + $0x178] sm:$0xff] 0.0
        %312 = vst [vmem:[%s257 + $0x180] sm:$0xff] 0.0
        %313 = vst [vmem:[%s257 + $0x188] sm:$0xff] 0.0
        %314 = vst [vmem:[%s257 + $0x190] sm:$0xff] 0.0
        %315 = vst [vmem:[%s257 + $0x198] sm:$0xff] 0.0
        %316 = vst [vmem:[%s257 + $0x1a0] sm:$0xff] 0.0
        %317 = vst [vmem:[%s257 + $0x1a8] sm:$0xff] 0.0
        %318 = vst [vmem:[%s257 + $0x1b0] sm:$0xff] 0.0
        %319 = vst [vmem:[%s257 + $0x1b8] sm:$0xff] 0.0
        %320 = vst [vmem:[%s257 + $0x1c0] sm:$0xff] 0.0
        %321 = vst [vmem:[%s257 + $0x1c8] sm:$0xff] 0.0
        %322 = vst [vmem:[%s257 + $0x1d0] sm:$0xff] 0.0
        %323 = vst [vmem:[%s257 + $0x1d8] sm:$0xff] 0.0
        %324 = vst [vmem:[%s257 + $0x1e0] sm:$0xff] 0.0
        %325 = vst [vmem:[%s257 + $0x1e8] sm:$0xff] 0.0
        %326 = vst [vmem:[%s257 + $0x1f0] sm:$0xff] 0.0
        %327 = vst [vmem:[%s257 + $0x1f8] sm:$0xff] 0.0
        %328 = vst [vmem:[%s257 + $0x200] sm:$0xff] 0.0
        %329 = vst [vmem:[%s257 + $0x208] sm:$0xff] 0.0
        %330 = vst [vmem:[%s257 + $0x210] sm:$0xff] 0.0
        %331 = vst [vmem:[%s257 + $0x218] sm:$0xff] 0.0
        %332 = vst [vmem:[%s257 + $0x220] sm:$0xff] 0.0
        %333 = vst [vmem:[%s257 + $0x228] sm:$0xff] 0.0
        %334 = vst [vmem:[%s257 + $0x230] sm:$0xff] 0.0
        %335 = vst [vmem:[%s257 + $0x238] sm:$0xff] 0.0
      $region36: #{linear_then_conv_forward.8} parent=31 // pred_fallthru
        _
      %v336 = vld [vmem:[%s257] sm:$0xff]
      %v337 = vld [vmem:[%s257 + $0x8] sm:$0xff]
      %v338 = vld [vmem:[%s257 + $0x10] sm:$0xff]
      %v339 = vld [vmem:[%s257 + $0x18] sm:$0xff]
      %v340 = vld [vmem:[%s257 + $0x20] sm:$0xff]
      %v341 = vld [vmem:[%s257 + $0x28] sm:$0xff]
      %v342 = vld [vmem:[%s257 + $0x30] sm:$0xff]
      %v343 = vld [vmem:[%s257 + $0x38] sm:$0xff]
      %v344 = vld [vmem:[%s257 + $0x40] sm:$0xff]
      %v345 = vld [vmem:[%s257 + $0x48] sm:$0xff]
      %v346 = vld [vmem:[%s257 + $0x50] sm:$0xff]
      %v347 = vld [vmem:[%s257 + $0x58] sm:$0xff]
      %v348 = vld [vmem:[%s257 + $0x60] sm:$0xff]
      %v349 = vld [vmem:[%s257 + $0x68] sm:$0xff]
      %v350 = vld [vmem:[%s257 + $0x70] sm:$0xff]
      %v351 = vld [vmem:[%s257 + $0x78] sm:$0xff]
      %v352 = vld [vmem:[%s257 + $0x80] sm:$0xff]
      %v353 = vld [vmem:[%s257 + $0x88] sm:$0xff]
      %v354 = vld [vmem:[%s257 + $0x90] sm:$0xff]
      %v355 = vld [vmem:[%s257 + $0x98] sm:$0xff]
      %v356 = vld [vmem:[%s257 + $0xa0] sm:$0xff]
      %v357 = vld [vmem:[%s257 + $0xa8] sm:$0xff]
      %v358 = vld [vmem:[%s257 + $0xb0] sm:$0xff]
      %v359 = vld [vmem:[%s257 + $0xb8] sm:$0xff]
      %v360 = vld [vmem:[%s257 + $0xc0] sm:$0xff]
      %v361 = vld [vmem:[%s257 + $0xc8] sm:$0xff]
      %v362 = vld [vmem:[%s257 + $0xd0] sm:$0xff]
      %v363 = vld [vmem:[%s257 + $0xd8] sm:$0xff]
      %v364 = vld [vmem:[%s257 + $0xe0] sm:$0xff]
      %v365 = vld [vmem:[%s257 + $0xe8] sm:$0xff]
      %v366 = vld [vmem:[%s257 + $0xf0] sm:$0xff]
      %v367 = vld [vmem:[%s257 + $0xf8] sm:$0xff]
      %v368 = vld [vmem:[%s257 + $0x100] sm:$0xff]
      %v369 = vld [vmem:[%s257 + $0x108] sm:$0xff]
      %v370 = vld [vmem:[%s257 + $0x110] sm:$0xff]
      %v371 = vld [vmem:[%s257 + $0x118] sm:$0xff]
      %v372 = vld [vmem:[%s257 + $0x120] sm:$0xff]
      %v373 = vld [vmem:[%s257 + $0x128] sm:$0xff]
      %v374 = vld [vmem:[%s257 + $0x130] sm:$0xff]
      %v375 = vld [vmem:[%s257 + $0x138] sm:$0xff]
      %v376 = vld [vmem:[%s257 + $0x140] sm:$0xff]
      %v377 = vld [vmem:[%s257 + $0x148] sm:$0xff]
      %v378 = vld [vmem:[%s257 + $0x150] sm:$0xff]
      %v379 = vld [vmem:[%s257 + $0x158] sm:$0xff]
      %v380 = vld [vmem:[%s257 + $0x160] sm:$0xff]
      %v381 = vld [vmem:[%s257 + $0x168] sm:$0xff]
      %v382 = vld [vmem:[%s257 + $0x170] sm:$0xff]
      %v383 = vld [vmem:[%s257 + $0x178] sm:$0xff]
      %v384 = vld [vmem:[%s257 + $0x180] sm:$0xff]
      %v385 = vld [vmem:[%s257 + $0x188] sm:$0xff]
      %v386 = vld [vmem:[%s257 + $0x190] sm:$0xff]
      %v387 = vld [vmem:[%s257 + $0x198] sm:$0xff]
      %v388 = vld [vmem:[%s257 + $0x1a0] sm:$0xff]
      %v389 = vld [vmem:[%s257 + $0x1a8] sm:$0xff]
      %v390 = vld [vmem:[%s257 + $0x1b0] sm:$0xff]
      %v391 = vld [vmem:[%s257 + $0x1b8] sm:$0xff]
      %v392 = vld [vmem:[%s257 + $0x1c0] sm:$0xff]
      %v393 = vld [vmem:[%s257 + $0x1c8] sm:$0xff]
      %v394 = vld [vmem:[%s257 + $0x1d0] sm:$0xff]
      %v395 = vld [vmem:[%s257 + $0x1d8] sm:$0xff]
      %v396 = vld [vmem:[%s257 + $0x1e0] sm:$0xff]
      %v397 = vld [vmem:[%s257 + $0x1e8] sm:$0xff]
      %v398 = vld [vmem:[%s257 + $0x1f0] sm:$0xff]
      %v399 = vld [vmem:[%s257 + $0x1f8] sm:$0xff]
      %v400 = vld [vmem:[%s257 + $0x200] sm:$0xff]
      %v401 = vld [vmem:[%s257 + $0x208] sm:$0xff]
      %v402 = vld [vmem:[%s257 + $0x210] sm:$0xff]
      %v403 = vld [vmem:[%s257 + $0x218] sm:$0xff]
      %v404 = vld [vmem:[%s257 + $0x220] sm:$0xff]
      %v405 = vld [vmem:[%s257 + $0x228] sm:$0xff]
      %v406 = vld [vmem:[%s257 + $0x230] sm:$0xff]
      %v407 = vld [vmem:[%s257 + $0x238] sm:$0xff]
      %v408 = vld [vmem:[%s236] sm:$0xf]
      %v409 = vld [vmem:[%s236 + $0x4] sm:$0xf]
      %v410 = vld [vmem:[%s236 + $0x8] sm:$0xf]
      %v411 = vld [vmem:[%s236 + $0xc] sm:$0xf]
      %v412 = vld [vmem:[%s236 + $0x10] sm:$0xf]
      %v413 = vld [vmem:[%s236 + $0x14] sm:$0xf]
      %v414 = vld [vmem:[%s236 + $0x18] sm:$0xf]
      %v415 = vld [vmem:[%s236 + $0x1c] sm:$0xf]
      %v416 = vld [vmem:[%s236 + $0x20] sm:$0xf]
      %v417 = vld [vmem:[%s236 + $0x24] sm:$0xf]
      %v418 = vld [vmem:[%s236 + $0x28] sm:$0xf]
      %v419 = vld [vmem:[%s236 + $0x2c] sm:$0xf]
      %v420 = vld [vmem:[%s236 + $0x30] sm:$0xf]
      %v421 = vld [vmem:[%s236 + $0x34] sm:$0xf]
      %v422 = vld [vmem:[%s236 + $0x38] sm:$0xf]
      %v423 = vld [vmem:[%s236 + $0x3c] sm:$0xf]
      %v424 = vld [vmem:[%s236 + $0x40] sm:$0xf]
      %v425 = vld [vmem:[%s236 + $0x44] sm:$0xf]
      %v426 = vld [vmem:[%s236 + $0x48] sm:$0xf]
      %v427 = vld [vmem:[%s236 + $0x4c] sm:$0xf]
      %v428 = vld [vmem:[%s236 + $0x50] sm:$0xf]
      %v429 = vld [vmem:[%s236 + $0x54] sm:$0xf]
      %v430 = vld [vmem:[%s236 + $0x58] sm:$0xf]
      %v431 = vld [vmem:[%s236 + $0x5c] sm:$0xf]
      %v432 = vld [vmem:[%s236 + $0x60] sm:$0xf]
      %v433 = vld [vmem:[%s236 + $0x64] sm:$0xf]
      %v434 = vld [vmem:[%s236 + $0x68] sm:$0xf]
      %v435 = vld [vmem:[%s236 + $0x6c] sm:$0xf]
      %v436 = vld [vmem:[%s236 + $0x70] sm:$0xf]
      %v437 = vld [vmem:[%s236 + $0x74] sm:$0xf]
      %v438 = vld [vmem:[%s236 + $0x78] sm:$0xf]
      %v439 = vld [vmem:[%s236 + $0x7c] sm:$0xf]
      %v440 = vld [vmem:[%s236 + $0x80] sm:$0xf]
      %v441 = vld [vmem:[%s236 + $0x84] sm:$0xf]
      %v442 = vld [vmem:[%s236 + $0x88] sm:$0xf]
      %v443 = vld [vmem:[%s236 + $0x8c] sm:$0xf]
      %v444 = vld [vmem:[%s236 + $0x90] sm:$0xf]
      %v445 = vld [vmem:[%s236 + $0x94] sm:$0xf]
      %v446 = vld [vmem:[%s236 + $0x98] sm:$0xf]
      %v447 = vld [vmem:[%s236 + $0x9c] sm:$0xf]
      %v448 = vld [vmem:[%s236 + $0xa0] sm:$0xf]
      %v449 = vld [vmem:[%s236 + $0xa4] sm:$0xf]
      %v450 = vld [vmem:[%s236 + $0xa8] sm:$0xf]
      %v451 = vld [vmem:[%s236 + $0xac] sm:$0xf]
      %v452 = vld [vmem:[%s236 + $0xb0] sm:$0xf]
      %v453 = vld [vmem:[%s236 + $0xb4] sm:$0xf]
      %v454 = vld [vmem:[%s236 + $0xb8] sm:$0xf]
      %v455 = vld [vmem:[%s236 + $0xbc] sm:$0xf]
      %v456 = vld [vmem:[%s236 + $0xc0] sm:$0xf]
      %v457 = vld [vmem:[%s236 + $0xc4] sm:$0xf]
      %v458 = vld [vmem:[%s236 + $0xc8] sm:$0xf]
      %v459 = vld [vmem:[%s236 + $0xcc] sm:$0xf]
      %v460 = vld [vmem:[%s236 + $0xd0] sm:$0xf]
      %v461 = vld [vmem:[%s236 + $0xd4] sm:$0xf]
      %v462 = vld [vmem:[%s236 + $0xd8] sm:$0xf]
      %v463 = vld [vmem:[%s236 + $0xdc] sm:$0xf]
      %v464 = vld [vmem:[%s236 + $0xe0] sm:$0xf]
      %v465 = vld [vmem:[%s236 + $0xe4] sm:$0xf]
      %v466 = vld [vmem:[%s236 + $0xe8] sm:$0xf]
      %v467 = vld [vmem:[%s236 + $0xec] sm:$0xf]
      %v468 = vld [vmem:[%s236 + $0xf0] sm:$0xf]
      %v469 = vld [vmem:[%s236 + $0xf4] sm:$0xf]
      %v470 = vld [vmem:[%s236 + $0xf8] sm:$0xf]
      %v471 = vld [vmem:[%s236 + $0xfc] sm:$0xf]
      %v472 = vld [vmem:[%s236 + $0x100] sm:$0xf]
      %v473 = vld [vmem:[%s236 + $0x104] sm:$0xf]
      %v474 = vld [vmem:[%s236 + $0x108] sm:$0xf]
      %v475 = vld [vmem:[%s236 + $0x10c] sm:$0xf]
      %v476 = vld [vmem:[%s236 + $0x110] sm:$0xf]
      %v477 = vld [vmem:[%s236 + $0x114] sm:$0xf]
      %v478 = vld [vmem:[%s236 + $0x118] sm:$0xf]
      %v479 = vld [vmem:[%s236 + $0x11c] sm:$0xf]
      %v480 = vld [vmem:[%s245] sm:$0xf]
      %v481 = vld [vmem:[%s245 + $0x4] sm:$0xf]
      %v482 = vld [vmem:[%s245 + $0x8] sm:$0xf]
      %v483 = vld [vmem:[%s245 + $0xc] sm:$0xf]
      %v484 = vld [vmem:[%s245 + $0x10] sm:$0xf]
      %v485 = vld [vmem:[%s245 + $0x14] sm:$0xf]
      %v486 = vld [vmem:[%s245 + $0x18] sm:$0xf]
      %v487 = vld [vmem:[%s245 + $0x1c] sm:$0xf]
      %v488 = vld [vmem:[%s245 + $0x20] sm:$0xf]
      %v489 = vld [vmem:[%s245 + $0x24] sm:$0xf]
      %v490 = vld [vmem:[%s245 + $0x28] sm:$0xf]
      %v491 = vld [vmem:[%s245 + $0x2c] sm:$0xf]
      %v492 = vld [vmem:[%s245 + $0x30] sm:$0xf]
      %v493 = vld [vmem:[%s245 + $0x34] sm:$0xf]
      %v494 = vld [vmem:[%s245 + $0x38] sm:$0xf]
      %v495 = vld [vmem:[%s245 + $0x3c] sm:$0xf]
      %v568 = vunpack.c.l.b16 %v408
      %v569 = vunpack.c.l.b16 %v409
      %v570 = vunpack.c.l.b16 %v410
      %v571 = vunpack.c.l.b16 %v411
      %v572 = vunpack.c.l.b16 %v412
      %v573 = vunpack.c.l.b16 %v413
      %v574 = vunpack.c.l.b16 %v414
      %v575 = vunpack.c.l.b16 %v415
      %v576 = vunpack.c.l.b16 %v416
      %v577 = vunpack.c.l.b16 %v417
      %v578 = vunpack.c.l.b16 %v418
      %v579 = vunpack.c.l.b16 %v419
      %v580 = vunpack.c.l.b16 %v420
      %v581 = vunpack.c.l.b16 %v421
      %v582 = vunpack.c.l.b16 %v422
      %v583 = vunpack.c.l.b16 %v423
      %v584 = vunpack.c.l.b16 %v424
      %v585 = vunpack.c.l.b16 %v425
      %v586 = vunpack.c.l.b16 %v426
      %v587 = vunpack.c.l.b16 %v427
      %v588 = vunpack.c.l.b16 %v428
      %v589 = vunpack.c.l.b16 %v429
      %v590 = vunpack.c.l.b16 %v430
      %v591 = vunpack.c.l.b16 %v431
      %v592 = vunpack.c.l.b16 %v432
      %v593 = vunpack.c.l.b16 %v433
      %v594 = vunpack.c.l.b16 %v434
      %v595 = vunpack.c.l.b16 %v435
      %v596 = vunpack.c.l.b16 %v436
      %v597 = vunpack.c.l.b16 %v437
      %v598 = vunpack.c.l.b16 %v438
      %v599 = vunpack.c.l.b16 %v439
      %v600 = vunpack.c.l.b16 %v440
      %v601 = vunpack.c.l.b16 %v441
      %v602 = vunpack.c.l.b16 %v442
      %v603 = vunpack.c.l.b16 %v443
      %v604 = vunpack.c.l.b16 %v444
      %v605 = vunpack.c.l.b16 %v445
      %v606 = vunpack.c.l.b16 %v446
      %v607 = vunpack.c.l.b16 %v447
      %v608 = vunpack.c.l.b16 %v448
      %v609 = vunpack.c.l.b16 %v449
      %v610 = vunpack.c.l.b16 %v450
      %v611 = vunpack.c.l.b16 %v451
      %v612 = vunpack.c.l.b16 %v452
      %v613 = vunpack.c.l.b16 %v453
      %v614 = vunpack.c.l.b16 %v454
      %v615 = vunpack.c.l.b16 %v455
      %v616 = vunpack.c.l.b16 %v456
      %v617 = vunpack.c.l.b16 %v457
      %v618 = vunpack.c.l.b16 %v458
      %v619 = vunpack.c.l.b16 %v459
      %v620 = vunpack.c.l.b16 %v460
      %v621 = vunpack.c.l.b16 %v461
      %v622 = vunpack.c.l.b16 %v462
      %v623 = vunpack.c.l.b16 %v463
      %v624 = vunpack.c.l.b16 %v464
      %v625 = vunpack.c.l.b16 %v465
      %v626 = vunpack.c.l.b16 %v466
      %v627 = vunpack.c.l.b16 %v467
      %v628 = vunpack.c.l.b16 %v468
      %v629 = vunpack.c.l.b16 %v469
      %v630 = vunpack.c.l.b16 %v470
      %v631 = vunpack.c.l.b16 %v471
      %v632 = vunpack.c.l.b16 %v472
      %v633 = vunpack.c.l.b16 %v473
      %v634 = vunpack.c.l.b16 %v474
      %v635 = vunpack.c.l.b16 %v475
      %v636 = vunpack.c.l.b16 %v476
      %v637 = vunpack.c.l.b16 %v477
      %v638 = vunpack.c.l.b16 %v478
      %v639 = vunpack.c.l.b16 %v479
      %v640 = vpack.c.b16 %v569, %v568
      %v641 = vpack.c.b16 %v571, %v570
      %v642 = vpack.c.b16 %v573, %v572
      %v643 = vpack.c.b16 %v575, %v574
      %v644 = vpack.c.b16 %v577, %v576
      %v645 = vpack.c.b16 %v579, %v578
      %v646 = vpack.c.b16 %v581, %v580
      %v647 = vpack.c.b16 %v583, %v582
      %v648 = vpack.c.b16 %v585, %v584
      %v649 = vpack.c.b16 %v587, %v586
      %v650 = vpack.c.b16 %v589, %v588
      %v651 = vpack.c.b16 %v591, %v590
      %v652 = vpack.c.b16 %v593, %v592
      %v653 = vpack.c.b16 %v595, %v594
      %v654 = vpack.c.b16 %v597, %v596
      %v655 = vpack.c.b16 %v599, %v598
      %v656 = vpack.c.b16 %v601, %v600
      %v657 = vpack.c.b16 %v603, %v602
      %v658 = vpack.c.b16 %v605, %v604
      %v659 = vpack.c.b16 %v607, %v606
      %v660 = vpack.c.b16 %v609, %v608
      %v661 = vpack.c.b16 %v611, %v610
      %v662 = vpack.c.b16 %v613, %v612
      %v663 = vpack.c.b16 %v615, %v614
      %v664 = vpack.c.b16 %v617, %v616
      %v665 = vpack.c.b16 %v619, %v618
      %v666 = vpack.c.b16 %v621, %v620
      %v667 = vpack.c.b16 %v623, %v622
      %v668 = vpack.c.b16 %v625, %v624
      %v669 = vpack.c.b16 %v627, %v626
      %v670 = vpack.c.b16 %v629, %v628
      %v671 = vpack.c.b16 %v631, %v630
      %v672 = vpack.c.b16 %v633, %v632
      %v673 = vpack.c.b16 %v635, %v634
      %v674 = vpack.c.b16 %v637, %v636
      %v675 = vpack.c.b16 %v639, %v638
      %v728 = vunpack.c.l.b16 %v480
      %v729 = vunpack.c.l.b16 %v481
      %v730 = vunpack.c.l.b16 %v482
      %v731 = vunpack.c.l.b16 %v483
      %v732 = vunpack.c.l.b16 %v484
      %v733 = vunpack.c.l.b16 %v485
      %v734 = vunpack.c.l.b16 %v486
      %v735 = vunpack.c.l.b16 %v487
      %v736 = vunpack.c.l.b16 %v488
      %v737 = vunpack.c.l.b16 %v489
      %v738 = vunpack.c.l.b16 %v490
      %v739 = vunpack.c.l.b16 %v491
      %v740 = vunpack.c.l.b16 %v492
      %v741 = vunpack.c.l.b16 %v493
      %v742 = vunpack.c.l.b16 %v494
      %v743 = vunpack.c.l.b16 %v495
      %v744 = vpack.c.b16 %v729, %v728
      %v745 = vpack.c.b16 %v731, %v730
      %v746 = vpack.c.b16 %v733, %v732
      %v747 = vpack.c.b16 %v735, %v734
      %v748 = vpack.c.b16 %v737, %v736
      %v749 = vpack.c.b16 %v739, %v738
      %v750 = vpack.c.b16 %v741, %v740
      %v751 = vpack.c.b16 %v743, %v742
      %760 = vmatprep.subr.bf16.mxu0 0
      %761 = vmatpush1.bf16.msra.mxu0 %v744
      %762 = vmatprep.subr.bf16.mxu0 0
      %763 = vmatpush1.bf16.msra.mxu0 %v745
      %764 = vmatprep.subr.bf16.mxu0 0
      %765 = vmatpush1.bf16.msra.mxu0 %v746
      %766 = vmatprep.subr.bf16.mxu0 0
      %767 = vmatpush1.bf16.msra.mxu0 %v747
      %768 = vmatprep.subr.bf16.mxu0 0
      %769 = vmatpush1.bf16.msra.mxu0 %v748
      %770 = vmatprep.subr.bf16.mxu0 0
      %771 = vmatpush1.bf16.msra.mxu0 %v749
      %772 = vmatprep.subr.bf16.mxu0 0
      %773 = vmatpush1.bf16.msra.mxu0 %v750
      %774 = vmatprep.subr.bf16.mxu0 0
      %775 = vmatpush1.bf16.msra.mxu0 %v751
      %776 = vmatprep.subr.bf16.mxu0 0
      %777 = vmatpush1.bf16.msra.mxu0 0
      %778 = vmatprep.subr.bf16.mxu0 0
      %779 = vmatpush1.bf16.msra.mxu0 0
      %780 = vmatprep.subr.bf16.mxu0 0
      %781 = vmatpush1.bf16.msra.mxu0 0
      %782 = vmatprep.subr.bf16.mxu0 0
      %783 = vmatpush1.bf16.msra.mxu0 0
      %784 = vmatprep.subr.bf16.mxu0 0
      %785 = vmatpush1.bf16.msra.mxu0 0
      %786 = vmatprep.subr.bf16.mxu0 0
      %787 = vmatpush1.bf16.msra.mxu0 0
      %788 = vmatprep.subr.bf16.mxu0 0
      %789 = vmatpush1.bf16.msra.mxu0 0
      %790 = vmatprep.subr.bf16.mxu0 0
      %791 = vmatpush1.bf16.msra.mxu0 0
      %792 = vmatprep.mubr.bf16.mxu0 0
      %793 = vmatmul.mubr.bf16.gmra.mrb[0].mxu0 %v640
      %v794 = vpop.f32.mrb[0].mxu0
      %v795 = vadd.f32 0.0, %v794
      %v796 = vpop.f32.mrb[0].mxu0
      %v797 = vpop.f32.mrb[0].mxu0
      %v798 = vadd.f32 0.0, %v797
      %v799 = vpop.f32.mrb[0].mxu0
      %800 = vmatprep.mubr.bf16.mxu0 0
      %801 = vmatmul.mubr.bf16.gmra.mrb[0].mxu0 %v641
      %v802 = vpop.f32.mrb[0].mxu0
      %v803 = vadd.f32 0.0, %v802
      %v804 = vpop.f32.mrb[0].mxu0
      %v805 = vpop.f32.mrb[0].mxu0
      %v806 = vadd.f32 0.0, %v805
      %v807 = vpop.f32.mrb[0].mxu0
      %808 = vmatprep.mubr.bf16.mxu0 0
      %809 = vmatmul.mubr.bf16.gmra.mrb[0].mxu0 %v642
      %v810 = vpop.f32.mrb[0].mxu0
      %v811 = vadd.f32 0.0, %v810
      %v812 = vpop.f32.mrb[0].mxu0
      %v813 = vpop.f32.mrb[0].mxu0
      %v814 = vadd.f32 0.0, %v813
      %v815 = vpop.f32.mrb[0].mxu0
      %816 = vmatprep.mubr.bf16.mxu0 0
      %817 = vmatmul.mubr.bf16.gmra.mrb[0].mxu0 %v643
      %v818 = vpop.f32.mrb[0].mxu0
      %v819 = vadd.f32 0.0, %v818
      %v820 = vpop.f32.mrb[0].mxu0
      %v821 = vpop.f32.mrb[0].mxu0
      %v822 = vadd.f32 0.0, %v821
      %v823 = vpop.f32.mrb[0].mxu0
      %824 = vmatprep.mubr.bf16.mxu0 0
      %825 = vmatmul.mubr.bf16.gmra.mrb[0].mxu0 %v644
      %v826 = vpop.f32.mrb[0].mxu0
      %v827 = vadd.f32 0.0, %v826
      %v828 = vpop.f32.mrb[0].mxu0
      %v829 = vpop.f32.mrb[0].mxu0
      %v830 = vadd.f32 0.0, %v829
      %v831 = vpop.f32.mrb[0].mxu0
      %832 = vmatprep.mubr.bf16.mxu0 0
      %833 = vmatmul.mubr.bf16.gmra.mrb[0].mxu0 %v645
      %v834 = vpop.f32.mrb[0].mxu0
      %v835 = vadd.f32 0.0, %v834
      %v836 = vpop.f32.mrb[0].mxu0
      %v837 = vpop.f32.mrb[0].mxu0
      %v838 = vadd.f32 0.0, %v837
      %v839 = vpop.f32.mrb[0].mxu0
      %840 = vmatprep.mubr.bf16.mxu0 0
      %841 = vmatmul.mubr.bf16.gmra.mrb[0].mxu0 %v646
      %v842 = vpop.f32.mrb[0].mxu0
      %v843 = vadd.f32 0.0, %v842
      %v844 = vpop.f32.mrb[0].mxu0
      %v845 = vpop.f32.mrb[0].mxu0
      %v846 = vadd.f32 0.0, %v845
      %v847 = vpop.f32.mrb[0].mxu0
      %848 = vmatprep.mubr.bf16.mxu0 0
      %849 = vmatmul.mubr.bf16.gmra.mrb[0].mxu0 %v647
      %v850 = vpop.f32.mrb[0].mxu0
      %v851 = vadd.f32 0.0, %v850
      %v852 = vpop.f32.mrb[0].mxu0
      %v853 = vpop.f32.mrb[0].mxu0
      %v854 = vadd.f32 0.0, %v853
      %v855 = vpop.f32.mrb[0].mxu0
      %856 = vmatprep.mubr.bf16.mxu0 0
      %857 = vmatmul.mubr.bf16.gmra.mrb[0].mxu0 %v648
      %v858 = vpop.f32.mrb[0].mxu0
      %v859 = vadd.f32 0.0, %v858
      %v860 = vpop.f32.mrb[0].mxu0
      %v861 = vpop.f32.mrb[0].mxu0
      %v862 = vadd.f32 0.0, %v861
      %v863 = vpop.f32.mrb[0].mxu0
      %864 = vmatprep.mubr.bf16.mxu0 0
      %865 = vmatmul.mubr.bf16.gmra.mrb[0].mxu0 %v649
      %v866 = vpop.f32.mrb[0].mxu0
      %v867 = vadd.f32 0.0, %v866
      %v868 = vpop.f32.mrb[0].mxu0
      %v869 = vpop.f32.mrb[0].mxu0
      %v870 = vadd.f32 0.0, %v869
      %v871 = vpop.f32.mrb[0].mxu0
      %872 = vmatprep.mubr.bf16.mxu0 0
      %873 = vmatmul.mubr.bf16.gmra.mrb[0].mxu0 %v650
      %v874 = vpop.f32.mrb[0].mxu0
      %v875 = vadd.f32 0.0, %v874
      %v876 = vpop.f32.mrb[0].mxu0
      %v877 = vpop.f32.mrb[0].mxu0
      %v878 = vadd.f32 0.0, %v877
      %v879 = vpop.f32.mrb[0].mxu0
      %880 = vmatprep.mubr.bf16.mxu0 0
      %881 = vmatmul.mubr.bf16.gmra.mrb[0].mxu0 %v651
      %v882 = vpop.f32.mrb[0].mxu0
      %v883 = vadd.f32 0.0, %v882
      %v884 = vpop.f32.mrb[0].mxu0
      %v885 = vpop.f32.mrb[0].mxu0
      %v886 = vadd.f32 0.0, %v885
      %v887 = vpop.f32.mrb[0].mxu0
      %888 = vmatprep.mubr.bf16.mxu0 0
      %889 = vmatmul.mubr.bf16.gmra.mrb[0].mxu0 %v652
      %v890 = vpop.f32.mrb[0].mxu0
      %v891 = vadd.f32 0.0, %v890
      %v892 = vpop.f32.mrb[0].mxu0
      %v893 = vpop.f32.mrb[0].mxu0
      %v894 = vadd.f32 0.0, %v893
      %v895 = vpop.f32.mrb[0].mxu0
      %896 = vmatprep.mubr.bf16.mxu0 0
      %897 = vmatmul.mubr.bf16.gmra.mrb[0].mxu0 %v653
      %v898 = vpop.f32.mrb[0].mxu0
      %v899 = vadd.f32 0.0, %v898
      %v900 = vpop.f32.mrb[0].mxu0
      %v901 = vpop.f32.mrb[0].mxu0
      %v902 = vadd.f32 0.0, %v901
      %v903 = vpop.f32.mrb[0].mxu0
      %904 = vmatprep.mubr.bf16.mxu0 0
      %905 = vmatmul.mubr.bf16.gmra.mrb[0].mxu0 %v654
      %v906 = vpop.f32.mrb[0].mxu0
      %v907 = vadd.f32 0.0, %v906
      %v908 = vpop.f32.mrb[0].mxu0
      %v909 = vpop.f32.mrb[0].mxu0
      %v910 = vadd.f32 0.0, %v909
      %v911 = vpop.f32.mrb[0].mxu0
      %912 = vmatprep.mubr.bf16.mxu0 0
      %913 = vmatmul.mubr.bf16.gmra.mrb[0].mxu0 %v655
      %v914 = vpop.f32.mrb[0].mxu0
      %v915 = vadd.f32 0.0, %v914
      %v916 = vpop.f32.mrb[0].mxu0
      %v917 = vpop.f32.mrb[0].mxu0
      %v918 = vadd.f32 0.0, %v917
      %v919 = vpop.f32.mrb[0].mxu0
      %920 = vmatprep.mubr.bf16.mxu0 0
      %921 = vmatmul.mubr.bf16.gmra.mrb[0].mxu0 %v656
      %v922 = vpop.f32.mrb[0].mxu0
      %v923 = vadd.f32 0.0, %v922
      %v924 = vpop.f32.mrb[0].mxu0
      %v925 = vpop.f32.mrb[0].mxu0
      %v926 = vadd.f32 0.0, %v925
      %v927 = vpop.f32.mrb[0].mxu0
      %928 = vmatprep.mubr.bf16.mxu0 0
      %929 = vmatmul.mubr.bf16.gmra.mrb[0].mxu0 %v657
      %v930 = vpop.f32.mrb[0].mxu0
      %v931 = vadd.f32 0.0, %v930
      %v932 = vpop.f32.mrb[0].mxu0
      %v933 = vpop.f32.mrb[0].mxu0
      %v934 = vadd.f32 0.0, %v933
      %v935 = vpop.f32.mrb[0].mxu0
      %936 = vmatprep.mubr.bf16.mxu0 0
      %937 = vmatmul.mubr.bf16.gmra.mrb[0].mxu0 %v658
      %v938 = vpop.f32.mrb[0].mxu0
      %v939 = vadd.f32 0.0, %v938
      %v940 = vpop.f32.mrb[0].mxu0
      %v941 = vpop.f32.mrb[0].mxu0
      %v942 = vadd.f32 0.0, %v941
      %v943 = vpop.f32.mrb[0].mxu0
      %944 = vmatprep.mubr.bf16.mxu0 0
      %945 = vmatmul.mubr.bf16.gmra.mrb[0].mxu0 %v659
      %v946 = vpop.f32.mrb[0].mxu0
      %v947 = vadd.f32 0.0, %v946
      %v948 = vpop.f32.mrb[0].mxu0
      %v949 = vpop.f32.mrb[0].mxu0
      %v950 = vadd.f32 0.0, %v949
      %v951 = vpop.f32.mrb[0].mxu0
      %952 = vmatprep.mubr.bf16.mxu0 0
      %953 = vmatmul.mubr.bf16.gmra.mrb[0].mxu0 %v660
      %v954 = vpop.f32.mrb[0].mxu0
      %v955 = vadd.f32 0.0, %v954
      %v956 = vpop.f32.mrb[0].mxu0
      %v957 = vpop.f32.mrb[0].mxu0
      %v958 = vadd.f32 0.0, %v957
      %v959 = vpop.f32.mrb[0].mxu0
      %960 = vmatprep.mubr.bf16.mxu0 0
      %961 = vmatmul.mubr.bf16.gmra.mrb[0].mxu0 %v661
      %v962 = vpop.f32.mrb[0].mxu0
      %v963 = vadd.f32 0.0, %v962
      %v964 = vpop.f32.mrb[0].mxu0
      %v965 = vpop.f32.mrb[0].mxu0
      %v966 = vadd.f32 0.0, %v965
      %v967 = vpop.f32.mrb[0].mxu0
      %968 = vmatprep.mubr.bf16.mxu0 0
      %969 = vmatmul.mubr.bf16.gmra.mrb[0].mxu0 %v662
      %v970 = vpop.f32.mrb[0].mxu0
      %v971 = vadd.f32 0.0, %v970
      %v972 = vpop.f32.mrb[0].mxu0
      %v973 = vpop.f32.mrb[0].mxu0
      %v974 = vadd.f32 0.0, %v973
      %v975 = vpop.f32.mrb[0].mxu0
      %976 = vmatprep.mubr.bf16.mxu0 0
      %977 = vmatmul.mubr.bf16.gmra.mrb[0].mxu0 %v663
      %v978 = vpop.f32.mrb[0].mxu0
      %v979 = vadd.f32 0.0, %v978
      %v980 = vpop.f32.mrb[0].mxu0
      %v981 = vpop.f32.mrb[0].mxu0
      %v982 = vadd.f32 0.0, %v981
      %v983 = vpop.f32.mrb[0].mxu0
      %984 = vmatprep.mubr.bf16.mxu0 0
      %985 = vmatmul.mubr.bf16.gmra.mrb[0].mxu0 %v664
      %v986 = vpop.f32.mrb[0].mxu0
      %v987 = vadd.f32 0.0, %v986
      %v988 = vpop.f32.mrb[0].mxu0
      %v989 = vpop.f32.mrb[0].mxu0
      %v990 = vadd.f32 0.0, %v989
      %v991 = vpop.f32.mrb[0].mxu0
      %992 = vmatprep.mubr.bf16.mxu0 0
      %993 = vmatmul.mubr.bf16.gmra.mrb[0].mxu0 %v665
      %v994 = vpop.f32.mrb[0].mxu0
      %v995 = vadd.f32 0.0, %v994
      %v996 = vpop.f32.mrb[0].mxu0
      %v997 = vpop.f32.mrb[0].mxu0
      %v998 = vadd.f32 0.0, %v997
      %v999 = vpop.f32.mrb[0].mxu0
      %1000 = vmatprep.mubr.bf16.mxu0 0
      %1001 = vmatmul.mubr.bf16.gmra.mrb[0].mxu0 %v666
      %v1002 = vpop.f32.mrb[0].mxu0
      %v1003 = vadd.f32 0.0, %v1002
      %v1004 = vpop.f32.mrb[0].mxu0
      %v1005 = vpop.f32.mrb[0].mxu0
      %v1006 = vadd.f32 0.0, %v1005
      %v1007 = vpop.f32.mrb[0].mxu0
      %1008 = vmatprep.mubr.bf16.mxu0 0
      %1009 = vmatmul.mubr.bf16.gmra.mrb[0].mxu0 %v667
      %v1010 = vpop.f32.mrb[0].mxu0
      %v1011 = vadd.f32 0.0, %v1010
      %v1012 = vpop.f32.mrb[0].mxu0
      %v1013 = vpop.f32.mrb[0].mxu0
      %v1014 = vadd.f32 0.0, %v1013
      %v1015 = vpop.f32.mrb[0].mxu0
      %1016 = vmatprep.mubr.bf16.mxu0 0
      %1017 = vmatmul.mubr.bf16.gmra.mrb[0].mxu0 %v668
      %v1018 = vpop.f32.mrb[0].mxu0
      %v1019 = vadd.f32 0.0, %v1018
      %v1020 = vpop.f32.mrb[0].mxu0
      %v1021 = vpop.f32.mrb[0].mxu0
      %v1022 = vadd.f32 0.0, %v1021
      %v1023 = vpop.f32.mrb[0].mxu0
      %1024 = vmatprep.mubr.bf16.mxu0 0
      %1025 = vmatmul.mubr.bf16.gmra.mrb[0].mxu0 %v669
      %v1026 = vpop.f32.mrb[0].mxu0
      %v1027 = vadd.f32 0.0, %v1026
      %v1028 = vpop.f32.mrb[0].mxu0
      %v1029 = vpop.f32.mrb[0].mxu0
      %v1030 = vadd.f32 0.0, %v1029
      %v1031 = vpop.f32.mrb[0].mxu0
      %1032 = vmatprep.mubr.bf16.mxu0 0
      %1033 = vmatmul.mubr.bf16.gmra.mrb[0].mxu0 %v670
      %v1034 = vpop.f32.mrb[0].mxu0
      %v1035 = vadd.f32 0.0, %v1034
      %v1036 = vpop.f32.mrb[0].mxu0
      %v1037 = vpop.f32.mrb[0].mxu0
      %v1038 = vadd.f32 0.0, %v1037
      %v1039 = vpop.f32.mrb[0].mxu0
      %1040 = vmatprep.mubr.bf16.mxu0 0
      %1041 = vmatmul.mubr.bf16.gmra.mrb[0].mxu0 %v671
      %v1042 = vpop.f32.mrb[0].mxu0
      %v1043 = vadd.f32 0.0, %v1042
      %v1044 = vpop.f32.mrb[0].mxu0
      %v1045 = vpop.f32.mrb[0].mxu0
      %v1046 = vadd.f32 0.0, %v1045
      %v1047 = vpop.f32.mrb[0].mxu0
      %1048 = vmatprep.mubr.bf16.mxu0 0
      %1049 = vmatmul.mubr.bf16.gmra.mrb[0].mxu0 %v672
      %v1050 = vpop.f32.mrb[0].mxu0
      %v1051 = vadd.f32 0.0, %v1050
      %v1052 = vpop.f32.mrb[0].mxu0
      %v1053 = vpop.f32.mrb[0].mxu0
      %v1054 = vadd.f32 0.0, %v1053
      %v1055 = vpop.f32.mrb[0].mxu0
      %1056 = vmatprep.mubr.bf16.mxu0 0
      %1057 = vmatmul.mubr.bf16.gmra.mrb[0].mxu0 %v673
      %v1058 = vpop.f32.mrb[0].mxu0
      %v1059 = vadd.f32 0.0, %v1058
      %v1060 = vpop.f32.mrb[0].mxu0
      %v1061 = vpop.f32.mrb[0].mxu0
      %v1062 = vadd.f32 0.0, %v1061
      %v1063 = vpop.f32.mrb[0].mxu0
      %1064 = vmatprep.mubr.bf16.mxu0 0
      %1065 = vmatmul.mubr.bf16.gmra.mrb[0].mxu0 %v674
      %v1066 = vpop.f32.mrb[0].mxu0
      %v1067 = vadd.f32 0.0, %v1066
      %v1068 = vpop.f32.mrb[0].mxu0
      %v1069 = vpop.f32.mrb[0].mxu0
      %v1070 = vadd.f32 0.0, %v1069
      %v1071 = vpop.f32.mrb[0].mxu0
      %1072 = vmatprep.mubr.bf16.mxu0 0
      %1073 = vmatmul.mubr.bf16.gmra.mrb[0].mxu0 %v675
      %v1074 = vpop.f32.mrb[0].mxu0
      %v1075 = vadd.f32 0.0, %v1074
      %v1076 = vpop.f32.mrb[0].mxu0
      %v1077 = vpop.f32.mrb[0].mxu0
      %v1078 = vadd.f32 0.0, %v1077
      %v1079 = vpop.f32.mrb[0].mxu0
      %1080 = vdwg.mxu0
      %v1081 = vadd.f32 %v336, %v795
      %v1082 = vadd.f32 %v337, %v798
      %v1083 = vadd.f32 %v338, %v803
      %v1084 = vadd.f32 %v339, %v806
      %v1085 = vadd.f32 %v340, %v811
      %v1086 = vadd.f32 %v341, %v814
      %v1087 = vadd.f32 %v342, %v819
      %v1088 = vadd.f32 %v343, %v822
      %v1089 = vadd.f32 %v344, %v827
      %v1090 = vadd.f32 %v345, %v830
      %v1091 = vadd.f32 %v346, %v835
      %v1092 = vadd.f32 %v347, %v838
      %v1093 = vadd.f32 %v348, %v843
      %v1094 = vadd.f32 %v349, %v846
      %v1095 = vadd.f32 %v350, %v851
      %v1096 = vadd.f32 %v351, %v854
      %v1097 = vadd.f32 %v352, %v859
      %v1098 = vadd.f32 %v353, %v862
      %v1099 = vadd.f32 %v354, %v867
      %v1100 = vadd.f32 %v355, %v870
      %v1101 = vadd.f32 %v356, %v875
      %v1102 = vadd.f32 %v357, %v878
      %v1103 = vadd.f32 %v358, %v883
      %v1104 = vadd.f32 %v359, %v886
      %v1105 = vadd.f32 %v360, %v891
      %v1106 = vadd.f32 %v361, %v894
      %v1107 = vadd.f32 %v362, %v899
      %v1108 = vadd.f32 %v363, %v902
      %v1109 = vadd.f32 %v364, %v907
      %v1110 = vadd.f32 %v365, %v910
      %v1111 = vadd.f32 %v366, %v915
      %v1112 = vadd.f32 %v367, %v918
      %v1113 = vadd.f32 %v368, %v923
      %v1114 = vadd.f32 %v369, %v926
      %v1115 = vadd.f32 %v370, %v931
      %v1116 = vadd.f32 %v371, %v934
      %v1117 = vadd.f32 %v372, %v939
      %v1118 = vadd.f32 %v373, %v942
      %v1119 = vadd.f32 %v374, %v947
      %v1120 = vadd.f32 %v375, %v950
      %v1121 = vadd.f32 %v376, %v955
      %v1122 = vadd.f32 %v377, %v958
      %v1123 = vadd.f32 %v378, %v963
      %v1124 = vadd.f32 %v379, %v966
      %v1125 = vadd.f32 %v380, %v971
      %v1126 = vadd.f32 %v381, %v974
      %v1127 = vadd.f32 %v382, %v979
      %v1128 = vadd.f32 %v383, %v982
      %v1129 = vadd.f32 %v384, %v987
      %v1130 = vadd.f32 %v385, %v990
      %v1131 = vadd.f32 %v386, %v995
      %v1132 = vadd.f32 %v387, %v998
      %v1133 = vadd.f32 %v388, %v1003
      %v1134 = vadd.f32 %v389, %v1006
      %v1135 = vadd.f32 %v390, %v1011
      %v1136 = vadd.f32 %v391, %v1014
      %v1137 = vadd.f32 %v392, %v1019
      %v1138 = vadd.f32 %v393, %v1022
      %v1139 = vadd.f32 %v394, %v1027
      %v1140 = vadd.f32 %v395, %v1030
      %v1141 = vadd.f32 %v396, %v1035
      %v1142 = vadd.f32 %v397, %v1038
      %v1143 = vadd.f32 %v398, %v1043
      %v1144 = vadd.f32 %v399, %v1046
      %v1145 = vadd.f32 %v400, %v1051
      %v1146 = vadd.f32 %v401, %v1054
      %v1147 = vadd.f32 %v402, %v1059
      %v1148 = vadd.f32 %v403, %v1062
      %v1149 = vadd.f32 %v404, %v1067
      %v1150 = vadd.f32 %v405, %v1070
      %v1151 = vadd.f32 %v406, %v1075
      %v1152 = vadd.f32 %v407, %v1078
      %1153 = vst [vmem:[%s257] sm:$0xff] %v1081
      %1154 = vst [vmem:[%s257 + $0x8] sm:$0xff] %v1082
      %1155 = vst [vmem:[%s257 + $0x10] sm:$0xff] %v1083
      %1156 = vst [vmem:[%s257 + $0x18] sm:$0xff] %v1084
      %1157 = vst [vmem:[%s257 + $0x20] sm:$0xff] %v1085
      %1158 = vst [vmem:[%s257 + $0x28] sm:$0xff] %v1086
      %1159 = vst [vmem:[%s257 + $0x30] sm:$0xff] %v1087
      %1160 = vst [vmem:[%s257 + $0x38] sm:$0xff] %v1088
      %1161 = vst [vmem:[%s257 + $0x40] sm:$0xff] %v1089
      %1162 = vst [vmem:[%s257 + $0x48] sm:$0xff] %v1090
      %1163 = vst [vmem:[%s257 + $0x50] sm:$0xff] %v1091
      %1164 = vst [vmem:[%s257 + $0x58] sm:$0xff] %v1092
      %1165 = vst [vmem:[%s257 + $0x60] sm:$0xff] %v1093
      %1166 = vst [vmem:[%s257 + $0x68] sm:$0xff] %v1094
      %1167 = vst [vmem:[%s257 + $0x70] sm:$0xff] %v1095
      %1168 = vst [vmem:[%s257 + $0x78] sm:$0xff] %v1096
      %1169 = vst [vmem:[%s257 + $0x80] sm:$0xff] %v1097
      %1170 = vst [vmem:[%s257 + $0x88] sm:$0xff] %v1098
      %1171 = vst [vmem:[%s257 + $0x90] sm:$0xff] %v1099
      %1172 = vst [vmem:[%s257 + $0x98] sm:$0xff] %v1100
      %1173 = vst [vmem:[%s257 + $0xa0] sm:$0xff] %v1101
      %1174 = vst [vmem:[%s257 + $0xa8] sm:$0xff] %v1102
      %1175 = vst [vmem:[%s257 + $0xb0] sm:$0xff] %v1103
      %1176 = vst [vmem:[%s257 + $0xb8] sm:$0xff] %v1104
      %1177 = vst [vmem:[%s257 + $0xc0] sm:$0xff] %v1105
      %1178 = vst [vmem:[%s257 + $0xc8] sm:$0xff] %v1106
      %1179 = vst [vmem:[%s257 + $0xd0] sm:$0xff] %v1107
      %1180 = vst [vmem:[%s257 + $0xd8] sm:$0xff] %v1108
      %1181 = vst [vmem:[%s257 + $0xe0] sm:$0xff] %v1109
      %1182 = vst [vmem:[%s257 + $0xe8] sm:$0xff] %v1110
      %1183 = vst [vmem:[%s257 + $0xf0] sm:$0xff] %v1111
      %1184 = vst [vmem:[%s257 + $0xf8] sm:$0xff] %v1112
      %1185 = vst [vmem:[%s257 + $0x100] sm:$0xff] %v1113
      %1186 = vst [vmem:[%s257 + $0x108] sm:$0xff] %v1114
      %1187 = vst [vmem:[%s257 + $0x110] sm:$0xff] %v1115
      %1188 = vst [vmem:[%s257 + $0x118] sm:$0xff] %v1116
      %1189 = vst [vmem:[%s257 + $0x120] sm:$0xff] %v1117
      %1190 = vst [vmem:[%s257 + $0x128] sm:$0xff] %v1118
      %1191 = vst [vmem:[%s257 + $0x130] sm:$0xff] %v1119
      %1192 = vst [vmem:[%s257 + $0x138] sm:$0xff] %v1120
      %1193 = vst [vmem:[%s257 + $0x140] sm:$0xff] %v1121
      %1194 = vst [vmem:[%s257 + $0x148] sm:$0xff] %v1122
      %1195 = vst [vmem:[%s257 + $0x150] sm:$0xff] %v1123
      %1196 = vst [vmem:[%s257 + $0x158] sm:$0xff] %v1124
      %1197 = vst [vmem:[%s257 + $0x160] sm:$0xff] %v1125
      %1198 = vst [vmem:[%s257 + $0x168] sm:$0xff] %v1126
      %1199 = vst [vmem:[%s257 + $0x170] sm:$0xff] %v1127
      %1200 = vst [vmem:[%s257 + $0x178] sm:$0xff] %v1128
      %1201 = vst [vmem:[%s257 + $0x180] sm:$0xff] %v1129
      %1202 = vst [vmem:[%s257 + $0x188] sm:$0xff] %v1130
      %1203 = vst [vmem:[%s257 + $0x190] sm:$0xff] %v1131
      %1204 = vst [vmem:[%s257 + $0x198] sm:$0xff] %v1132
      %1205 = vst [vmem:[%s257 + $0x1a0] sm:$0xff] %v1133
      %1206 = vst [vmem:[%s257 + $0x1a8] sm:$0xff] %v1134
      %1207 = vst [vmem:[%s257 + $0x1b0] sm:$0xff] %v1135
      %1208 = vst [vmem:[%s257 + $0x1b8] sm:$0xff] %v1136
      %1209 = vst [vmem:[%s257 + $0x1c0] sm:$0xff] %v1137
      %1210 = vst [vmem:[%s257 + $0x1c8] sm:$0xff] %v1138
      %1211 = vst [vmem:[%s257 + $0x1d0] sm:$0xff] %v1139
      %1212 = vst [vmem:[%s257 + $0x1d8] sm:$0xff] %v1140
      %1213 = vst [vmem:[%s257 + $0x1e0] sm:$0xff] %v1141
      %1214 = vst [vmem:[%s257 + $0x1e8] sm:$0xff] %v1142
      %1215 = vst [vmem:[%s257 + $0x1f0] sm:$0xff] %v1143
      %1216 = vst [vmem:[%s257 + $0x1f8] sm:$0xff] %v1144
      %1217 = vst [vmem:[%s257 + $0x200] sm:$0xff] %v1145
      %1218 = vst [vmem:[%s257 + $0x208] sm:$0xff] %v1146
      %1219 = vst [vmem:[%s257 + $0x210] sm:$0xff] %v1147
      %1220 = vst [vmem:[%s257 + $0x218] sm:$0xff] %v1148
      %1221 = vst [vmem:[%s257 + $0x220] sm:$0xff] %v1149
      %1222 = vst [vmem:[%s257 + $0x228] sm:$0xff] %v1150
      %1223 = vst [vmem:[%s257 + $0x230] sm:$0xff] %v1151
      %1224 = vst [vmem:[%s257 + $0x238] sm:$0xff] %v1152
      // Predicated region
      $region37: #{linear_then_conv_forward.8} parent=31 // pred_check
        %p1225 = pneg %p260
      $region38: #{linear_then_conv_forward.8} parent=31 // pred_check_branch
        %1227 = sbr.rel (%p1225) target = $region40
      $region39: #{linear_then_conv_forward.8} parent=31 // pred_region
        %v1228 = vld [vmem:[%s257] sm:$0xff]
        %v1229 = vld [vmem:[%s257 + $0x8] sm:$0xff]
        %v1230 = vld [vmem:[%s257 + $0x10] sm:$0xff]
        %v1231 = vld [vmem:[%s257 + $0x18] sm:$0xff]
        %v1232 = vld [vmem:[%s257 + $0x20] sm:$0xff]
        %v1233 = vld [vmem:[%s257 + $0x28] sm:$0xff]
        %v1234 = vld [vmem:[%s257 + $0x30] sm:$0xff]
        %v1235 = vld [vmem:[%s257 + $0x38] sm:$0xff]
        %v1236 = vld [vmem:[%s257 + $0x40] sm:$0xff]
        %v1237 = vld [vmem:[%s257 + $0x48] sm:$0xff]
        %v1238 = vld [vmem:[%s257 + $0x50] sm:$0xff]
        %v1239 = vld [vmem:[%s257 + $0x58] sm:$0xff]
        %v1240 = vld [vmem:[%s257 + $0x60] sm:$0xff]
        %v1241 = vld [vmem:[%s257 + $0x68] sm:$0xff]
        %v1242 = vld [vmem:[%s257 + $0x70] sm:$0xff]
        %v1243 = vld [vmem:[%s257 + $0x78] sm:$0xff]
        %v1244 = vld [vmem:[%s257 + $0x80] sm:$0xff]
        %v1245 = vld [vmem:[%s257 + $0x88] sm:$0xff]
        %v1246 = vld [vmem:[%s257 + $0x90] sm:$0xff]
        %v1247 = vld [vmem:[%s257 + $0x98] sm:$0xff]
        %v1248 = vld [vmem:[%s257 + $0xa0] sm:$0xff]
        %v1249 = vld [vmem:[%s257 + $0xa8] sm:$0xff]
        %v1250 = vld [vmem:[%s257 + $0xb0] sm:$0xff]
        %v1251 = vld [vmem:[%s257 + $0xb8] sm:$0xff]
        %v1252 = vld [vmem:[%s257 + $0xc0] sm:$0xff]
        %v1253 = vld [vmem:[%s257 + $0xc8] sm:$0xff]
        %v1254 = vld [vmem:[%s257 + $0xd0] sm:$0xff]
        %v1255 = vld [vmem:[%s257 + $0xd8] sm:$0xff]
        %v1256 = vld [vmem:[%s257 + $0xe0] sm:$0xff]
        %v1257 = vld [vmem:[%s257 + $0xe8] sm:$0xff]
        %v1258 = vld [vmem:[%s257 + $0xf0] sm:$0xff]
        %v1259 = vld [vmem:[%s257 + $0xf8] sm:$0xff]
        %v1260 = vld [vmem:[%s257 + $0x100] sm:$0xff]
        %v1261 = vld [vmem:[%s257 + $0x108] sm:$0xff]
        %v1262 = vld [vmem:[%s257 + $0x110] sm:$0xff]
        %v1263 = vld [vmem:[%s257 + $0x118] sm:$0xff]
        %v1264 = vld [vmem:[%s257 + $0x120] sm:$0xff]
        %v1265 = vld [vmem:[%s257 + $0x128] sm:$0xff]
        %v1266 = vld [vmem:[%s257 + $0x130] sm:$0xff]
        %v1267 = vld [vmem:[%s257 + $0x138] sm:$0xff]
        %v1268 = vld [vmem:[%s257 + $0x140] sm:$0xff]
        %v1269 = vld [vmem:[%s257 + $0x148] sm:$0xff]
        %v1270 = vld [vmem:[%s257 + $0x150] sm:$0xff]
        %v1271 = vld [vmem:[%s257 + $0x158] sm:$0xff]
        %v1272 = vld [vmem:[%s257 + $0x160] sm:$0xff]
        %v1273 = vld [vmem:[%s257 + $0x168] sm:$0xff]
        %v1274 = vld [vmem:[%s257 + $0x170] sm:$0xff]
        %v1275 = vld [vmem:[%s257 + $0x178] sm:$0xff]
        %v1276 = vld [vmem:[%s257 + $0x180] sm:$0xff]
        %v1277 = vld [vmem:[%s257 + $0x188] sm:$0xff]
        %v1278 = vld [vmem:[%s257 + $0x190] sm:$0xff]
        %v1279 = vld [vmem:[%s257 + $0x198] sm:$0xff]
        %v1280 = vld [vmem:[%s257 + $0x1a0] sm:$0xff]
        %v1281 = vld [vmem:[%s257 + $0x1a8] sm:$0xff]
        %v1282 = vld [vmem:[%s257 + $0x1b0] sm:$0xff]
        %v1283 = vld [vmem:[%s257 + $0x1b8] sm:$0xff]
        %v1284 = vld [vmem:[%s257 + $0x1c0] sm:$0xff]
        %v1285 = vld [vmem:[%s257 + $0x1c8] sm:$0xff]
        %v1286 = vld [vmem:[%s257 + $0x1d0] sm:$0xff]
        %v1287 = vld [vmem:[%s257 + $0x1d8] sm:$0xff]
        %v1288 = vld [vmem:[%s257 + $0x1e0] sm:$0xff]
        %v1289 = vld [vmem:[%s257 + $0x1e8] sm:$0xff]
        %v1290 = vld [vmem:[%s257 + $0x1f0] sm:$0xff]
        %v1291 = vld [vmem:[%s257 + $0x1f8] sm:$0xff]
        %v1292 = vld [vmem:[%s257 + $0x200] sm:$0xff]
        %v1293 = vld [vmem:[%s257 + $0x208] sm:$0xff]
        %v1294 = vld [vmem:[%s257 + $0x210] sm:$0xff]
        %v1295 = vld [vmem:[%s257 + $0x218] sm:$0xff]
        %v1296 = vld [vmem:[%s257 + $0x220] sm:$0xff]
        %v1297 = vld [vmem:[%s257 + $0x228] sm:$0xff]
        %v1298 = vld [vmem:[%s257 + $0x230] sm:$0xff]
        %v1299 = vld [vmem:[%s257 + $0x238] sm:$0xff]
        %v1300 = vld [vmem:[%s249] sm:$0x1]
        %v1302 = vlaneseq
        %v1303 = vshrl.u32 %v1302, 7
        %v1304 = vsub.s32 0, %v1303
        %v1305 = vrot.slane %v1300, %v1304
        %v1307 = vadd.f32 %v1228, %v1305
        %v1308 = vadd.f32 %v1229, %v1305
        %v1309 = vadd.f32 %v1230, %v1305
        %v1310 = vadd.f32 %v1231, %v1305
        %v1311 = vadd.f32 %v1232, %v1305
        %v1312 = vadd.f32 %v1233, %v1305
        %v1313 = vadd.f32 %v1234, %v1305
        %v1314 = vadd.f32 %v1235, %v1305
        %v1315 = vadd.f32 %v1236, %v1305
        %v1316 = vadd.f32 %v1237, %v1305
        %v1317 = vadd.f32 %v1238, %v1305
        %v1318 = vadd.f32 %v1239, %v1305
        %v1319 = vadd.f32 %v1240, %v1305
        %v1320 = vadd.f32 %v1241, %v1305
        %v1321 = vadd.f32 %v1242, %v1305
        %v1322 = vadd.f32 %v1243, %v1305
        %v1323 = vadd.f32 %v1244, %v1305
        %v1324 = vadd.f32 %v1245, %v1305
        %v1325 = vadd.f32 %v1246, %v1305
        %v1326 = vadd.f32 %v1247, %v1305
        %v1327 = vadd.f32 %v1248, %v1305
        %v1328 = vadd.f32 %v1249, %v1305
        %v1329 = vadd.f32 %v1250, %v1305
        %v1330 = vadd.f32 %v1251, %v1305
        %v1331 = vadd.f32 %v1252, %v1305
        %v1332 = vadd.f32 %v1253, %v1305
        %v1333 = vadd.f32 %v1254, %v1305
        %v1334 = vadd.f32 %v1255, %v1305
        %v1335 = vadd.f32 %v1256, %v1305
        %v1336 = vadd.f32 %v1257, %v1305
        %v1337 = vadd.f32 %v1258, %v1305
        %v1338 = vadd.f32 %v1259, %v1305
        %v1339 = vadd.f32 %v1260, %v1305
        %v1340 = vadd.f32 %v1261, %v1305
        %v1341 = vadd.f32 %v1262, %v1305
        %v1342 = vadd.f32 %v1263, %v1305
        %v1343 = vadd.f32 %v1264, %v1305
        %v1344 = vadd.f32 %v1265, %v1305
        %v1345 = vadd.f32 %v1266, %v1305
        %v1346 = vadd.f32 %v1267, %v1305
        %v1347 = vadd.f32 %v1268, %v1305
        %v1348 = vadd.f32 %v1269, %v1305
        %v1349 = vadd.f32 %v1270, %v1305
        %v1350 = vadd.f32 %v1271, %v1305
        %v1351 = vadd.f32 %v1272, %v1305
        %v1352 = vadd.f32 %v1273, %v1305
        %v1353 = vadd.f32 %v1274, %v1305
        %v1354 = vadd.f32 %v1275, %v1305
        %v1355 = vadd.f32 %v1276, %v1305
        %v1356 = vadd.f32 %v1277, %v1305
        %v1357 = vadd.f32 %v1278, %v1305
        %v1358 = vadd.f32 %v1279, %v1305
        %v1359 = vadd.f32 %v1280, %v1305
        %v1360 = vadd.f32 %v1281, %v1305
        %v1361 = vadd.f32 %v1282, %v1305
        %v1362 = vadd.f32 %v1283, %v1305
        %v1363 = vadd.f32 %v1284, %v1305
        %v1364 = vadd.f32 %v1285, %v1305
        %v1365 = vadd.f32 %v1286, %v1305
        %v1366 = vadd.f32 %v1287, %v1305
        %v1367 = vadd.f32 %v1288, %v1305
        %v1368 = vadd.f32 %v1289, %v1305
        %v1369 = vadd.f32 %v1290, %v1305
        %v1370 = vadd.f32 %v1291, %v1305
        %v1371 = vadd.f32 %v1292, %v1305
        %v1372 = vadd.f32 %v1293, %v1305
        %v1373 = vadd.f32 %v1294, %v1305
        %v1374 = vadd.f32 %v1295, %v1305
        %v1375 = vadd.f32 %v1296, %v1305
        %v1376 = vadd.f32 %v1297, %v1305
        %v1377 = vadd.f32 %v1298, %v1305
        %v1378 = vadd.f32 %v1299, %v1305
        %v1379 = vmax.f32 %v1307, 0.0
        %v1380 = vmax.f32 %v1308, 0.0
        %v1381 = vmax.f32 %v1309, 0.0
        %v1382 = vmax.f32 %v1310, 0.0
        %v1383 = vmax.f32 %v1311, 0.0
        %v1384 = vmax.f32 %v1312, 0.0
        %v1385 = vmax.f32 %v1313, 0.0
        %v1386 = vmax.f32 %v1314, 0.0
        %v1387 = vmax.f32 %v1315, 0.0
        %v1388 = vmax.f32 %v1316, 0.0
        %v1389 = vmax.f32 %v1317, 0.0
        %v1390 = vmax.f32 %v1318, 0.0
        %v1391 = vmax.f32 %v1319, 0.0
        %v1392 = vmax.f32 %v1320, 0.0
        %v1393 = vmax.f32 %v1321, 0.0
        %v1394 = vmax.f32 %v1322, 0.0
        %v1395 = vmax.f32 %v1323, 0.0
        %v1396 = vmax.f32 %v1324, 0.0
        %v1397 = vmax.f32 %v1325, 0.0
        %v1398 = vmax.f32 %v1326, 0.0
        %v1399 = vmax.f32 %v1327, 0.0
        %v1400 = vmax.f32 %v1328, 0.0
        %v1401 = vmax.f32 %v1329, 0.0
        %v1402 = vmax.f32 %v1330, 0.0
        %v1403 = vmax.f32 %v1331, 0.0
        %v1404 = vmax.f32 %v1332, 0.0
        %v1405 = vmax.f32 %v1333, 0.0
        %v1406 = vmax.f32 %v1334, 0.0
        %v1407 = vmax.f32 %v1335, 0.0
        %v1408 = vmax.f32 %v1336, 0.0
        %v1409 = vmax.f32 %v1337, 0.0
        %v1410 = vmax.f32 %v1338, 0.0
        %v1411 = vmax.f32 %v1339, 0.0
        %v1412 = vmax.f32 %v1340, 0.0
        %v1413 = vmax.f32 %v1341, 0.0
        %v1414 = vmax.f32 %v1342, 0.0
        %v1415 = vmax.f32 %v1343, 0.0
        %v1416 = vmax.f32 %v1344, 0.0
        %v1417 = vmax.f32 %v1345, 0.0
        %v1418 = vmax.f32 %v1346, 0.0
        %v1419 = vmax.f32 %v1347, 0.0
        %v1420 = vmax.f32 %v1348, 0.0
        %v1421 = vmax.f32 %v1349, 0.0
        %v1422 = vmax.f32 %v1350, 0.0
        %v1423 = vmax.f32 %v1351, 0.0
        %v1424 = vmax.f32 %v1352, 0.0
        %v1425 = vmax.f32 %v1353, 0.0
        %v1426 = vmax.f32 %v1354, 0.0
        %v1427 = vmax.f32 %v1355, 0.0
        %v1428 = vmax.f32 %v1356, 0.0
        %v1429 = vmax.f32 %v1357, 0.0
        %v1430 = vmax.f32 %v1358, 0.0
        %v1431 = vmax.f32 %v1359, 0.0
        %v1432 = vmax.f32 %v1360, 0.0
        %v1433 = vmax.f32 %v1361, 0.0
        %v1434 = vmax.f32 %v1362, 0.0
        %v1435 = vmax.f32 %v1363, 0.0
        %v1436 = vmax.f32 %v1364, 0.0
        %v1437 = vmax.f32 %v1365, 0.0
        %v1438 = vmax.f32 %v1366, 0.0
        %v1439 = vmax.f32 %v1367, 0.0
        %v1440 = vmax.f32 %v1368, 0.0
        %v1441 = vmax.f32 %v1369, 0.0
        %v1442 = vmax.f32 %v1370, 0.0
        %v1443 = vmax.f32 %v1371, 0.0
        %v1444 = vmax.f32 %v1372, 0.0
        %v1445 = vmax.f32 %v1373, 0.0
        %v1446 = vmax.f32 %v1374, 0.0
        %v1447 = vmax.f32 %v1375, 0.0
        %v1448 = vmax.f32 %v1376, 0.0
        %v1449 = vmax.f32 %v1377, 0.0
        %v1450 = vmax.f32 %v1378, 0.0
        %1451 = vst [vmem:[%s257] sm:$0xff] %v1379
        %1452 = vst [vmem:[%s257 + $0x8] sm:$0xff] %v1380
        %1453 = vst [vmem:[%s257 + $0x10] sm:$0xff] %v1381
        %1454 = vst [vmem:[%s257 + $0x18] sm:$0xff] %v1382
        %1455 = vst [vmem:[%s257 + $0x20] sm:$0xff] %v1383
        %1456 = vst [vmem:[%s257 + $0x28] sm:$0xff] %v1384
        %1457 = vst [vmem:[%s257 + $0x30] sm:$0xff] %v1385
        %1458 = vst [vmem:[%s257 + $0x38] sm:$0xff] %v1386
        %1459 = vst [vmem:[%s257 + $0x40] sm:$0xff] %v1387
        %1460 = vst [vmem:[%s257 + $0x48] sm:$0xff] %v1388
        %1461 = vst [vmem:[%s257 + $0x50] sm:$0xff] %v1389
        %1462 = vst [vmem:[%s257 + $0x58] sm:$0xff] %v1390
        %1463 = vst [vmem:[%s257 + $0x60] sm:$0xff] %v1391
        %1464 = vst [vmem:[%s257 + $0x68] sm:$0xff] %v1392
        %1465 = vst [vmem:[%s257 + $0x70] sm:$0xff] %v1393
        %1466 = vst [vmem:[%s257 + $0x78] sm:$0xff] %v1394
        %1467 = vst [vmem:[%s257 + $0x80] sm:$0xff] %v1395
        %1468 = vst [vmem:[%s257 + $0x88] sm:$0xff] %v1396
        %1469 = vst [vmem:[%s257 + $0x90] sm:$0xff] %v1397
        %1470 = vst [vmem:[%s257 + $0x98] sm:$0xff] %v1398
        %1471 = vst [vmem:[%s257 + $0xa0] sm:$0xff] %v1399
        %1472 = vst [vmem:[%s257 + $0xa8] sm:$0xff] %v1400
        %1473 = vst [vmem:[%s257 + $0xb0] sm:$0xff] %v1401
        %1474 = vst [vmem:[%s257 + $0xb8] sm:$0xff] %v1402
        %1475 = vst [vmem:[%s257 + $0xc0] sm:$0xff] %v1403
        %1476 = vst [vmem:[%s257 + $0xc8] sm:$0xff] %v1404
        %1477 = vst [vmem:[%s257 + $0xd0] sm:$0xff] %v1405
        %1478 = vst [vmem:[%s257 + $0xd8] sm:$0xff] %v1406
        %1479 = vst [vmem:[%s257 + $0xe0] sm:$0xff] %v1407
        %1480 = vst [vmem:[%s257 + $0xe8] sm:$0xff] %v1408
        %1481 = vst [vmem:[%s257 + $0xf0] sm:$0xff] %v1409
        %1482 = vst [vmem:[%s257 + $0xf8] sm:$0xff] %v1410
        %1483 = vst [vmem:[%s257 + $0x100] sm:$0xff] %v1411
        %1484 = vst [vmem:[%s257 + $0x108] sm:$0xff] %v1412
        %1485 = vst [vmem:[%s257 + $0x110] sm:$0xff] %v1413
        %1486 = vst [vmem:[%s257 + $0x118] sm:$0xff] %v1414
        %1487 = vst [vmem:[%s257 + $0x120] sm:$0xff] %v1415
        %1488 = vst [vmem:[%s257 + $0x128] sm:$0xff] %v1416
        %1489 = vst [vmem:[%s257 + $0x130] sm:$0xff] %v1417
        %1490 = vst [vmem:[%s257 + $0x138] sm:$0xff] %v1418
        %1491 = vst [vmem:[%s257 + $0x140] sm:$0xff] %v1419
        %1492 = vst [vmem:[%s257 + $0x148] sm:$0xff] %v1420
        %1493 = vst [vmem:[%s257 + $0x150] sm:$0xff] %v1421
        %1494 = vst [vmem:[%s257 + $0x158] sm:$0xff] %v1422
        %1495 = vst [vmem:[%s257 + $0x160] sm:$0xff] %v1423
        %1496 = vst [vmem:[%s257 + $0x168] sm:$0xff] %v1424
        %1497 = vst [vmem:[%s257 + $0x170] sm:$0xff] %v1425
        %1498 = vst [vmem:[%s257 + $0x178] sm:$0xff] %v1426
        %1499 = vst [vmem:[%s257 + $0x180] sm:$0xff] %v1427
        %1500 = vst [vmem:[%s257 + $0x188] sm:$0xff] %v1428
        %1501 = vst [vmem:[%s257 + $0x190] sm:$0xff] %v1429
        %1502 = vst [vmem:[%s257 + $0x198] sm:$0xff] %v1430
        %1503 = vst [vmem:[%s257 + $0x1a0] sm:$0xff] %v1431
        %1504 = vst [vmem:[%s257 + $0x1a8] sm:$0xff] %v1432
        %1505 = vst [vmem:[%s257 + $0x1b0] sm:$0xff] %v1433
        %1506 = vst [vmem:[%s257 + $0x1b8] sm:$0xff] %v1434
        %1507 = vst [vmem:[%s257 + $0x1c0] sm:$0xff] %v1435
        %1508 = vst [vmem:[%s257 + $0x1c8] sm:$0xff] %v1436
        %1509 = vst [vmem:[%s257 + $0x1d0] sm:$0xff] %v1437
        %1510 = vst [vmem:[%s257 + $0x1d8] sm:$0xff] %v1438
        %1511 = vst [vmem:[%s257 + $0x1e0] sm:$0xff] %v1439
        %1512 = vst [vmem:[%s257 + $0x1e8] sm:$0xff] %v1440
        %1513 = vst [vmem:[%s257 + $0x1f0] sm:$0xff] %v1441
        %1514 = vst [vmem:[%s257 + $0x1f8] sm:$0xff] %v1442
        %1515 = vst [vmem:[%s257 + $0x200] sm:$0xff] %v1443
        %1516 = vst [vmem:[%s257 + $0x208] sm:$0xff] %v1444
        %1517 = vst [vmem:[%s257 + $0x210] sm:$0xff] %v1445
        %1518 = vst [vmem:[%s257 + $0x218] sm:$0xff] %v1446
        %1519 = vst [vmem:[%s257 + $0x220] sm:$0xff] %v1447
        %1520 = vst [vmem:[%s257 + $0x228] sm:$0xff] %v1448
        %1521 = vst [vmem:[%s257 + $0x230] sm:$0xff] %v1449
        %1522 = vst [vmem:[%s257 + $0x238] sm:$0xff] %v1450
      $region40: #{linear_then_conv_forward.8} parent=31 // pred_fallthru
        _
      %s1523 = smul.u32 72, %s19
      %p1524 = scmp.lt.s32.totalorder %s1523, 143
      %s1525 = scalar_select %p1524, %s1523, 143
      %p1526 = scmp.lt.s32.totalorder %s20, 0
      %s1527 = scalar_select %p1526, %s20, 0
      %s1528 = sadd.s32 %s1527, %s1525
      %s1529 = smul.addr %s1528, 8
      %s1530 = scalar_lea.vmem %s3, %s1529
      // Predicated region
      $region41: #{linear_then_conv_forward.8} parent=31 // pred_check
        %p1531 = pneg %p135
      $region42: #{linear_then_conv_forward.8} parent=31 // pred_check_branch
        %1533 = sbr.rel (%p1531) target = $region44
      $region43: #{linear_then_conv_forward.8} parent=31 // pred_region
        %s1534 = smul.u32 72, %s19
      $region44: #{linear_then_conv_forward.8} parent=31 // pred_fallthru
        _
    $region32: #{linear_then_conv_forward.8} parent=5 // pred_fallthru
      _
    %p1535 = scmp.le.s32.totalorder 2, %s9
    // Predicated region
    $region45: #{linear_then_conv_forward.8} parent=5 // pred_check
      %p1536 = pneg %p1535
    $region46: #{linear_then_conv_forward.8} parent=5 // pred_check_branch
      %1538 = sbr.rel (%p1536) target = $region48
    $region47: #{linear_then_conv_forward.8} parent=5 // pred_region
      %s1539 = ssub.s32 %s9, 2
      // Predicated region
      $region49: #{linear_then_conv_forward.8} parent=47 // pred_check
        %p1540 = pneg %p141
      $region50: #{linear_then_conv_forward.8} parent=47 // pred_check_branch
        %1542 = sbr.rel (%p1540) target = $region52
      $region51: #{linear_then_conv_forward.8} parent=47 // pred_region
        %s1543 = smul.u32 72, %s22
        %p1544 = scmp.lt.s32.totalorder %s1543, 143
        %s1545 = scalar_select %p1544, %s1543, 143
        %p1546 = scmp.lt.s32.totalorder %s23, 0
        %s1547 = scalar_select %p1546, %s23, 0
        %s1548 = sadd.s32 %s1547, %s1545
        %s1549 = smul.addr %s1548, 8
        %s1550 = scalar_lea.vmem %s3, %s1549
      $region52: #{linear_then_conv_forward.8} parent=47 // pred_fallthru
        _
    $region48: #{linear_then_conv_forward.8} parent=5 // pred_fallthru
      _
  $region6: #{linear_then_conv_forward.8} parent=0 // loop_footer
    %s13 = sadd.s32 1, %s9
  $region7: #{linear_then_conv_forward.8} parent=0 // loop_footer_branch
    %8 = sbr.rel target = $region3
  $region8: #{linear_then_conv_forward.8} parent=0 // loop_exit
    _

// kernel: linear_then_conv_forward.9
$region0: #{linear_then_conv_forward.9}
  #allocation0 [shape = 'u32[]', space=smem, size = 0x4, offset = 0x4, fixed_abs, tag = 'smem constant byte address 0x4 - core index']
  #allocation1 [shape = 'u32[144,128]{1,0:T(1,128)}', space=vmem, size = 0x12000, scoped, tag = 'internal scratch']
  %s0 = inlined_call_operand.vmem [shape: f32[24,2,12,2,20], index: 0, kind: input, shape index: {}]
  %s1 = inlined_call_operand.vmem [shape: f32[24,12,20], index: 1, kind: output, shape index: {}]
  %s2 = sld [smem:[#allocation0]]
  $region14: #{linear_then_conv_forward.9} parent=0
    _
  %s4 = ssub.s32 1, %s2
  %s5 = scalar_select 0, %s4, %s2
  // Predicated region
  $region2: #{linear_then_conv_forward.9} parent=0 // pred_check
    _
  $region3: #{linear_then_conv_forward.9} parent=0 // pred_check_branch
    %7 = sbr.rel (0) target = $region5
  $region4: #{linear_then_conv_forward.9} parent=0 // pred_region
    _
  $region5: #{linear_then_conv_forward.9} parent=0 // pred_fallthru
    _
  %v8 = vld [vmem:[%s0] sm:$0x3]
  %v9 = vld [vmem:[%s0 + $0x2] sm:$0x3]
  %v10 = vld [vmem:[%s0 + $0x4] sm:$0x3]
  %v11 = vld [vmem:[%s0 + $0x6] sm:$0x3]
  %v12 = vld [vmem:[%s0 + $0x8] sm:$0x3]
  %v13 = vld [vmem:[%s0 + $0xa] sm:$0x3]
  %v14 = vld [vmem:[%s0 + $0xc] sm:$0x3]
  %v15 = vld [vmem:[%s0 + $0xe] sm:$0x3]
  %v16 = vld [vmem:[%s0 + $0x10] sm:$0x3]
  %v17 = vld [vmem:[%s0 + $0x12] sm:$0x3]
  %v18 = vld [vmem:[%s0 + $0x14] sm:$0x3]
  %v19 = vld [vmem:[%s0 + $0x16] sm:$0x3]
  %v20 = vld [vmem:[%s0 + $0x18] sm:$0x3]
  %v21 = vld [vmem:[%s0 + $0x1a] sm:$0x3]
  %v22 = vld [vmem:[%s0 + $0x1c] sm:$0x3]
  %v23 = vld [vmem:[%s0 + $0x1e] sm:$0x3]
  %v24 = vld [vmem:[%s0 + $0x20] sm:$0x3]
  %v25 = vld [vmem:[%s0 + $0x22] sm:$0x3]
  %v26 = vld [vmem:[%s0 + $0x24] sm:$0x3]
  %v27 = vld [vmem:[%s0 + $0x26] sm:$0x3]
  %v28 = vld [vmem:[%s0 + $0x28] sm:$0x3]
  %v29 = vld [vmem:[%s0 + $0x2a] sm:$0x3]
  %v30 = vld [vmem:[%s0 + $0x2c] sm:$0x3]
  %v31 = vld [vmem:[%s0 + $0x2e] sm:$0x3]
  %v32 = vld [vmem:[%s0 + $0x30] sm:$0x3]
  %v33 = vld [vmem:[%s0 + $0x32] sm:$0x3]
  %v34 = vld [vmem:[%s0 + $0x34] sm:$0x3]
  %v35 = vld [vmem:[%s0 + $0x36] sm:$0x3]
  %v36 = vld [vmem:[%s0 + $0x38] sm:$0x3]
  %v37 = vld [vmem:[%s0 + $0x3a] sm:$0x3]
  %v38 = vld [vmem:[%s0 + $0x3c] sm:$0x3]
  %v39 = vld [vmem:[%s0 + $0x3e] sm:$0x3]
  %v40 = vld [vmem:[%s0 + $0x40] sm:$0x3]
  %v41 = vld [vmem:[%s0 + $0x42] sm:$0x3]
  %v42 = vld [vmem:[%s0 + $0x44] sm:$0x3]
  %v43 = vld [vmem:[%s0 + $0x46] sm:$0x3]
  %v44 = vld [vmem:[%s0 + $0x48] sm:$0x3]
  %v45 = vld [vmem:[%s0 + $0x4a] sm:$0x3]
  %v46 = vld [vmem:[%s0 + $0x4c] sm:$0x3]
  %v47 = vld [vmem:[%s0 + $0x4e] sm:$0x3]
  %v48 = vld [vmem:[%s0 + $0x50] sm:$0x3]
  %v49 = vld [vmem:[%s0 + $0x52] sm:$0x3]
  %v50 = vld [vmem:[%s0 + $0x54] sm:$0x3]
  %v51 = vld [vmem:[%s0 + $0x56] sm:$0x3]
  %v52 = vld [vmem:[%s0 + $0x58] sm:$0x3]
  %v53 = vld [vmem:[%s0 + $0x5a] sm:$0x3]
  %v54 = vld [vmem:[%s0 + $0x5c] sm:$0x3]
  %v55 = vld [vmem:[%s0 + $0x5e] sm:$0x3]
  %v56 = vld [vmem:[%s0 + $0x60] sm:$0x3]
  %v57 = vld [vmem:[%s0 + $0x62] sm:$0x3]
  %v58 = vld [vmem:[%s0 + $0x64] sm:$0x3]
  %v59 = vld [vmem:[%s0 + $0x66] sm:$0x3]
  %v60 = vld [vmem:[%s0 + $0x68] sm:$0x3]
  %v61 = vld [vmem:[%s0 + $0x6a] sm:$0x3]
  %v62 = vld [vmem:[%s0 + $0x6c] sm:$0x3]
  %v63 = vld [vmem:[%s0 + $0x6e] sm:$0x3]
  %v64 = vld [vmem:[%s0 + $0x70] sm:$0x3]
  %v65 = vld [vmem:[%s0 + $0x72] sm:$0x3]
  %v66 = vld [vmem:[%s0 + $0x74] sm:$0x3]
  %v67 = vld [vmem:[%s0 + $0x76] sm:$0x3]
  %v68 = vld [vmem:[%s0 + $0x78] sm:$0x3]
  %v69 = vld [vmem:[%s0 + $0x7a] sm:$0x3]
  %v70 = vld [vmem:[%s0 + $0x7c] sm:$0x3]
  %v71 = vld [vmem:[%s0 + $0x7e] sm:$0x3]
  %v72 = vld [vmem:[%s0 + $0x80] sm:$0x3]
  %v73 = vld [vmem:[%s0 + $0x82] sm:$0x3]
  %v74 = vld [vmem:[%s0 + $0x84] sm:$0x3]
  %v75 = vld [vmem:[%s0 + $0x86] sm:$0x3]
  %v76 = vld [vmem:[%s0 + $0x88] sm:$0x3]
  %v77 = vld [vmem:[%s0 + $0x8a] sm:$0x3]
  %v78 = vld [vmem:[%s0 + $0x8c] sm:$0x3]
  %v79 = vld [vmem:[%s0 + $0x8e] sm:$0x3]
  %v80 = vld [vmem:[%s0 + $0x90] sm:$0x3]
  %v81 = vld [vmem:[%s0 + $0x92] sm:$0x3]
  %v82 = vld [vmem:[%s0 + $0x94] sm:$0x3]
  %v83 = vld [vmem:[%s0 + $0x96] sm:$0x3]
  %v84 = vld [vmem:[%s0 + $0x98] sm:$0x3]
  %v85 = vld [vmem:[%s0 + $0x9a] sm:$0x3]
  %v86 = vld [vmem:[%s0 + $0x9c] sm:$0x3]
  %v87 = vld [vmem:[%s0 + $0x9e] sm:$0x3]
  %v88 = vld [vmem:[%s0 + $0xa0] sm:$0x3]
  %v89 = vld [vmem:[%s0 + $0xa2] sm:$0x3]
  %v90 = vld [vmem:[%s0 + $0xa4] sm:$0x3]
  %v91 = vld [vmem:[%s0 + $0xa6] sm:$0x3]
  %v92 = vld [vmem:[%s0 + $0xa8] sm:$0x3]
  %v93 = vld [vmem:[%s0 + $0xaa] sm:$0x3]
  %v94 = vld [vmem:[%s0 + $0xac] sm:$0x3]
  %v95 = vld [vmem:[%s0 + $0xae] sm:$0x3]
  %v96 = vld [vmem:[%s0 + $0xb0] sm:$0x3]
  %v97 = vld [vmem:[%s0 + $0xb2] sm:$0x3]
  %v98 = vld [vmem:[%s0 + $0xb4] sm:$0x3]
  %v99 = vld [vmem:[%s0 + $0xb6] sm:$0x3]
  %v100 = vld [vmem:[%s0 + $0xb8] sm:$0x3]
  %v101 = vld [vmem:[%s0 + $0xba] sm:$0x3]
  %v102 = vld [vmem:[%s0 + $0xbc] sm:$0x3]
  %v103 = vld [vmem:[%s0 + $0xbe] sm:$0x3]
  %v104 = vld [vmem:[%s0 + $0xc0] sm:$0x3]
  %v105 = vld [vmem:[%s0 + $0xc2] sm:$0x3]
  %v106 = vld [vmem:[%s0 + $0xc4] sm:$0x3]
  %v107 = vld [vmem:[%s0 + $0xc6] sm:$0x3]
  %v108 = vld [vmem:[%s0 + $0xc8] sm:$0x3]
  %v109 = vld [vmem:[%s0 + $0xca] sm:$0x3]
  %v110 = vld [vmem:[%s0 + $0xcc] sm:$0x3]
  %v111 = vld [vmem:[%s0 + $0xce] sm:$0x3]
  %v112 = vld [vmem:[%s0 + $0xd0] sm:$0x3]
  %v113 = vld [vmem:[%s0 + $0xd2] sm:$0x3]
  %v114 = vld [vmem:[%s0 + $0xd4] sm:$0x3]
  %v115 = vld [vmem:[%s0 + $0xd6] sm:$0x3]
  %v116 = vld [vmem:[%s0 + $0xd8] sm:$0x3]
  %v117 = vld [vmem:[%s0 + $0xda] sm:$0x3]
  %v118 = vld [vmem:[%s0 + $0xdc] sm:$0x3]
  %v119 = vld [vmem:[%s0 + $0xde] sm:$0x3]
  %v120 = vld [vmem:[%s0 + $0xe0] sm:$0x3]
  %v121 = vld [vmem:[%s0 + $0xe2] sm:$0x3]
  %v122 = vld [vmem:[%s0 + $0xe4] sm:$0x3]
  %v123 = vld [vmem:[%s0 + $0xe6] sm:$0x3]
  %v124 = vld [vmem:[%s0 + $0xe8] sm:$0x3]
  %v125 = vld [vmem:[%s0 + $0xea] sm:$0x3]
  %v126 = vld [vmem:[%s0 + $0xec] sm:$0x3]
  %v127 = vld [vmem:[%s0 + $0xee] sm:$0x3]
  %v128 = vld [vmem:[%s0 + $0xf0] sm:$0x3]
  %v129 = vld [vmem:[%s0 + $0xf2] sm:$0x3]
  %v130 = vld [vmem:[%s0 + $0xf4] sm:$0x3]
  %v131 = vld [vmem:[%s0 + $0xf6] sm:$0x3]
  %v132 = vld [vmem:[%s0 + $0xf8] sm:$0x3]
  %v133 = vld [vmem:[%s0 + $0xfa] sm:$0x3]
  %v134 = vld [vmem:[%s0 + $0xfc] sm:$0x3]
  %v135 = vld [vmem:[%s0 + $0xfe] sm:$0x3]
  %v136 = vld [vmem:[%s0 + $0x100] sm:$0x3]
  %v137 = vld [vmem:[%s0 + $0x102] sm:$0x3]
  %v138 = vld [vmem:[%s0 + $0x104] sm:$0x3]
  %v139 = vld [vmem:[%s0 + $0x106] sm:$0x3]
  %v140 = vld [vmem:[%s0 + $0x108] sm:$0x3]
  %v141 = vld [vmem:[%s0 + $0x10a] sm:$0x3]
  %v142 = vld [vmem:[%s0 + $0x10c] sm:$0x3]
  %v143 = vld [vmem:[%s0 + $0x10e] sm:$0x3]
  %v144 = vld [vmem:[%s0 + $0x110] sm:$0x3]
  %v145 = vld [vmem:[%s0 + $0x112] sm:$0x3]
  %v146 = vld [vmem:[%s0 + $0x114] sm:$0x3]
  %v147 = vld [vmem:[%s0 + $0x116] sm:$0x3]
  %v148 = vld [vmem:[%s0 + $0x118] sm:$0x3]
  %v149 = vld [vmem:[%s0 + $0x11a] sm:$0x3]
  %v150 = vld [vmem:[%s0 + $0x11c] sm:$0x3]
  %v151 = vld [vmem:[%s0 + $0x11e] sm:$0x3]
  %v152 = vld [vmem:[%s0 + $0x120] sm:$0x3]
  %v153 = vld [vmem:[%s0 + $0x122] sm:$0x3]
  %v154 = vld [vmem:[%s0 + $0x124] sm:$0x3]
  %v155 = vld [vmem:[%s0 + $0x126] sm:$0x3]
  %v156 = vld [vmem:[%s0 + $0x128] sm:$0x3]
  %v157 = vld [vmem:[%s0 + $0x12a] sm:$0x3]
  %v158 = vld [vmem:[%s0 + $0x12c] sm:$0x3]
  %v159 = vld [vmem:[%s0 + $0x12e] sm:$0x3]
  %v160 = vld [vmem:[%s0 + $0x130] sm:$0x3]
  %v161 = vld [vmem:[%s0 + $0x132] sm:$0x3]
  %v162 = vld [vmem:[%s0 + $0x134] sm:$0x3]
  %v163 = vld [vmem:[%s0 + $0x136] sm:$0x3]
  %v164 = vld [vmem:[%s0 + $0x138] sm:$0x3]
  %v165 = vld [vmem:[%s0 + $0x13a] sm:$0x3]
  %v166 = vld [vmem:[%s0 + $0x13c] sm:$0x3]
  %v167 = vld [vmem:[%s0 + $0x13e] sm:$0x3]
  %v168 = vld [vmem:[%s0 + $0x140] sm:$0x3]
  %v169 = vld [vmem:[%s0 + $0x142] sm:$0x3]
  %v170 = vld [vmem:[%s0 + $0x144] sm:$0x3]
  %v171 = vld [vmem:[%s0 + $0x146] sm:$0x3]
  %v172 = vld [vmem:[%s0 + $0x148] sm:$0x3]
  %v173 = vld [vmem:[%s0 + $0x14a] sm:$0x3]
  %v174 = vld [vmem:[%s0 + $0x14c] sm:$0x3]
  %v175 = vld [vmem:[%s0 + $0x14e] sm:$0x3]
  %v176 = vld [vmem:[%s0 + $0x150] sm:$0x3]
  %v177 = vld [vmem:[%s0 + $0x152] sm:$0x3]
  %v178 = vld [vmem:[%s0 + $0x154] sm:$0x3]
  %v179 = vld [vmem:[%s0 + $0x156] sm:$0x3]
  %v180 = vld [vmem:[%s0 + $0x158] sm:$0x3]
  %v181 = vld [vmem:[%s0 + $0x15a] sm:$0x3]
  %v182 = vld [vmem:[%s0 + $0x15c] sm:$0x3]
  %v183 = vld [vmem:[%s0 + $0x15e] sm:$0x3]
  %v184 = vld [vmem:[%s0 + $0x160] sm:$0x3]
  %v185 = vld [vmem:[%s0 + $0x162] sm:$0x3]
  %v186 = vld [vmem:[%s0 + $0x164] sm:$0x3]
  %v187 = vld [vmem:[%s0 + $0x166] sm:$0x3]
  %v188 = vld [vmem:[%s0 + $0x168] sm:$0x3]
  %v189 = vld [vmem:[%s0 + $0x16a] sm:$0x3]
  %v190 = vld [vmem:[%s0 + $0x16c] sm:$0x3]
  %v191 = vld [vmem:[%s0 + $0x16e] sm:$0x3]
  %v192 = vld [vmem:[%s0 + $0x170] sm:$0x3]
  %v193 = vld [vmem:[%s0 + $0x172] sm:$0x3]
  %v194 = vld [vmem:[%s0 + $0x174] sm:$0x3]
  %v195 = vld [vmem:[%s0 + $0x176] sm:$0x3]
  %v196 = vld [vmem:[%s0 + $0x178] sm:$0x3]
  %v197 = vld [vmem:[%s0 + $0x17a] sm:$0x3]
  %v198 = vld [vmem:[%s0 + $0x17c] sm:$0x3]
  %v199 = vld [vmem:[%s0 + $0x17e] sm:$0x3]
  %v200 = vld [vmem:[%s0 + $0x180] sm:$0x3]
  %v201 = vld [vmem:[%s0 + $0x182] sm:$0x3]
  %v202 = vld [vmem:[%s0 + $0x184] sm:$0x3]
  %v203 = vld [vmem:[%s0 + $0x186] sm:$0x3]
  %v204 = vld [vmem:[%s0 + $0x188] sm:$0x3]
  %v205 = vld [vmem:[%s0 + $0x18a] sm:$0x3]
  %v206 = vld [vmem:[%s0 + $0x18c] sm:$0x3]
  %v207 = vld [vmem:[%s0 + $0x18e] sm:$0x3]
  %v208 = vld [vmem:[%s0 + $0x190] sm:$0x3]
  %v209 = vld [vmem:[%s0 + $0x192] sm:$0x3]
  %v210 = vld [vmem:[%s0 + $0x194] sm:$0x3]
  %v211 = vld [vmem:[%s0 + $0x196] sm:$0x3]
  %v212 = vld [vmem:[%s0 + $0x198] sm:$0x3]
  %v213 = vld [vmem:[%s0 + $0x19a] sm:$0x3]
  %v214 = vld [vmem:[%s0 + $0x19c] sm:$0x3]
  %v215 = vld [vmem:[%s0 + $0x19e] sm:$0x3]
  %v216 = vld [vmem:[%s0 + $0x1a0] sm:$0x3]
  %v217 = vld [vmem:[%s0 + $0x1a2] sm:$0x3]
  %v218 = vld [vmem:[%s0 + $0x1a4] sm:$0x3]
  %v219 = vld [vmem:[%s0 + $0x1a6] sm:$0x3]
  %v220 = vld [vmem:[%s0 + $0x1a8] sm:$0x3]
  %v221 = vld [vmem:[%s0 + $0x1aa] sm:$0x3]
  %v222 = vld [vmem:[%s0 + $0x1ac] sm:$0x3]
  %v223 = vld [vmem:[%s0 + $0x1ae] sm:$0x3]
  %v224 = vld [vmem:[%s0 + $0x1b0] sm:$0x3]
  %v225 = vld [vmem:[%s0 + $0x1b2] sm:$0x3]
  %v226 = vld [vmem:[%s0 + $0x1b4] sm:$0x3]
  %v227 = vld [vmem:[%s0 + $0x1b6] sm:$0x3]
  %v228 = vld [vmem:[%s0 + $0x1b8] sm:$0x3]
  %v229 = vld [vmem:[%s0 + $0x1ba] sm:$0x3]
  %v230 = vld [vmem:[%s0 + $0x1bc] sm:$0x3]
  %v231 = vld [vmem:[%s0 + $0x1be] sm:$0x3]
  %v232 = vld [vmem:[%s0 + $0x1c0] sm:$0x3]
  %v233 = vld [vmem:[%s0 + $0x1c2] sm:$0x3]
  %v234 = vld [vmem:[%s0 + $0x1c4] sm:$0x3]
  %v235 = vld [vmem:[%s0 + $0x1c6] sm:$0x3]
  %v236 = vld [vmem:[%s0 + $0x1c8] sm:$0x3]
  %v237 = vld [vmem:[%s0 + $0x1ca] sm:$0x3]
  %v238 = vld [vmem:[%s0 + $0x1cc] sm:$0x3]
  %v239 = vld [vmem:[%s0 + $0x1ce] sm:$0x3]
  %v240 = vld [vmem:[%s0 + $0x1d0] sm:$0x3]
  %v241 = vld [vmem:[%s0 + $0x1d2] sm:$0x3]
  %v242 = vld [vmem:[%s0 + $0x1d4] sm:$0x3]
  %v243 = vld [vmem:[%s0 + $0x1d6] sm:$0x3]
  %v244 = vld [vmem:[%s0 + $0x1d8] sm:$0x3]
  %v245 = vld [vmem:[%s0 + $0x1da] sm:$0x3]
  %v246 = vld [vmem:[%s0 + $0x1dc] sm:$0x3]
  %v247 = vld [vmem:[%s0 + $0x1de] sm:$0x3]
  %v248 = vld [vmem:[%s0 + $0x1e0] sm:$0x3]
  %v249 = vld [vmem:[%s0 + $0x1e2] sm:$0x3]
  %v250 = vld [vmem:[%s0 + $0x1e4] sm:$0x3]
  %v251 = vld [vmem:[%s0 + $0x1e6] sm:$0x3]
  %v252 = vld [vmem:[%s0 + $0x1e8] sm:$0x3]
  %v253 = vld [vmem:[%s0 + $0x1ea] sm:$0x3]
  %v254 = vld [vmem:[%s0 + $0x1ec] sm:$0x3]
  %v255 = vld [vmem:[%s0 + $0x1ee] sm:$0x3]
  %v256 = vld [vmem:[%s0 + $0x1f0] sm:$0x3]
  %v257 = vld [vmem:[%s0 + $0x1f2] sm:$0x3]
  %v258 = vld [vmem:[%s0 + $0x1f4] sm:$0x3]
  %v259 = vld [vmem:[%s0 + $0x1f6] sm:$0x3]
  %v260 = vld [vmem:[%s0 + $0x1f8] sm:$0x3]
  %v261 = vld [vmem:[%s0 + $0x1fa] sm:$0x3]
  %v262 = vld [vmem:[%s0 + $0x1fc] sm:$0x3]
  %v263 = vld [vmem:[%s0 + $0x1fe] sm:$0x3]
  %v264 = vld [vmem:[%s0 + $0x200] sm:$0x3]
  %v265 = vld [vmem:[%s0 + $0x202] sm:$0x3]
  %v266 = vld [vmem:[%s0 + $0x204] sm:$0x3]
  %v267 = vld [vmem:[%s0 + $0x206] sm:$0x3]
  %v268 = vld [vmem:[%s0 + $0x208] sm:$0x3]
  %v269 = vld [vmem:[%s0 + $0x20a] sm:$0x3]
  %v270 = vld [vmem:[%s0 + $0x20c] sm:$0x3]
  %v271 = vld [vmem:[%s0 + $0x20e] sm:$0x3]
  %v272 = vld [vmem:[%s0 + $0x210] sm:$0x3]
  %v273 = vld [vmem:[%s0 + $0x212] sm:$0x3]
  %v274 = vld [vmem:[%s0 + $0x214] sm:$0x3]
  %v275 = vld [vmem:[%s0 + $0x216] sm:$0x3]
  %v276 = vld [vmem:[%s0 + $0x218] sm:$0x3]
  %v277 = vld [vmem:[%s0 + $0x21a] sm:$0x3]
  %v278 = vld [vmem:[%s0 + $0x21c] sm:$0x3]
  %v279 = vld [vmem:[%s0 + $0x21e] sm:$0x3]
  %v280 = vld [vmem:[%s0 + $0x220] sm:$0x3]
  %v281 = vld [vmem:[%s0 + $0x222] sm:$0x3]
  %v282 = vld [vmem:[%s0 + $0x224] sm:$0x3]
  %v283 = vld [vmem:[%s0 + $0x226] sm:$0x3]
  %v284 = vld [vmem:[%s0 + $0x228] sm:$0x3]
  %v285 = vld [vmem:[%s0 + $0x22a] sm:$0x3]
  %v286 = vld [vmem:[%s0 + $0x22c] sm:$0x3]
  %v287 = vld [vmem:[%s0 + $0x22e] sm:$0x3]
  %v288 = vld [vmem:[%s0 + $0x230] sm:$0x3]
  %v289 = vld [vmem:[%s0 + $0x232] sm:$0x3]
  %v290 = vld [vmem:[%s0 + $0x234] sm:$0x3]
  %v291 = vld [vmem:[%s0 + $0x236] sm:$0x3]
  %v292 = vld [vmem:[%s0 + $0x238] sm:$0x3]
  %v293 = vld [vmem:[%s0 + $0x23a] sm:$0x3]
  %v294 = vld [vmem:[%s0 + $0x23c] sm:$0x3]
  %v295 = vld [vmem:[%s0 + $0x23e] sm:$0x3]
  %v296 = vld [vmem:[%s0 + $0x240] sm:$0x3]
  %v297 = vld [vmem:[%s0 + $0x242] sm:$0x3]
  %v298 = vld [vmem:[%s0 + $0x244] sm:$0x3]
  %v299 = vld [vmem:[%s0 + $0x246] sm:$0x3]
  %v300 = vld [vmem:[%s0 + $0x248] sm:$0x3]
  %v301 = vld [vmem:[%s0 + $0x24a] sm:$0x3]
  %v302 = vld [vmem:[%s0 + $0x24c] sm:$0x3]
  %v303 = vld [vmem:[%s0 + $0x24e] sm:$0x3]
  %v304 = vld [vmem:[%s0 + $0x250] sm:$0x3]
  %v305 = vld [vmem:[%s0 + $0x252] sm:$0x3]
  %v306 = vld [vmem:[%s0 + $0x254] sm:$0x3]
  %v307 = vld [vmem:[%s0 + $0x256] sm:$0x3]
  %v308 = vld [vmem:[%s0 + $0x258] sm:$0x3]
  %v309 = vld [vmem:[%s0 + $0x25a] sm:$0x3]
  %v310 = vld [vmem:[%s0 + $0x25c] sm:$0x3]
  %v311 = vld [vmem:[%s0 + $0x25e] sm:$0x3]
  %v312 = vld [vmem:[%s0 + $0x260] sm:$0x3]
  %v313 = vld [vmem:[%s0 + $0x262] sm:$0x3]
  %v314 = vld [vmem:[%s0 + $0x264] sm:$0x3]
  %v315 = vld [vmem:[%s0 + $0x266] sm:$0x3]
  %v316 = vld [vmem:[%s0 + $0x268] sm:$0x3]
  %v317 = vld [vmem:[%s0 + $0x26a] sm:$0x3]
  %v318 = vld [vmem:[%s0 + $0x26c] sm:$0x3]
  %v319 = vld [vmem:[%s0 + $0x26e] sm:$0x3]
  %v320 = vld [vmem:[%s0 + $0x270] sm:$0x3]
  %v321 = vld [vmem:[%s0 + $0x272] sm:$0x3]
  %v322 = vld [vmem:[%s0 + $0x274] sm:$0x3]
  %v323 = vld [vmem:[%s0 + $0x276] sm:$0x3]
  %v324 = vld [vmem:[%s0 + $0x278] sm:$0x3]
  %v325 = vld [vmem:[%s0 + $0x27a] sm:$0x3]
  %v326 = vld [vmem:[%s0 + $0x27c] sm:$0x3]
  %v327 = vld [vmem:[%s0 + $0x27e] sm:$0x3]
  %v328 = vld [vmem:[%s0 + $0x280] sm:$0x3]
  %v329 = vld [vmem:[%s0 + $0x282] sm:$0x3]
  %v330 = vld [vmem:[%s0 + $0x284] sm:$0x3]
  %v331 = vld [vmem:[%s0 + $0x286] sm:$0x3]
  %v332 = vld [vmem:[%s0 + $0x288] sm:$0x3]
  %v333 = vld [vmem:[%s0 + $0x28a] sm:$0x3]
  %v334 = vld [vmem:[%s0 + $0x28c] sm:$0x3]
  %v335 = vld [vmem:[%s0 + $0x28e] sm:$0x3]
  %v336 = vld [vmem:[%s0 + $0x290] sm:$0x3]
  %v337 = vld [vmem:[%s0 + $0x292] sm:$0x3]
  %v338 = vld [vmem:[%s0 + $0x294] sm:$0x3]
  %v339 = vld [vmem:[%s0 + $0x296] sm:$0x3]
  %v340 = vld [vmem:[%s0 + $0x298] sm:$0x3]
  %v341 = vld [vmem:[%s0 + $0x29a] sm:$0x3]
  %v342 = vld [vmem:[%s0 + $0x29c] sm:$0x3]
  %v343 = vld [vmem:[%s0 + $0x29e] sm:$0x3]
  %v344 = vld [vmem:[%s0 + $0x2a0] sm:$0x3]
  %v345 = vld [vmem:[%s0 + $0x2a2] sm:$0x3]
  %v346 = vld [vmem:[%s0 + $0x2a4] sm:$0x3]
  %v347 = vld [vmem:[%s0 + $0x2a6] sm:$0x3]
  %v348 = vld [vmem:[%s0 + $0x2a8] sm:$0x3]
  %v349 = vld [vmem:[%s0 + $0x2aa] sm:$0x3]
  %v350 = vld [vmem:[%s0 + $0x2ac] sm:$0x3]
  %v351 = vld [vmem:[%s0 + $0x2ae] sm:$0x3]
  %v352 = vld [vmem:[%s0 + $0x2b0] sm:$0x3]
  %v353 = vld [vmem:[%s0 + $0x2b2] sm:$0x3]
  %v354 = vld [vmem:[%s0 + $0x2b4] sm:$0x3]
  %v355 = vld [vmem:[%s0 + $0x2b6] sm:$0x3]
  %v356 = vld [vmem:[%s0 + $0x2b8] sm:$0x3]
  %v357 = vld [vmem:[%s0 + $0x2ba] sm:$0x3]
  %v358 = vld [vmem:[%s0 + $0x2bc] sm:$0x3]
  %v359 = vld [vmem:[%s0 + $0x2be] sm:$0x3]
  %v360 = vld [vmem:[%s0 + $0x2c0] sm:$0x3]
  %v361 = vld [vmem:[%s0 + $0x2c2] sm:$0x3]
  %v362 = vld [vmem:[%s0 + $0x2c4] sm:$0x3]
  %v363 = vld [vmem:[%s0 + $0x2c6] sm:$0x3]
  %v364 = vld [vmem:[%s0 + $0x2c8] sm:$0x3]
  %v365 = vld [vmem:[%s0 + $0x2ca] sm:$0x3]
  %v366 = vld [vmem:[%s0 + $0x2cc] sm:$0x3]
  %v367 = vld [vmem:[%s0 + $0x2ce] sm:$0x3]
  %v368 = vld [vmem:[%s0 + $0x2d0] sm:$0x3]
  %v369 = vld [vmem:[%s0 + $0x2d2] sm:$0x3]
  %v370 = vld [vmem:[%s0 + $0x2d4] sm:$0x3]
  %v371 = vld [vmem:[%s0 + $0x2d6] sm:$0x3]
  %v372 = vld [vmem:[%s0 + $0x2d8] sm:$0x3]
  %v373 = vld [vmem:[%s0 + $0x2da] sm:$0x3]
  %v374 = vld [vmem:[%s0 + $0x2dc] sm:$0x3]
  %v375 = vld [vmem:[%s0 + $0x2de] sm:$0x3]
  %v376 = vld [vmem:[%s0 + $0x2e0] sm:$0x3]
  %v377 = vld [vmem:[%s0 + $0x2e2] sm:$0x3]
  %v378 = vld [vmem:[%s0 + $0x2e4] sm:$0x3]
  %v379 = vld [vmem:[%s0 + $0x2e6] sm:$0x3]
  %v380 = vld [vmem:[%s0 + $0x2e8] sm:$0x3]
  %v381 = vld [vmem:[%s0 + $0x2ea] sm:$0x3]
  %v382 = vld [vmem:[%s0 + $0x2ec] sm:$0x3]
  %v383 = vld [vmem:[%s0 + $0x2ee] sm:$0x3]
  %v384 = vld [vmem:[%s0 + $0x2f0] sm:$0x3]
  %v385 = vld [vmem:[%s0 + $0x2f2] sm:$0x3]
  %v386 = vld [vmem:[%s0 + $0x2f4] sm:$0x3]
  %v387 = vld [vmem:[%s0 + $0x2f6] sm:$0x3]
  %v388 = vld [vmem:[%s0 + $0x2f8] sm:$0x3]
  %v389 = vld [vmem:[%s0 + $0x2fa] sm:$0x3]
  %v390 = vld [vmem:[%s0 + $0x2fc] sm:$0x3]
  %v391 = vld [vmem:[%s0 + $0x2fe] sm:$0x3]
  %v392 = vld [vmem:[%s0 + $0x300] sm:$0x3]
  %v393 = vld [vmem:[%s0 + $0x302] sm:$0x3]
  %v394 = vld [vmem:[%s0 + $0x304] sm:$0x3]
  %v395 = vld [vmem:[%s0 + $0x306] sm:$0x3]
  %v396 = vld [vmem:[%s0 + $0x308] sm:$0x3]
  %v397 = vld [vmem:[%s0 + $0x30a] sm:$0x3]
  %v398 = vld [vmem:[%s0 + $0x30c] sm:$0x3]
  %v399 = vld [vmem:[%s0 + $0x30e] sm:$0x3]
  %v400 = vld [vmem:[%s0 + $0x310] sm:$0x3]
  %v401 = vld [vmem:[%s0 + $0x312] sm:$0x3]
  %v402 = vld [vmem:[%s0 + $0x314] sm:$0x3]
  %v403 = vld [vmem:[%s0 + $0x316] sm:$0x3]
  %v404 = vld [vmem:[%s0 + $0x318] sm:$0x3]
  %v405 = vld [vmem:[%s0 + $0x31a] sm:$0x3]
  %v406 = vld [vmem:[%s0 + $0x31c] sm:$0x3]
  %v407 = vld [vmem:[%s0 + $0x31e] sm:$0x3]
  %v408 = vld [vmem:[%s0 + $0x320] sm:$0x3]
  %v409 = vld [vmem:[%s0 + $0x322] sm:$0x3]
  %v410 = vld [vmem:[%s0 + $0x324] sm:$0x3]
  %v411 = vld [vmem:[%s0 + $0x326] sm:$0x3]
  %v412 = vld [vmem:[%s0 + $0x328] sm:$0x3]
  %v413 = vld [vmem:[%s0 + $0x32a] sm:$0x3]
  %v414 = vld [vmem:[%s0 + $0x32c] sm:$0x3]
  %v415 = vld [vmem:[%s0 + $0x32e] sm:$0x3]
  %v416 = vld [vmem:[%s0 + $0x330] sm:$0x3]
  %v417 = vld [vmem:[%s0 + $0x332] sm:$0x3]
  %v418 = vld [vmem:[%s0 + $0x334] sm:$0x3]
  %v419 = vld [vmem:[%s0 + $0x336] sm:$0x3]
  %v420 = vld [vmem:[%s0 + $0x338] sm:$0x3]
  %v421 = vld [vmem:[%s0 + $0x33a] sm:$0x3]
  %v422 = vld [vmem:[%s0 + $0x33c] sm:$0x3]
  %v423 = vld [vmem:[%s0 + $0x33e] sm:$0x3]
  %v424 = vld [vmem:[%s0 + $0x340] sm:$0x3]
  %v425 = vld [vmem:[%s0 + $0x342] sm:$0x3]
  %v426 = vld [vmem:[%s0 + $0x344] sm:$0x3]
  %v427 = vld [vmem:[%s0 + $0x346] sm:$0x3]
  %v428 = vld [vmem:[%s0 + $0x348] sm:$0x3]
  %v429 = vld [vmem:[%s0 + $0x34a] sm:$0x3]
  %v430 = vld [vmem:[%s0 + $0x34c] sm:$0x3]
  %v431 = vld [vmem:[%s0 + $0x34e] sm:$0x3]
  %v432 = vld [vmem:[%s0 + $0x350] sm:$0x3]
  %v433 = vld [vmem:[%s0 + $0x352] sm:$0x3]
  %v434 = vld [vmem:[%s0 + $0x354] sm:$0x3]
  %v435 = vld [vmem:[%s0 + $0x356] sm:$0x3]
  %v436 = vld [vmem:[%s0 + $0x358] sm:$0x3]
  %v437 = vld [vmem:[%s0 + $0x35a] sm:$0x3]
  %v438 = vld [vmem:[%s0 + $0x35c] sm:$0x3]
  %v439 = vld [vmem:[%s0 + $0x35e] sm:$0x3]
  %v440 = vld [vmem:[%s0 + $0x360] sm:$0x3]
  %v441 = vld [vmem:[%s0 + $0x362] sm:$0x3]
  %v442 = vld [vmem:[%s0 + $0x364] sm:$0x3]
  %v443 = vld [vmem:[%s0 + $0x366] sm:$0x3]
  %v444 = vld [vmem:[%s0 + $0x368] sm:$0x3]
  %v445 = vld [vmem:[%s0 + $0x36a] sm:$0x3]
  %v446 = vld [vmem:[%s0 + $0x36c] sm:$0x3]
  %v447 = vld [vmem:[%s0 + $0x36e] sm:$0x3]
  %v448 = vld [vmem:[%s0 + $0x370] sm:$0x3]
  %v449 = vld [vmem:[%s0 + $0x372] sm:$0x3]
  %v450 = vld [vmem:[%s0 + $0x374] sm:$0x3]
  %v451 = vld [vmem:[%s0 + $0x376] sm:$0x3]
  %v452 = vld [vmem:[%s0 + $0x378] sm:$0x3]
  %v453 = vld [vmem:[%s0 + $0x37a] sm:$0x3]
  %v454 = vld [vmem:[%s0 + $0x37c] sm:$0x3]
  %v455 = vld [vmem:[%s0 + $0x37e] sm:$0x3]
  %v456 = vld [vmem:[%s0 + $0x380] sm:$0x3]
  %v457 = vld [vmem:[%s0 + $0x382] sm:$0x3]
  %v458 = vld [vmem:[%s0 + $0x384] sm:$0x3]
  %v459 = vld [vmem:[%s0 + $0x386] sm:$0x3]
  %v460 = vld [vmem:[%s0 + $0x388] sm:$0x3]
  %v461 = vld [vmem:[%s0 + $0x38a] sm:$0x3]
  %v462 = vld [vmem:[%s0 + $0x38c] sm:$0x3]
  %v463 = vld [vmem:[%s0 + $0x38e] sm:$0x3]
  %v464 = vld [vmem:[%s0 + $0x390] sm:$0x3]
  %v465 = vld [vmem:[%s0 + $0x392] sm:$0x3]
  %v466 = vld [vmem:[%s0 + $0x394] sm:$0x3]
  %v467 = vld [vmem:[%s0 + $0x396] sm:$0x3]
  %v468 = vld [vmem:[%s0 + $0x398] sm:$0x3]
  %v469 = vld [vmem:[%s0 + $0x39a] sm:$0x3]
  %v470 = vld [vmem:[%s0 + $0x39c] sm:$0x3]
  %v471 = vld [vmem:[%s0 + $0x39e] sm:$0x3]
  %v472 = vld [vmem:[%s0 + $0x3a0] sm:$0x3]
  %v473 = vld [vmem:[%s0 + $0x3a2] sm:$0x3]
  %v474 = vld [vmem:[%s0 + $0x3a4] sm:$0x3]
  %v475 = vld [vmem:[%s0 + $0x3a6] sm:$0x3]
  %v476 = vld [vmem:[%s0 + $0x3a8] sm:$0x3]
  %v477 = vld [vmem:[%s0 + $0x3aa] sm:$0x3]
  %v478 = vld [vmem:[%s0 + $0x3ac] sm:$0x3]
  %v479 = vld [vmem:[%s0 + $0x3ae] sm:$0x3]
  %v480 = vld [vmem:[%s0 + $0x3b0] sm:$0x3]
  %v481 = vld [vmem:[%s0 + $0x3b2] sm:$0x3]
  %v482 = vld [vmem:[%s0 + $0x3b4] sm:$0x3]
  %v483 = vld [vmem:[%s0 + $0x3b6] sm:$0x3]
  %v484 = vld [vmem:[%s0 + $0x3b8] sm:$0x3]
  %v485 = vld [vmem:[%s0 + $0x3ba] sm:$0x3]
  %v486 = vld [vmem:[%s0 + $0x3bc] sm:$0x3]
  %v487 = vld [vmem:[%s0 + $0x3be] sm:$0x3]
  %v488 = vld [vmem:[%s0 + $0x3c0] sm:$0x3]
  %v489 = vld [vmem:[%s0 + $0x3c2] sm:$0x3]
  %v490 = vld [vmem:[%s0 + $0x3c4] sm:$0x3]
  %v491 = vld [vmem:[%s0 + $0x3c6] sm:$0x3]
  %v492 = vld [vmem:[%s0 + $0x3c8] sm:$0x3]
  %v493 = vld [vmem:[%s0 + $0x3ca] sm:$0x3]
  %v494 = vld [vmem:[%s0 + $0x3cc] sm:$0x3]
  %v495 = vld [vmem:[%s0 + $0x3ce] sm:$0x3]
  %v496 = vld [vmem:[%s0 + $0x3d0] sm:$0x3]
  %v497 = vld [vmem:[%s0 + $0x3d2] sm:$0x3]
  %v498 = vld [vmem:[%s0 + $0x3d4] sm:$0x3]
  %v499 = vld [vmem:[%s0 + $0x3d6] sm:$0x3]
  %v500 = vld [vmem:[%s0 + $0x3d8] sm:$0x3]
  %v501 = vld [vmem:[%s0 + $0x3da] sm:$0x3]
  %v502 = vld [vmem:[%s0 + $0x3dc] sm:$0x3]
  %v503 = vld [vmem:[%s0 + $0x3de] sm:$0x3]
  %v504 = vld [vmem:[%s0 + $0x3e0] sm:$0x3]
  %v505 = vld [vmem:[%s0 + $0x3e2] sm:$0x3]
  %v506 = vld [vmem:[%s0 + $0x3e4] sm:$0x3]
  %v507 = vld [vmem:[%s0 + $0x3e6] sm:$0x3]
  %v508 = vld [vmem:[%s0 + $0x3e8] sm:$0x3]
  %v509 = vld [vmem:[%s0 + $0x3ea] sm:$0x3]
  %v510 = vld [vmem:[%s0 + $0x3ec] sm:$0x3]
  %v511 = vld [vmem:[%s0 + $0x3ee] sm:$0x3]
  %v512 = vld [vmem:[%s0 + $0x3f0] sm:$0x3]
  %v513 = vld [vmem:[%s0 + $0x3f2] sm:$0x3]
  %v514 = vld [vmem:[%s0 + $0x3f4] sm:$0x3]
  %v515 = vld [vmem:[%s0 + $0x3f6] sm:$0x3]
  %v516 = vld [vmem:[%s0 + $0x3f8] sm:$0x3]
  %v517 = vld [vmem:[%s0 + $0x3fa] sm:$0x3]
  %v518 = vld [vmem:[%s0 + $0x3fc] sm:$0x3]
  %v519 = vld [vmem:[%s0 + $0x3fe] sm:$0x3]
  %v520 = vld [vmem:[%s0 + $0x400] sm:$0x3]
  %v521 = vld [vmem:[%s0 + $0x402] sm:$0x3]
  %v522 = vld [vmem:[%s0 + $0x404] sm:$0x3]
  %v523 = vld [vmem:[%s0 + $0x406] sm:$0x3]
  %v524 = vld [vmem:[%s0 + $0x408] sm:$0x3]
  %v525 = vld [vmem:[%s0 + $0x40a] sm:$0x3]
  %v526 = vld [vmem:[%s0 + $0x40c] sm:$0x3]
  %v527 = vld [vmem:[%s0 + $0x40e] sm:$0x3]
  %v528 = vld [vmem:[%s0 + $0x410] sm:$0x3]
  %v529 = vld [vmem:[%s0 + $0x412] sm:$0x3]
  %v530 = vld [vmem:[%s0 + $0x414] sm:$0x3]
  %v531 = vld [vmem:[%s0 + $0x416] sm:$0x3]
  %v532 = vld [vmem:[%s0 + $0x418] sm:$0x3]
  %v533 = vld [vmem:[%s0 + $0x41a] sm:$0x3]
  %v534 = vld [vmem:[%s0 + $0x41c] sm:$0x3]
  %v535 = vld [vmem:[%s0 + $0x41e] sm:$0x3]
  %v536 = vld [vmem:[%s0 + $0x420] sm:$0x3]
  %v537 = vld [vmem:[%s0 + $0x422] sm:$0x3]
  %v538 = vld [vmem:[%s0 + $0x424] sm:$0x3]
  %v539 = vld [vmem:[%s0 + $0x426] sm:$0x3]
  %v540 = vld [vmem:[%s0 + $0x428] sm:$0x3]
  %v541 = vld [vmem:[%s0 + $0x42a] sm:$0x3]
  %v542 = vld [vmem:[%s0 + $0x42c] sm:$0x3]
  %v543 = vld [vmem:[%s0 + $0x42e] sm:$0x3]
  %v544 = vld [vmem:[%s0 + $0x430] sm:$0x3]
  %v545 = vld [vmem:[%s0 + $0x432] sm:$0x3]
  %v546 = vld [vmem:[%s0 + $0x434] sm:$0x3]
  %v547 = vld [vmem:[%s0 + $0x436] sm:$0x3]
  %v548 = vld [vmem:[%s0 + $0x438] sm:$0x3]
  %v549 = vld [vmem:[%s0 + $0x43a] sm:$0x3]
  %v550 = vld [vmem:[%s0 + $0x43c] sm:$0x3]
  %v551 = vld [vmem:[%s0 + $0x43e] sm:$0x3]
  %v552 = vld [vmem:[%s0 + $0x440] sm:$0x3]
  %v553 = vld [vmem:[%s0 + $0x442] sm:$0x3]
  %v554 = vld [vmem:[%s0 + $0x444] sm:$0x3]
  %v555 = vld [vmem:[%s0 + $0x446] sm:$0x3]
  %v556 = vld [vmem:[%s0 + $0x448] sm:$0x3]
  %v557 = vld [vmem:[%s0 + $0x44a] sm:$0x3]
  %v558 = vld [vmem:[%s0 + $0x44c] sm:$0x3]
  %v559 = vld [vmem:[%s0 + $0x44e] sm:$0x3]
  %v560 = vld [vmem:[%s0 + $0x450] sm:$0x3]
  %v561 = vld [vmem:[%s0 + $0x452] sm:$0x3]
  %v562 = vld [vmem:[%s0 + $0x454] sm:$0x3]
  %v563 = vld [vmem:[%s0 + $0x456] sm:$0x3]
  %v564 = vld [vmem:[%s0 + $0x458] sm:$0x3]
  %v565 = vld [vmem:[%s0 + $0x45a] sm:$0x3]
  %v566 = vld [vmem:[%s0 + $0x45c] sm:$0x3]
  %v567 = vld [vmem:[%s0 + $0x45e] sm:$0x3]
  %v568 = vld [vmem:[%s0 + $0x460] sm:$0x3]
  %v569 = vld [vmem:[%s0 + $0x462] sm:$0x3]
  %v570 = vld [vmem:[%s0 + $0x464] sm:$0x3]
  %v571 = vld [vmem:[%s0 + $0x466] sm:$0x3]
  %v572 = vld [vmem:[%s0 + $0x468] sm:$0x3]
  %v573 = vld [vmem:[%s0 + $0x46a] sm:$0x3]
  %v574 = vld [vmem:[%s0 + $0x46c] sm:$0x3]
  %v575 = vld [vmem:[%s0 + $0x46e] sm:$0x3]
  %v576 = vld [vmem:[%s0 + $0x470] sm:$0x3]
  %v577 = vld [vmem:[%s0 + $0x472] sm:$0x3]
  %v578 = vld [vmem:[%s0 + $0x474] sm:$0x3]
  %v579 = vld [vmem:[%s0 + $0x476] sm:$0x3]
  %v580 = vld [vmem:[%s0 + $0x478] sm:$0x3]
  %v581 = vld [vmem:[%s0 + $0x47a] sm:$0x3]
  %v582 = vld [vmem:[%s0 + $0x47c] sm:$0x3]
  %v583 = vld [vmem:[%s0 + $0x47e] sm:$0x3]
  %vm584 = vcmask 156672
  %v585 = vsel %vm584, %v8, -inf
  %v586 = vsel %vm584, %v20, -inf
  %v587 = vmax.f32 %v585, %v586
  %v588 = vsel %vm584, %v9, -inf
  %v589 = vsel %vm584, %v21, -inf
  %v590 = vmax.f32 %v588, %v589
  %v591 = vsel %vm584, %v10, -inf
  %v592 = vsel %vm584, %v22, -inf
  %v593 = vmax.f32 %v591, %v592
  %v594 = vsel %vm584, %v11, -inf
  %v595 = vsel %vm584, %v23, -inf
  %v596 = vmax.f32 %v594, %v595
  %v597 = vsel %vm584, %v12, -inf
  %v598 = vsel %vm584, %v24, -inf
  %v599 = vmax.f32 %v597, %v598
  %v600 = vsel %vm584, %v13, -inf
  %v601 = vsel %vm584, %v25, -inf
  %v602 = vmax.f32 %v600, %v601
  %v603 = vsel %vm584, %v14, -inf
  %v604 = vsel %vm584, %v26, -inf
  %v605 = vmax.f32 %v603, %v604
  %v606 = vsel %vm584, %v15, -inf
  %v607 = vsel %vm584, %v27, -inf
  %v608 = vmax.f32 %v606, %v607
  %v609 = vsel %vm584, %v16, -inf
  %v610 = vsel %vm584, %v28, -inf
  %v611 = vmax.f32 %v609, %v610
  %v612 = vsel %vm584, %v17, -inf
  %v613 = vsel %vm584, %v29, -inf
  %v614 = vmax.f32 %v612, %v613
  %v615 = vsel %vm584, %v18, -inf
  %v616 = vsel %vm584, %v30, -inf
  %v617 = vmax.f32 %v615, %v616
  %v618 = vsel %vm584, %v19, -inf
  %v619 = vsel %vm584, %v31, -inf
  %v620 = vmax.f32 %v618, %v619
  %v621 = vsel %vm584, %v32, -inf
  %v622 = vsel %vm584, %v44, -inf
  %v623 = vmax.f32 %v621, %v622
  %v624 = vsel %vm584, %v33, -inf
  %v625 = vsel %vm584, %v45, -inf
  %v626 = vmax.f32 %v624, %v625
  %v627 = vsel %vm584, %v34, -inf
  %v628 = vsel %vm584, %v46, -inf
  %v629 = vmax.f32 %v627, %v628
  %v630 = vsel %vm584, %v35, -inf
  %v631 = vsel %vm584, %v47, -inf
  %v632 = vmax.f32 %v630, %v631
  %v633 = vsel %vm584, %v36, -inf
  %v634 = vsel %vm584, %v48, -inf
  %v635 = vmax.f32 %v633, %v634
  %v636 = vsel %vm584, %v37, -inf
  %v637 = vsel %vm584, %v49, -inf
  %v638 = vmax.f32 %v636, %v637
  %v639 = vsel %vm584, %v38, -inf
  %v640 = vsel %vm584, %v50, -inf
  %v641 = vmax.f32 %v639, %v640
  %v642 = vsel %vm584, %v39, -inf
  %v643 = vsel %vm584, %v51, -inf
  %v644 = vmax.f32 %v642, %v643
  %v645 = vsel %vm584, %v40, -inf
  %v646 = vsel %vm584, %v52, -inf
  %v647 = vmax.f32 %v645, %v646
  %v648 = vsel %vm584, %v41, -inf
  %v649 = vsel %vm584, %v53, -inf
  %v650 = vmax.f32 %v648, %v649
  %v651 = vsel %vm584, %v42, -inf
  %v652 = vsel %vm584, %v54, -inf
  %v653 = vmax.f32 %v651, %v652
  %v654 = vsel %vm584, %v43, -inf
  %v655 = vsel %vm584, %v55, -inf
  %v656 = vmax.f32 %v654, %v655
  %v657 = vsel %vm584, %v56, -inf
  %v658 = vsel %vm584, %v68, -inf
  %v659 = vmax.f32 %v657, %v658
  %v660 = vsel %vm584, %v57, -inf
  %v661 = vsel %vm584, %v69, -inf
  %v662 = vmax.f32 %v660, %v661
  %v663 = vsel %vm584, %v58, -inf
  %v664 = vsel %vm584, %v70, -inf
  %v665 = vmax.f32 %v663, %v664
  %v666 = vsel %vm584, %v59, -inf
  %v667 = vsel %vm584, %v71, -inf
  %v668 = vmax.f32 %v666, %v667
  %v669 = vsel %vm584, %v60, -inf
  %v670 = vsel %vm584, %v72, -inf
  %v671 = vmax.f32 %v669, %v670
  %v672 = vsel %vm584, %v61, -inf
  %v673 = vsel %vm584, %v73, -inf
  %v674 = vmax.f32 %v672, %v673
  %v675 = vsel %vm584, %v62, -inf
  %v676 = vsel %vm584, %v74, -inf
  %v677 = vmax.f32 %v675, %v676
  %v678 = vsel %vm584, %v63, -inf
  %v679 = vsel %vm584, %v75, -inf
  %v680 = vmax.f32 %v678, %v679
  %v681 = vsel %vm584, %v64, -inf
  %v682 = vsel %vm584, %v76, -inf
  %v683 = vmax.f32 %v681, %v682
  %v684 = vsel %vm584, %v65, -inf
  %v685 = vsel %vm584, %v77, -inf
  %v686 = vmax.f32 %v684, %v685
  %v687 = vsel %vm584, %v66, -inf
  %v688 = vsel %vm584, %v78, -inf
  %v689 = vmax.f32 %v687, %v688
  %v690 = vsel %vm584, %v67, -inf
  %v691 = vsel %vm584, %v79, -inf
  %v692 = vmax.f32 %v690, %v691
  %v693 = vsel %vm584, %v80, -inf
  %v694 = vsel %vm584, %v92, -inf
  %v695 = vmax.f32 %v693, %v694
  %v696 = vsel %vm584, %v81, -inf
  %v697 = vsel %vm584, %v93, -inf
  %v698 = vmax.f32 %v696, %v697
  %v699 = vsel %vm584, %v82, -inf
  %v700 = vsel %vm584, %v94, -inf
  %v701 = vmax.f32 %v699, %v700
  %v702 = vsel %vm584, %v83, -inf
  %v703 = vsel %vm584, %v95, -inf
  %v704 = vmax.f32 %v702, %v703
  %v705 = vsel %vm584, %v84, -inf
  %v706 = vsel %vm584, %v96, -inf
  %v707 = vmax.f32 %v705, %v706
  %v708 = vsel %vm584, %v85, -inf
  %v709 = vsel %vm584, %v97, -inf
  %v710 = vmax.f32 %v708, %v709
  %v711 = vsel %vm584, %v86, -inf
  %v712 = vsel %vm584, %v98, -inf
  %v713 = vmax.f32 %v711, %v712
  %v714 = vsel %vm584, %v87, -inf
  %v715 = vsel %vm584, %v99, -inf
  %v716 = vmax.f32 %v714, %v715
  %v717 = vsel %vm584, %v88, -inf
  %v718 = vsel %vm584, %v100, -inf
  %v719 = vmax.f32 %v717, %v718
  %v720 = vsel %vm584, %v89, -inf
  %v721 = vsel %vm584, %v101, -inf
  %v722 = vmax.f32 %v720, %v721
  %v723 = vsel %vm584, %v90, -inf
  %v724 = vsel %vm584, %v102, -inf
  %v725 = vmax.f32 %v723, %v724
  %v726 = vsel %vm584, %v91, -inf
  %v727 = vsel %vm584, %v103, -inf
  %v728 = vmax.f32 %v726, %v727
  %v729 = vsel %vm584, %v104, -inf
  %v730 = vsel %vm584, %v116, -inf
  %v731 = vmax.f32 %v729, %v730
  %v732 = vsel %vm584, %v105, -inf
  %v733 = vsel %vm584, %v117, -inf
  %v734 = vmax.f32 %v732, %v733
  %v735 = vsel %vm584, %v106, -inf
  %v736 = vsel %vm584, %v118, -inf
  %v737 = vmax.f32 %v735, %v736
  %v738 = vsel %vm584, %v107, -inf
  %v739 = vsel %vm584, %v119, -inf
  %v740 = vmax.f32 %v738, %v739
  %v741 = vsel %vm584, %v108, -inf
  %v742 = vsel %vm584, %v120, -inf
  %v743 = vmax.f32 %v741, %v742
  %v744 = vsel %vm584, %v109, -inf
  %v745 = vsel %vm584, %v121, -inf
  %v746 = vmax.f32 %v744, %v745
  %v747 = vsel %vm584, %v110, -inf
  %v748 = vsel %vm584, %v122, -inf
  %v749 = vmax.f32 %v747, %v748
  %v750 = vsel %vm584, %v111, -inf
  %v751 = vsel %vm584, %v123, -inf
  %v752 = vmax.f32 %v750, %v751
  %v753 = vsel %vm584, %v112, -inf
  %v754 = vsel %vm584, %v124, -inf
  %v755 = vmax.f32 %v753, %v754
  %v756 = vsel %vm584, %v113, -inf
  %v757 = vsel %vm584, %v125, -inf
  %v758 = vmax.f32 %v756, %v757
  %v759 = vsel %vm584, %v114, -inf
  %v760 = vsel %vm584, %v126, -inf
  %v761 = vmax.f32 %v759, %v760
  %v762 = vsel %vm584, %v115, -inf
  %v763 = vsel %vm584, %v127, -inf
  %v764 = vmax.f32 %v762, %v763
  %v765 = vsel %vm584, %v128, -inf
  %v766 = vsel %vm584, %v140, -inf
  %v767 = vmax.f32 %v765, %v766
  %v768 = vsel %vm584, %v129, -inf
  %v769 = vsel %vm584, %v141, -inf
  %v770 = vmax.f32 %v768, %v769
  %v771 = vsel %vm584, %v130, -inf
  %v772 = vsel %vm584, %v142, -inf
  %v773 = vmax.f32 %v771, %v772
  %v774 = vsel %vm584, %v131, -inf
  %v775 = vsel %vm584, %v143, -inf
  %v776 = vmax.f32 %v774, %v775
  %v777 = vsel %vm584, %v132, -inf
  %v778 = vsel %vm584, %v144, -inf
  %v779 = vmax.f32 %v777, %v778
  %v780 = vsel %vm584, %v133, -inf
  %v781 = vsel %vm584, %v145, -inf
  %v782 = vmax.f32 %v780, %v781
  %v783 = vsel %vm584, %v134, -inf
  %v784 = vsel %vm584, %v146, -inf
  %v785 = vmax.f32 %v783, %v784
  %v786 = vsel %vm584, %v135, -inf
  %v787 = vsel %vm584, %v147, -inf
  %v788 = vmax.f32 %v786, %v787
  %v789 = vsel %vm584, %v136, -inf
  %v790 = vsel %vm584, %v148, -inf
  %v791 = vmax.f32 %v789, %v790
  %v792 = vsel %vm584, %v137, -inf
  %v793 = vsel %vm584, %v149, -inf
  %v794 = vmax.f32 %v792, %v793
  %v795 = vsel %vm584, %v138, -inf
  %v796 = vsel %vm584, %v150, -inf
  %v797 = vmax.f32 %v795, %v796
  %v798 = vsel %vm584, %v139, -inf
  %v799 = vsel %vm584, %v151, -inf
  %v800 = vmax.f32 %v798, %v799
  %v801 = vsel %vm584, %v152, -inf
  %v802 = vsel %vm584, %v164, -inf
  %v803 = vmax.f32 %v801, %v802
  %v804 = vsel %vm584, %v153, -inf
  %v805 = vsel %vm584, %v165, -inf
  %v806 = vmax.f32 %v804, %v805
  %v807 = vsel %vm584, %v154, -inf
  %v808 = vsel %vm584, %v166, -inf
  %v809 = vmax.f32 %v807, %v808
  %v810 = vsel %vm584, %v155, -inf
  %v811 = vsel %vm584, %v167, -inf
  %v812 = vmax.f32 %v810, %v811
  %v813 = vsel %vm584, %v156, -inf
  %v814 = vsel %vm584, %v168, -inf
  %v815 = vmax.f32 %v813, %v814
  %v816 = vsel %vm584, %v157, -inf
  %v817 = vsel %vm584, %v169, -inf
  %v818 = vmax.f32 %v816, %v817
  %v819 = vsel %vm584, %v158, -inf
  %v820 = vsel %vm584, %v170, -inf
  %v821 = vmax.f32 %v819, %v820
  %v822 = vsel %vm584, %v159, -inf
  %v823 = vsel %vm584, %v171, -inf
  %v824 = vmax.f32 %v822, %v823
  %v825 = vsel %vm584, %v160, -inf
  %v826 = vsel %vm584, %v172, -inf
  %v827 = vmax.f32 %v825, %v826
  %v828 = vsel %vm584, %v161, -inf
  %v829 = vsel %vm584, %v173, -inf
  %v830 = vmax.f32 %v828, %v829
  %v831 = vsel %vm584, %v162, -inf
  %v832 = vsel %vm584, %v174, -inf
  %v833 = vmax.f32 %v831, %v832
  %v834 = vsel %vm584, %v163, -inf
  %v835 = vsel %vm584, %v175, -inf
  %v836 = vmax.f32 %v834, %v835
  %v837 = vsel %vm584, %v176, -inf
  %v838 = vsel %vm584, %v188, -inf
  %v839 = vmax.f32 %v837, %v838
  %v840 = vsel %vm584, %v177, -inf
  %v841 = vsel %vm584, %v189, -inf
  %v842 = vmax.f32 %v840, %v841
  %v843 = vsel %vm584, %v178, -inf
  %v844 = vsel %vm584, %v190, -inf
  %v845 = vmax.f32 %v843, %v844
  %v846 = vsel %vm584, %v179, -inf
  %v847 = vsel %vm584, %v191, -inf
  %v848 = vmax.f32 %v846, %v847
  %v849 = vsel %vm584, %v180, -inf
  %v850 = vsel %vm584, %v192, -inf
  %v851 = vmax.f32 %v849, %v850
  %v852 = vsel %vm584, %v181, -inf
  %v853 = vsel %vm584, %v193, -inf
  %v854 = vmax.f32 %v852, %v853
  %v855 = vsel %vm584, %v182, -inf
  %v856 = vsel %vm584, %v194, -inf
  %v857 = vmax.f32 %v855, %v856
  %v858 = vsel %vm584, %v183, -inf
  %v859 = vsel %vm584, %v195, -inf
  %v860 = vmax.f32 %v858, %v859
  %v861 = vsel %vm584, %v184, -inf
  %v862 = vsel %vm584, %v196, -inf
  %v863 = vmax.f32 %v861, %v862
  %v864 = vsel %vm584, %v185, -inf
  %v865 = vsel %vm584, %v197, -inf
  %v866 = vmax.f32 %v864, %v865
  %v867 = vsel %vm584, %v186, -inf
  %v868 = vsel %vm584, %v198, -inf
  %v869 = vmax.f32 %v867, %v868
  %v870 = vsel %vm584, %v187, -inf
  %v871 = vsel %vm584, %v199, -inf
  %v872 = vmax.f32 %v870, %v871
  %v873 = vsel %vm584, %v200, -inf
  %v874 = vsel %vm584, %v212, -inf
  %v875 = vmax.f32 %v873, %v874
  %v876 = vsel %vm584, %v201, -inf
  %v877 = vsel %vm584, %v213, -inf
  %v878 = vmax.f32 %v876, %v877
  %v879 = vsel %vm584, %v202, -inf
  %v880 = vsel %vm584, %v214, -inf
  %v881 = vmax.f32 %v879, %v880
  %v882 = vsel %vm584, %v203, -inf
  %v883 = vsel %vm584, %v215, -inf
  %v884 = vmax.f32 %v882, %v883
  %v885 = vsel %vm584, %v204, -inf
  %v886 = vsel %vm584, %v216, -inf
  %v887 = vmax.f32 %v885, %v886
  %v888 = vsel %vm584, %v205, -inf
  %v889 = vsel %vm584, %v217, -inf
  %v890 = vmax.f32 %v888, %v889
  %v891 = vsel %vm584, %v206, -inf
  %v892 = vsel %vm584, %v218, -inf
  %v893 = vmax.f32 %v891, %v892
  %v894 = vsel %vm584, %v207, -inf
  %v895 = vsel %vm584, %v219, -inf
  %v896 = vmax.f32 %v894, %v895
  %v897 = vsel %vm584, %v208, -inf
  %v898 = vsel %vm584, %v220, -inf
  %v899 = vmax.f32 %v897, %v898
  %v900 = vsel %vm584, %v209, -inf
  %v901 = vsel %vm584, %v221, -inf
  %v902 = vmax.f32 %v900, %v901
  %v903 = vsel %vm584, %v210, -inf
  %v904 = vsel %vm584, %v222, -inf
  %v905 = vmax.f32 %v903, %v904
  %v906 = vsel %vm584, %v211, -inf
  %v907 = vsel %vm584, %v223, -inf
  %v908 = vmax.f32 %v906, %v907
  %v909 = vsel %vm584, %v224, -inf
  %v910 = vsel %vm584, %v236, -inf
  %v911 = vmax.f32 %v909, %v910
  %v912 = vsel %vm584, %v225, -inf
  %v913 = vsel %vm584, %v237, -inf
  %v914 = vmax.f32 %v912, %v913
  %v915 = vsel %vm584, %v226, -inf
  %v916 = vsel %vm584, %v238, -inf
  %v917 = vmax.f32 %v915, %v916
  %v918 = vsel %vm584, %v227, -inf
  %v919 = vsel %vm584, %v239, -inf
  %v920 = vmax.f32 %v918, %v919
  %v921 = vsel %vm584, %v228, -inf
  %v922 = vsel %vm584, %v240, -inf
  %v923 = vmax.f32 %v921, %v922
  %v924 = vsel %vm584, %v229, -inf
  %v925 = vsel %vm584, %v241, -inf
  %v926 = vmax.f32 %v924, %v925
  %v927 = vsel %vm584, %v230, -inf
  %v928 = vsel %vm584, %v242, -inf
  %v929 = vmax.f32 %v927, %v928
  %v930 = vsel %vm584, %v231, -inf
  %v931 = vsel %vm584, %v243, -inf
  %v932 = vmax.f32 %v930, %v931
  %v933 = vsel %vm584, %v232, -inf
  %v934 = vsel %vm584, %v244, -inf
  %v935 = vmax.f32 %v933, %v934
  %v936 = vsel %vm584, %v233, -inf
  %v937 = vsel %vm584, %v245, -inf
  %v938 = vmax.f32 %v936, %v937
  %v939 = vsel %vm584, %v234, -inf
  %v940 = vsel %vm584, %v246, -inf
  %v941 = vmax.f32 %v939, %v940
  %v942 = vsel %vm584, %v235, -inf
  %v943 = vsel %vm584, %v247, -inf
  %v944 = vmax.f32 %v942, %v943
  %v945 = vsel %vm584, %v248, -inf
  %v946 = vsel %vm584, %v260, -inf
  %v947 = vmax.f32 %v945, %v946
  %v948 = vsel %vm584, %v249, -inf
  %v949 = vsel %vm584, %v261, -inf
  %v950 = vmax.f32 %v948, %v949
  %v951 = vsel %vm584, %v250, -inf
  %v952 = vsel %vm584, %v262, -inf
  %v953 = vmax.f32 %v951, %v952
  %v954 = vsel %vm584, %v251, -inf
  %v955 = vsel %vm584, %v263, -inf
  %v956 = vmax.f32 %v954, %v955
  %v957 = vsel %vm584, %v252, -inf
  %v958 = vsel %vm584, %v264, -inf
  %v959 = vmax.f32 %v957, %v958
  %v960 = vsel %vm584, %v253, -inf
  %v961 = vsel %vm584, %v265, -inf
  %v962 = vmax.f32 %v960, %v961
  %v963 = vsel %vm584, %v254, -inf
  %v964 = vsel %vm584, %v266, -inf
  %v965 = vmax.f32 %v963, %v964
  %v966 = vsel %vm584, %v255, -inf
  %v967 = vsel %vm584, %v267, -inf
  %v968 = vmax.f32 %v966, %v967
  %v969 = vsel %vm584, %v256, -inf
  %v970 = vsel %vm584, %v268, -inf
  %v971 = vmax.f32 %v969, %v970
  %v972 = vsel %vm584, %v257, -inf
  %v973 = vsel %vm584, %v269, -inf
  %v974 = vmax.f32 %v972, %v973
  %v975 = vsel %vm584, %v258, -inf
  %v976 = vsel %vm584, %v270, -inf
  %v977 = vmax.f32 %v975, %v976
  %v978 = vsel %vm584, %v259, -inf
  %v979 = vsel %vm584, %v271, -inf
  %v980 = vmax.f32 %v978, %v979
  %v981 = vsel %vm584, %v272, -inf
  %v982 = vsel %vm584, %v284, -inf
  %v983 = vmax.f32 %v981, %v982
  %v984 = vsel %vm584, %v273, -inf
  %v985 = vsel %vm584, %v285, -inf
  %v986 = vmax.f32 %v984, %v985
  %v987 = vsel %vm584, %v274, -inf
  %v988 = vsel %vm584, %v286, -inf
  %v989 = vmax.f32 %v987, %v988
  %v990 = vsel %vm584, %v275, -inf
  %v991 = vsel %vm584, %v287, -inf
  %v992 = vmax.f32 %v990, %v991
  %v993 = vsel %vm584, %v276, -inf
  %v994 = vsel %vm584, %v288, -inf
  %v995 = vmax.f32 %v993, %v994
  %v996 = vsel %vm584, %v277, -inf
  %v997 = vsel %vm584, %v289, -inf
  %v998 = vmax.f32 %v996, %v997
  %v999 = vsel %vm584, %v278, -inf
  %v1000 = vsel %vm584, %v290, -inf
  %v1001 = vmax.f32 %v999, %v1000
  %v1002 = vsel %vm584, %v279, -inf
  %v1003 = vsel %vm584, %v291, -inf
  %v1004 = vmax.f32 %v1002, %v1003
  %v1005 = vsel %vm584, %v280, -inf
  %v1006 = vsel %vm584, %v292, -inf
  %v1007 = vmax.f32 %v1005, %v1006
  %v1008 = vsel %vm584, %v281, -inf
  %v1009 = vsel %vm584, %v293, -inf
  %v1010 = vmax.f32 %v1008, %v1009
  %v1011 = vsel %vm584, %v282, -inf
  %v1012 = vsel %vm584, %v294, -inf
  %v1013 = vmax.f32 %v1011, %v1012
  %v1014 = vsel %vm584, %v283, -inf
  %v1015 = vsel %vm584, %v295, -inf
  %v1016 = vmax.f32 %v1014, %v1015
  %v1017 = vsel %vm584, %v296, -inf
  %v1018 = vsel %vm584, %v308, -inf
  %v1019 = vmax.f32 %v1017, %v1018
  %v1020 = vsel %vm584, %v297, -inf
  %v1021 = vsel %vm584, %v309, -inf
  %v1022 = vmax.f32 %v1020, %v1021
  %v1023 = vsel %vm584, %v298, -inf
  %v1024 = vsel %vm584, %v310, -inf
  %v1025 = vmax.f32 %v1023, %v1024
  %v1026 = vsel %vm584, %v299, -inf
  %v1027 = vsel %vm584, %v311, -inf
  %v1028 = vmax.f32 %v1026, %v1027
  %v1029 = vsel %vm584, %v300, -inf
  %v1030 = vsel %vm584, %v312, -inf
  %v1031 = vmax.f32 %v1029, %v1030
  %v1032 = vsel %vm584, %v301, -inf
  %v1033 = vsel %vm584, %v313, -inf
  %v1034 = vmax.f32 %v1032, %v1033
  %v1035 = vsel %vm584, %v302, -inf
  %v1036 = vsel %vm584, %v314, -inf
  %v1037 = vmax.f32 %v1035, %v1036
  %v1038 = vsel %vm584, %v303, -inf
  %v1039 = vsel %vm584, %v315, -inf
  %v1040 = vmax.f32 %v1038, %v1039
  %v1041 = vsel %vm584, %v304, -inf
  %v1042 = vsel %vm584, %v316, -inf
  %v1043 = vmax.f32 %v1041, %v1042
  %v1044 = vsel %vm584, %v305, -inf
  %v1045 = vsel %vm584, %v317, -inf
  %v1046 = vmax.f32 %v1044, %v1045
  %v1047 = vsel %vm584, %v306, -inf
  %v1048 = vsel %vm584, %v318, -inf
  %v1049 = vmax.f32 %v1047, %v1048
  %v1050 = vsel %vm584, %v307, -inf
  %v1051 = vsel %vm584, %v319, -inf
  %v1052 = vmax.f32 %v1050, %v1051
  %v1053 = vsel %vm584, %v320, -inf
  %v1054 = vsel %vm584, %v332, -inf
  %v1055 = vmax.f32 %v1053, %v1054
  %v1056 = vsel %vm584, %v321, -inf
  %v1057 = vsel %vm584, %v333, -inf
  %v1058 = vmax.f32 %v1056, %v1057
  %v1059 = vsel %vm584, %v322, -inf
  %v1060 = vsel %vm584, %v334, -inf
  %v1061 = vmax.f32 %v1059, %v1060
  %v1062 = vsel %vm584, %v323, -inf
  %v1063 = vsel %vm584, %v335, -inf
  %v1064 = vmax.f32 %v1062, %v1063
  %v1065 = vsel %vm584, %v324, -inf
  %v1066 = vsel %vm584, %v336, -inf
  %v1067 = vmax.f32 %v1065, %v1066
  %v1068 = vsel %vm584, %v325, -inf
  %v1069 = vsel %vm584, %v337, -inf
  %v1070 = vmax.f32 %v1068, %v1069
  %v1071 = vsel %vm584, %v326, -inf
  %v1072 = vsel %vm584, %v338, -inf
  %v1073 = vmax.f32 %v1071, %v1072
  %v1074 = vsel %vm584, %v327, -inf
  %v1075 = vsel %vm584, %v339, -inf
  %v1076 = vmax.f32 %v1074, %v1075
  %v1077 = vsel %vm584, %v328, -inf
  %v1078 = vsel %vm584, %v340, -inf
  %v1079 = vmax.f32 %v1077, %v1078
  %v1080 = vsel %vm584, %v329, -inf
  %v1081 = vsel %vm584, %v341, -inf
  %v1082 = vmax.f32 %v1080, %v1081
  %v1083 = vsel %vm584, %v330, -inf
  %v1084 = vsel %vm584, %v342, -inf
  %v1085 = vmax.f32 %v1083, %v1084
  %v1086 = vsel %vm584, %v331, -inf
  %v1087 = vsel %vm584, %v343, -inf
  %v1088 = vmax.f32 %v1086, %v1087
  %v1089 = vsel %vm584, %v344, -inf
  %v1090 = vsel %vm584, %v356, -inf
  %v1091 = vmax.f32 %v1089, %v1090
  %v1092 = vsel %vm584, %v345, -inf
  %v1093 = vsel %vm584, %v357, -inf
  %v1094 = vmax.f32 %v1092, %v1093
  %v1095 = vsel %vm584, %v346, -inf
  %v1096 = vsel %vm584, %v358, -inf
  %v1097 = vmax.f32 %v1095, %v1096
  %v1098 = vsel %vm584, %v347, -inf
  %v1099 = vsel %vm584, %v359, -inf
  %v1100 = vmax.f32 %v1098, %v1099
  %v1101 = vsel %vm584, %v348, -inf
  %v1102 = vsel %vm584, %v360, -inf
  %v1103 = vmax.f32 %v1101, %v1102
  %v1104 = vsel %vm584, %v349, -inf
  %v1105 = vsel %vm584, %v361, -inf
  %v1106 = vmax.f32 %v1104, %v1105
  %v1107 = vsel %vm584, %v350, -inf
  %v1108 = vsel %vm584, %v362, -inf
  %v1109 = vmax.f32 %v1107, %v1108
  %v1110 = vsel %vm584, %v351, -inf
  %v1111 = vsel %vm584, %v363, -inf
  %v1112 = vmax.f32 %v1110, %v1111
  %v1113 = vsel %vm584, %v352, -inf
  %v1114 = vsel %vm584, %v364, -inf
  %v1115 = vmax.f32 %v1113, %v1114
  %v1116 = vsel %vm584, %v353, -inf
  %v1117 = vsel %vm584, %v365, -inf
  %v1118 = vmax.f32 %v1116, %v1117
  %v1119 = vsel %vm584, %v354, -inf
  %v1120 = vsel %vm584, %v366, -inf
  %v1121 = vmax.f32 %v1119, %v1120
  %v1122 = vsel %vm584, %v355, -inf
  %v1123 = vsel %vm584, %v367, -inf
  %v1124 = vmax.f32 %v1122, %v1123
  %v1125 = vsel %vm584, %v368, -inf
  %v1126 = vsel %vm584, %v380, -inf
  %v1127 = vmax.f32 %v1125, %v1126
  %v1128 = vsel %vm584, %v369, -inf
  %v1129 = vsel %vm584, %v381, -inf
  %v1130 = vmax.f32 %v1128, %v1129
  %v1131 = vsel %vm584, %v370, -inf
  %v1132 = vsel %vm584, %v382, -inf
  %v1133 = vmax.f32 %v1131, %v1132
  %v1134 = vsel %vm584, %v371, -inf
  %v1135 = vsel %vm584, %v383, -inf
  %v1136 = vmax.f32 %v1134, %v1135
  %v1137 = vsel %vm584, %v372, -inf
  %v1138 = vsel %vm584, %v384, -inf
  %v1139 = vmax.f32 %v1137, %v1138
  %v1140 = vsel %vm584, %v373, -inf
  %v1141 = vsel %vm584, %v385, -inf
  %v1142 = vmax.f32 %v1140, %v1141
  %v1143 = vsel %vm584, %v374, -inf
  %v1144 = vsel %vm584, %v386, -inf
  %v1145 = vmax.f32 %v1143, %v1144
  %v1146 = vsel %vm584, %v375, -inf
  %v1147 = vsel %vm584, %v387, -inf
  %v1148 = vmax.f32 %v1146, %v1147
  %v1149 = vsel %vm584, %v376, -inf
  %v1150 = vsel %vm584, %v388, -inf
  %v1151 = vmax.f32 %v1149, %v1150
  %v1152 = vsel %vm584, %v377, -inf
  %v1153 = vsel %vm584, %v389, -inf
  %v1154 = vmax.f32 %v1152, %v1153
  %v1155 = vsel %vm584, %v378, -inf
  %v1156 = vsel %vm584, %v390, -inf
  %v1157 = vmax.f32 %v1155, %v1156
  %v1158 = vsel %vm584, %v379, -inf
  %v1159 = vsel %vm584, %v391, -inf
  %v1160 = vmax.f32 %v1158, %v1159
  %v1161 = vsel %vm584, %v392, -inf
  %v1162 = vsel %vm584, %v404, -inf
  %v1163 = vmax.f32 %v1161, %v1162
  %v1164 = vsel %vm584, %v393, -inf
  %v1165 = vsel %vm584, %v405, -inf
  %v1166 = vmax.f32 %v1164, %v1165
  %v1167 = vsel %vm584, %v394, -inf
  %v1168 = vsel %vm584, %v406, -inf
  %v1169 = vmax.f32 %v1167, %v1168
  %v1170 = vsel %vm584, %v395, -inf
  %v1171 = vsel %vm584, %v407, -inf
  %v1172 = vmax.f32 %v1170, %v1171
  %v1173 = vsel %vm584, %v396, -inf
  %v1174 = vsel %vm584, %v408, -inf
  %v1175 = vmax.f32 %v1173, %v1174
  %v1176 = vsel %vm584, %v397, -inf
  %v1177 = vsel %vm584, %v409, -inf
  %v1178 = vmax.f32 %v1176, %v1177
  %v1179 = vsel %vm584, %v398, -inf
  %v1180 = vsel %vm584, %v410, -inf
  %v1181 = vmax.f32 %v1179, %v1180
  %v1182 = vsel %vm584, %v399, -inf
  %v1183 = vsel %vm584, %v411, -inf
  %v1184 = vmax.f32 %v1182, %v1183
  %v1185 = vsel %vm584, %v400, -inf
  %v1186 = vsel %vm584, %v412, -inf
  %v1187 = vmax.f32 %v1185, %v1186
  %v1188 = vsel %vm584, %v401, -inf
  %v1189 = vsel %vm584, %v413, -inf
  %v1190 = vmax.f32 %v1188, %v1189
  %v1191 = vsel %vm584, %v402, -inf
  %v1192 = vsel %vm584, %v414, -inf
  %v1193 = vmax.f32 %v1191, %v1192
  %v1194 = vsel %vm584, %v403, -inf
  %v1195 = vsel %vm584, %v415, -inf
  %v1196 = vmax.f32 %v1194, %v1195
  %v1197 = vsel %vm584, %v416, -inf
  %v1198 = vsel %vm584, %v428, -inf
  %v1199 = vmax.f32 %v1197, %v1198
  %v1200 = vsel %vm584, %v417, -inf
  %v1201 = vsel %vm584, %v429, -inf
  %v1202 = vmax.f32 %v1200, %v1201
  %v1203 = vsel %vm584, %v418, -inf
  %v1204 = vsel %vm584, %v430, -inf
  %v1205 = vmax.f32 %v1203, %v1204
  %v1206 = vsel %vm584, %v419, -inf
  %v1207 = vsel %vm584, %v431, -inf
  %v1208 = vmax.f32 %v1206, %v1207
  %v1209 = vsel %vm584, %v420, -inf
  %v1210 = vsel %vm584, %v432, -inf
  %v1211 = vmax.f32 %v1209, %v1210
  %v1212 = vsel %vm584, %v421, -inf
  %v1213 = vsel %vm584, %v433, -inf
  %v1214 = vmax.f32 %v1212, %v1213
  %v1215 = vsel %vm584, %v422, -inf
  %v1216 = vsel %vm584, %v434, -inf
  %v1217 = vmax.f32 %v1215, %v1216
  %v1218 = vsel %vm584, %v423, -inf
  %v1219 = vsel %vm584, %v435, -inf
  %v1220 = vmax.f32 %v1218, %v1219
  %v1221 = vsel %vm584, %v424, -inf
  %v1222 = vsel %vm584, %v436, -inf
  %v1223 = vmax.f32 %v1221, %v1222
  %v1224 = vsel %vm584, %v425, -inf
  %v1225 = vsel %vm584, %v437, -inf
  %v1226 = vmax.f32 %v1224, %v1225
  %v1227 = vsel %vm584, %v426, -inf
  %v1228 = vsel %vm584, %v438, -inf
  %v1229 = vmax.f32 %v1227, %v1228
  %v1230 = vsel %vm584, %v427, -inf
  %v1231 = vsel %vm584, %v439, -inf
  %v1232 = vmax.f32 %v1230, %v1231
  %v1233 = vsel %vm584, %v440, -inf
  %v1234 = vsel %vm584, %v452, -inf
  %v1235 = vmax.f32 %v1233, %v1234
  %v1236 = vsel %vm584, %v441, -inf
  %v1237 = vsel %vm584, %v453, -inf
  %v1238 = vmax.f32 %v1236, %v1237
  %v1239 = vsel %vm584, %v442, -inf
  %v1240 = vsel %vm584, %v454, -inf
  %v1241 = vmax.f32 %v1239, %v1240
  %v1242 = vsel %vm584, %v443, -inf
  %v1243 = vsel %vm584, %v455, -inf
  %v1244 = vmax.f32 %v1242, %v1243
  %v1245 = vsel %vm584, %v444, -inf
  %v1246 = vsel %vm584, %v456, -inf
  %v1247 = vmax.f32 %v1245, %v1246
  %v1248 = vsel %vm584, %v445, -inf
  %v1249 = vsel %vm584, %v457, -inf
  %v1250 = vmax.f32 %v1248, %v1249
  %v1251 = vsel %vm584, %v446, -inf
  %v1252 = vsel %vm584, %v458, -inf
  %v1253 = vmax.f32 %v1251, %v1252
  %v1254 = vsel %vm584, %v447, -inf
  %v1255 = vsel %vm584, %v459, -inf
  %v1256 = vmax.f32 %v1254, %v1255
  %v1257 = vsel %vm584, %v448, -inf
  %v1258 = vsel %vm584, %v460, -inf
  %v1259 = vmax.f32 %v1257, %v1258
  %v1260 = vsel %vm584, %v449, -inf
  %v1261 = vsel %vm584, %v461, -inf
  %v1262 = vmax.f32 %v1260, %v1261
  %v1263 = vsel %vm584, %v450, -inf
  %v1264 = vsel %vm584, %v462, -inf
  %v1265 = vmax.f32 %v1263, %v1264
  %v1266 = vsel %vm584, %v451, -inf
  %v1267 = vsel %vm584, %v463, -inf
  %v1268 = vmax.f32 %v1266, %v1267
  %v1269 = vsel %vm584, %v464, -inf
  %v1270 = vsel %vm584, %v476, -inf
  %v1271 = vmax.f32 %v1269, %v1270
  %v1272 = vsel %vm584, %v465, -inf
  %v1273 = vsel %vm584, %v477, -inf
  %v1274 = vmax.f32 %v1272, %v1273
  %v1275 = vsel %vm584, %v466, -inf
  %v1276 = vsel %vm584, %v478, -inf
  %v1277 = vmax.f32 %v1275, %v1276
  %v1278 = vsel %vm584, %v467, -inf
  %v1279 = vsel %vm584, %v479, -inf
  %v1280 = vmax.f32 %v1278, %v1279
  %v1281 = vsel %vm584, %v468, -inf
  %v1282 = vsel %vm584, %v480, -inf
  %v1283 = vmax.f32 %v1281, %v1282
  %v1284 = vsel %vm584, %v469, -inf
  %v1285 = vsel %vm584, %v481, -inf
  %v1286 = vmax.f32 %v1284, %v1285
  %v1287 = vsel %vm584, %v470, -inf
  %v1288 = vsel %vm584, %v482, -inf
  %v1289 = vmax.f32 %v1287, %v1288
  %v1290 = vsel %vm584, %v471, -inf
  %v1291 = vsel %vm584, %v483, -inf
  %v1292 = vmax.f32 %v1290, %v1291
  %v1293 = vsel %vm584, %v472, -inf
  %v1294 = vsel %vm584, %v484, -inf
  %v1295 = vmax.f32 %v1293, %v1294
  %v1296 = vsel %vm584, %v473, -inf
  %v1297 = vsel %vm584, %v485, -inf
  %v1298 = vmax.f32 %v1296, %v1297
  %v1299 = vsel %vm584, %v474, -inf
  %v1300 = vsel %vm584, %v486, -inf
  %v1301 = vmax.f32 %v1299, %v1300
  %v1302 = vsel %vm584, %v475, -inf
  %v1303 = vsel %vm584, %v487, -inf
  %v1304 = vmax.f32 %v1302, %v1303
  %v1305 = vsel %vm584, %v488, -inf
  %v1306 = vsel %vm584, %v500, -inf
  %v1307 = vmax.f32 %v1305, %v1306
  %v1308 = vsel %vm584, %v489, -inf
  %v1309 = vsel %vm584, %v501, -inf
  %v1310 = vmax.f32 %v1308, %v1309
  %v1311 = vsel %vm584, %v490, -inf
  %v1312 = vsel %vm584, %v502, -inf
  %v1313 = vmax.f32 %v1311, %v1312
  %v1314 = vsel %vm584, %v491, -inf
  %v1315 = vsel %vm584, %v503, -inf
  %v1316 = vmax.f32 %v1314, %v1315
  %v1317 = vsel %vm584, %v492, -inf
  %v1318 = vsel %vm584, %v504, -inf
  %v1319 = vmax.f32 %v1317, %v1318
  %v1320 = vsel %vm584, %v493, -inf
  %v1321 = vsel %vm584, %v505, -inf
  %v1322 = vmax.f32 %v1320, %v1321
  %v1323 = vsel %vm584, %v494, -inf
  %v1324 = vsel %vm584, %v506, -inf
  %v1325 = vmax.f32 %v1323, %v1324
  %v1326 = vsel %vm584, %v495, -inf
  %v1327 = vsel %vm584, %v507, -inf
  %v1328 = vmax.f32 %v1326, %v1327
  %v1329 = vsel %vm584, %v496, -inf
  %v1330 = vsel %vm584, %v508, -inf
  %v1331 = vmax.f32 %v1329, %v1330
  %v1332 = vsel %vm584, %v497, -inf
  %v1333 = vsel %vm584, %v509, -inf
  %v1334 = vmax.f32 %v1332, %v1333
  %v1335 = vsel %vm584, %v498, -inf
  %v1336 = vsel %vm584, %v510, -inf
  %v1337 = vmax.f32 %v1335, %v1336
  %v1338 = vsel %vm584, %v499, -inf
  %v1339 = vsel %vm584, %v511, -inf
  %v1340 = vmax.f32 %v1338, %v1339
  %v1341 = vsel %vm584, %v512, -inf
  %v1342 = vsel %vm584, %v524, -inf
  %v1343 = vmax.f32 %v1341, %v1342
  %v1344 = vsel %vm584, %v513, -inf
  %v1345 = vsel %vm584, %v525, -inf
  %v1346 = vmax.f32 %v1344, %v1345
  %v1347 = vsel %vm584, %v514, -inf
  %v1348 = vsel %vm584, %v526, -inf
  %v1349 = vmax.f32 %v1347, %v1348
  %v1350 = vsel %vm584, %v515, -inf
  %v1351 = vsel %vm584, %v527, -inf
  %v1352 = vmax.f32 %v1350, %v1351
  %v1353 = vsel %vm584, %v516, -inf
  %v1354 = vsel %vm584, %v528, -inf
  %v1355 = vmax.f32 %v1353, %v1354
  %v1356 = vsel %vm584, %v517, -inf
  %v1357 = vsel %vm584, %v529, -inf
  %v1358 = vmax.f32 %v1356, %v1357
  %v1359 = vsel %vm584, %v518, -inf
  %v1360 = vsel %vm584, %v530, -inf
  %v1361 = vmax.f32 %v1359, %v1360
  %v1362 = vsel %vm584, %v519, -inf
  %v1363 = vsel %vm584, %v531, -inf
  %v1364 = vmax.f32 %v1362, %v1363
  %v1365 = vsel %vm584, %v520, -inf
  %v1366 = vsel %vm584, %v532, -inf
  %v1367 = vmax.f32 %v1365, %v1366
  %v1368 = vsel %vm584, %v521, -inf
  %v1369 = vsel %vm584, %v533, -inf
  %v1370 = vmax.f32 %v1368, %v1369
  %v1371 = vsel %vm584, %v522, -inf
  %v1372 = vsel %vm584, %v534, -inf
  %v1373 = vmax.f32 %v1371, %v1372
  %v1374 = vsel %vm584, %v523, -inf
  %v1375 = vsel %vm584, %v535, -inf
  %v1376 = vmax.f32 %v1374, %v1375
  %v1377 = vsel %vm584, %v536, -inf
  %v1378 = vsel %vm584, %v548, -inf
  %v1379 = vmax.f32 %v1377, %v1378
  %v1380 = vsel %vm584, %v537, -inf
  %v1381 = vsel %vm584, %v549, -inf
  %v1382 = vmax.f32 %v1380, %v1381
  %v1383 = vsel %vm584, %v538, -inf
  %v1384 = vsel %vm584, %v550, -inf
  %v1385 = vmax.f32 %v1383, %v1384
  %v1386 = vsel %vm584, %v539, -inf
  %v1387 = vsel %vm584, %v551, -inf
  %v1388 = vmax.f32 %v1386, %v1387
  %v1389 = vsel %vm584, %v540, -inf
  %v1390 = vsel %vm584, %v552, -inf
  %v1391 = vmax.f32 %v1389, %v1390
  %v1392 = vsel %vm584, %v541, -inf
  %v1393 = vsel %vm584, %v553, -inf
  %v1394 = vmax.f32 %v1392, %v1393
  %v1395 = vsel %vm584, %v542, -inf
  %v1396 = vsel %vm584, %v554, -inf
  %v1397 = vmax.f32 %v1395, %v1396
  %v1398 = vsel %vm584, %v543, -inf
  %v1399 = vsel %vm584, %v555, -inf
  %v1400 = vmax.f32 %v1398, %v1399
  %v1401 = vsel %vm584, %v544, -inf
  %v1402 = vsel %vm584, %v556, -inf
  %v1403 = vmax.f32 %v1401, %v1402
  %v1404 = vsel %vm584, %v545, -inf
  %v1405 = vsel %vm584, %v557, -inf
  %v1406 = vmax.f32 %v1404, %v1405
  %v1407 = vsel %vm584, %v546, -inf
  %v1408 = vsel %vm584, %v558, -inf
  %v1409 = vmax.f32 %v1407, %v1408
  %v1410 = vsel %vm584, %v547, -inf
  %v1411 = vsel %vm584, %v559, -inf
  %v1412 = vmax.f32 %v1410, %v1411
  %v1413 = vsel %vm584, %v560, -inf
  %v1414 = vsel %vm584, %v572, -inf
  %v1415 = vmax.f32 %v1413, %v1414
  %v1416 = vsel %vm584, %v561, -inf
  %v1417 = vsel %vm584, %v573, -inf
  %v1418 = vmax.f32 %v1416, %v1417
  %v1419 = vsel %vm584, %v562, -inf
  %v1420 = vsel %vm584, %v574, -inf
  %v1421 = vmax.f32 %v1419, %v1420
  %v1422 = vsel %vm584, %v563, -inf
  %v1423 = vsel %vm584, %v575, -inf
  %v1424 = vmax.f32 %v1422, %v1423
  %v1425 = vsel %vm584, %v564, -inf
  %v1426 = vsel %vm584, %v576, -inf
  %v1427 = vmax.f32 %v1425, %v1426
  %v1428 = vsel %vm584, %v565, -inf
  %v1429 = vsel %vm584, %v577, -inf
  %v1430 = vmax.f32 %v1428, %v1429
  %v1431 = vsel %vm584, %v566, -inf
  %v1432 = vsel %vm584, %v578, -inf
  %v1433 = vmax.f32 %v1431, %v1432
  %v1434 = vsel %vm584, %v567, -inf
  %v1435 = vsel %vm584, %v579, -inf
  %v1436 = vmax.f32 %v1434, %v1435
  %v1437 = vsel %vm584, %v568, -inf
  %v1438 = vsel %vm584, %v580, -inf
  %v1439 = vmax.f32 %v1437, %v1438
  %v1440 = vsel %vm584, %v569, -inf
  %v1441 = vsel %vm584, %v581, -inf
  %v1442 = vmax.f32 %v1440, %v1441
  %v1443 = vsel %vm584, %v570, -inf
  %v1444 = vsel %vm584, %v582, -inf
  %v1445 = vmax.f32 %v1443, %v1444
  %v1446 = vsel %vm584, %v571, -inf
  %v1447 = vsel %vm584, %v583, -inf
  %v1448 = vmax.f32 %v1446, %v1447
  %v1449 = vsel %vm584, %v587, -inf
  %v1450 = vrot.slane %v1449, 4
  %v1451 = vmax.f32 %v1449, %v1450
  %v1452 = vrot.slane %v1451, 2
  %v1453 = vmax.f32 %v1451, %v1452
  %v1454 = vrot.slane %v1453, 1
  %v1455 = vmax.f32 %v1453, %v1454
  %v1456 = vsel %vm584, %v590, -inf
  %v1457 = vrot.slane %v1456, 4
  %v1458 = vmax.f32 %v1456, %v1457
  %v1459 = vrot.slane %v1458, 2
  %v1460 = vmax.f32 %v1458, %v1459
  %v1461 = vrot.slane %v1460, 1
  %v1462 = vmax.f32 %v1460, %v1461
  %v1463 = vsel %vm584, %v593, -inf
  %v1464 = vrot.slane %v1463, 4
  %v1465 = vmax.f32 %v1463, %v1464
  %v1466 = vrot.slane %v1465, 2
  %v1467 = vmax.f32 %v1465, %v1466
  %v1468 = vrot.slane %v1467, 1
  %v1469 = vmax.f32 %v1467, %v1468
  %v1470 = vsel %vm584, %v596, -inf
  %v1471 = vrot.slane %v1470, 4
  %v1472 = vmax.f32 %v1470, %v1471
  %v1473 = vrot.slane %v1472, 2
  %v1474 = vmax.f32 %v1472, %v1473
  %v1475 = vrot.slane %v1474, 1
  %v1476 = vmax.f32 %v1474, %v1475
  %v1477 = vsel %vm584, %v599, -inf
  %v1478 = vrot.slane %v1477, 4
  %v1479 = vmax.f32 %v1477, %v1478
  %v1480 = vrot.slane %v1479, 2
  %v1481 = vmax.f32 %v1479, %v1480
  %v1482 = vrot.slane %v1481, 1
  %v1483 = vmax.f32 %v1481, %v1482
  %v1484 = vsel %vm584, %v602, -inf
  %v1485 = vrot.slane %v1484, 4
  %v1486 = vmax.f32 %v1484, %v1485
  %v1487 = vrot.slane %v1486, 2
  %v1488 = vmax.f32 %v1486, %v1487
  %v1489 = vrot.slane %v1488, 1
  %v1490 = vmax.f32 %v1488, %v1489
  %v1491 = vsel %vm584, %v605, -inf
  %v1492 = vrot.slane %v1491, 4
  %v1493 = vmax.f32 %v1491, %v1492
  %v1494 = vrot.slane %v1493, 2
  %v1495 = vmax.f32 %v1493, %v1494
  %v1496 = vrot.slane %v1495, 1
  %v1497 = vmax.f32 %v1495, %v1496
  %v1498 = vsel %vm584, %v608, -inf
  %v1499 = vrot.slane %v1498, 4
  %v1500 = vmax.f32 %v1498, %v1499
  %v1501 = vrot.slane %v1500, 2
  %v1502 = vmax.f32 %v1500, %v1501
  %v1503 = vrot.slane %v1502, 1
  %v1504 = vmax.f32 %v1502, %v1503
  %v1505 = vsel %vm584, %v611, -inf
  %v1506 = vrot.slane %v1505, 4
  %v1507 = vmax.f32 %v1505, %v1506
  %v1508 = vrot.slane %v1507, 2
  %v1509 = vmax.f32 %v1507, %v1508
  %v1510 = vrot.slane %v1509, 1
  %v1511 = vmax.f32 %v1509, %v1510
  %v1512 = vsel %vm584, %v614, -inf
  %v1513 = vrot.slane %v1512, 4
  %v1514 = vmax.f32 %v1512, %v1513
  %v1515 = vrot.slane %v1514, 2
  %v1516 = vmax.f32 %v1514, %v1515
  %v1517 = vrot.slane %v1516, 1
  %v1518 = vmax.f32 %v1516, %v1517
  %v1519 = vsel %vm584, %v617, -inf
  %v1520 = vrot.slane %v1519, 4
  %v1521 = vmax.f32 %v1519, %v1520
  %v1522 = vrot.slane %v1521, 2
  %v1523 = vmax.f32 %v1521, %v1522
  %v1524 = vrot.slane %v1523, 1
  %v1525 = vmax.f32 %v1523, %v1524
  %v1526 = vsel %vm584, %v620, -inf
  %v1527 = vrot.slane %v1526, 4
  %v1528 = vmax.f32 %v1526, %v1527
  %v1529 = vrot.slane %v1528, 2
  %v1530 = vmax.f32 %v1528, %v1529
  %v1531 = vrot.slane %v1530, 1
  %v1532 = vmax.f32 %v1530, %v1531
  %v1533 = vsel %vm584, %v623, -inf
  %v1534 = vrot.slane %v1533, 4
  %v1535 = vmax.f32 %v1533, %v1534
  %v1536 = vrot.slane %v1535, 2
  %v1537 = vmax.f32 %v1535, %v1536
  %v1538 = vrot.slane %v1537, 1
  %v1539 = vmax.f32 %v1537, %v1538
  %v1540 = vsel %vm584, %v626, -inf
  %v1541 = vrot.slane %v1540, 4
  %v1542 = vmax.f32 %v1540, %v1541
  %v1543 = vrot.slane %v1542, 2
  %v1544 = vmax.f32 %v1542, %v1543
  %v1545 = vrot.slane %v1544, 1
  %v1546 = vmax.f32 %v1544, %v1545
  %v1547 = vsel %vm584, %v629, -inf
  %v1548 = vrot.slane %v1547, 4
  %v1549 = vmax.f32 %v1547, %v1548
  %v1550 = vrot.slane %v1549, 2
  %v1551 = vmax.f32 %v1549, %v1550
  %v1552 = vrot.slane %v1551, 1
  %v1553 = vmax.f32 %v1551, %v1552
  %v1554 = vsel %vm584, %v632, -inf
  %v1555 = vrot.slane %v1554, 4
  %v1556 = vmax.f32 %v1554, %v1555
  %v1557 = vrot.slane %v1556, 2
  %v1558 = vmax.f32 %v1556, %v1557
  %v1559 = vrot.slane %v1558, 1
  %v1560 = vmax.f32 %v1558, %v1559
  %v1561 = vsel %vm584, %v635, -inf
  %v1562 = vrot.slane %v1561, 4
  %v1563 = vmax.f32 %v1561, %v1562
  %v1564 = vrot.slane %v1563, 2
  %v1565 = vmax.f32 %v1563, %v1564
  %v1566 = vrot.slane %v1565, 1
  %v1567 = vmax.f32 %v1565, %v1566
  %v1568 = vsel %vm584, %v638, -inf
  %v1569 = vrot.slane %v1568, 4
  %v1570 = vmax.f32 %v1568, %v1569
  %v1571 = vrot.slane %v1570, 2
  %v1572 = vmax.f32 %v1570, %v1571
  %v1573 = vrot.slane %v1572, 1
  %v1574 = vmax.f32 %v1572, %v1573
  %v1575 = vsel %vm584, %v641, -inf
  %v1576 = vrot.slane %v1575, 4
  %v1577 = vmax.f32 %v1575, %v1576
  %v1578 = vrot.slane %v1577, 2
  %v1579 = vmax.f32 %v1577, %v1578
  %v1580 = vrot.slane %v1579, 1
  %v1581 = vmax.f32 %v1579, %v1580
  %v1582 = vsel %vm584, %v644, -inf
  %v1583 = vrot.slane %v1582, 4
  %v1584 = vmax.f32 %v1582, %v1583
  %v1585 = vrot.slane %v1584, 2
  %v1586 = vmax.f32 %v1584, %v1585
  %v1587 = vrot.slane %v1586, 1
  %v1588 = vmax.f32 %v1586, %v1587
  %v1589 = vsel %vm584, %v647, -inf
  %v1590 = vrot.slane %v1589, 4
  %v1591 = vmax.f32 %v1589, %v1590
  %v1592 = vrot.slane %v1591, 2
  %v1593 = vmax.f32 %v1591, %v1592
  %v1594 = vrot.slane %v1593, 1
  %v1595 = vmax.f32 %v1593, %v1594
  %v1596 = vsel %vm584, %v650, -inf
  %v1597 = vrot.slane %v1596, 4
  %v1598 = vmax.f32 %v1596, %v1597
  %v1599 = vrot.slane %v1598, 2
  %v1600 = vmax.f32 %v1598, %v1599
  %v1601 = vrot.slane %v1600, 1
  %v1602 = vmax.f32 %v1600, %v1601
  %v1603 = vsel %vm584, %v653, -inf
  %v1604 = vrot.slane %v1603, 4
  %v1605 = vmax.f32 %v1603, %v1604
  %v1606 = vrot.slane %v1605, 2
  %v1607 = vmax.f32 %v1605, %v1606
  %v1608 = vrot.slane %v1607, 1
  %v1609 = vmax.f32 %v1607, %v1608
  %v1610 = vsel %vm584, %v656, -inf
  %v1611 = vrot.slane %v1610, 4
  %v1612 = vmax.f32 %v1610, %v1611
  %v1613 = vrot.slane %v1612, 2
  %v1614 = vmax.f32 %v1612, %v1613
  %v1615 = vrot.slane %v1614, 1
  %v1616 = vmax.f32 %v1614, %v1615
  %v1617 = vsel %vm584, %v659, -inf
  %v1618 = vrot.slane %v1617, 4
  %v1619 = vmax.f32 %v1617, %v1618
  %v1620 = vrot.slane %v1619, 2
  %v1621 = vmax.f32 %v1619, %v1620
  %v1622 = vrot.slane %v1621, 1
  %v1623 = vmax.f32 %v1621, %v1622
  %v1624 = vsel %vm584, %v662, -inf
  %v1625 = vrot.slane %v1624, 4
  %v1626 = vmax.f32 %v1624, %v1625
  %v1627 = vrot.slane %v1626, 2
  %v1628 = vmax.f32 %v1626, %v1627
  %v1629 = vrot.slane %v1628, 1
  %v1630 = vmax.f32 %v1628, %v1629
  %v1631 = vsel %vm584, %v665, -inf
  %v1632 = vrot.slane %v1631, 4
  %v1633 = vmax.f32 %v1631, %v1632
  %v1634 = vrot.slane %v1633, 2
  %v1635 = vmax.f32 %v1633, %v1634
  %v1636 = vrot.slane %v1635, 1
  %v1637 = vmax.f32 %v1635, %v1636
  %v1638 = vsel %vm584, %v668, -inf
  %v1639 = vrot.slane %v1638, 4
  %v1640 = vmax.f32 %v1638, %v1639
  %v1641 = vrot.slane %v1640, 2
  %v1642 = vmax.f32 %v1640, %v1641
  %v1643 = vrot.slane %v1642, 1
  %v1644 = vmax.f32 %v1642, %v1643
  %v1645 = vsel %vm584, %v671, -inf
  %v1646 = vrot.slane %v1645, 4
  %v1647 = vmax.f32 %v1645, %v1646
  %v1648 = vrot.slane %v1647, 2
  %v1649 = vmax.f32 %v1647, %v1648
  %v1650 = vrot.slane %v1649, 1
  %v1651 = vmax.f32 %v1649, %v1650
  %v1652 = vsel %vm584, %v674, -inf
  %v1653 = vrot.slane %v1652, 4
  %v1654 = vmax.f32 %v1652, %v1653
  %v1655 = vrot.slane %v1654, 2
  %v1656 = vmax.f32 %v1654, %v1655
  %v1657 = vrot.slane %v1656, 1
  %v1658 = vmax.f32 %v1656, %v1657
  %v1659 = vsel %vm584, %v677, -inf
  %v1660 = vrot.slane %v1659, 4
  %v1661 = vmax.f32 %v1659, %v1660
  %v1662 = vrot.slane %v1661, 2
  %v1663 = vmax.f32 %v1661, %v1662
  %v1664 = vrot.slane %v1663, 1
  %v1665 = vmax.f32 %v1663, %v1664
  %v1666 = vsel %vm584, %v680, -inf
  %v1667 = vrot.slane %v1666, 4
  %v1668 = vmax.f32 %v1666, %v1667
  %v1669 = vrot.slane %v1668, 2
  %v1670 = vmax.f32 %v1668, %v1669
  %v1671 = vrot.slane %v1670, 1
  %v1672 = vmax.f32 %v1670, %v1671
  %v1673 = vsel %vm584, %v683, -inf
  %v1674 = vrot.slane %v1673, 4
  %v1675 = vmax.f32 %v1673, %v1674
  %v1676 = vrot.slane %v1675, 2
  %v1677 = vmax.f32 %v1675, %v1676
  %v1678 = vrot.slane %v1677, 1
  %v1679 = vmax.f32 %v1677, %v1678
  %v1680 = vsel %vm584, %v686, -inf
  %v1681 = vrot.slane %v1680, 4
  %v1682 = vmax.f32 %v1680, %v1681
  %v1683 = vrot.slane %v1682, 2
  %v1684 = vmax.f32 %v1682, %v1683
  %v1685 = vrot.slane %v1684, 1
  %v1686 = vmax.f32 %v1684, %v1685
  %v1687 = vsel %vm584, %v689, -inf
  %v1688 = vrot.slane %v1687, 4
  %v1689 = vmax.f32 %v1687, %v1688
  %v1690 = vrot.slane %v1689, 2
  %v1691 = vmax.f32 %v1689, %v1690
  %v1692 = vrot.slane %v1691, 1
  %v1693 = vmax.f32 %v1691, %v1692
  %v1694 = vsel %vm584, %v692, -inf
  %v1695 = vrot.slane %v1694, 4
  %v1696 = vmax.f32 %v1694, %v1695
  %v1697 = vrot.slane %v1696, 2
  %v1698 = vmax.f32 %v1696, %v1697
  %v1699 = vrot.slane %v1698, 1
  %v1700 = vmax.f32 %v1698, %v1699
  %v1701 = vsel %vm584, %v695, -inf
  %v1702 = vrot.slane %v1701, 4
  %v1703 = vmax.f32 %v1701, %v1702
  %v1704 = vrot.slane %v1703, 2
  %v1705 = vmax.f32 %v1703, %v1704
  %v1706 = vrot.slane %v1705, 1
  %v1707 = vmax.f32 %v1705, %v1706
  %v1708 = vsel %vm584, %v698, -inf
  %v1709 = vrot.slane %v1708, 4
  %v1710 = vmax.f32 %v1708, %v1709
  %v1711 = vrot.slane %v1710, 2
  %v1712 = vmax.f32 %v1710, %v1711
  %v1713 = vrot.slane %v1712, 1
  %v1714 = vmax.f32 %v1712, %v1713
  %v1715 = vsel %vm584, %v701, -inf
  %v1716 = vrot.slane %v1715, 4
  %v1717 = vmax.f32 %v1715, %v1716
  %v1718 = vrot.slane %v1717, 2
  %v1719 = vmax.f32 %v1717, %v1718
  %v1720 = vrot.slane %v1719, 1
  %v1721 = vmax.f32 %v1719, %v1720
  %v1722 = vsel %vm584, %v704, -inf
  %v1723 = vrot.slane %v1722, 4
  %v1724 = vmax.f32 %v1722, %v1723
  %v1725 = vrot.slane %v1724, 2
  %v1726 = vmax.f32 %v1724, %v1725
  %v1727 = vrot.slane %v1726, 1
  %v1728 = vmax.f32 %v1726, %v1727
  %v1729 = vsel %vm584, %v707, -inf
  %v1730 = vrot.slane %v1729, 4
  %v1731 = vmax.f32 %v1729, %v1730
  %v1732 = vrot.slane %v1731, 2
  %v1733 = vmax.f32 %v1731, %v1732
  %v1734 = vrot.slane %v1733, 1
  %v1735 = vmax.f32 %v1733, %v1734
  %v1736 = vsel %vm584, %v710, -inf
  %v1737 = vrot.slane %v1736, 4
  %v1738 = vmax.f32 %v1736, %v1737
  %v1739 = vrot.slane %v1738, 2
  %v1740 = vmax.f32 %v1738, %v1739
  %v1741 = vrot.slane %v1740, 1
  %v1742 = vmax.f32 %v1740, %v1741
  %v1743 = vsel %vm584, %v713, -inf
  %v1744 = vrot.slane %v1743, 4
  %v1745 = vmax.f32 %v1743, %v1744
  %v1746 = vrot.slane %v1745, 2
  %v1747 = vmax.f32 %v1745, %v1746
  %v1748 = vrot.slane %v1747, 1
  %v1749 = vmax.f32 %v1747, %v1748
  %v1750 = vsel %vm584, %v716, -inf
  %v1751 = vrot.slane %v1750, 4
  %v1752 = vmax.f32 %v1750, %v1751
  %v1753 = vrot.slane %v1752, 2
  %v1754 = vmax.f32 %v1752, %v1753
  %v1755 = vrot.slane %v1754, 1
  %v1756 = vmax.f32 %v1754, %v1755
  %v1757 = vsel %vm584, %v719, -inf
  %v1758 = vrot.slane %v1757, 4
  %v1759 = vmax.f32 %v1757, %v1758
  %v1760 = vrot.slane %v1759, 2
  %v1761 = vmax.f32 %v1759, %v1760
  %v1762 = vrot.slane %v1761, 1
  %v1763 = vmax.f32 %v1761, %v1762
  %v1764 = vsel %vm584, %v722, -inf
  %v1765 = vrot.slane %v1764, 4
  %v1766 = vmax.f32 %v1764, %v1765
  %v1767 = vrot.slane %v1766, 2
  %v1768 = vmax.f32 %v1766, %v1767
  %v1769 = vrot.slane %v1768, 1
  %v1770 = vmax.f32 %v1768, %v1769
  %v1771 = vsel %vm584, %v725, -inf
  %v1772 = vrot.slane %v1771, 4
  %v1773 = vmax.f32 %v1771, %v1772
  %v1774 = vrot.slane %v1773, 2
  %v1775 = vmax.f32 %v1773, %v1774
  %v1776 = vrot.slane %v1775, 1
  %v1777 = vmax.f32 %v1775, %v1776
  %v1778 = vsel %vm584, %v728, -inf
  %v1779 = vrot.slane %v1778, 4
  %v1780 = vmax.f32 %v1778, %v1779
  %v1781 = vrot.slane %v1780, 2
  %v1782 = vmax.f32 %v1780, %v1781
  %v1783 = vrot.slane %v1782, 1
  %v1784 = vmax.f32 %v1782, %v1783
  %v1785 = vsel %vm584, %v731, -inf
  %v1786 = vrot.slane %v1785, 4
  %v1787 = vmax.f32 %v1785, %v1786
  %v1788 = vrot.slane %v1787, 2
  %v1789 = vmax.f32 %v1787, %v1788
  %v1790 = vrot.slane %v1789, 1
  %v1791 = vmax.f32 %v1789, %v1790
  %v1792 = vsel %vm584, %v734, -inf
  %v1793 = vrot.slane %v1792, 4
  %v1794 = vmax.f32 %v1792, %v1793
  %v1795 = vrot.slane %v1794, 2
  %v1796 = vmax.f32 %v1794, %v1795
  %v1797 = vrot.slane %v1796, 1
  %v1798 = vmax.f32 %v1796, %v1797
  %v1799 = vsel %vm584, %v737, -inf
  %v1800 = vrot.slane %v1799, 4
  %v1801 = vmax.f32 %v1799, %v1800
  %v1802 = vrot.slane %v1801, 2
  %v1803 = vmax.f32 %v1801, %v1802
  %v1804 = vrot.slane %v1803, 1
  %v1805 = vmax.f32 %v1803, %v1804
  %v1806 = vsel %vm584, %v740, -inf
  %v1807 = vrot.slane %v1806, 4
  %v1808 = vmax.f32 %v1806, %v1807
  %v1809 = vrot.slane %v1808, 2
  %v1810 = vmax.f32 %v1808, %v1809
  %v1811 = vrot.slane %v1810, 1
  %v1812 = vmax.f32 %v1810, %v1811
  %v1813 = vsel %vm584, %v743, -inf
  %v1814 = vrot.slane %v1813, 4
  %v1815 = vmax.f32 %v1813, %v1814
  %v1816 = vrot.slane %v1815, 2
  %v1817 = vmax.f32 %v1815, %v1816
  %v1818 = vrot.slane %v1817, 1
  %v1819 = vmax.f32 %v1817, %v1818
  %v1820 = vsel %vm584, %v746, -inf
  %v1821 = vrot.slane %v1820, 4
  %v1822 = vmax.f32 %v1820, %v1821
  %v1823 = vrot.slane %v1822, 2
  %v1824 = vmax.f32 %v1822, %v1823
  %v1825 = vrot.slane %v1824, 1
  %v1826 = vmax.f32 %v1824, %v1825
  %v1827 = vsel %vm584, %v749, -inf
  %v1828 = vrot.slane %v1827, 4
  %v1829 = vmax.f32 %v1827, %v1828
  %v1830 = vrot.slane %v1829, 2
  %v1831 = vmax.f32 %v1829, %v1830
  %v1832 = vrot.slane %v1831, 1
  %v1833 = vmax.f32 %v1831, %v1832
  %v1834 = vsel %vm584, %v752, -inf
  %v1835 = vrot.slane %v1834, 4
  %v1836 = vmax.f32 %v1834, %v1835
  %v1837 = vrot.slane %v1836, 2
  %v1838 = vmax.f32 %v1836, %v1837
  %v1839 = vrot.slane %v1838, 1
  %v1840 = vmax.f32 %v1838, %v1839
  %v1841 = vsel %vm584, %v755, -inf
  %v1842 = vrot.slane %v1841, 4
  %v1843 = vmax.f32 %v1841, %v1842
  %v1844 = vrot.slane %v1843, 2
  %v1845 = vmax.f32 %v1843, %v1844
  %v1846 = vrot.slane %v1845, 1
  %v1847 = vmax.f32 %v1845, %v1846
  %v1848 = vsel %vm584, %v758, -inf
  %v1849 = vrot.slane %v1848, 4
  %v1850 = vmax.f32 %v1848, %v1849
  %v1851 = vrot.slane %v1850, 2
  %v1852 = vmax.f32 %v1850, %v1851
  %v1853 = vrot.slane %v1852, 1
  %v1854 = vmax.f32 %v1852, %v1853
  %v1855 = vsel %vm584, %v761, -inf
  %v1856 = vrot.slane %v1855, 4
  %v1857 = vmax.f32 %v1855, %v1856
  %v1858 = vrot.slane %v1857, 2
  %v1859 = vmax.f32 %v1857, %v1858
  %v1860 = vrot.slane %v1859, 1
  %v1861 = vmax.f32 %v1859, %v1860
  %v1862 = vsel %vm584, %v764, -inf
  %v1863 = vrot.slane %v1862, 4
  %v1864 = vmax.f32 %v1862, %v1863
  %v1865 = vrot.slane %v1864, 2
  %v1866 = vmax.f32 %v1864, %v1865
  %v1867 = vrot.slane %v1866, 1
  %v1868 = vmax.f32 %v1866, %v1867
  %v1869 = vsel %vm584, %v767, -inf
  %v1870 = vrot.slane %v1869, 4
  %v1871 = vmax.f32 %v1869, %v1870
  %v1872 = vrot.slane %v1871, 2
  %v1873 = vmax.f32 %v1871, %v1872
  %v1874 = vrot.slane %v1873, 1
  %v1875 = vmax.f32 %v1873, %v1874
  %v1876 = vsel %vm584, %v770, -inf
  %v1877 = vrot.slane %v1876, 4
  %v1878 = vmax.f32 %v1876, %v1877
  %v1879 = vrot.slane %v1878, 2
  %v1880 = vmax.f32 %v1878, %v1879
  %v1881 = vrot.slane %v1880, 1
  %v1882 = vmax.f32 %v1880, %v1881
  %v1883 = vsel %vm584, %v773, -inf
  %v1884 = vrot.slane %v1883, 4
  %v1885 = vmax.f32 %v1883, %v1884
  %v1886 = vrot.slane %v1885, 2
  %v1887 = vmax.f32 %v1885, %v1886
  %v1888 = vrot.slane %v1887, 1
  %v1889 = vmax.f32 %v1887, %v1888
  %v1890 = vsel %vm584, %v776, -inf
  %v1891 = vrot.slane %v1890, 4
  %v1892 = vmax.f32 %v1890, %v1891
  %v1893 = vrot.slane %v1892, 2
  %v1894 = vmax.f32 %v1892, %v1893
  %v1895 = vrot.slane %v1894, 1
  %v1896 = vmax.f32 %v1894, %v1895
  %v1897 = vsel %vm584, %v779, -inf
  %v1898 = vrot.slane %v1897, 4
  %v1899 = vmax.f32 %v1897, %v1898
  %v1900 = vrot.slane %v1899, 2
  %v1901 = vmax.f32 %v1899, %v1900
  %v1902 = vrot.slane %v1901, 1
  %v1903 = vmax.f32 %v1901, %v1902
  %v1904 = vsel %vm584, %v782, -inf
  %v1905 = vrot.slane %v1904, 4
  %v1906 = vmax.f32 %v1904, %v1905
  %v1907 = vrot.slane %v1906, 2
  %v1908 = vmax.f32 %v1906, %v1907
  %v1909 = vrot.slane %v1908, 1
  %v1910 = vmax.f32 %v1908, %v1909
  %v1911 = vsel %vm584, %v785, -inf
  %v1912 = vrot.slane %v1911, 4
  %v1913 = vmax.f32 %v1911, %v1912
  %v1914 = vrot.slane %v1913, 2
  %v1915 = vmax.f32 %v1913, %v1914
  %v1916 = vrot.slane %v1915, 1
  %v1917 = vmax.f32 %v1915, %v1916
  %v1918 = vsel %vm584, %v788, -inf
  %v1919 = vrot.slane %v1918, 4
  %v1920 = vmax.f32 %v1918, %v1919
  %v1921 = vrot.slane %v1920, 2
  %v1922 = vmax.f32 %v1920, %v1921
  %v1923 = vrot.slane %v1922, 1
  %v1924 = vmax.f32 %v1922, %v1923
  %v1925 = vsel %vm584, %v791, -inf
  %v1926 = vrot.slane %v1925, 4
  %v1927 = vmax.f32 %v1925, %v1926
  %v1928 = vrot.slane %v1927, 2
  %v1929 = vmax.f32 %v1927, %v1928
  %v1930 = vrot.slane %v1929, 1
  %v1931 = vmax.f32 %v1929, %v1930
  %v1932 = vsel %vm584, %v794, -inf
  %v1933 = vrot.slane %v1932, 4
  %v1934 = vmax.f32 %v1932, %v1933
  %v1935 = vrot.slane %v1934, 2
  %v1936 = vmax.f32 %v1934, %v1935
  %v1937 = vrot.slane %v1936, 1
  %v1938 = vmax.f32 %v1936, %v1937
  %v1939 = vsel %vm584, %v797, -inf
  %v1940 = vrot.slane %v1939, 4
  %v1941 = vmax.f32 %v1939, %v1940
  %v1942 = vrot.slane %v1941, 2
  %v1943 = vmax.f32 %v1941, %v1942
  %v1944 = vrot.slane %v1943, 1
  %v1945 = vmax.f32 %v1943, %v1944
  %v1946 = vsel %vm584, %v800, -inf
  %v1947 = vrot.slane %v1946, 4
  %v1948 = vmax.f32 %v1946, %v1947
  %v1949 = vrot.slane %v1948, 2
  %v1950 = vmax.f32 %v1948, %v1949
  %v1951 = vrot.slane %v1950, 1
  %v1952 = vmax.f32 %v1950, %v1951
  %v1953 = vsel %vm584, %v803, -inf
  %v1954 = vrot.slane %v1953, 4
  %v1955 = vmax.f32 %v1953, %v1954
  %v1956 = vrot.slane %v1955, 2
  %v1957 = vmax.f32 %v1955, %v1956
  %v1958 = vrot.slane %v1957, 1
  %v1959 = vmax.f32 %v1957, %v1958
  %v1960 = vsel %vm584, %v806, -inf
  %v1961 = vrot.slane %v1960, 4
  %v1962 = vmax.f32 %v1960, %v1961
  %v1963 = vrot.slane %v1962, 2
  %v1964 = vmax.f32 %v1962, %v1963
  %v1965 = vrot.slane %v1964, 1
  %v1966 = vmax.f32 %v1964, %v1965
  %v1967 = vsel %vm584, %v809, -inf
  %v1968 = vrot.slane %v1967, 4
  %v1969 = vmax.f32 %v1967, %v1968
  %v1970 = vrot.slane %v1969, 2
  %v1971 = vmax.f32 %v1969, %v1970
  %v1972 = vrot.slane %v1971, 1
  %v1973 = vmax.f32 %v1971, %v1972
  %v1974 = vsel %vm584, %v812, -inf
  %v1975 = vrot.slane %v1974, 4
  %v1976 = vmax.f32 %v1974, %v1975
  %v1977 = vrot.slane %v1976, 2
  %v1978 = vmax.f32 %v1976, %v1977
  %v1979 = vrot.slane %v1978, 1
  %v1980 = vmax.f32 %v1978, %v1979
  %v1981 = vsel %vm584, %v815, -inf
  %v1982 = vrot.slane %v1981, 4
  %v1983 = vmax.f32 %v1981, %v1982
  %v1984 = vrot.slane %v1983, 2
  %v1985 = vmax.f32 %v1983, %v1984
  %v1986 = vrot.slane %v1985, 1
  %v1987 = vmax.f32 %v1985, %v1986
  %v1988 = vsel %vm584, %v818, -inf
  %v1989 = vrot.slane %v1988, 4
  %v1990 = vmax.f32 %v1988, %v1989
  %v1991 = vrot.slane %v1990, 2
  %v1992 = vmax.f32 %v1990, %v1991
  %v1993 = vrot.slane %v1992, 1
  %v1994 = vmax.f32 %v1992, %v1993
  %v1995 = vsel %vm584, %v821, -inf
  %v1996 = vrot.slane %v1995, 4
  %v1997 = vmax.f32 %v1995, %v1996
  %v1998 = vrot.slane %v1997, 2
  %v1999 = vmax.f32 %v1997, %v1998
  %v2000 = vrot.slane %v1999, 1
  %v2001 = vmax.f32 %v1999, %v2000
  %v2002 = vsel %vm584, %v824, -inf
  %v2003 = vrot.slane %v2002, 4
  %v2004 = vmax.f32 %v2002, %v2003
  %v2005 = vrot.slane %v2004, 2
  %v2006 = vmax.f32 %v2004, %v2005
  %v2007 = vrot.slane %v2006, 1
  %v2008 = vmax.f32 %v2006, %v2007
  %v2009 = vsel %vm584, %v827, -inf
  %v2010 = vrot.slane %v2009, 4
  %v2011 = vmax.f32 %v2009, %v2010
  %v2012 = vrot.slane %v2011, 2
  %v2013 = vmax.f32 %v2011, %v2012
  %v2014 = vrot.slane %v2013, 1
  %v2015 = vmax.f32 %v2013, %v2014
  %v2016 = vsel %vm584, %v830, -inf
  %v2017 = vrot.slane %v2016, 4
  %v2018 = vmax.f32 %v2016, %v2017
  %v2019 = vrot.slane %v2018, 2
  %v2020 = vmax.f32 %v2018, %v2019
  %v2021 = vrot.slane %v2020, 1
  %v2022 = vmax.f32 %v2020, %v2021
  %v2023 = vsel %vm584, %v833, -inf
  %v2024 = vrot.slane %v2023, 4
  %v2025 = vmax.f32 %v2023, %v2024
  %v2026 = vrot.slane %v2025, 2
  %v2027 = vmax.f32 %v2025, %v2026
  %v2028 = vrot.slane %v2027, 1
  %v2029 = vmax.f32 %v2027, %v2028
  %v2030 = vsel %vm584, %v836, -inf
  %v2031 = vrot.slane %v2030, 4
  %v2032 = vmax.f32 %v2030, %v2031
  %v2033 = vrot.slane %v2032, 2
  %v2034 = vmax.f32 %v2032, %v2033
  %v2035 = vrot.slane %v2034, 1
  %v2036 = vmax.f32 %v2034, %v2035
  %v2037 = vsel %vm584, %v839, -inf
  %v2038 = vrot.slane %v2037, 4
  %v2039 = vmax.f32 %v2037, %v2038
  %v2040 = vrot.slane %v2039, 2
  %v2041 = vmax.f32 %v2039, %v2040
  %v2042 = vrot.slane %v2041, 1
  %v2043 = vmax.f32 %v2041, %v2042
  %v2044 = vsel %vm584, %v842, -inf
  %v2045 = vrot.slane %v2044, 4
  %v2046 = vmax.f32 %v2044, %v2045
  %v2047 = vrot.slane %v2046, 2
  %v2048 = vmax.f32 %v2046, %v2047
  %v2049 = vrot.slane %v2048, 1
  %v2050 = vmax.f32 %v2048, %v2049
  %v2051 = vsel %vm584, %v845, -inf
  %v2052 = vrot.slane %v2051, 4
  %v2053 = vmax.f32 %v2051, %v2052
  %v2054 = vrot.slane %v2053, 2
  %v2055 = vmax.f32 %v2053, %v2054
  %v2056 = vrot.slane %v2055, 1
  %v2057 = vmax.f32 %v2055, %v2056
  %v2058 = vsel %vm584, %v848, -inf
  %v2059 = vrot.slane %v2058, 4
  %v2060 = vmax.f32 %v2058, %v2059
  %v2061 = vrot.slane %v2060, 2
  %v2062 = vmax.f32 %v2060, %v2061
  %v2063 = vrot.slane %v2062, 1
  %v2064 = vmax.f32 %v2062, %v2063
  %v2065 = vsel %vm584, %v851, -inf
  %v2066 = vrot.slane %v2065, 4
  %v2067 = vmax.f32 %v2065, %v2066
  %v2068 = vrot.slane %v2067, 2
  %v2069 = vmax.f32 %v2067, %v2068
  %v2070 = vrot.slane %v2069, 1
  %v2071 = vmax.f32 %v2069, %v2070
  %v2072 = vsel %vm584, %v854, -inf
  %v2073 = vrot.slane %v2072, 4
  %v2074 = vmax.f32 %v2072, %v2073
  %v2075 = vrot.slane %v2074, 2
  %v2076 = vmax.f32 %v2074, %v2075
  %v2077 = vrot.slane %v2076, 1
  %v2078 = vmax.f32 %v2076, %v2077
  %v2079 = vsel %vm584, %v857, -inf
  %v2080 = vrot.slane %v2079, 4
  %v2081 = vmax.f32 %v2079, %v2080
  %v2082 = vrot.slane %v2081, 2
  %v2083 = vmax.f32 %v2081, %v2082
  %v2084 = vrot.slane %v2083, 1
  %v2085 = vmax.f32 %v2083, %v2084
  %v2086 = vsel %vm584, %v860, -inf
  %v2087 = vrot.slane %v2086, 4
  %v2088 = vmax.f32 %v2086, %v2087
  %v2089 = vrot.slane %v2088, 2
  %v2090 = vmax.f32 %v2088, %v2089
  %v2091 = vrot.slane %v2090, 1
  %v2092 = vmax.f32 %v2090, %v2091
  %v2093 = vsel %vm584, %v863, -inf
  %v2094 = vrot.slane %v2093, 4
  %v2095 = vmax.f32 %v2093, %v2094
  %v2096 = vrot.slane %v2095, 2
  %v2097 = vmax.f32 %v2095, %v2096
  %v2098 = vrot.slane %v2097, 1
  %v2099 = vmax.f32 %v2097, %v2098
  %v2100 = vsel %vm584, %v866, -inf
  %v2101 = vrot.slane %v2100, 4
  %v2102 = vmax.f32 %v2100, %v2101
  %v2103 = vrot.slane %v2102, 2
  %v2104 = vmax.f32 %v2102, %v2103
  %v2105 = vrot.slane %v2104, 1
  %v2106 = vmax.f32 %v2104, %v2105
  %v2107 = vsel %vm584, %v869, -inf
  %v2108 = vrot.slane %v2107, 4
  %v2109 = vmax.f32 %v2107, %v2108
  %v2110 = vrot.slane %v2109, 2
  %v2111 = vmax.f32 %v2109, %v2110
  %v2112 = vrot.slane %v2111, 1
  %v2113 = vmax.f32 %v2111, %v2112
  %v2114 = vsel %vm584, %v872, -inf
  %v2115 = vrot.slane %v2114, 4
  %v2116 = vmax.f32 %v2114, %v2115
  %v2117 = vrot.slane %v2116, 2
  %v2118 = vmax.f32 %v2116, %v2117
  %v2119 = vrot.slane %v2118, 1
  %v2120 = vmax.f32 %v2118, %v2119
  %v2121 = vsel %vm584, %v875, -inf
  %v2122 = vrot.slane %v2121, 4
  %v2123 = vmax.f32 %v2121, %v2122
  %v2124 = vrot.slane %v2123, 2
  %v2125 = vmax.f32 %v2123, %v2124
  %v2126 = vrot.slane %v2125, 1
  %v2127 = vmax.f32 %v2125, %v2126
  %v2128 = vsel %vm584, %v878, -inf
  %v2129 = vrot.slane %v2128, 4
  %v2130 = vmax.f32 %v2128, %v2129
  %v2131 = vrot.slane %v2130, 2
  %v2132 = vmax.f32 %v2130, %v2131
  %v2133 = vrot.slane %v2132, 1
  %v2134 = vmax.f32 %v2132, %v2133
  %v2135 = vsel %vm584, %v881, -inf
  %v2136 = vrot.slane %v2135, 4
  %v2137 = vmax.f32 %v2135, %v2136
  %v2138 = vrot.slane %v2137, 2
  %v2139 = vmax.f32 %v2137, %v2138
  %v2140 = vrot.slane %v2139, 1
  %v2141 = vmax.f32 %v2139, %v2140
  %v2142 = vsel %vm584, %v884, -inf
  %v2143 = vrot.slane %v2142, 4
  %v2144 = vmax.f32 %v2142, %v2143
  %v2145 = vrot.slane %v2144, 2
  %v2146 = vmax.f32 %v2144, %v2145
  %v2147 = vrot.slane %v2146, 1
  %v2148 = vmax.f32 %v2146, %v2147
  %v2149 = vsel %vm584, %v887, -inf
  %v2150 = vrot.slane %v2149, 4
  %v2151 = vmax.f32 %v2149, %v2150
  %v2152 = vrot.slane %v2151, 2
  %v2153 = vmax.f32 %v2151, %v2152
  %v2154 = vrot.slane %v2153, 1
  %v2155 = vmax.f32 %v2153, %v2154
  %v2156 = vsel %vm584, %v890, -inf
  %v2157 = vrot.slane %v2156, 4
  %v2158 = vmax.f32 %v2156, %v2157
  %v2159 = vrot.slane %v2158, 2
  %v2160 = vmax.f32 %v2158, %v2159
  %v2161 = vrot.slane %v2160, 1
  %v2162 = vmax.f32 %v2160, %v2161
  %v2163 = vsel %vm584, %v893, -inf
  %v2164 = vrot.slane %v2163, 4
  %v2165 = vmax.f32 %v2163, %v2164
  %v2166 = vrot.slane %v2165, 2
  %v2167 = vmax.f32 %v2165, %v2166
  %v2168 = vrot.slane %v2167, 1
  %v2169 = vmax.f32 %v2167, %v2168
  %v2170 = vsel %vm584, %v896, -inf
  %v2171 = vrot.slane %v2170, 4
  %v2172 = vmax.f32 %v2170, %v2171
  %v2173 = vrot.slane %v2172, 2
  %v2174 = vmax.f32 %v2172, %v2173
  %v2175 = vrot.slane %v2174, 1
  %v2176 = vmax.f32 %v2174, %v2175
  %v2177 = vsel %vm584, %v899, -inf
  %v2178 = vrot.slane %v2177, 4
  %v2179 = vmax.f32 %v2177, %v2178
  %v2180 = vrot.slane %v2179, 2
  %v2181 = vmax.f32 %v2179, %v2180
  %v2182 = vrot.slane %v2181, 1
  %v2183 = vmax.f32 %v2181, %v2182
  %v2184 = vsel %vm584, %v902, -inf
  %v2185 = vrot.slane %v2184, 4
  %v2186 = vmax.f32 %v2184, %v2185
  %v2187 = vrot.slane %v2186, 2
  %v2188 = vmax.f32 %v2186, %v2187
  %v2189 = vrot.slane %v2188, 1
  %v2190 = vmax.f32 %v2188, %v2189
  %v2191 = vsel %vm584, %v905, -inf
  %v2192 = vrot.slane %v2191, 4
  %v2193 = vmax.f32 %v2191, %v2192
  %v2194 = vrot.slane %v2193, 2
  %v2195 = vmax.f32 %v2193, %v2194
  %v2196 = vrot.slane %v2195, 1
  %v2197 = vmax.f32 %v2195, %v2196
  %v2198 = vsel %vm584, %v908, -inf
  %v2199 = vrot.slane %v2198, 4
  %v2200 = vmax.f32 %v2198, %v2199
  %v2201 = vrot.slane %v2200, 2
  %v2202 = vmax.f32 %v2200, %v2201
  %v2203 = vrot.slane %v2202, 1
  %v2204 = vmax.f32 %v2202, %v2203
  %v2205 = vsel %vm584, %v911, -inf
  %v2206 = vrot.slane %v2205, 4
  %v2207 = vmax.f32 %v2205, %v2206
  %v2208 = vrot.slane %v2207, 2
  %v2209 = vmax.f32 %v2207, %v2208
  %v2210 = vrot.slane %v2209, 1
  %v2211 = vmax.f32 %v2209, %v2210
  %v2212 = vsel %vm584, %v914, -inf
  %v2213 = vrot.slane %v2212, 4
  %v2214 = vmax.f32 %v2212, %v2213
  %v2215 = vrot.slane %v2214, 2
  %v2216 = vmax.f32 %v2214, %v2215
  %v2217 = vrot.slane %v2216, 1
  %v2218 = vmax.f32 %v2216, %v2217
  %v2219 = vsel %vm584, %v917, -inf
  %v2220 = vrot.slane %v2219, 4
  %v2221 = vmax.f32 %v2219, %v2220
  %v2222 = vrot.slane %v2221, 2
  %v2223 = vmax.f32 %v2221, %v2222
  %v2224 = vrot.slane %v2223, 1
  %v2225 = vmax.f32 %v2223, %v2224
  %v2226 = vsel %vm584, %v920, -inf
  %v2227 = vrot.slane %v2226, 4
  %v2228 = vmax.f32 %v2226, %v2227
  %v2229 = vrot.slane %v2228, 2
  %v2230 = vmax.f32 %v2228, %v2229
  %v2231 = vrot.slane %v2230, 1
  %v2232 = vmax.f32 %v2230, %v2231
  %v2233 = vsel %vm584, %v923, -inf
  %v2234 = vrot.slane %v2233, 4
  %v2235 = vmax.f32 %v2233, %v2234
  %v2236 = vrot.slane %v2235, 2
  %v2237 = vmax.f32 %v2235, %v2236
  %v2238 = vrot.slane %v2237, 1
  %v2239 = vmax.f32 %v2237, %v2238
  %v2240 = vsel %vm584, %v926, -inf
  %v2241 = vrot.slane %v2240, 4
  %v2242 = vmax.f32 %v2240, %v2241
  %v2243 = vrot.slane %v2242, 2
  %v2244 = vmax.f32 %v2242, %v2243
  %v2245 = vrot.slane %v2244, 1
  %v2246 = vmax.f32 %v2244, %v2245
  %v2247 = vsel %vm584, %v929, -inf
  %v2248 = vrot.slane %v2247, 4
  %v2249 = vmax.f32 %v2247, %v2248
  %v2250 = vrot.slane %v2249, 2
  %v2251 = vmax.f32 %v2249, %v2250
  %v2252 = vrot.slane %v2251, 1
  %v2253 = vmax.f32 %v2251, %v2252
  %v2254 = vsel %vm584, %v932, -inf
  %v2255 = vrot.slane %v2254, 4
  %v2256 = vmax.f32 %v2254, %v2255
  %v2257 = vrot.slane %v2256, 2
  %v2258 = vmax.f32 %v2256, %v2257
  %v2259 = vrot.slane %v2258, 1
  %v2260 = vmax.f32 %v2258, %v2259
  %v2261 = vsel %vm584, %v935, -inf
  %v2262 = vrot.slane %v2261, 4
  %v2263 = vmax.f32 %v2261, %v2262
  %v2264 = vrot.slane %v2263, 2
  %v2265 = vmax.f32 %v2263, %v2264
  %v2266 = vrot.slane %v2265, 1
  %v2267 = vmax.f32 %v2265, %v2266
  %v2268 = vsel %vm584, %v938, -inf
  %v2269 = vrot.slane %v2268, 4
  %v2270 = vmax.f32 %v2268, %v2269
  %v2271 = vrot.slane %v2270, 2
  %v2272 = vmax.f32 %v2270, %v2271
  %v2273 = vrot.slane %v2272, 1
  %v2274 = vmax.f32 %v2272, %v2273
  %v2275 = vsel %vm584, %v941, -inf
  %v2276 = vrot.slane %v2275, 4
  %v2277 = vmax.f32 %v2275, %v2276
  %v2278 = vrot.slane %v2277, 2
  %v2279 = vmax.f32 %v2277, %v2278
  %v2280 = vrot.slane %v2279, 1
  %v2281 = vmax.f32 %v2279, %v2280
  %v2282 = vsel %vm584, %v944, -inf
  %v2283 = vrot.slane %v2282, 4
  %v2284 = vmax.f32 %v2282, %v2283
  %v2285 = vrot.slane %v2284, 2
  %v2286 = vmax.f32 %v2284, %v2285
  %v2287 = vrot.slane %v2286, 1
  %v2288 = vmax.f32 %v2286, %v2287
  %v2289 = vsel %vm584, %v947, -inf
  %v2290 = vrot.slane %v2289, 4
  %v2291 = vmax.f32 %v2289, %v2290
  %v2292 = vrot.slane %v2291, 2
  %v2293 = vmax.f32 %v2291, %v2292
  %v2294 = vrot.slane %v2293, 1
  %v2295 = vmax.f32 %v2293, %v2294
  %v2296 = vsel %vm584, %v950, -inf
  %v2297 = vrot.slane %v2296, 4
  %v2298 = vmax.f32 %v2296, %v2297
  %v2299 = vrot.slane %v2298, 2
  %v2300 = vmax.f32 %v2298, %v2299
  %v2301 = vrot.slane %v2300, 1
  %v2302 = vmax.f32 %v2300, %v2301
  %v2303 = vsel %vm584, %v953, -inf
  %v2304 = vrot.slane %v2303, 4
  %v2305 = vmax.f32 %v2303, %v2304
  %v2306 = vrot.slane %v2305, 2
  %v2307 = vmax.f32 %v2305, %v2306
  %v2308 = vrot.slane %v2307, 1
  %v2309 = vmax.f32 %v2307, %v2308
  %v2310 = vsel %vm584, %v956, -inf
  %v2311 = vrot.slane %v2310, 4
  %v2312 = vmax.f32 %v2310, %v2311
  %v2313 = vrot.slane %v2312, 2
  %v2314 = vmax.f32 %v2312, %v2313
  %v2315 = vrot.slane %v2314, 1
  %v2316 = vmax.f32 %v2314, %v2315
  %v2317 = vsel %vm584, %v959, -inf
  %v2318 = vrot.slane %v2317, 4
  %v2319 = vmax.f32 %v2317, %v2318
  %v2320 = vrot.slane %v2319, 2
  %v2321 = vmax.f32 %v2319, %v2320
  %v2322 = vrot.slane %v2321, 1
  %v2323 = vmax.f32 %v2321, %v2322
  %v2324 = vsel %vm584, %v962, -inf
  %v2325 = vrot.slane %v2324, 4
  %v2326 = vmax.f32 %v2324, %v2325
  %v2327 = vrot.slane %v2326, 2
  %v2328 = vmax.f32 %v2326, %v2327
  %v2329 = vrot.slane %v2328, 1
  %v2330 = vmax.f32 %v2328, %v2329
  %v2331 = vsel %vm584, %v965, -inf
  %v2332 = vrot.slane %v2331, 4
  %v2333 = vmax.f32 %v2331, %v2332
  %v2334 = vrot.slane %v2333, 2
  %v2335 = vmax.f32 %v2333, %v2334
  %v2336 = vrot.slane %v2335, 1
  %v2337 = vmax.f32 %v2335, %v2336
  %v2338 = vsel %vm584, %v968, -inf
  %v2339 = vrot.slane %v2338, 4
  %v2340 = vmax.f32 %v2338, %v2339
  %v2341 = vrot.slane %v2340, 2
  %v2342 = vmax.f32 %v2340, %v2341
  %v2343 = vrot.slane %v2342, 1
  %v2344 = vmax.f32 %v2342, %v2343
  %v2345 = vsel %vm584, %v971, -inf
  %v2346 = vrot.slane %v2345, 4
  %v2347 = vmax.f32 %v2345, %v2346
  %v2348 = vrot.slane %v2347, 2
  %v2349 = vmax.f32 %v2347, %v2348
  %v2350 = vrot.slane %v2349, 1
  %v2351 = vmax.f32 %v2349, %v2350
  %v2352 = vsel %vm584, %v974, -inf
  %v2353 = vrot.slane %v2352, 4
  %v2354 = vmax.f32 %v2352, %v2353
  %v2355 = vrot.slane %v2354, 2
  %v2356 = vmax.f32 %v2354, %v2355
  %v2357 = vrot.slane %v2356, 1
  %v2358 = vmax.f32 %v2356, %v2357
  %v2359 = vsel %vm584, %v977, -inf
  %v2360 = vrot.slane %v2359, 4
  %v2361 = vmax.f32 %v2359, %v2360
  %v2362 = vrot.slane %v2361, 2
  %v2363 = vmax.f32 %v2361, %v2362
  %v2364 = vrot.slane %v2363, 1
  %v2365 = vmax.f32 %v2363, %v2364
  %v2366 = vsel %vm584, %v980, -inf
  %v2367 = vrot.slane %v2366, 4
  %v2368 = vmax.f32 %v2366, %v2367
  %v2369 = vrot.slane %v2368, 2
  %v2370 = vmax.f32 %v2368, %v2369
  %v2371 = vrot.slane %v2370, 1
  %v2372 = vmax.f32 %v2370, %v2371
  %v2373 = vsel %vm584, %v983, -inf
  %v2374 = vrot.slane %v2373, 4
  %v2375 = vmax.f32 %v2373, %v2374
  %v2376 = vrot.slane %v2375, 2
  %v2377 = vmax.f32 %v2375, %v2376
  %v2378 = vrot.slane %v2377, 1
  %v2379 = vmax.f32 %v2377, %v2378
  %v2380 = vsel %vm584, %v986, -inf
  %v2381 = vrot.slane %v2380, 4
  %v2382 = vmax.f32 %v2380, %v2381
  %v2383 = vrot.slane %v2382, 2
  %v2384 = vmax.f32 %v2382, %v2383
  %v2385 = vrot.slane %v2384, 1
  %v2386 = vmax.f32 %v2384, %v2385
  %v2387 = vsel %vm584, %v989, -inf
  %v2388 = vrot.slane %v2387, 4
  %v2389 = vmax.f32 %v2387, %v2388
  %v2390 = vrot.slane %v2389, 2
  %v2391 = vmax.f32 %v2389, %v2390
  %v2392 = vrot.slane %v2391, 1
  %v2393 = vmax.f32 %v2391, %v2392
  %v2394 = vsel %vm584, %v992, -inf
  %v2395 = vrot.slane %v2394, 4
  %v2396 = vmax.f32 %v2394, %v2395
  %v2397 = vrot.slane %v2396, 2
  %v2398 = vmax.f32 %v2396, %v2397
  %v2399 = vrot.slane %v2398, 1
  %v2400 = vmax.f32 %v2398, %v2399
  %v2401 = vsel %vm584, %v995, -inf
  %v2402 = vrot.slane %v2401, 4
  %v2403 = vmax.f32 %v2401, %v2402
  %v2404 = vrot.slane %v2403, 2
  %v2405 = vmax.f32 %v2403, %v2404
  %v2406 = vrot.slane %v2405, 1
  %v2407 = vmax.f32 %v2405, %v2406
  %v2408 = vsel %vm584, %v998, -inf
  %v2409 = vrot.slane %v2408, 4
  %v2410 = vmax.f32 %v2408, %v2409
  %v2411 = vrot.slane %v2410, 2
  %v2412 = vmax.f32 %v2410, %v2411
  %v2413 = vrot.slane %v2412, 1
  %v2414 = vmax.f32 %v2412, %v2413
  %v2415 = vsel %vm584, %v1001, -inf
  %v2416 = vrot.slane %v2415, 4
  %v2417 = vmax.f32 %v2415, %v2416
  %v2418 = vrot.slane %v2417, 2
  %v2419 = vmax.f32 %v2417, %v2418
  %v2420 = vrot.slane %v2419, 1
  %v2421 = vmax.f32 %v2419, %v2420
  %v2422 = vsel %vm584, %v1004, -inf
  %v2423 = vrot.slane %v2422, 4
  %v2424 = vmax.f32 %v2422, %v2423
  %v2425 = vrot.slane %v2424, 2
  %v2426 = vmax.f32 %v2424, %v2425
  %v2427 = vrot.slane %v2426, 1
  %v2428 = vmax.f32 %v2426, %v2427
  %v2429 = vsel %vm584, %v1007, -inf
  %v2430 = vrot.slane %v2429, 4
  %v2431 = vmax.f32 %v2429, %v2430
  %v2432 = vrot.slane %v2431, 2
  %v2433 = vmax.f32 %v2431, %v2432
  %v2434 = vrot.slane %v2433, 1
  %v2435 = vmax.f32 %v2433, %v2434
  %v2436 = vsel %vm584, %v1010, -inf
  %v2437 = vrot.slane %v2436, 4
  %v2438 = vmax.f32 %v2436, %v2437
  %v2439 = vrot.slane %v2438, 2
  %v2440 = vmax.f32 %v2438, %v2439
  %v2441 = vrot.slane %v2440, 1
  %v2442 = vmax.f32 %v2440, %v2441
  %v2443 = vsel %vm584, %v1013, -inf
  %v2444 = vrot.slane %v2443, 4
  %v2445 = vmax.f32 %v2443, %v2444
  %v2446 = vrot.slane %v2445, 2
  %v2447 = vmax.f32 %v2445, %v2446
  %v2448 = vrot.slane %v2447, 1
  %v2449 = vmax.f32 %v2447, %v2448
  %v2450 = vsel %vm584, %v1016, -inf
  %v2451 = vrot.slane %v2450, 4
  %v2452 = vmax.f32 %v2450, %v2451
  %v2453 = vrot.slane %v2452, 2
  %v2454 = vmax.f32 %v2452, %v2453
  %v2455 = vrot.slane %v2454, 1
  %v2456 = vmax.f32 %v2454, %v2455
  %v2457 = vsel %vm584, %v1019, -inf
  %v2458 = vrot.slane %v2457, 4
  %v2459 = vmax.f32 %v2457, %v2458
  %v2460 = vrot.slane %v2459, 2
  %v2461 = vmax.f32 %v2459, %v2460
  %v2462 = vrot.slane %v2461, 1
  %v2463 = vmax.f32 %v2461, %v2462
  %v2464 = vsel %vm584, %v1022, -inf
  %v2465 = vrot.slane %v2464, 4
  %v2466 = vmax.f32 %v2464, %v2465
  %v2467 = vrot.slane %v2466, 2
  %v2468 = vmax.f32 %v2466, %v2467
  %v2469 = vrot.slane %v2468, 1
  %v2470 = vmax.f32 %v2468, %v2469
  %v2471 = vsel %vm584, %v1025, -inf
  %v2472 = vrot.slane %v2471, 4
  %v2473 = vmax.f32 %v2471, %v2472
  %v2474 = vrot.slane %v2473, 2
  %v2475 = vmax.f32 %v2473, %v2474
  %v2476 = vrot.slane %v2475, 1
  %v2477 = vmax.f32 %v2475, %v2476
  %v2478 = vsel %vm584, %v1028, -inf
  %v2479 = vrot.slane %v2478, 4
  %v2480 = vmax.f32 %v2478, %v2479
  %v2481 = vrot.slane %v2480, 2
  %v2482 = vmax.f32 %v2480, %v2481
  %v2483 = vrot.slane %v2482, 1
  %v2484 = vmax.f32 %v2482, %v2483
  %v2485 = vsel %vm584, %v1031, -inf
  %v2486 = vrot.slane %v2485, 4
  %v2487 = vmax.f32 %v2485, %v2486
  %v2488 = vrot.slane %v2487, 2
  %v2489 = vmax.f32 %v2487, %v2488
  %v2490 = vrot.slane %v2489, 1
  %v2491 = vmax.f32 %v2489, %v2490
  %v2492 = vsel %vm584, %v1034, -inf
  %v2493 = vrot.slane %v2492, 4
  %v2494 = vmax.f32 %v2492, %v2493
  %v2495 = vrot.slane %v2494, 2
  %v2496 = vmax.f32 %v2494, %v2495
  %v2497 = vrot.slane %v2496, 1
  %v2498 = vmax.f32 %v2496, %v2497
  %v2499 = vsel %vm584, %v1037, -inf
  %v2500 = vrot.slane %v2499, 4
  %v2501 = vmax.f32 %v2499, %v2500
  %v2502 = vrot.slane %v2501, 2
  %v2503 = vmax.f32 %v2501, %v2502
  %v2504 = vrot.slane %v2503, 1
  %v2505 = vmax.f32 %v2503, %v2504
  %v2506 = vsel %vm584, %v1040, -inf
  %v2507 = vrot.slane %v2506, 4
  %v2508 = vmax.f32 %v2506, %v2507
  %v2509 = vrot.slane %v2508, 2
  %v2510 = vmax.f32 %v2508, %v2509
  %v2511 = vrot.slane %v2510, 1
  %v2512 = vmax.f32 %v2510, %v2511
  %v2513 = vsel %vm584, %v1043, -inf
  %v2514 = vrot.slane %v2513, 4
  %v2515 = vmax.f32 %v2513, %v2514
  %v2516 = vrot.slane %v2515, 2
  %v2517 = vmax.f32 %v2515, %v2516
  %v2518 = vrot.slane %v2517, 1
  %v2519 = vmax.f32 %v2517, %v2518
  %v2520 = vsel %vm584, %v1046, -inf
  %v2521 = vrot.slane %v2520, 4
  %v2522 = vmax.f32 %v2520, %v2521
  %v2523 = vrot.slane %v2522, 2
  %v2524 = vmax.f32 %v2522, %v2523
  %v2525 = vrot.slane %v2524, 1
  %v2526 = vmax.f32 %v2524, %v2525
  %v2527 = vsel %vm584, %v1049, -inf
  %v2528 = vrot.slane %v2527, 4
  %v2529 = vmax.f32 %v2527, %v2528
  %v2530 = vrot.slane %v2529, 2
  %v2531 = vmax.f32 %v2529, %v2530
  %v2532 = vrot.slane %v2531, 1
  %v2533 = vmax.f32 %v2531, %v2532
  %v2534 = vsel %vm584, %v1052, -inf
  %v2535 = vrot.slane %v2534, 4
  %v2536 = vmax.f32 %v2534, %v2535
  %v2537 = vrot.slane %v2536, 2
  %v2538 = vmax.f32 %v2536, %v2537
  %v2539 = vrot.slane %v2538, 1
  %v2540 = vmax.f32 %v2538, %v2539
  %v2541 = vsel %vm584, %v1055, -inf
  %v2542 = vrot.slane %v2541, 4
  %v2543 = vmax.f32 %v2541, %v2542
  %v2544 = vrot.slane %v2543, 2
  %v2545 = vmax.f32 %v2543, %v2544
  %v2546 = vrot.slane %v2545, 1
  %v2547 = vmax.f32 %v2545, %v2546
  %v2548 = vsel %vm584, %v1058, -inf
  %v2549 = vrot.slane %v2548, 4
  %v2550 = vmax.f32 %v2548, %v2549
  %v2551 = vrot.slane %v2550, 2
  %v2552 = vmax.f32 %v2550, %v2551
  %v2553 = vrot.slane %v2552, 1
  %v2554 = vmax.f32 %v2552, %v2553
  %v2555 = vsel %vm584, %v1061, -inf
  %v2556 = vrot.slane %v2555, 4
  %v2557 = vmax.f32 %v2555, %v2556
  %v2558 = vrot.slane %v2557, 2
  %v2559 = vmax.f32 %v2557, %v2558
  %v2560 = vrot.slane %v2559, 1
  %v2561 = vmax.f32 %v2559, %v2560
  %v2562 = vsel %vm584, %v1064, -inf
  %v2563 = vrot.slane %v2562, 4
  %v2564 = vmax.f32 %v2562, %v2563
  %v2565 = vrot.slane %v2564, 2
  %v2566 = vmax.f32 %v2564, %v2565
  %v2567 = vrot.slane %v2566, 1
  %v2568 = vmax.f32 %v2566, %v2567
  %v2569 = vsel %vm584, %v1067, -inf
  %v2570 = vrot.slane %v2569, 4
  %v2571 = vmax.f32 %v2569, %v2570
  %v2572 = vrot.slane %v2571, 2
  %v2573 = vmax.f32 %v2571, %v2572
  %v2574 = vrot.slane %v2573, 1
  %v2575 = vmax.f32 %v2573, %v2574
  %v2576 = vsel %vm584, %v1070, -inf
  %v2577 = vrot.slane %v2576, 4
  %v2578 = vmax.f32 %v2576, %v2577
  %v2579 = vrot.slane %v2578, 2
  %v2580 = vmax.f32 %v2578, %v2579
  %v2581 = vrot.slane %v2580, 1
  %v2582 = vmax.f32 %v2580, %v2581
  %v2583 = vsel %vm584, %v1073, -inf
  %v2584 = vrot.slane %v2583, 4
  %v2585 = vmax.f32 %v2583, %v2584
  %v2586 = vrot.slane %v2585, 2
  %v2587 = vmax.f32 %v2585, %v2586
  %v2588 = vrot.slane %v2587, 1
  %v2589 = vmax.f32 %v2587, %v2588
  %v2590 = vsel %vm584, %v1076, -inf
  %v2591 = vrot.slane %v2590, 4
  %v2592 = vmax.f32 %v2590, %v2591
  %v2593 = vrot.slane %v2592, 2
  %v2594 = vmax.f32 %v2592, %v2593
  %v2595 = vrot.slane %v2594, 1
  %v2596 = vmax.f32 %v2594, %v2595
  %v2597 = vsel %vm584, %v1079, -inf
  %v2598 = vrot.slane %v2597, 4
  %v2599 = vmax.f32 %v2597, %v2598
  %v2600 = vrot.slane %v2599, 2
  %v2601 = vmax.f32 %v2599, %v2600
  %v2602 = vrot.slane %v2601, 1
  %v2603 = vmax.f32 %v2601, %v2602
  %v2604 = vsel %vm584, %v1082, -inf
  %v2605 = vrot.slane %v2604, 4
  %v2606 = vmax.f32 %v2604, %v2605
  %v2607 = vrot.slane %v2606, 2
  %v2608 = vmax.f32 %v2606, %v2607
  %v2609 = vrot.slane %v2608, 1
  %v2610 = vmax.f32 %v2608, %v2609
  %v2611 = vsel %vm584, %v1085, -inf
  %v2612 = vrot.slane %v2611, 4
  %v2613 = vmax.f32 %v2611, %v2612
  %v2614 = vrot.slane %v2613, 2
  %v2615 = vmax.f32 %v2613, %v2614
  %v2616 = vrot.slane %v2615, 1
  %v2617 = vmax.f32 %v2615, %v2616
  %v2618 = vsel %vm584, %v1088, -inf
  %v2619 = vrot.slane %v2618, 4
  %v2620 = vmax.f32 %v2618, %v2619
  %v2621 = vrot.slane %v2620, 2
  %v2622 = vmax.f32 %v2620, %v2621
  %v2623 = vrot.slane %v2622, 1
  %v2624 = vmax.f32 %v2622, %v2623
  %v2625 = vsel %vm584, %v1091, -inf
  %v2626 = vrot.slane %v2625, 4
  %v2627 = vmax.f32 %v2625, %v2626
  %v2628 = vrot.slane %v2627, 2
  %v2629 = vmax.f32 %v2627, %v2628
  %v2630 = vrot.slane %v2629, 1
  %v2631 = vmax.f32 %v2629, %v2630
  %v2632 = vsel %vm584, %v1094, -inf
  %v2633 = vrot.slane %v2632, 4
  %v2634 = vmax.f32 %v2632, %v2633
  %v2635 = vrot.slane %v2634, 2
  %v2636 = vmax.f32 %v2634, %v2635
  %v2637 = vrot.slane %v2636, 1
  %v2638 = vmax.f32 %v2636, %v2637
  %v2639 = vsel %vm584, %v1097, -inf
  %v2640 = vrot.slane %v2639, 4
  %v2641 = vmax.f32 %v2639, %v2640
  %v2642 = vrot.slane %v2641, 2
  %v2643 = vmax.f32 %v2641, %v2642
  %v2644 = vrot.slane %v2643, 1
  %v2645 = vmax.f32 %v2643, %v2644
  %v2646 = vsel %vm584, %v1100, -inf
  %v2647 = vrot.slane %v2646, 4
  %v2648 = vmax.f32 %v2646, %v2647
  %v2649 = vrot.slane %v2648, 2
  %v2650 = vmax.f32 %v2648, %v2649
  %v2651 = vrot.slane %v2650, 1
  %v2652 = vmax.f32 %v2650, %v2651
  %v2653 = vsel %vm584, %v1103, -inf
  %v2654 = vrot.slane %v2653, 4
  %v2655 = vmax.f32 %v2653, %v2654
  %v2656 = vrot.slane %v2655, 2
  %v2657 = vmax.f32 %v2655, %v2656
  %v2658 = vrot.slane %v2657, 1
  %v2659 = vmax.f32 %v2657, %v2658
  %v2660 = vsel %vm584, %v1106, -inf
  %v2661 = vrot.slane %v2660, 4
  %v2662 = vmax.f32 %v2660, %v2661
  %v2663 = vrot.slane %v2662, 2
  %v2664 = vmax.f32 %v2662, %v2663
  %v2665 = vrot.slane %v2664, 1
  %v2666 = vmax.f32 %v2664, %v2665
  %v2667 = vsel %vm584, %v1109, -inf
  %v2668 = vrot.slane %v2667, 4
  %v2669 = vmax.f32 %v2667, %v2668
  %v2670 = vrot.slane %v2669, 2
  %v2671 = vmax.f32 %v2669, %v2670
  %v2672 = vrot.slane %v2671, 1
  %v2673 = vmax.f32 %v2671, %v2672
  %v2674 = vsel %vm584, %v1112, -inf
  %v2675 = vrot.slane %v2674, 4
  %v2676 = vmax.f32 %v2674, %v2675
  %v2677 = vrot.slane %v2676, 2
  %v2678 = vmax.f32 %v2676, %v2677
  %v2679 = vrot.slane %v2678, 1
  %v2680 = vmax.f32 %v2678, %v2679
  %v2681 = vsel %vm584, %v1115, -inf
  %v2682 = vrot.slane %v2681, 4
  %v2683 = vmax.f32 %v2681, %v2682
  %v2684 = vrot.slane %v2683, 2
  %v2685 = vmax.f32 %v2683, %v2684
  %v2686 = vrot.slane %v2685, 1
  %v2687 = vmax.f32 %v2685, %v2686
  %v2688 = vsel %vm584, %v1118, -inf
  %v2689 = vrot.slane %v2688, 4
  %v2690 = vmax.f32 %v2688, %v2689
  %v2691 = vrot.slane %v2690, 2
  %v2692 = vmax.f32 %v2690, %v2691
  %v2693 = vrot.slane %v2692, 1
  %v2694 = vmax.f32 %v2692, %v2693
  %v2695 = vsel %vm584, %v1121, -inf
  %v2696 = vrot.slane %v2695, 4
  %v2697 = vmax.f32 %v2695, %v2696
  %v2698 = vrot.slane %v2697, 2
  %v2699 = vmax.f32 %v2697, %v2698
  %v2700 = vrot.slane %v2699, 1
  %v2701 = vmax.f32 %v2699, %v2700
  %v2702 = vsel %vm584, %v1124, -inf
  %v2703 = vrot.slane %v2702, 4
  %v2704 = vmax.f32 %v2702, %v2703
  %v2705 = vrot.slane %v2704, 2
  %v2706 = vmax.f32 %v2704, %v2705
  %v2707 = vrot.slane %v2706, 1
  %v2708 = vmax.f32 %v2706, %v2707
  %v2709 = vsel %vm584, %v1127, -inf
  %v2710 = vrot.slane %v2709, 4
  %v2711 = vmax.f32 %v2709, %v2710
  %v2712 = vrot.slane %v2711, 2
  %v2713 = vmax.f32 %v2711, %v2712
  %v2714 = vrot.slane %v2713, 1
  %v2715 = vmax.f32 %v2713, %v2714
  %v2716 = vsel %vm584, %v1130, -inf
  %v2717 = vrot.slane %v2716, 4
  %v2718 = vmax.f32 %v2716, %v2717
  %v2719 = vrot.slane %v2718, 2
  %v2720 = vmax.f32 %v2718, %v2719
  %v2721 = vrot.slane %v2720, 1
  %v2722 = vmax.f32 %v2720, %v2721
  %v2723 = vsel %vm584, %v1133, -inf
  %v2724 = vrot.slane %v2723, 4
  %v2725 = vmax.f32 %v2723, %v2724
  %v2726 = vrot.slane %v2725, 2
  %v2727 = vmax.f32 %v2725, %v2726
  %v2728 = vrot.slane %v2727, 1
  %v2729 = vmax.f32 %v2727, %v2728
  %v2730 = vsel %vm584, %v1136, -inf
  %v2731 = vrot.slane %v2730, 4
  %v2732 = vmax.f32 %v2730, %v2731
  %v2733 = vrot.slane %v2732, 2
  %v2734 = vmax.f32 %v2732, %v2733
  %v2735 = vrot.slane %v2734, 1
  %v2736 = vmax.f32 %v2734, %v2735
  %v2737 = vsel %vm584, %v1139, -inf
  %v2738 = vrot.slane %v2737, 4
  %v2739 = vmax.f32 %v2737, %v2738
  %v2740 = vrot.slane %v2739, 2
  %v2741 = vmax.f32 %v2739, %v2740
  %v2742 = vrot.slane %v2741, 1
  %v2743 = vmax.f32 %v2741, %v2742
  %v2744 = vsel %vm584, %v1142, -inf
  %v2745 = vrot.slane %v2744, 4
  %v2746 = vmax.f32 %v2744, %v2745
  %v2747 = vrot.slane %v2746, 2
  %v2748 = vmax.f32 %v2746, %v2747
  %v2749 = vrot.slane %v2748, 1
  %v2750 = vmax.f32 %v2748, %v2749
  %v2751 = vsel %vm584, %v1145, -inf
  %v2752 = vrot.slane %v2751, 4
  %v2753 = vmax.f32 %v2751, %v2752
  %v2754 = vrot.slane %v2753, 2
  %v2755 = vmax.f32 %v2753, %v2754
  %v2756 = vrot.slane %v2755, 1
  %v2757 = vmax.f32 %v2755, %v2756
  %v2758 = vsel %vm584, %v1148, -inf
  %v2759 = vrot.slane %v2758, 4
  %v2760 = vmax.f32 %v2758, %v2759
  %v2761 = vrot.slane %v2760, 2
  %v2762 = vmax.f32 %v2760, %v2761
  %v2763 = vrot.slane %v2762, 1
  %v2764 = vmax.f32 %v2762, %v2763
  %v2765 = vsel %vm584, %v1151, -inf
  %v2766 = vrot.slane %v2765, 4
  %v2767 = vmax.f32 %v2765, %v2766
  %v2768 = vrot.slane %v2767, 2
  %v2769 = vmax.f32 %v2767, %v2768
  %v2770 = vrot.slane %v2769, 1
  %v2771 = vmax.f32 %v2769, %v2770
  %v2772 = vsel %vm584, %v1154, -inf
  %v2773 = vrot.slane %v2772, 4
  %v2774 = vmax.f32 %v2772, %v2773
  %v2775 = vrot.slane %v2774, 2
  %v2776 = vmax.f32 %v2774, %v2775
  %v2777 = vrot.slane %v2776, 1
  %v2778 = vmax.f32 %v2776, %v2777
  %v2779 = vsel %vm584, %v1157, -inf
  %v2780 = vrot.slane %v2779, 4
  %v2781 = vmax.f32 %v2779, %v2780
  %v2782 = vrot.slane %v2781, 2
  %v2783 = vmax.f32 %v2781, %v2782
  %v2784 = vrot.slane %v2783, 1
  %v2785 = vmax.f32 %v2783, %v2784
  %v2786 = vsel %vm584, %v1160, -inf
  %v2787 = vrot.slane %v2786, 4
  %v2788 = vmax.f32 %v2786, %v2787
  %v2789 = vrot.slane %v2788, 2
  %v2790 = vmax.f32 %v2788, %v2789
  %v2791 = vrot.slane %v2790, 1
  %v2792 = vmax.f32 %v2790, %v2791
  %v2793 = vsel %vm584, %v1163, -inf
  %v2794 = vrot.slane %v2793, 4
  %v2795 = vmax.f32 %v2793, %v2794
  %v2796 = vrot.slane %v2795, 2
  %v2797 = vmax.f32 %v2795, %v2796
  %v2798 = vrot.slane %v2797, 1
  %v2799 = vmax.f32 %v2797, %v2798
  %v2800 = vsel %vm584, %v1166, -inf
  %v2801 = vrot.slane %v2800, 4
  %v2802 = vmax.f32 %v2800, %v2801
  %v2803 = vrot.slane %v2802, 2
  %v2804 = vmax.f32 %v2802, %v2803
  %v2805 = vrot.slane %v2804, 1
  %v2806 = vmax.f32 %v2804, %v2805
  %v2807 = vsel %vm584, %v1169, -inf
  %v2808 = vrot.slane %v2807, 4
  %v2809 = vmax.f32 %v2807, %v2808
  %v2810 = vrot.slane %v2809, 2
  %v2811 = vmax.f32 %v2809, %v2810
  %v2812 = vrot.slane %v2811, 1
  %v2813 = vmax.f32 %v2811, %v2812
  %v2814 = vsel %vm584, %v1172, -inf
  %v2815 = vrot.slane %v2814, 4
  %v2816 = vmax.f32 %v2814, %v2815
  %v2817 = vrot.slane %v2816, 2
  %v2818 = vmax.f32 %v2816, %v2817
  %v2819 = vrot.slane %v2818, 1
  %v2820 = vmax.f32 %v2818, %v2819
  %v2821 = vsel %vm584, %v1175, -inf
  %v2822 = vrot.slane %v2821, 4
  %v2823 = vmax.f32 %v2821, %v2822
  %v2824 = vrot.slane %v2823, 2
  %v2825 = vmax.f32 %v2823, %v2824
  %v2826 = vrot.slane %v2825, 1
  %v2827 = vmax.f32 %v2825, %v2826
  %v2828 = vsel %vm584, %v1178, -inf
  %v2829 = vrot.slane %v2828, 4
  %v2830 = vmax.f32 %v2828, %v2829
  %v2831 = vrot.slane %v2830, 2
  %v2832 = vmax.f32 %v2830, %v2831
  %v2833 = vrot.slane %v2832, 1
  %v2834 = vmax.f32 %v2832, %v2833
  %v2835 = vsel %vm584, %v1181, -inf
  %v2836 = vrot.slane %v2835, 4
  %v2837 = vmax.f32 %v2835, %v2836
  %v2838 = vrot.slane %v2837, 2
  %v2839 = vmax.f32 %v2837, %v2838
  %v2840 = vrot.slane %v2839, 1
  %v2841 = vmax.f32 %v2839, %v2840
  %v2842 = vsel %vm584, %v1184, -inf
  %v2843 = vrot.slane %v2842, 4
  %v2844 = vmax.f32 %v2842, %v2843
  %v2845 = vrot.slane %v2844, 2
  %v2846 = vmax.f32 %v2844, %v2845
  %v2847 = vrot.slane %v2846, 1
  %v2848 = vmax.f32 %v2846, %v2847
  %v2849 = vsel %vm584, %v1187, -inf
  %v2850 = vrot.slane %v2849, 4
  %v2851 = vmax.f32 %v2849, %v2850
  %v2852 = vrot.slane %v2851, 2
  %v2853 = vmax.f32 %v2851, %v2852
  %v2854 = vrot.slane %v2853, 1
  %v2855 = vmax.f32 %v2853, %v2854
  %v2856 = vsel %vm584, %v1190, -inf
  %v2857 = vrot.slane %v2856, 4
  %v2858 = vmax.f32 %v2856, %v2857
  %v2859 = vrot.slane %v2858, 2
  %v2860 = vmax.f32 %v2858, %v2859
  %v2861 = vrot.slane %v2860, 1
  %v2862 = vmax.f32 %v2860, %v2861
  %v2863 = vsel %vm584, %v1193, -inf
  %v2864 = vrot.slane %v2863, 4
  %v2865 = vmax.f32 %v2863, %v2864
  %v2866 = vrot.slane %v2865, 2
  %v2867 = vmax.f32 %v2865, %v2866
  %v2868 = vrot.slane %v2867, 1
  %v2869 = vmax.f32 %v2867, %v2868
  %v2870 = vsel %vm584, %v1196, -inf
  %v2871 = vrot.slane %v2870, 4
  %v2872 = vmax.f32 %v2870, %v2871
  %v2873 = vrot.slane %v2872, 2
  %v2874 = vmax.f32 %v2872, %v2873
  %v2875 = vrot.slane %v2874, 1
  %v2876 = vmax.f32 %v2874, %v2875
  %v2877 = vsel %vm584, %v1199, -inf
  %v2878 = vrot.slane %v2877, 4
  %v2879 = vmax.f32 %v2877, %v2878
  %v2880 = vrot.slane %v2879, 2
  %v2881 = vmax.f32 %v2879, %v2880
  %v2882 = vrot.slane %v2881, 1
  %v2883 = vmax.f32 %v2881, %v2882
  %v2884 = vsel %vm584, %v1202, -inf
  %v2885 = vrot.slane %v2884, 4
  %v2886 = vmax.f32 %v2884, %v2885
  %v2887 = vrot.slane %v2886, 2
  %v2888 = vmax.f32 %v2886, %v2887
  %v2889 = vrot.slane %v2888, 1
  %v2890 = vmax.f32 %v2888, %v2889
  %v2891 = vsel %vm584, %v1205, -inf
  %v2892 = vrot.slane %v2891, 4
  %v2893 = vmax.f32 %v2891, %v2892
  %v2894 = vrot.slane %v2893, 2
  %v2895 = vmax.f32 %v2893, %v2894
  %v2896 = vrot.slane %v2895, 1
  %v2897 = vmax.f32 %v2895, %v2896
  %v2898 = vsel %vm584, %v1208, -inf
  %v2899 = vrot.slane %v2898, 4
  %v2900 = vmax.f32 %v2898, %v2899
  %v2901 = vrot.slane %v2900, 2
  %v2902 = vmax.f32 %v2900, %v2901
  %v2903 = vrot.slane %v2902, 1
  %v2904 = vmax.f32 %v2902, %v2903
  %v2905 = vsel %vm584, %v1211, -inf
  %v2906 = vrot.slane %v2905, 4
  %v2907 = vmax.f32 %v2905, %v2906
  %v2908 = vrot.slane %v2907, 2
  %v2909 = vmax.f32 %v2907, %v2908
  %v2910 = vrot.slane %v2909, 1
  %v2911 = vmax.f32 %v2909, %v2910
  %v2912 = vsel %vm584, %v1214, -inf
  %v2913 = vrot.slane %v2912, 4
  %v2914 = vmax.f32 %v2912, %v2913
  %v2915 = vrot.slane %v2914, 2
  %v2916 = vmax.f32 %v2914, %v2915
  %v2917 = vrot.slane %v2916, 1
  %v2918 = vmax.f32 %v2916, %v2917
  %v2919 = vsel %vm584, %v1217, -inf
  %v2920 = vrot.slane %v2919, 4
  %v2921 = vmax.f32 %v2919, %v2920
  %v2922 = vrot.slane %v2921, 2
  %v2923 = vmax.f32 %v2921, %v2922
  %v2924 = vrot.slane %v2923, 1
  %v2925 = vmax.f32 %v2923, %v2924
  %v2926 = vsel %vm584, %v1220, -inf
  %v2927 = vrot.slane %v2926, 4
  %v2928 = vmax.f32 %v2926, %v2927
  %v2929 = vrot.slane %v2928, 2
  %v2930 = vmax.f32 %v2928, %v2929
  %v2931 = vrot.slane %v2930, 1
  %v2932 = vmax.f32 %v2930, %v2931
  %v2933 = vsel %vm584, %v1223, -inf
  %v2934 = vrot.slane %v2933, 4
  %v2935 = vmax.f32 %v2933, %v2934
  %v2936 = vrot.slane %v2935, 2
  %v2937 = vmax.f32 %v2935, %v2936
  %v2938 = vrot.slane %v2937, 1
  %v2939 = vmax.f32 %v2937, %v2938
  %v2940 = vsel %vm584, %v1226, -inf
  %v2941 = vrot.slane %v2940, 4
  %v2942 = vmax.f32 %v2940, %v2941
  %v2943 = vrot.slane %v2942, 2
  %v2944 = vmax.f32 %v2942, %v2943
  %v2945 = vrot.slane %v2944, 1
  %v2946 = vmax.f32 %v2944, %v2945
  %v2947 = vsel %vm584, %v1229, -inf
  %v2948 = vrot.slane %v2947, 4
  %v2949 = vmax.f32 %v2947, %v2948
  %v2950 = vrot.slane %v2949, 2
  %v2951 = vmax.f32 %v2949, %v2950
  %v2952 = vrot.slane %v2951, 1
  %v2953 = vmax.f32 %v2951, %v2952
  %v2954 = vsel %vm584, %v1232, -inf
  %v2955 = vrot.slane %v2954, 4
  %v2956 = vmax.f32 %v2954, %v2955
  %v2957 = vrot.slane %v2956, 2
  %v2958 = vmax.f32 %v2956, %v2957
  %v2959 = vrot.slane %v2958, 1
  %v2960 = vmax.f32 %v2958, %v2959
  %v2961 = vsel %vm584, %v1235, -inf
  %v2962 = vrot.slane %v2961, 4
  %v2963 = vmax.f32 %v2961, %v2962
  %v2964 = vrot.slane %v2963, 2
  %v2965 = vmax.f32 %v2963, %v2964
  %v2966 = vrot.slane %v2965, 1
  %v2967 = vmax.f32 %v2965, %v2966
  %v2968 = vsel %vm584, %v1238, -inf
  %v2969 = vrot.slane %v2968, 4
  %v2970 = vmax.f32 %v2968, %v2969
  %v2971 = vrot.slane %v2970, 2
  %v2972 = vmax.f32 %v2970, %v2971
  %v2973 = vrot.slane %v2972, 1
  %v2974 = vmax.f32 %v2972, %v2973
  %v2975 = vsel %vm584, %v1241, -inf
  %v2976 = vrot.slane %v2975, 4
  %v2977 = vmax.f32 %v2975, %v2976
  %v2978 = vrot.slane %v2977, 2
  %v2979 = vmax.f32 %v2977, %v2978
  %v2980 = vrot.slane %v2979, 1
  %v2981 = vmax.f32 %v2979, %v2980
  %v2982 = vsel %vm584, %v1244, -inf
  %v2983 = vrot.slane %v2982, 4
  %v2984 = vmax.f32 %v2982, %v2983
  %v2985 = vrot.slane %v2984, 2
  %v2986 = vmax.f32 %v2984, %v2985
  %v2987 = vrot.slane %v2986, 1
  %v2988 = vmax.f32 %v2986, %v2987
  %v2989 = vsel %vm584, %v1247, -inf
  %v2990 = vrot.slane %v2989, 4
  %v2991 = vmax.f32 %v2989, %v2990
  %v2992 = vrot.slane %v2991, 2
  %v2993 = vmax.f32 %v2991, %v2992
  %v2994 = vrot.slane %v2993, 1
  %v2995 = vmax.f32 %v2993, %v2994
  %v2996 = vsel %vm584, %v1250, -inf
  %v2997 = vrot.slane %v2996, 4
  %v2998 = vmax.f32 %v2996, %v2997
  %v2999 = vrot.slane %v2998, 2
  %v3000 = vmax.f32 %v2998, %v2999
  %v3001 = vrot.slane %v3000, 1
  %v3002 = vmax.f32 %v3000, %v3001
  %v3003 = vsel %vm584, %v1253, -inf
  %v3004 = vrot.slane %v3003, 4
  %v3005 = vmax.f32 %v3003, %v3004
  %v3006 = vrot.slane %v3005, 2
  %v3007 = vmax.f32 %v3005, %v3006
  %v3008 = vrot.slane %v3007, 1
  %v3009 = vmax.f32 %v3007, %v3008
  %v3010 = vsel %vm584, %v1256, -inf
  %v3011 = vrot.slane %v3010, 4
  %v3012 = vmax.f32 %v3010, %v3011
  %v3013 = vrot.slane %v3012, 2
  %v3014 = vmax.f32 %v3012, %v3013
  %v3015 = vrot.slane %v3014, 1
  %v3016 = vmax.f32 %v3014, %v3015
  %v3017 = vsel %vm584, %v1259, -inf
  %v3018 = vrot.slane %v3017, 4
  %v3019 = vmax.f32 %v3017, %v3018
  %v3020 = vrot.slane %v3019, 2
  %v3021 = vmax.f32 %v3019, %v3020
  %v3022 = vrot.slane %v3021, 1
  %v3023 = vmax.f32 %v3021, %v3022
  %v3024 = vsel %vm584, %v1262, -inf
  %v3025 = vrot.slane %v3024, 4
  %v3026 = vmax.f32 %v3024, %v3025
  %v3027 = vrot.slane %v3026, 2
  %v3028 = vmax.f32 %v3026, %v3027
  %v3029 = vrot.slane %v3028, 1
  %v3030 = vmax.f32 %v3028, %v3029
  %v3031 = vsel %vm584, %v1265, -inf
  %v3032 = vrot.slane %v3031, 4
  %v3033 = vmax.f32 %v3031, %v3032
  %v3034 = vrot.slane %v3033, 2
  %v3035 = vmax.f32 %v3033, %v3034
  %v3036 = vrot.slane %v3035, 1
  %v3037 = vmax.f32 %v3035, %v3036
  %v3038 = vsel %vm584, %v1268, -inf
  %v3039 = vrot.slane %v3038, 4
  %v3040 = vmax.f32 %v3038, %v3039
  %v3041 = vrot.slane %v3040, 2
  %v3042 = vmax.f32 %v3040, %v3041
  %v3043 = vrot.slane %v3042, 1
  %v3044 = vmax.f32 %v3042, %v3043
  %v3045 = vsel %vm584, %v1271, -inf
  %v3046 = vrot.slane %v3045, 4
  %v3047 = vmax.f32 %v3045, %v3046
  %v3048 = vrot.slane %v3047, 2
  %v3049 = vmax.f32 %v3047, %v3048
  %v3050 = vrot.slane %v3049, 1
  %v3051 = vmax.f32 %v3049, %v3050
  %v3052 = vsel %vm584, %v1274, -inf
  %v3053 = vrot.slane %v3052, 4
  %v3054 = vmax.f32 %v3052, %v3053
  %v3055 = vrot.slane %v3054, 2
  %v3056 = vmax.f32 %v3054, %v3055
  %v3057 = vrot.slane %v3056, 1
  %v3058 = vmax.f32 %v3056, %v3057
  %v3059 = vsel %vm584, %v1277, -inf
  %v3060 = vrot.slane %v3059, 4
  %v3061 = vmax.f32 %v3059, %v3060
  %v3062 = vrot.slane %v3061, 2
  %v3063 = vmax.f32 %v3061, %v3062
  %v3064 = vrot.slane %v3063, 1
  %v3065 = vmax.f32 %v3063, %v3064
  %v3066 = vsel %vm584, %v1280, -inf
  %v3067 = vrot.slane %v3066, 4
  %v3068 = vmax.f32 %v3066, %v3067
  %v3069 = vrot.slane %v3068, 2
  %v3070 = vmax.f32 %v3068, %v3069
  %v3071 = vrot.slane %v3070, 1
  %v3072 = vmax.f32 %v3070, %v3071
  %v3073 = vsel %vm584, %v1283, -inf
  %v3074 = vrot.slane %v3073, 4
  %v3075 = vmax.f32 %v3073, %v3074
  %v3076 = vrot.slane %v3075, 2
  %v3077 = vmax.f32 %v3075, %v3076
  %v3078 = vrot.slane %v3077, 1
  %v3079 = vmax.f32 %v3077, %v3078
  %v3080 = vsel %vm584, %v1286, -inf
  %v3081 = vrot.slane %v3080, 4
  %v3082 = vmax.f32 %v3080, %v3081
  %v3083 = vrot.slane %v3082, 2
  %v3084 = vmax.f32 %v3082, %v3083
  %v3085 = vrot.slane %v3084, 1
  %v3086 = vmax.f32 %v3084, %v3085
  %v3087 = vsel %vm584, %v1289, -inf
  %v3088 = vrot.slane %v3087, 4
  %v3089 = vmax.f32 %v3087, %v3088
  %v3090 = vrot.slane %v3089, 2
  %v3091 = vmax.f32 %v3089, %v3090
  %v3092 = vrot.slane %v3091, 1
  %v3093 = vmax.f32 %v3091, %v3092
  %v3094 = vsel %vm584, %v1292, -inf
  %v3095 = vrot.slane %v3094, 4
  %v3096 = vmax.f32 %v3094, %v3095
  %v3097 = vrot.slane %v3096, 2
  %v3098 = vmax.f32 %v3096, %v3097
  %v3099 = vrot.slane %v3098, 1
  %v3100 = vmax.f32 %v3098, %v3099
  %v3101 = vsel %vm584, %v1295, -inf
  %v3102 = vrot.slane %v3101, 4
  %v3103 = vmax.f32 %v3101, %v3102
  %v3104 = vrot.slane %v3103, 2
  %v3105 = vmax.f32 %v3103, %v3104
  %v3106 = vrot.slane %v3105, 1
  %v3107 = vmax.f32 %v3105, %v3106
  %v3108 = vsel %vm584, %v1298, -inf
  %v3109 = vrot.slane %v3108, 4
  %v3110 = vmax.f32 %v3108, %v3109
  %v3111 = vrot.slane %v3110, 2
  %v3112 = vmax.f32 %v3110, %v3111
  %v3113 = vrot.slane %v3112, 1
  %v3114 = vmax.f32 %v3112, %v3113
  %v3115 = vsel %vm584, %v1301, -inf
  %v3116 = vrot.slane %v3115, 4
  %v3117 = vmax.f32 %v3115, %v3116
  %v3118 = vrot.slane %v3117, 2
  %v3119 = vmax.f32 %v3117, %v3118
  %v3120 = vrot.slane %v3119, 1
  %v3121 = vmax.f32 %v3119, %v3120
  %v3122 = vsel %vm584, %v1304, -inf
  %v3123 = vrot.slane %v3122, 4
  %v3124 = vmax.f32 %v3122, %v3123
  %v3125 = vrot.slane %v3124, 2
  %v3126 = vmax.f32 %v3124, %v3125
  %v3127 = vrot.slane %v3126, 1
  %v3128 = vmax.f32 %v3126, %v3127
  %v3129 = vsel %vm584, %v1307, -inf
  %v3130 = vrot.slane %v3129, 4
  %v3131 = vmax.f32 %v3129, %v3130
  %v3132 = vrot.slane %v3131, 2
  %v3133 = vmax.f32 %v3131, %v3132
  %v3134 = vrot.slane %v3133, 1
  %v3135 = vmax.f32 %v3133, %v3134
  %v3136 = vsel %vm584, %v1310, -inf
  %v3137 = vrot.slane %v3136, 4
  %v3138 = vmax.f32 %v3136, %v3137
  %v3139 = vrot.slane %v3138, 2
  %v3140 = vmax.f32 %v3138, %v3139
  %v3141 = vrot.slane %v3140, 1
  %v3142 = vmax.f32 %v3140, %v3141
  %v3143 = vsel %vm584, %v1313, -inf
  %v3144 = vrot.slane %v3143, 4
  %v3145 = vmax.f32 %v3143, %v3144
  %v3146 = vrot.slane %v3145, 2
  %v3147 = vmax.f32 %v3145, %v3146
  %v3148 = vrot.slane %v3147, 1
  %v3149 = vmax.f32 %v3147, %v3148
  %v3150 = vsel %vm584, %v1316, -inf
  %v3151 = vrot.slane %v3150, 4
  %v3152 = vmax.f32 %v3150, %v3151
  %v3153 = vrot.slane %v3152, 2
  %v3154 = vmax.f32 %v3152, %v3153
  %v3155 = vrot.slane %v3154, 1
  %v3156 = vmax.f32 %v3154, %v3155
  %v3157 = vsel %vm584, %v1319, -inf
  %v3158 = vrot.slane %v3157, 4
  %v3159 = vmax.f32 %v3157, %v3158
  %v3160 = vrot.slane %v3159, 2
  %v3161 = vmax.f32 %v3159, %v3160
  %v3162 = vrot.slane %v3161, 1
  %v3163 = vmax.f32 %v3161, %v3162
  %v3164 = vsel %vm584, %v1322, -inf
  %v3165 = vrot.slane %v3164, 4
  %v3166 = vmax.f32 %v3164, %v3165
  %v3167 = vrot.slane %v3166, 2
  %v3168 = vmax.f32 %v3166, %v3167
  %v3169 = vrot.slane %v3168, 1
  %v3170 = vmax.f32 %v3168, %v3169
  %v3171 = vsel %vm584, %v1325, -inf
  %v3172 = vrot.slane %v3171, 4
  %v3173 = vmax.f32 %v3171, %v3172
  %v3174 = vrot.slane %v3173, 2
  %v3175 = vmax.f32 %v3173, %v3174
  %v3176 = vrot.slane %v3175, 1
  %v3177 = vmax.f32 %v3175, %v3176
  %v3178 = vsel %vm584, %v1328, -inf
  %v3179 = vrot.slane %v3178, 4
  %v3180 = vmax.f32 %v3178, %v3179
  %v3181 = vrot.slane %v3180, 2
  %v3182 = vmax.f32 %v3180, %v3181
  %v3183 = vrot.slane %v3182, 1
  %v3184 = vmax.f32 %v3182, %v3183
  %v3185 = vsel %vm584, %v1331, -inf
  %v3186 = vrot.slane %v3185, 4
  %v3187 = vmax.f32 %v3185, %v3186
  %v3188 = vrot.slane %v3187, 2
  %v3189 = vmax.f32 %v3187, %v3188
  %v3190 = vrot.slane %v3189, 1
  %v3191 = vmax.f32 %v3189, %v3190
  %v3192 = vsel %vm584, %v1334, -inf
  %v3193 = vrot.slane %v3192, 4
  %v3194 = vmax.f32 %v3192, %v3193
  %v3195 = vrot.slane %v3194, 2
  %v3196 = vmax.f32 %v3194, %v3195
  %v3197 = vrot.slane %v3196, 1
  %v3198 = vmax.f32 %v3196, %v3197
  %v3199 = vsel %vm584, %v1337, -inf
  %v3200 = vrot.slane %v3199, 4
  %v3201 = vmax.f32 %v3199, %v3200
  %v3202 = vrot.slane %v3201, 2
  %v3203 = vmax.f32 %v3201, %v3202
  %v3204 = vrot.slane %v3203, 1
  %v3205 = vmax.f32 %v3203, %v3204
  %v3206 = vsel %vm584, %v1340, -inf
  %v3207 = vrot.slane %v3206, 4
  %v3208 = vmax.f32 %v3206, %v3207
  %v3209 = vrot.slane %v3208, 2
  %v3210 = vmax.f32 %v3208, %v3209
  %v3211 = vrot.slane %v3210, 1
  %v3212 = vmax.f32 %v3210, %v3211
  %v3213 = vsel %vm584, %v1343, -inf
  %v3214 = vrot.slane %v3213, 4
  %v3215 = vmax.f32 %v3213, %v3214
  %v3216 = vrot.slane %v3215, 2
  %v3217 = vmax.f32 %v3215, %v3216
  %v3218 = vrot.slane %v3217, 1
  %v3219 = vmax.f32 %v3217, %v3218
  %v3220 = vsel %vm584, %v1346, -inf
  %v3221 = vrot.slane %v3220, 4
  %v3222 = vmax.f32 %v3220, %v3221
  %v3223 = vrot.slane %v3222, 2
  %v3224 = vmax.f32 %v3222, %v3223
  %v3225 = vrot.slane %v3224, 1
  %v3226 = vmax.f32 %v3224, %v3225
  %v3227 = vsel %vm584, %v1349, -inf
  %v3228 = vrot.slane %v3227, 4
  %v3229 = vmax.f32 %v3227, %v3228
  %v3230 = vrot.slane %v3229, 2
  %v3231 = vmax.f32 %v3229, %v3230
  %v3232 = vrot.slane %v3231, 1
  %v3233 = vmax.f32 %v3231, %v3232
  %v3234 = vsel %vm584, %v1352, -inf
  %v3235 = vrot.slane %v3234, 4
  %v3236 = vmax.f32 %v3234, %v3235
  %v3237 = vrot.slane %v3236, 2
  %v3238 = vmax.f32 %v3236, %v3237
  %v3239 = vrot.slane %v3238, 1
  %v3240 = vmax.f32 %v3238, %v3239
  %v3241 = vsel %vm584, %v1355, -inf
  %v3242 = vrot.slane %v3241, 4
  %v3243 = vmax.f32 %v3241, %v3242
  %v3244 = vrot.slane %v3243, 2
  %v3245 = vmax.f32 %v3243, %v3244
  %v3246 = vrot.slane %v3245, 1
  %v3247 = vmax.f32 %v3245, %v3246
  %v3248 = vsel %vm584, %v1358, -inf
  %v3249 = vrot.slane %v3248, 4
  %v3250 = vmax.f32 %v3248, %v3249
  %v3251 = vrot.slane %v3250, 2
  %v3252 = vmax.f32 %v3250, %v3251
  %v3253 = vrot.slane %v3252, 1
  %v3254 = vmax.f32 %v3252, %v3253
  %v3255 = vsel %vm584, %v1361, -inf
  %v3256 = vrot.slane %v3255, 4
  %v3257 = vmax.f32 %v3255, %v3256
  %v3258 = vrot.slane %v3257, 2
  %v3259 = vmax.f32 %v3257, %v3258
  %v3260 = vrot.slane %v3259, 1
  %v3261 = vmax.f32 %v3259, %v3260
  %v3262 = vsel %vm584, %v1364, -inf
  %v3263 = vrot.slane %v3262, 4
  %v3264 = vmax.f32 %v3262, %v3263
  %v3265 = vrot.slane %v3264, 2
  %v3266 = vmax.f32 %v3264, %v3265
  %v3267 = vrot.slane %v3266, 1
  %v3268 = vmax.f32 %v3266, %v3267
  %v3269 = vsel %vm584, %v1367, -inf
  %v3270 = vrot.slane %v3269, 4
  %v3271 = vmax.f32 %v3269, %v3270
  %v3272 = vrot.slane %v3271, 2
  %v3273 = vmax.f32 %v3271, %v3272
  %v3274 = vrot.slane %v3273, 1
  %v3275 = vmax.f32 %v3273, %v3274
  %v3276 = vsel %vm584, %v1370, -inf
  %v3277 = vrot.slane %v3276, 4
  %v3278 = vmax.f32 %v3276, %v3277
  %v3279 = vrot.slane %v3278, 2
  %v3280 = vmax.f32 %v3278, %v3279
  %v3281 = vrot.slane %v3280, 1
  %v3282 = vmax.f32 %v3280, %v3281
  %v3283 = vsel %vm584, %v1373, -inf
  %v3284 = vrot.slane %v3283, 4
  %v3285 = vmax.f32 %v3283, %v3284
  %v3286 = vrot.slane %v3285, 2
  %v3287 = vmax.f32 %v3285, %v3286
  %v3288 = vrot.slane %v3287, 1
  %v3289 = vmax.f32 %v3287, %v3288
  %v3290 = vsel %vm584, %v1376, -inf
  %v3291 = vrot.slane %v3290, 4
  %v3292 = vmax.f32 %v3290, %v3291
  %v3293 = vrot.slane %v3292, 2
  %v3294 = vmax.f32 %v3292, %v3293
  %v3295 = vrot.slane %v3294, 1
  %v3296 = vmax.f32 %v3294, %v3295
  %v3297 = vsel %vm584, %v1379, -inf
  %v3298 = vrot.slane %v3297, 4
  %v3299 = vmax.f32 %v3297, %v3298
  %v3300 = vrot.slane %v3299, 2
  %v3301 = vmax.f32 %v3299, %v3300
  %v3302 = vrot.slane %v3301, 1
  %v3303 = vmax.f32 %v3301, %v3302
  %v3304 = vsel %vm584, %v1382, -inf
  %v3305 = vrot.slane %v3304, 4
  %v3306 = vmax.f32 %v3304, %v3305
  %v3307 = vrot.slane %v3306, 2
  %v3308 = vmax.f32 %v3306, %v3307
  %v3309 = vrot.slane %v3308, 1
  %v3310 = vmax.f32 %v3308, %v3309
  %v3311 = vsel %vm584, %v1385, -inf
  %v3312 = vrot.slane %v3311, 4
  %v3313 = vmax.f32 %v3311, %v3312
  %v3314 = vrot.slane %v3313, 2
  %v3315 = vmax.f32 %v3313, %v3314
  %v3316 = vrot.slane %v3315, 1
  %v3317 = vmax.f32 %v3315, %v3316
  %v3318 = vsel %vm584, %v1388, -inf
  %v3319 = vrot.slane %v3318, 4
  %v3320 = vmax.f32 %v3318, %v3319
  %v3321 = vrot.slane %v3320, 2
  %v3322 = vmax.f32 %v3320, %v3321
  %v3323 = vrot.slane %v3322, 1
  %v3324 = vmax.f32 %v3322, %v3323
  %v3325 = vsel %vm584, %v1391, -inf
  %v3326 = vrot.slane %v3325, 4
  %v3327 = vmax.f32 %v3325, %v3326
  %v3328 = vrot.slane %v3327, 2
  %v3329 = vmax.f32 %v3327, %v3328
  %v3330 = vrot.slane %v3329, 1
  %v3331 = vmax.f32 %v3329, %v3330
  %v3332 = vsel %vm584, %v1394, -inf
  %v3333 = vrot.slane %v3332, 4
  %v3334 = vmax.f32 %v3332, %v3333
  %v3335 = vrot.slane %v3334, 2
  %v3336 = vmax.f32 %v3334, %v3335
  %v3337 = vrot.slane %v3336, 1
  %v3338 = vmax.f32 %v3336, %v3337
  %v3339 = vsel %vm584, %v1397, -inf
  %v3340 = vrot.slane %v3339, 4
  %v3341 = vmax.f32 %v3339, %v3340
  %v3342 = vrot.slane %v3341, 2
  %v3343 = vmax.f32 %v3341, %v3342
  %v3344 = vrot.slane %v3343, 1
  %v3345 = vmax.f32 %v3343, %v3344
  %v3346 = vsel %vm584, %v1400, -inf
  %v3347 = vrot.slane %v3346, 4
  %v3348 = vmax.f32 %v3346, %v3347
  %v3349 = vrot.slane %v3348, 2
  %v3350 = vmax.f32 %v3348, %v3349
  %v3351 = vrot.slane %v3350, 1
  %v3352 = vmax.f32 %v3350, %v3351
  %v3353 = vsel %vm584, %v1403, -inf
  %v3354 = vrot.slane %v3353, 4
  %v3355 = vmax.f32 %v3353, %v3354
  %v3356 = vrot.slane %v3355, 2
  %v3357 = vmax.f32 %v3355, %v3356
  %v3358 = vrot.slane %v3357, 1
  %v3359 = vmax.f32 %v3357, %v3358
  %v3360 = vsel %vm584, %v1406, -inf
  %v3361 = vrot.slane %v3360, 4
  %v3362 = vmax.f32 %v3360, %v3361
  %v3363 = vrot.slane %v3362, 2
  %v3364 = vmax.f32 %v3362, %v3363
  %v3365 = vrot.slane %v3364, 1
  %v3366 = vmax.f32 %v3364, %v3365
  %v3367 = vsel %vm584, %v1409, -inf
  %v3368 = vrot.slane %v3367, 4
  %v3369 = vmax.f32 %v3367, %v3368
  %v3370 = vrot.slane %v3369, 2
  %v3371 = vmax.f32 %v3369, %v3370
  %v3372 = vrot.slane %v3371, 1
  %v3373 = vmax.f32 %v3371, %v3372
  %v3374 = vsel %vm584, %v1412, -inf
  %v3375 = vrot.slane %v3374, 4
  %v3376 = vmax.f32 %v3374, %v3375
  %v3377 = vrot.slane %v3376, 2
  %v3378 = vmax.f32 %v3376, %v3377
  %v3379 = vrot.slane %v3378, 1
  %v3380 = vmax.f32 %v3378, %v3379
  %v3381 = vsel %vm584, %v1415, -inf
  %v3382 = vrot.slane %v3381, 4
  %v3383 = vmax.f32 %v3381, %v3382
  %v3384 = vrot.slane %v3383, 2
  %v3385 = vmax.f32 %v3383, %v3384
  %v3386 = vrot.slane %v3385, 1
  %v3387 = vmax.f32 %v3385, %v3386
  %v3388 = vsel %vm584, %v1418, -inf
  %v3389 = vrot.slane %v3388, 4
  %v3390 = vmax.f32 %v3388, %v3389
  %v3391 = vrot.slane %v3390, 2
  %v3392 = vmax.f32 %v3390, %v3391
  %v3393 = vrot.slane %v3392, 1
  %v3394 = vmax.f32 %v3392, %v3393
  %v3395 = vsel %vm584, %v1421, -inf
  %v3396 = vrot.slane %v3395, 4
  %v3397 = vmax.f32 %v3395, %v3396
  %v3398 = vrot.slane %v3397, 2
  %v3399 = vmax.f32 %v3397, %v3398
  %v3400 = vrot.slane %v3399, 1
  %v3401 = vmax.f32 %v3399, %v3400
  %v3402 = vsel %vm584, %v1424, -inf
  %v3403 = vrot.slane %v3402, 4
  %v3404 = vmax.f32 %v3402, %v3403
  %v3405 = vrot.slane %v3404, 2
  %v3406 = vmax.f32 %v3404, %v3405
  %v3407 = vrot.slane %v3406, 1
  %v3408 = vmax.f32 %v3406, %v3407
  %v3409 = vsel %vm584, %v1427, -inf
  %v3410 = vrot.slane %v3409, 4
  %v3411 = vmax.f32 %v3409, %v3410
  %v3412 = vrot.slane %v3411, 2
  %v3413 = vmax.f32 %v3411, %v3412
  %v3414 = vrot.slane %v3413, 1
  %v3415 = vmax.f32 %v3413, %v3414
  %v3416 = vsel %vm584, %v1430, -inf
  %v3417 = vrot.slane %v3416, 4
  %v3418 = vmax.f32 %v3416, %v3417
  %v3419 = vrot.slane %v3418, 2
  %v3420 = vmax.f32 %v3418, %v3419
  %v3421 = vrot.slane %v3420, 1
  %v3422 = vmax.f32 %v3420, %v3421
  %v3423 = vsel %vm584, %v1433, -inf
  %v3424 = vrot.slane %v3423, 4
  %v3425 = vmax.f32 %v3423, %v3424
  %v3426 = vrot.slane %v3425, 2
  %v3427 = vmax.f32 %v3425, %v3426
  %v3428 = vrot.slane %v3427, 1
  %v3429 = vmax.f32 %v3427, %v3428
  %v3430 = vsel %vm584, %v1436, -inf
  %v3431 = vrot.slane %v3430, 4
  %v3432 = vmax.f32 %v3430, %v3431
  %v3433 = vrot.slane %v3432, 2
  %v3434 = vmax.f32 %v3432, %v3433
  %v3435 = vrot.slane %v3434, 1
  %v3436 = vmax.f32 %v3434, %v3435
  %v3437 = vsel %vm584, %v1439, -inf
  %v3438 = vrot.slane %v3437, 4
  %v3439 = vmax.f32 %v3437, %v3438
  %v3440 = vrot.slane %v3439, 2
  %v3441 = vmax.f32 %v3439, %v3440
  %v3442 = vrot.slane %v3441, 1
  %v3443 = vmax.f32 %v3441, %v3442
  %v3444 = vsel %vm584, %v1442, -inf
  %v3445 = vrot.slane %v3444, 4
  %v3446 = vmax.f32 %v3444, %v3445
  %v3447 = vrot.slane %v3446, 2
  %v3448 = vmax.f32 %v3446, %v3447
  %v3449 = vrot.slane %v3448, 1
  %v3450 = vmax.f32 %v3448, %v3449
  %v3451 = vsel %vm584, %v1445, -inf
  %v3452 = vrot.slane %v3451, 4
  %v3453 = vmax.f32 %v3451, %v3452
  %v3454 = vrot.slane %v3453, 2
  %v3455 = vmax.f32 %v3453, %v3454
  %v3456 = vrot.slane %v3455, 1
  %v3457 = vmax.f32 %v3455, %v3456
  %v3458 = vsel %vm584, %v1448, -inf
  %v3459 = vrot.slane %v3458, 4
  %v3460 = vmax.f32 %v3458, %v3459
  %v3461 = vrot.slane %v3460, 2
  %v3462 = vmax.f32 %v3460, %v3461
  %v3463 = vrot.slane %v3462, 1
  %v3464 = vmax.f32 %v3462, %v3463
  %vm3753 = vcmask 1041409
  %v3754 = vsel %vm3753, %v1462, %v1455
  %vm3755 = vcmask 1042434
  %v3756 = vsel %vm3755, %v1469, %v3754
  %vm3757 = vcmask 1043459
  %v3758 = vsel %vm3757, %v1476, %v3756
  %vm3759 = vcmask 1044484
  %v3760 = vsel %vm3759, %v1483, %v3758
  %vm3761 = vcmask 1045509
  %v3762 = vsel %vm3761, %v1490, %v3760
  %vm3763 = vcmask 1046534
  %v3764 = vsel %vm3763, %v1497, %v3762
  %vm3765 = vcmask 1047559
  %v3766 = vsel %vm3765, %v1504, %v3764
  %v3767 = vsel %vm3753, %v1518, %v1511
  %v3768 = vsel %vm3755, %v1525, %v3767
  %v3769 = vsel %vm3757, %v1532, %v3768
  %v3770 = vsel %vm3753, %v1546, %v1539
  %v3771 = vsel %vm3755, %v1553, %v3770
  %v3772 = vsel %vm3757, %v1560, %v3771
  %v3773 = vsel %vm3759, %v1567, %v3772
  %v3774 = vsel %vm3761, %v1574, %v3773
  %v3775 = vsel %vm3763, %v1581, %v3774
  %v3776 = vsel %vm3765, %v1588, %v3775
  %v3777 = vsel %vm3753, %v1602, %v1595
  %v3778 = vsel %vm3755, %v1609, %v3777
  %v3779 = vsel %vm3757, %v1616, %v3778
  %v3780 = vsel %vm3753, %v1630, %v1623
  %v3781 = vsel %vm3755, %v1637, %v3780
  %v3782 = vsel %vm3757, %v1644, %v3781
  %v3783 = vsel %vm3759, %v1651, %v3782
  %v3784 = vsel %vm3761, %v1658, %v3783
  %v3785 = vsel %vm3763, %v1665, %v3784
  %v3786 = vsel %vm3765, %v1672, %v3785
  %v3787 = vsel %vm3753, %v1686, %v1679
  %v3788 = vsel %vm3755, %v1693, %v3787
  %v3789 = vsel %vm3757, %v1700, %v3788
  %v3790 = vsel %vm3753, %v1714, %v1707
  %v3791 = vsel %vm3755, %v1721, %v3790
  %v3792 = vsel %vm3757, %v1728, %v3791
  %v3793 = vsel %vm3759, %v1735, %v3792
  %v3794 = vsel %vm3761, %v1742, %v3793
  %v3795 = vsel %vm3763, %v1749, %v3794
  %v3796 = vsel %vm3765, %v1756, %v3795
  %v3797 = vsel %vm3753, %v1770, %v1763
  %v3798 = vsel %vm3755, %v1777, %v3797
  %v3799 = vsel %vm3757, %v1784, %v3798
  %v3800 = vsel %vm3753, %v1798, %v1791
  %v3801 = vsel %vm3755, %v1805, %v3800
  %v3802 = vsel %vm3757, %v1812, %v3801
  %v3803 = vsel %vm3759, %v1819, %v3802
  %v3804 = vsel %vm3761, %v1826, %v3803
  %v3805 = vsel %vm3763, %v1833, %v3804
  %v3806 = vsel %vm3765, %v1840, %v3805
  %v3807 = vsel %vm3753, %v1854, %v1847
  %v3808 = vsel %vm3755, %v1861, %v3807
  %v3809 = vsel %vm3757, %v1868, %v3808
  %v3810 = vsel %vm3753, %v1882, %v1875
  %v3811 = vsel %vm3755, %v1889, %v3810
  %v3812 = vsel %vm3757, %v1896, %v3811
  %v3813 = vsel %vm3759, %v1903, %v3812
  %v3814 = vsel %vm3761, %v1910, %v3813
  %v3815 = vsel %vm3763, %v1917, %v3814
  %v3816 = vsel %vm3765, %v1924, %v3815
  %v3817 = vsel %vm3753, %v1938, %v1931
  %v3818 = vsel %vm3755, %v1945, %v3817
  %v3819 = vsel %vm3757, %v1952, %v3818
  %v3820 = vsel %vm3753, %v1966, %v1959
  %v3821 = vsel %vm3755, %v1973, %v3820
  %v3822 = vsel %vm3757, %v1980, %v3821
  %v3823 = vsel %vm3759, %v1987, %v3822
  %v3824 = vsel %vm3761, %v1994, %v3823
  %v3825 = vsel %vm3763, %v2001, %v3824
  %v3826 = vsel %vm3765, %v2008, %v3825
  %v3827 = vsel %vm3753, %v2022, %v2015
  %v3828 = vsel %vm3755, %v2029, %v3827
  %v3829 = vsel %vm3757, %v2036, %v3828
  %v3830 = vsel %vm3753, %v2050, %v2043
  %v3831 = vsel %vm3755, %v2057, %v3830
  %v3832 = vsel %vm3757, %v2064, %v3831
  %v3833 = vsel %vm3759, %v2071, %v3832
  %v3834 = vsel %vm3761, %v2078, %v3833
  %v3835 = vsel %vm3763, %v2085, %v3834
  %v3836 = vsel %vm3765, %v2092, %v3835
  %v3837 = vsel %vm3753, %v2106, %v2099
  %v3838 = vsel %vm3755, %v2113, %v3837
  %v3839 = vsel %vm3757, %v2120, %v3838
  %v3840 = vsel %vm3753, %v2134, %v2127
  %v3841 = vsel %vm3755, %v2141, %v3840
  %v3842 = vsel %vm3757, %v2148, %v3841
  %v3843 = vsel %vm3759, %v2155, %v3842
  %v3844 = vsel %vm3761, %v2162, %v3843
  %v3845 = vsel %vm3763, %v2169, %v3844
  %v3846 = vsel %vm3765, %v2176, %v3845
  %v3847 = vsel %vm3753, %v2190, %v2183
  %v3848 = vsel %vm3755, %v2197, %v3847
  %v3849 = vsel %vm3757, %v2204, %v3848
  %v3850 = vsel %vm3753, %v2218, %v2211
  %v3851 = vsel %vm3755, %v2225, %v3850
  %v3852 = vsel %vm3757, %v2232, %v3851
  %v3853 = vsel %vm3759, %v2239, %v3852
  %v3854 = vsel %vm3761, %v2246, %v3853
  %v3855 = vsel %vm3763, %v2253, %v3854
  %v3856 = vsel %vm3765, %v2260, %v3855
  %v3857 = vsel %vm3753, %v2274, %v2267
  %v3858 = vsel %vm3755, %v2281, %v3857
  %v3859 = vsel %vm3757, %v2288, %v3858
  %v3860 = vsel %vm3753, %v2302, %v2295
  %v3861 = vsel %vm3755, %v2309, %v3860
  %v3862 = vsel %vm3757, %v2316, %v3861
  %v3863 = vsel %vm3759, %v2323, %v3862
  %v3864 = vsel %vm3761, %v2330, %v3863
  %v3865 = vsel %vm3763, %v2337, %v3864
  %v3866 = vsel %vm3765, %v2344, %v3865
  %v3867 = vsel %vm3753, %v2358, %v2351
  %v3868 = vsel %vm3755, %v2365, %v3867
  %v3869 = vsel %vm3757, %v2372, %v3868
  %v3870 = vsel %vm3753, %v2386, %v2379
  %v3871 = vsel %vm3755, %v2393, %v3870
  %v3872 = vsel %vm3757, %v2400, %v3871
  %v3873 = vsel %vm3759, %v2407, %v3872
  %v3874 = vsel %vm3761, %v2414, %v3873
  %v3875 = vsel %vm3763, %v2421, %v3874
  %v3876 = vsel %vm3765, %v2428, %v3875
  %v3877 = vsel %vm3753, %v2442, %v2435
  %v3878 = vsel %vm3755, %v2449, %v3877
  %v3879 = vsel %vm3757, %v2456, %v3878
  %v3880 = vsel %vm3753, %v2470, %v2463
  %v3881 = vsel %vm3755, %v2477, %v3880
  %v3882 = vsel %vm3757, %v2484, %v3881
  %v3883 = vsel %vm3759, %v2491, %v3882
  %v3884 = vsel %vm3761, %v2498, %v3883
  %v3885 = vsel %vm3763, %v2505, %v3884
  %v3886 = vsel %vm3765, %v2512, %v3885
  %v3887 = vsel %vm3753, %v2526, %v2519
  %v3888 = vsel %vm3755, %v2533, %v3887
  %v3889 = vsel %vm3757, %v2540, %v3888
  %v3890 = vsel %vm3753, %v2554, %v2547
  %v3891 = vsel %vm3755, %v2561, %v3890
  %v3892 = vsel %vm3757, %v2568, %v3891
  %v3893 = vsel %vm3759, %v2575, %v3892
  %v3894 = vsel %vm3761, %v2582, %v3893
  %v3895 = vsel %vm3763, %v2589, %v3894
  %v3896 = vsel %vm3765, %v2596, %v3895
  %v3897 = vsel %vm3753, %v2610, %v2603
  %v3898 = vsel %vm3755, %v2617, %v3897
  %v3899 = vsel %vm3757, %v2624, %v3898
  %v3900 = vsel %vm3753, %v2638, %v2631
  %v3901 = vsel %vm3755, %v2645, %v3900
  %v3902 = vsel %vm3757, %v2652, %v3901
  %v3903 = vsel %vm3759, %v2659, %v3902
  %v3904 = vsel %vm3761, %v2666, %v3903
  %v3905 = vsel %vm3763, %v2673, %v3904
  %v3906 = vsel %vm3765, %v2680, %v3905
  %v3907 = vsel %vm3753, %v2694, %v2687
  %v3908 = vsel %vm3755, %v2701, %v3907
  %v3909 = vsel %vm3757, %v2708, %v3908
  %v3910 = vsel %vm3753, %v2722, %v2715
  %v3911 = vsel %vm3755, %v2729, %v3910
  %v3912 = vsel %vm3757, %v2736, %v3911
  %v3913 = vsel %vm3759, %v2743, %v3912
  %v3914 = vsel %vm3761, %v2750, %v3913
  %v3915 = vsel %vm3763, %v2757, %v3914
  %v3916 = vsel %vm3765, %v2764, %v3915
  %v3917 = vsel %vm3753, %v2778, %v2771
  %v3918 = vsel %vm3755, %v2785, %v3917
  %v3919 = vsel %vm3757, %v2792, %v3918
  %v3920 = vsel %vm3753, %v2806, %v2799
  %v3921 = vsel %vm3755, %v2813, %v3920
  %v3922 = vsel %vm3757, %v2820, %v3921
  %v3923 = vsel %vm3759, %v2827, %v3922
  %v3924 = vsel %vm3761, %v2834, %v3923
  %v3925 = vsel %vm3763, %v2841, %v3924
  %v3926 = vsel %vm3765, %v2848, %v3925
  %v3927 = vsel %vm3753, %v2862, %v2855
  %v3928 = vsel %vm3755, %v2869, %v3927
  %v3929 = vsel %vm3757, %v2876, %v3928
  %v3930 = vsel %vm3753, %v2890, %v2883
  %v3931 = vsel %vm3755, %v2897, %v3930
  %v3932 = vsel %vm3757, %v2904, %v3931
  %v3933 = vsel %vm3759, %v2911, %v3932
  %v3934 = vsel %vm3761, %v2918, %v3933
  %v3935 = vsel %vm3763, %v2925, %v3934
  %v3936 = vsel %vm3765, %v2932, %v3935
  %v3937 = vsel %vm3753, %v2946, %v2939
  %v3938 = vsel %vm3755, %v2953, %v3937
  %v3939 = vsel %vm3757, %v2960, %v3938
  %v3940 = vsel %vm3753, %v2974, %v2967
  %v3941 = vsel %vm3755, %v2981, %v3940
  %v3942 = vsel %vm3757, %v2988, %v3941
  %v3943 = vsel %vm3759, %v2995, %v3942
  %v3944 = vsel %vm3761, %v3002, %v3943
  %v3945 = vsel %vm3763, %v3009, %v3944
  %v3946 = vsel %vm3765, %v3016, %v3945
  %v3947 = vsel %vm3753, %v3030, %v3023
  %v3948 = vsel %vm3755, %v3037, %v3947
  %v3949 = vsel %vm3757, %v3044, %v3948
  %v3950 = vsel %vm3753, %v3058, %v3051
  %v3951 = vsel %vm3755, %v3065, %v3950
  %v3952 = vsel %vm3757, %v3072, %v3951
  %v3953 = vsel %vm3759, %v3079, %v3952
  %v3954 = vsel %vm3761, %v3086, %v3953
  %v3955 = vsel %vm3763, %v3093, %v3954
  %v3956 = vsel %vm3765, %v3100, %v3955
  %v3957 = vsel %vm3753, %v3114, %v3107
  %v3958 = vsel %vm3755, %v3121, %v3957
  %v3959 = vsel %vm3757, %v3128, %v3958
  %v3960 = vsel %vm3753, %v3142, %v3135
  %v3961 = vsel %vm3755, %v3149, %v3960
  %v3962 = vsel %vm3757, %v3156, %v3961
  %v3963 = vsel %vm3759, %v3163, %v3962
  %v3964 = vsel %vm3761, %v3170, %v3963
  %v3965 = vsel %vm3763, %v3177, %v3964
  %v3966 = vsel %vm3765, %v3184, %v3965
  %v3967 = vsel %vm3753, %v3198, %v3191
  %v3968 = vsel %vm3755, %v3205, %v3967
  %v3969 = vsel %vm3757, %v3212, %v3968
  %v3970 = vsel %vm3753, %v3226, %v3219
  %v3971 = vsel %vm3755, %v3233, %v3970
  %v3972 = vsel %vm3757, %v3240, %v3971
  %v3973 = vsel %vm3759, %v3247, %v3972
  %v3974 = vsel %vm3761, %v3254, %v3973
  %v3975 = vsel %vm3763, %v3261, %v3974
  %v3976 = vsel %vm3765, %v3268, %v3975
  %v3977 = vsel %vm3753, %v3282, %v3275
  %v3978 = vsel %vm3755, %v3289, %v3977
  %v3979 = vsel %vm3757, %v3296, %v3978
  %v3980 = vsel %vm3753, %v3310, %v3303
  %v3981 = vsel %vm3755, %v3317, %v3980
  %v3982 = vsel %vm3757, %v3324, %v3981
  %v3983 = vsel %vm3759, %v3331, %v3982
  %v3984 = vsel %vm3761, %v3338, %v3983
  %v3985 = vsel %vm3763, %v3345, %v3984
  %v3986 = vsel %vm3765, %v3352, %v3985
  %v3987 = vsel %vm3753, %v3366, %v3359
  %v3988 = vsel %vm3755, %v3373, %v3987
  %v3989 = vsel %vm3757, %v3380, %v3988
  %v3990 = vsel %vm3753, %v3394, %v3387
  %v3991 = vsel %vm3755, %v3401, %v3990
  %v3992 = vsel %vm3757, %v3408, %v3991
  %v3993 = vsel %vm3759, %v3415, %v3992
  %v3994 = vsel %vm3761, %v3422, %v3993
  %v3995 = vsel %vm3763, %v3429, %v3994
  %v3996 = vsel %vm3765, %v3436, %v3995
  %v3997 = vsel %vm3753, %v3450, %v3443
  %v3998 = vsel %vm3755, %v3457, %v3997
  %v3999 = vsel %vm3757, %v3464, %v3998
  %vm4048 = vcmask 162816
  %4049 = vst.msk [vmem:[%s1] sm:$0xff] %vm4048, %v3766
  %vm4050 = vcmask 158720
  %4051 = vst.msk [vmem:[%s1 + $0x8] sm:$0xf] %vm4050, %v3769
  %4052 = vst.msk [vmem:[%s1 + $0x10] sm:$0xff] %vm4048, %v3776
  %4053 = vst.msk [vmem:[%s1 + $0x18] sm:$0xf] %vm4050, %v3779
  %4054 = vst.msk [vmem:[%s1 + $0x20] sm:$0xff] %vm4048, %v3786
  %4055 = vst.msk [vmem:[%s1 + $0x28] sm:$0xf] %vm4050, %v3789
  %4056 = vst.msk [vmem:[%s1 + $0x30] sm:$0xff] %vm4048, %v3796
  %4057 = vst.msk [vmem:[%s1 + $0x38] sm:$0xf] %vm4050, %v3799
  %4058 = vst.msk [vmem:[%s1 + $0x40] sm:$0xff] %vm4048, %v3806
  %4059 = vst.msk [vmem:[%s1 + $0x48] sm:$0xf] %vm4050, %v3809
  %4060 = vst.msk [vmem:[%s1 + $0x50] sm:$0xff] %vm4048, %v3816
  %4061 = vst.msk [vmem:[%s1 + $0x58] sm:$0xf] %vm4050, %v3819
  %4062 = vst.msk [vmem:[%s1 + $0x60] sm:$0xff] %vm4048, %v3826
  %4063 = vst.msk [vmem:[%s1 + $0x68] sm:$0xf] %vm4050, %v3829
  %4064 = vst.msk [vmem:[%s1 + $0x70] sm:$0xff] %vm4048, %v3836
  %4065 = vst.msk [vmem:[%s1 + $0x78] sm:$0xf] %vm4050, %v3839
  %4066 = vst.msk [vmem:[%s1 + $0x80] sm:$0xff] %vm4048, %v3846
  %4067 = vst.msk [vmem:[%s1 + $0x88] sm:$0xf] %vm4050, %v3849
  %4068 = vst.msk [vmem:[%s1 + $0x90] sm:$0xff] %vm4048, %v3856
  %4069 = vst.msk [vmem:[%s1 + $0x98] sm:$0xf] %vm4050, %v3859
  %4070 = vst.msk [vmem:[%s1 + $0xa0] sm:$0xff] %vm4048, %v3866
  %4071 = vst.msk [vmem:[%s1 + $0xa8] sm:$0xf] %vm4050, %v3869
  %4072 = vst.msk [vmem:[%s1 + $0xb0] sm:$0xff] %vm4048, %v3876
  %4073 = vst.msk [vmem:[%s1 + $0xb8] sm:$0xf] %vm4050, %v3879
  %4074 = vst.msk [vmem:[%s1 + $0xc0] sm:$0xff] %vm4048, %v3886
  %4075 = vst.msk [vmem:[%s1 + $0xc8] sm:$0xf] %vm4050, %v3889
  %4076 = vst.msk [vmem:[%s1 + $0xd0] sm:$0xff] %vm4048, %v3896
  %4077 = vst.msk [vmem:[%s1 + $0xd8] sm:$0xf] %vm4050, %v3899
  %4078 = vst.msk [vmem:[%s1 + $0xe0] sm:$0xff] %vm4048, %v3906
  %4079 = vst.msk [vmem:[%s1 + $0xe8] sm:$0xf] %vm4050, %v3909
  %4080 = vst.msk [vmem:[%s1 + $0xf0] sm:$0xff] %vm4048, %v3916
  %4081 = vst.msk [vmem:[%s1 + $0xf8] sm:$0xf] %vm4050, %v3919
  %4082 = vst.msk [vmem:[%s1 + $0x100] sm:$0xff] %vm4048, %v3926
  %4083 = vst.msk [vmem:[%s1 + $0x108] sm:$0xf] %vm4050, %v3929
  %4084 = vst.msk [vmem:[%s1 + $0x110] sm:$0xff] %vm4048, %v3936
  %4085 = vst.msk [vmem:[%s1 + $0x118] sm:$0xf] %vm4050, %v3939
  %4086 = vst.msk [vmem:[%s1 + $0x120] sm:$0xff] %vm4048, %v3946
  %4087 = vst.msk [vmem:[%s1 + $0x128] sm:$0xf] %vm4050, %v3949
  %4088 = vst.msk [vmem:[%s1 + $0x130] sm:$0xff] %vm4048, %v3956
  %4089 = vst.msk [vmem:[%s1 + $0x138] sm:$0xf] %vm4050, %v3959
  %4090 = vst.msk [vmem:[%s1 + $0x140] sm:$0xff] %vm4048, %v3966
  %4091 = vst.msk [vmem:[%s1 + $0x148] sm:$0xf] %vm4050, %v3969
  %4092 = vst.msk [vmem:[%s1 + $0x150] sm:$0xff] %vm4048, %v3976
  %4093 = vst.msk [vmem:[%s1 + $0x158] sm:$0xf] %vm4050, %v3979
  %4094 = vst.msk [vmem:[%s1 + $0x160] sm:$0xff] %vm4048, %v3986
  %4095 = vst.msk [vmem:[%s1 + $0x168] sm:$0xf] %vm4050, %v3989
  %4096 = vst.msk [vmem:[%s1 + $0x170] sm:$0xff] %vm4048, %v3996
  %4097 = vst.msk [vmem:[%s1 + $0x178] sm:$0xf] %vm4050, %v3999
  // Predicated region
  $region6: #{linear_then_conv_forward.9} parent=0 // pred_check
    _
  $region7: #{linear_then_conv_forward.9} parent=0 // pred_check_branch
    %4099 = sbr.rel (0) target = $region9
  $region8: #{linear_then_conv_forward.9} parent=0 // pred_region
    _
  $region9: #{linear_then_conv_forward.9} parent=0 // pred_fallthru
    _
  // Predicated region
  $region10: #{linear_then_conv_forward.9} parent=0 // pred_check
    _
  $region11: #{linear_then_conv_forward.9} parent=0 // pred_check_branch
    %4101 = sbr.rel (0) target = $region13
  $region12: #{linear_then_conv_forward.9} parent=0 // pred_region
    _
  $region13: #{linear_then_conv_forward.9} parent=0 // pred_fallthru
    _

// kernel: linear_then_conv_forward.10
$region0: #{linear_then_conv_forward.10}
  #allocation0 [shape = 'u32[]', space=smem, size = 0x4, offset = 0x4, fixed_abs, tag = 'smem constant byte address 0x4 - core index']
  #allocation1 [shape = 'u32[144,128]{1,0:T(1,128)}', space=vmem, size = 0x12000, scoped, tag = 'internal scratch']
  %s0 = inlined_call_operand.vmem [shape: bf16[128,512], index: 0, kind: input, shape index: {}]
  %s1 = inlined_call_operand.vmem [shape: bf16[512,128], index: 1, kind: input, shape index: {}]
  %s2 = inlined_call_operand.vmem [shape: f32[1,128], index: 2, kind: input, shape index: {}]
  %s3 = inlined_call_operand.vmem [shape: f32[128,128], index: 3, kind: output, shape index: {}]
  %s4 = sld [smem:[#allocation0]]
  $region30: #{linear_then_conv_forward.10} parent=0
    _
  %s6 = ssub.s32 1, %s4
  %s7 = scalar_select 0, %s6, %s4
  // Predicated region
  $region2: #{linear_then_conv_forward.10} parent=0 // pred_check
    _
  $region3: #{linear_then_conv_forward.10} parent=0 // pred_check_branch
    %9 = sbr.rel (0) target = $region5
  $region4: #{linear_then_conv_forward.10} parent=0 // pred_region
    _
  $region5: #{linear_then_conv_forward.10} parent=0 // pred_fallthru
    _
  // Predicated region
  $region6: #{linear_then_conv_forward.10} parent=0 // pred_check
    _
  $region7: #{linear_then_conv_forward.10} parent=0 // pred_check_branch
    %11 = sbr.rel (0) target = $region9
  $region8: #{linear_then_conv_forward.10} parent=0 // pred_region
    _
  $region9: #{linear_then_conv_forward.10} parent=0 // pred_fallthru
    _
  // Predicated region
  $region10: #{linear_then_conv_forward.10} parent=0 // pred_check
    _
  $region11: #{linear_then_conv_forward.10} parent=0 // pred_check_branch
    %13 = sbr.rel (0) target = $region13
  $region12: #{linear_then_conv_forward.10} parent=0 // pred_region
    _
  $region13: #{linear_then_conv_forward.10} parent=0 // pred_fallthru
    _
  %p15 = scmp.eq.s32.totalorder 0, 0
  // Predicated region
  $region14: #{linear_then_conv_forward.10} parent=0 // pred_check
    %p16 = pneg %p15
  $region15: #{linear_then_conv_forward.10} parent=0 // pred_check_branch
    %18 = sbr.rel (%p16) target = $region17
  $region16: #{linear_then_conv_forward.10} parent=0 // pred_region
    %19 = vst [vmem:[%s3] sm:$0xff] 0.0
    %20 = vst [vmem:[%s3 + $0x8] sm:$0xff] 0.0
    %21 = vst [vmem:[%s3 + $0x10] sm:$0xff] 0.0
    %22 = vst [vmem:[%s3 + $0x18] sm:$0xff] 0.0
    %23 = vst [vmem:[%s3 + $0x20] sm:$0xff] 0.0
    %24 = vst [vmem:[%s3 + $0x28] sm:$0xff] 0.0
    %25 = vst [vmem:[%s3 + $0x30] sm:$0xff] 0.0
    %26 = vst [vmem:[%s3 + $0x38] sm:$0xff] 0.0
    %27 = vst [vmem:[%s3 + $0x40] sm:$0xff] 0.0
    %28 = vst [vmem:[%s3 + $0x48] sm:$0xff] 0.0
    %29 = vst [vmem:[%s3 + $0x50] sm:$0xff] 0.0
    %30 = vst [vmem:[%s3 + $0x58] sm:$0xff] 0.0
    %31 = vst [vmem:[%s3 + $0x60] sm:$0xff] 0.0
    %32 = vst [vmem:[%s3 + $0x68] sm:$0xff] 0.0
    %33 = vst [vmem:[%s3 + $0x70] sm:$0xff] 0.0
    %34 = vst [vmem:[%s3 + $0x78] sm:$0xff] 0.0
  $region17: #{linear_then_conv_forward.10} parent=0 // pred_fallthru
    _
  %v35 = vld [vmem:[%s3] sm:$0xff]
  %v36 = vld [vmem:[%s3 + $0x8] sm:$0xff]
  %v37 = vld [vmem:[%s3 + $0x10] sm:$0xff]
  %v38 = vld [vmem:[%s3 + $0x18] sm:$0xff]
  %v39 = vld [vmem:[%s3 + $0x20] sm:$0xff]
  %v40 = vld [vmem:[%s3 + $0x28] sm:$0xff]
  %v41 = vld [vmem:[%s3 + $0x30] sm:$0xff]
  %v42 = vld [vmem:[%s3 + $0x38] sm:$0xff]
  %v43 = vld [vmem:[%s3 + $0x40] sm:$0xff]
  %v44 = vld [vmem:[%s3 + $0x48] sm:$0xff]
  %v45 = vld [vmem:[%s3 + $0x50] sm:$0xff]
  %v46 = vld [vmem:[%s3 + $0x58] sm:$0xff]
  %v47 = vld [vmem:[%s3 + $0x60] sm:$0xff]
  %v48 = vld [vmem:[%s3 + $0x68] sm:$0xff]
  %v49 = vld [vmem:[%s3 + $0x70] sm:$0xff]
  %v50 = vld [vmem:[%s3 + $0x78] sm:$0xff]
  %v51 = vld [vmem:[%s0] sm:$0xff]
  %v52 = vld [vmem:[%s0 + $0x8] sm:$0xff]
  %v53 = vld [vmem:[%s0 + $0x10] sm:$0xff]
  %v54 = vld [vmem:[%s0 + $0x18] sm:$0xff]
  %v55 = vld [vmem:[%s0 + $0x20] sm:$0xff]
  %v56 = vld [vmem:[%s0 + $0x28] sm:$0xff]
  %v57 = vld [vmem:[%s0 + $0x30] sm:$0xff]
  %v58 = vld [vmem:[%s0 + $0x38] sm:$0xff]
  %v59 = vld [vmem:[%s0 + $0x40] sm:$0xff]
  %v60 = vld [vmem:[%s0 + $0x48] sm:$0xff]
  %v61 = vld [vmem:[%s0 + $0x50] sm:$0xff]
  %v62 = vld [vmem:[%s0 + $0x58] sm:$0xff]
  %v63 = vld [vmem:[%s0 + $0x60] sm:$0xff]
  %v64 = vld [vmem:[%s0 + $0x68] sm:$0xff]
  %v65 = vld [vmem:[%s0 + $0x70] sm:$0xff]
  %v66 = vld [vmem:[%s0 + $0x78] sm:$0xff]
  %v67 = vld [vmem:[%s0 + $0x80] sm:$0xff]
  %v68 = vld [vmem:[%s0 + $0x88] sm:$0xff]
  %v69 = vld [vmem:[%s0 + $0x90] sm:$0xff]
  %v70 = vld [vmem:[%s0 + $0x98] sm:$0xff]
  %v71 = vld [vmem:[%s0 + $0xa0] sm:$0xff]
  %v72 = vld [vmem:[%s0 + $0xa8] sm:$0xff]
  %v73 = vld [vmem:[%s0 + $0xb0] sm:$0xff]
  %v74 = vld [vmem:[%s0 + $0xb8] sm:$0xff]
  %v75 = vld [vmem:[%s0 + $0xc0] sm:$0xff]
  %v76 = vld [vmem:[%s0 + $0xc8] sm:$0xff]
  %v77 = vld [vmem:[%s0 + $0xd0] sm:$0xff]
  %v78 = vld [vmem:[%s0 + $0xd8] sm:$0xff]
  %v79 = vld [vmem:[%s0 + $0xe0] sm:$0xff]
  %v80 = vld [vmem:[%s0 + $0xe8] sm:$0xff]
  %v81 = vld [vmem:[%s0 + $0xf0] sm:$0xff]
  %v82 = vld [vmem:[%s0 + $0xf8] sm:$0xff]
  %v83 = vld [vmem:[%s1] sm:$0xf]
  %v84 = vld [vmem:[%s1 + $0x4] sm:$0xf]
  %v85 = vld [vmem:[%s1 + $0x8] sm:$0xf]
  %v86 = vld [vmem:[%s1 + $0xc] sm:$0xf]
  %v87 = vld [vmem:[%s1 + $0x10] sm:$0xf]
  %v88 = vld [vmem:[%s1 + $0x14] sm:$0xf]
  %v89 = vld [vmem:[%s1 + $0x18] sm:$0xf]
  %v90 = vld [vmem:[%s1 + $0x1c] sm:$0xf]
  %v91 = vld [vmem:[%s1 + $0x20] sm:$0xf]
  %v92 = vld [vmem:[%s1 + $0x24] sm:$0xf]
  %v93 = vld [vmem:[%s1 + $0x28] sm:$0xf]
  %v94 = vld [vmem:[%s1 + $0x2c] sm:$0xf]
  %v95 = vld [vmem:[%s1 + $0x30] sm:$0xf]
  %v96 = vld [vmem:[%s1 + $0x34] sm:$0xf]
  %v97 = vld [vmem:[%s1 + $0x38] sm:$0xf]
  %v98 = vld [vmem:[%s1 + $0x3c] sm:$0xf]
  %v99 = vld [vmem:[%s1 + $0x40] sm:$0xf]
  %v100 = vld [vmem:[%s1 + $0x44] sm:$0xf]
  %v101 = vld [vmem:[%s1 + $0x48] sm:$0xf]
  %v102 = vld [vmem:[%s1 + $0x4c] sm:$0xf]
  %v103 = vld [vmem:[%s1 + $0x50] sm:$0xf]
  %v104 = vld [vmem:[%s1 + $0x54] sm:$0xf]
  %v105 = vld [vmem:[%s1 + $0x58] sm:$0xf]
  %v106 = vld [vmem:[%s1 + $0x5c] sm:$0xf]
  %v107 = vld [vmem:[%s1 + $0x60] sm:$0xf]
  %v108 = vld [vmem:[%s1 + $0x64] sm:$0xf]
  %v109 = vld [vmem:[%s1 + $0x68] sm:$0xf]
  %v110 = vld [vmem:[%s1 + $0x6c] sm:$0xf]
  %v111 = vld [vmem:[%s1 + $0x70] sm:$0xf]
  %v112 = vld [vmem:[%s1 + $0x74] sm:$0xf]
  %v113 = vld [vmem:[%s1 + $0x78] sm:$0xf]
  %v114 = vld [vmem:[%s1 + $0x7c] sm:$0xf]
  %v115 = vld [vmem:[%s1 + $0x80] sm:$0xf]
  %v116 = vld [vmem:[%s1 + $0x84] sm:$0xf]
  %v117 = vld [vmem:[%s1 + $0x88] sm:$0xf]
  %v118 = vld [vmem:[%s1 + $0x8c] sm:$0xf]
  %v119 = vld [vmem:[%s1 + $0x90] sm:$0xf]
  %v120 = vld [vmem:[%s1 + $0x94] sm:$0xf]
  %v121 = vld [vmem:[%s1 + $0x98] sm:$0xf]
  %v122 = vld [vmem:[%s1 + $0x9c] sm:$0xf]
  %v123 = vld [vmem:[%s1 + $0xa0] sm:$0xf]
  %v124 = vld [vmem:[%s1 + $0xa4] sm:$0xf]
  %v125 = vld [vmem:[%s1 + $0xa8] sm:$0xf]
  %v126 = vld [vmem:[%s1 + $0xac] sm:$0xf]
  %v127 = vld [vmem:[%s1 + $0xb0] sm:$0xf]
  %v128 = vld [vmem:[%s1 + $0xb4] sm:$0xf]
  %v129 = vld [vmem:[%s1 + $0xb8] sm:$0xf]
  %v130 = vld [vmem:[%s1 + $0xbc] sm:$0xf]
  %v131 = vld [vmem:[%s1 + $0xc0] sm:$0xf]
  %v132 = vld [vmem:[%s1 + $0xc4] sm:$0xf]
  %v133 = vld [vmem:[%s1 + $0xc8] sm:$0xf]
  %v134 = vld [vmem:[%s1 + $0xcc] sm:$0xf]
  %v135 = vld [vmem:[%s1 + $0xd0] sm:$0xf]
  %v136 = vld [vmem:[%s1 + $0xd4] sm:$0xf]
  %v137 = vld [vmem:[%s1 + $0xd8] sm:$0xf]
  %v138 = vld [vmem:[%s1 + $0xdc] sm:$0xf]
  %v139 = vld [vmem:[%s1 + $0xe0] sm:$0xf]
  %v140 = vld [vmem:[%s1 + $0xe4] sm:$0xf]
  %v141 = vld [vmem:[%s1 + $0xe8] sm:$0xf]
  %v142 = vld [vmem:[%s1 + $0xec] sm:$0xf]
  %v143 = vld [vmem:[%s1 + $0xf0] sm:$0xf]
  %v144 = vld [vmem:[%s1 + $0xf4] sm:$0xf]
  %v145 = vld [vmem:[%s1 + $0xf8] sm:$0xf]
  %v146 = vld [vmem:[%s1 + $0xfc] sm:$0xf]
  %v179 = vunpack.c.l.b16 %v51
  %v180 = vunpack.c.h.b16 %v51
  %v181 = vunpack.c.l.b16 %v52
  %v182 = vunpack.c.h.b16 %v52
  %v183 = vunpack.c.l.b16 %v53
  %v184 = vunpack.c.h.b16 %v53
  %v185 = vunpack.c.l.b16 %v54
  %v186 = vunpack.c.h.b16 %v54
  %v187 = vunpack.c.l.b16 %v55
  %v188 = vunpack.c.h.b16 %v55
  %v189 = vunpack.c.l.b16 %v56
  %v190 = vunpack.c.h.b16 %v56
  %v191 = vunpack.c.l.b16 %v57
  %v192 = vunpack.c.h.b16 %v57
  %v193 = vunpack.c.l.b16 %v58
  %v194 = vunpack.c.h.b16 %v58
  %v195 = vunpack.c.l.b16 %v59
  %v196 = vunpack.c.h.b16 %v59
  %v197 = vunpack.c.l.b16 %v60
  %v198 = vunpack.c.h.b16 %v60
  %v199 = vunpack.c.l.b16 %v61
  %v200 = vunpack.c.h.b16 %v61
  %v201 = vunpack.c.l.b16 %v62
  %v202 = vunpack.c.h.b16 %v62
  %v203 = vunpack.c.l.b16 %v63
  %v204 = vunpack.c.h.b16 %v63
  %v205 = vunpack.c.l.b16 %v64
  %v206 = vunpack.c.h.b16 %v64
  %v207 = vunpack.c.l.b16 %v65
  %v208 = vunpack.c.h.b16 %v65
  %v209 = vunpack.c.l.b16 %v66
  %v210 = vunpack.c.h.b16 %v66
  %v211 = vunpack.c.l.b16 %v67
  %v212 = vunpack.c.h.b16 %v67
  %v213 = vunpack.c.l.b16 %v68
  %v214 = vunpack.c.h.b16 %v68
  %v215 = vunpack.c.l.b16 %v69
  %v216 = vunpack.c.h.b16 %v69
  %v217 = vunpack.c.l.b16 %v70
  %v218 = vunpack.c.h.b16 %v70
  %v219 = vunpack.c.l.b16 %v71
  %v220 = vunpack.c.h.b16 %v71
  %v221 = vunpack.c.l.b16 %v72
  %v222 = vunpack.c.h.b16 %v72
  %v223 = vunpack.c.l.b16 %v73
  %v224 = vunpack.c.h.b16 %v73
  %v225 = vunpack.c.l.b16 %v74
  %v226 = vunpack.c.h.b16 %v74
  %v227 = vunpack.c.l.b16 %v75
  %v228 = vunpack.c.h.b16 %v75
  %v229 = vunpack.c.l.b16 %v76
  %v230 = vunpack.c.h.b16 %v76
  %v231 = vunpack.c.l.b16 %v77
  %v232 = vunpack.c.h.b16 %v77
  %v233 = vunpack.c.l.b16 %v78
  %v234 = vunpack.c.h.b16 %v78
  %v235 = vunpack.c.l.b16 %v79
  %v236 = vunpack.c.h.b16 %v79
  %v237 = vunpack.c.l.b16 %v80
  %v238 = vunpack.c.h.b16 %v80
  %v239 = vunpack.c.l.b16 %v81
  %v240 = vunpack.c.h.b16 %v81
  %v241 = vunpack.c.l.b16 %v82
  %v242 = vunpack.c.h.b16 %v82
  %v243 = vpack.c.b16 %v183, %v179
  %v244 = vpack.c.b16 %v184, %v180
  %v245 = vpack.c.b16 %v185, %v181
  %v246 = vpack.c.b16 %v186, %v182
  %v247 = vpack.c.b16 %v191, %v187
  %v248 = vpack.c.b16 %v192, %v188
  %v249 = vpack.c.b16 %v193, %v189
  %v250 = vpack.c.b16 %v194, %v190
  %v251 = vpack.c.b16 %v199, %v195
  %v252 = vpack.c.b16 %v200, %v196
  %v253 = vpack.c.b16 %v201, %v197
  %v254 = vpack.c.b16 %v202, %v198
  %v255 = vpack.c.b16 %v207, %v203
  %v256 = vpack.c.b16 %v208, %v204
  %v257 = vpack.c.b16 %v209, %v205
  %v258 = vpack.c.b16 %v210, %v206
  %v259 = vpack.c.b16 %v215, %v211
  %v260 = vpack.c.b16 %v216, %v212
  %v261 = vpack.c.b16 %v217, %v213
  %v262 = vpack.c.b16 %v218, %v214
  %v263 = vpack.c.b16 %v223, %v219
  %v264 = vpack.c.b16 %v224, %v220
  %v265 = vpack.c.b16 %v225, %v221
  %v266 = vpack.c.b16 %v226, %v222
  %v267 = vpack.c.b16 %v231, %v227
  %v268 = vpack.c.b16 %v232, %v228
  %v269 = vpack.c.b16 %v233, %v229
  %v270 = vpack.c.b16 %v234, %v230
  %v271 = vpack.c.b16 %v239, %v235
  %v272 = vpack.c.b16 %v240, %v236
  %v273 = vpack.c.b16 %v241, %v237
  %v274 = vpack.c.b16 %v242, %v238
  %v371 = vunpack.c.l.b16 %v83
  %v372 = vunpack.c.l.b16 %v84
  %v373 = vunpack.c.l.b16 %v85
  %v374 = vunpack.c.l.b16 %v86
  %v375 = vunpack.c.l.b16 %v87
  %v376 = vunpack.c.l.b16 %v88
  %v377 = vunpack.c.l.b16 %v89
  %v378 = vunpack.c.l.b16 %v90
  %v379 = vunpack.c.l.b16 %v91
  %v380 = vunpack.c.l.b16 %v92
  %v381 = vunpack.c.l.b16 %v93
  %v382 = vunpack.c.l.b16 %v94
  %v383 = vunpack.c.l.b16 %v95
  %v384 = vunpack.c.l.b16 %v96
  %v385 = vunpack.c.l.b16 %v97
  %v386 = vunpack.c.l.b16 %v98
  %v387 = vunpack.c.l.b16 %v99
  %v388 = vunpack.c.l.b16 %v100
  %v389 = vunpack.c.l.b16 %v101
  %v390 = vunpack.c.l.b16 %v102
  %v391 = vunpack.c.l.b16 %v103
  %v392 = vunpack.c.l.b16 %v104
  %v393 = vunpack.c.l.b16 %v105
  %v394 = vunpack.c.l.b16 %v106
  %v395 = vunpack.c.l.b16 %v107
  %v396 = vunpack.c.l.b16 %v108
  %v397 = vunpack.c.l.b16 %v109
  %v398 = vunpack.c.l.b16 %v110
  %v399 = vunpack.c.l.b16 %v111
  %v400 = vunpack.c.l.b16 %v112
  %v401 = vunpack.c.l.b16 %v113
  %v402 = vunpack.c.l.b16 %v114
  %v403 = vunpack.c.l.b16 %v115
  %v404 = vunpack.c.l.b16 %v116
  %v405 = vunpack.c.l.b16 %v117
  %v406 = vunpack.c.l.b16 %v118
  %v407 = vunpack.c.l.b16 %v119
  %v408 = vunpack.c.l.b16 %v120
  %v409 = vunpack.c.l.b16 %v121
  %v410 = vunpack.c.l.b16 %v122
  %v411 = vunpack.c.l.b16 %v123
  %v412 = vunpack.c.l.b16 %v124
  %v413 = vunpack.c.l.b16 %v125
  %v414 = vunpack.c.l.b16 %v126
  %v415 = vunpack.c.l.b16 %v127
  %v416 = vunpack.c.l.b16 %v128
  %v417 = vunpack.c.l.b16 %v129
  %v418 = vunpack.c.l.b16 %v130
  %v419 = vunpack.c.l.b16 %v131
  %v420 = vunpack.c.l.b16 %v132
  %v421 = vunpack.c.l.b16 %v133
  %v422 = vunpack.c.l.b16 %v134
  %v423 = vunpack.c.l.b16 %v135
  %v424 = vunpack.c.l.b16 %v136
  %v425 = vunpack.c.l.b16 %v137
  %v426 = vunpack.c.l.b16 %v138
  %v427 = vunpack.c.l.b16 %v139
  %v428 = vunpack.c.l.b16 %v140
  %v429 = vunpack.c.l.b16 %v141
  %v430 = vunpack.c.l.b16 %v142
  %v431 = vunpack.c.l.b16 %v143
  %v432 = vunpack.c.l.b16 %v144
  %v433 = vunpack.c.l.b16 %v145
  %v434 = vunpack.c.l.b16 %v146
  %v435 = vpack.c.b16 %v372, %v371
  %v436 = vpack.c.b16 %v374, %v373
  %v437 = vpack.c.b16 %v376, %v375
  %v438 = vpack.c.b16 %v378, %v377
  %v439 = vpack.c.b16 %v380, %v379
  %v440 = vpack.c.b16 %v382, %v381
  %v441 = vpack.c.b16 %v384, %v383
  %v442 = vpack.c.b16 %v386, %v385
  %v443 = vpack.c.b16 %v388, %v387
  %v444 = vpack.c.b16 %v390, %v389
  %v445 = vpack.c.b16 %v392, %v391
  %v446 = vpack.c.b16 %v394, %v393
  %v447 = vpack.c.b16 %v396, %v395
  %v448 = vpack.c.b16 %v398, %v397
  %v449 = vpack.c.b16 %v400, %v399
  %v450 = vpack.c.b16 %v402, %v401
  %v451 = vpack.c.b16 %v404, %v403
  %v452 = vpack.c.b16 %v406, %v405
  %v453 = vpack.c.b16 %v408, %v407
  %v454 = vpack.c.b16 %v410, %v409
  %v455 = vpack.c.b16 %v412, %v411
  %v456 = vpack.c.b16 %v414, %v413
  %v457 = vpack.c.b16 %v416, %v415
  %v458 = vpack.c.b16 %v418, %v417
  %v459 = vpack.c.b16 %v420, %v419
  %v460 = vpack.c.b16 %v422, %v421
  %v461 = vpack.c.b16 %v424, %v423
  %v462 = vpack.c.b16 %v426, %v425
  %v463 = vpack.c.b16 %v428, %v427
  %v464 = vpack.c.b16 %v430, %v429
  %v465 = vpack.c.b16 %v432, %v431
  %v466 = vpack.c.b16 %v434, %v433
  %499 = vmatprep.subr.bf16.mxu0 0
  %500 = vmatpush1.bf16.msra.mxu0 %v435
  %501 = vmatprep.subr.bf16.mxu0 0
  %502 = vmatpush1.bf16.msra.mxu0 %v436
  %503 = vmatprep.subr.bf16.mxu0 0
  %504 = vmatpush1.bf16.msra.mxu0 %v437
  %505 = vmatprep.subr.bf16.mxu0 0
  %506 = vmatpush1.bf16.msra.mxu0 %v438
  %507 = vmatprep.subr.bf16.mxu0 0
  %508 = vmatpush1.bf16.msra.mxu0 %v439
  %509 = vmatprep.subr.bf16.mxu0 0
  %510 = vmatpush1.bf16.msra.mxu0 %v440
  %511 = vmatprep.subr.bf16.mxu0 0
  %512 = vmatpush1.bf16.msra.mxu0 %v441
  %513 = vmatprep.subr.bf16.mxu0 0
  %514 = vmatpush1.bf16.msra.mxu0 %v442
  %515 = vmatprep.subr.bf16.mxu0 0
  %516 = vmatpush1.bf16.msra.mxu0 %v443
  %517 = vmatprep.subr.bf16.mxu0 0
  %518 = vmatpush1.bf16.msra.mxu0 %v444
  %519 = vmatprep.subr.bf16.mxu0 0
  %520 = vmatpush1.bf16.msra.mxu0 %v445
  %521 = vmatprep.subr.bf16.mxu0 0
  %522 = vmatpush1.bf16.msra.mxu0 %v446
  %523 = vmatprep.subr.bf16.mxu0 0
  %524 = vmatpush1.bf16.msra.mxu0 %v447
  %525 = vmatprep.subr.bf16.mxu0 0
  %526 = vmatpush1.bf16.msra.mxu0 %v448
  %527 = vmatprep.subr.bf16.mxu0 0
  %528 = vmatpush1.bf16.msra.mxu0 %v449
  %529 = vmatprep.subr.bf16.mxu0 0
  %530 = vmatpush1.bf16.msra.mxu0 %v450
  %531 = vmatprep.mubr.bf16.mxu0 %v244
  %532 = vmatmul.mubr.bf16.gmra.mrb[0].mxu0 %v243
  %v533 = vpop.f32.mrb[0].mxu0
  %v534 = vadd.f32 0.0, %v533
  %v535 = vpop.f32.mrb[0].mxu0
  %v536 = vpop.f32.mrb[0].mxu0
  %v537 = vadd.f32 0.0, %v536
  %v538 = vpop.f32.mrb[0].mxu0
  %539 = vmatprep.mubr.bf16.mxu0 %v248
  %540 = vmatmul.mubr.bf16.gmra.mrb[0].mxu0 %v247
  %v541 = vpop.f32.mrb[0].mxu0
  %v542 = vadd.f32 0.0, %v541
  %v543 = vpop.f32.mrb[0].mxu0
  %v544 = vpop.f32.mrb[0].mxu0
  %v545 = vadd.f32 0.0, %v544
  %v546 = vpop.f32.mrb[0].mxu0
  %547 = vmatprep.mubr.bf16.mxu0 %v252
  %548 = vmatmul.mubr.bf16.gmra.mrb[0].mxu0 %v251
  %v549 = vpop.f32.mrb[0].mxu0
  %v550 = vadd.f32 0.0, %v549
  %v551 = vpop.f32.mrb[0].mxu0
  %v552 = vpop.f32.mrb[0].mxu0
  %v553 = vadd.f32 0.0, %v552
  %v554 = vpop.f32.mrb[0].mxu0
  %555 = vmatprep.mubr.bf16.mxu0 %v256
  %556 = vmatmul.mubr.bf16.gmra.mrb[0].mxu0 %v255
  %v557 = vpop.f32.mrb[0].mxu0
  %v558 = vadd.f32 0.0, %v557
  %v559 = vpop.f32.mrb[0].mxu0
  %v560 = vpop.f32.mrb[0].mxu0
  %v561 = vadd.f32 0.0, %v560
  %v562 = vpop.f32.mrb[0].mxu0
  %563 = vmatprep.mubr.bf16.mxu0 %v260
  %564 = vmatmul.mubr.bf16.gmra.mrb[0].mxu0 %v259
  %v565 = vpop.f32.mrb[0].mxu0
  %v566 = vadd.f32 0.0, %v565
  %v567 = vpop.f32.mrb[0].mxu0
  %v568 = vpop.f32.mrb[0].mxu0
  %v569 = vadd.f32 0.0, %v568
  %v570 = vpop.f32.mrb[0].mxu0
  %571 = vmatprep.mubr.bf16.mxu0 %v264
  %572 = vmatmul.mubr.bf16.gmra.mrb[0].mxu0 %v263
  %v573 = vpop.f32.mrb[0].mxu0
  %v574 = vadd.f32 0.0, %v573
  %v575 = vpop.f32.mrb[0].mxu0
  %v576 = vpop.f32.mrb[0].mxu0
  %v577 = vadd.f32 0.0, %v576
  %v578 = vpop.f32.mrb[0].mxu0
  %579 = vmatprep.mubr.bf16.mxu0 %v268
  %580 = vmatmul.mubr.bf16.gmra.mrb[0].mxu0 %v267
  %v581 = vpop.f32.mrb[0].mxu0
  %v582 = vadd.f32 0.0, %v581
  %v583 = vpop.f32.mrb[0].mxu0
  %v584 = vpop.f32.mrb[0].mxu0
  %v585 = vadd.f32 0.0, %v584
  %v586 = vpop.f32.mrb[0].mxu0
  %587 = vmatprep.mubr.bf16.mxu0 %v272
  %588 = vmatmul.mubr.bf16.gmra.mrb[0].mxu0 %v271
  %v589 = vpop.f32.mrb[0].mxu0
  %v590 = vadd.f32 0.0, %v589
  %v591 = vpop.f32.mrb[0].mxu0
  %v592 = vpop.f32.mrb[0].mxu0
  %v593 = vadd.f32 0.0, %v592
  %v594 = vpop.f32.mrb[0].mxu0
  %595 = vdwg.mxu0
  %596 = vmatprep.subr.bf16.mxu0 0
  %597 = vmatpush1.bf16.msra.mxu0 %v451
  %598 = vmatprep.subr.bf16.mxu0 0
  %599 = vmatpush1.bf16.msra.mxu0 %v452
  %600 = vmatprep.subr.bf16.mxu0 0
  %601 = vmatpush1.bf16.msra.mxu0 %v453
  %602 = vmatprep.subr.bf16.mxu0 0
  %603 = vmatpush1.bf16.msra.mxu0 %v454
  %604 = vmatprep.subr.bf16.mxu0 0
  %605 = vmatpush1.bf16.msra.mxu0 %v455
  %606 = vmatprep.subr.bf16.mxu0 0
  %607 = vmatpush1.bf16.msra.mxu0 %v456
  %608 = vmatprep.subr.bf16.mxu0 0
  %609 = vmatpush1.bf16.msra.mxu0 %v457
  %610 = vmatprep.subr.bf16.mxu0 0
  %611 = vmatpush1.bf16.msra.mxu0 %v458
  %612 = vmatprep.subr.bf16.mxu0 0
  %613 = vmatpush1.bf16.msra.mxu0 %v459
  %614 = vmatprep.subr.bf16.mxu0 0
  %615 = vmatpush1.bf16.msra.mxu0 %v460
  %616 = vmatprep.subr.bf16.mxu0 0
  %617 = vmatpush1.bf16.msra.mxu0 %v461
  %618 = vmatprep.subr.bf16.mxu0 0
  %619 = vmatpush1.bf16.msra.mxu0 %v462
  %620 = vmatprep.subr.bf16.mxu0 0
  %621 = vmatpush1.bf16.msra.mxu0 %v463
  %622 = vmatprep.subr.bf16.mxu0 0
  %623 = vmatpush1.bf16.msra.mxu0 %v464
  %624 = vmatprep.subr.bf16.mxu0 0
  %625 = vmatpush1.bf16.msra.mxu0 %v465
  %626 = vmatprep.subr.bf16.mxu0 0
  %627 = vmatpush1.bf16.msra.mxu0 %v466
  %628 = vmatprep.mubr.bf16.mxu0 %v246
  %629 = vmatmul.mubr.bf16.gmra.mrb[0].mxu0 %v245
  %v630 = vpop.f32.mrb[0].mxu0
  %v631 = vadd.f32 %v534, %v630
  %v632 = vpop.f32.mrb[0].mxu0
  %v633 = vpop.f32.mrb[0].mxu0
  %v634 = vadd.f32 %v537, %v633
  %v635 = vpop.f32.mrb[0].mxu0
  %636 = vmatprep.mubr.bf16.mxu0 %v250
  %637 = vmatmul.mubr.bf16.gmra.mrb[0].mxu0 %v249
  %v638 = vpop.f32.mrb[0].mxu0
  %v639 = vadd.f32 %v542, %v638
  %v640 = vpop.f32.mrb[0].mxu0
  %v641 = vpop.f32.mrb[0].mxu0
  %v642 = vadd.f32 %v545, %v641
  %v643 = vpop.f32.mrb[0].mxu0
  %644 = vmatprep.mubr.bf16.mxu0 %v254
  %645 = vmatmul.mubr.bf16.gmra.mrb[0].mxu0 %v253
  %v646 = vpop.f32.mrb[0].mxu0
  %v647 = vadd.f32 %v550, %v646
  %v648 = vpop.f32.mrb[0].mxu0
  %v649 = vpop.f32.mrb[0].mxu0
  %v650 = vadd.f32 %v553, %v649
  %v651 = vpop.f32.mrb[0].mxu0
  %652 = vmatprep.mubr.bf16.mxu0 %v258
  %653 = vmatmul.mubr.bf16.gmra.mrb[0].mxu0 %v257
  %v654 = vpop.f32.mrb[0].mxu0
  %v655 = vadd.f32 %v558, %v654
  %v656 = vpop.f32.mrb[0].mxu0
  %v657 = vpop.f32.mrb[0].mxu0
  %v658 = vadd.f32 %v561, %v657
  %v659 = vpop.f32.mrb[0].mxu0
  %660 = vmatprep.mubr.bf16.mxu0 %v262
  %661 = vmatmul.mubr.bf16.gmra.mrb[0].mxu0 %v261
  %v662 = vpop.f32.mrb[0].mxu0
  %v663 = vadd.f32 %v566, %v662
  %v664 = vpop.f32.mrb[0].mxu0
  %v665 = vpop.f32.mrb[0].mxu0
  %v666 = vadd.f32 %v569, %v665
  %v667 = vpop.f32.mrb[0].mxu0
  %668 = vmatprep.mubr.bf16.mxu0 %v266
  %669 = vmatmul.mubr.bf16.gmra.mrb[0].mxu0 %v265
  %v670 = vpop.f32.mrb[0].mxu0
  %v671 = vadd.f32 %v574, %v670
  %v672 = vpop.f32.mrb[0].mxu0
  %v673 = vpop.f32.mrb[0].mxu0
  %v674 = vadd.f32 %v577, %v673
  %v675 = vpop.f32.mrb[0].mxu0
  %676 = vmatprep.mubr.bf16.mxu0 %v270
  %677 = vmatmul.mubr.bf16.gmra.mrb[0].mxu0 %v269
  %v678 = vpop.f32.mrb[0].mxu0
  %v679 = vadd.f32 %v582, %v678
  %v680 = vpop.f32.mrb[0].mxu0
  %v681 = vpop.f32.mrb[0].mxu0
  %v682 = vadd.f32 %v585, %v681
  %v683 = vpop.f32.mrb[0].mxu0
  %684 = vmatprep.mubr.bf16.mxu0 %v274
  %685 = vmatmul.mubr.bf16.gmra.mrb[0].mxu0 %v273
  %v686 = vpop.f32.mrb[0].mxu0
  %v687 = vadd.f32 %v590, %v686
  %v688 = vpop.f32.mrb[0].mxu0
  %v689 = vpop.f32.mrb[0].mxu0
  %v690 = vadd.f32 %v593, %v689
  %v691 = vpop.f32.mrb[0].mxu0
  %692 = vdwg.mxu0
  %v693 = vadd.f32 %v35, %v631
  %v694 = vadd.f32 %v36, %v634
  %v695 = vadd.f32 %v37, %v639
  %v696 = vadd.f32 %v38, %v642
  %v697 = vadd.f32 %v39, %v647
  %v698 = vadd.f32 %v40, %v650
  %v699 = vadd.f32 %v41, %v655
  %v700 = vadd.f32 %v42, %v658
  %v701 = vadd.f32 %v43, %v663
  %v702 = vadd.f32 %v44, %v666
  %v703 = vadd.f32 %v45, %v671
  %v704 = vadd.f32 %v46, %v674
  %v705 = vadd.f32 %v47, %v679
  %v706 = vadd.f32 %v48, %v682
  %v707 = vadd.f32 %v49, %v687
  %v708 = vadd.f32 %v50, %v690
  %709 = vst [vmem:[%s3] sm:$0xff] %v693
  %710 = vst [vmem:[%s3 + $0x8] sm:$0xff] %v694
  %711 = vst [vmem:[%s3 + $0x10] sm:$0xff] %v695
  %712 = vst [vmem:[%s3 + $0x18] sm:$0xff] %v696
  %713 = vst [vmem:[%s3 + $0x20] sm:$0xff] %v697
  %714 = vst [vmem:[%s3 + $0x28] sm:$0xff] %v698
  %715 = vst [vmem:[%s3 + $0x30] sm:$0xff] %v699
  %716 = vst [vmem:[%s3 + $0x38] sm:$0xff] %v700
  %717 = vst [vmem:[%s3 + $0x40] sm:$0xff] %v701
  %718 = vst [vmem:[%s3 + $0x48] sm:$0xff] %v702
  %719 = vst [vmem:[%s3 + $0x50] sm:$0xff] %v703
  %720 = vst [vmem:[%s3 + $0x58] sm:$0xff] %v704
  %721 = vst [vmem:[%s3 + $0x60] sm:$0xff] %v705
  %722 = vst [vmem:[%s3 + $0x68] sm:$0xff] %v706
  %723 = vst [vmem:[%s3 + $0x70] sm:$0xff] %v707
  %724 = vst [vmem:[%s3 + $0x78] sm:$0xff] %v708
  // Predicated region
  $region18: #{linear_then_conv_forward.10} parent=0 // pred_check
    %p725 = pneg %p15
  $region19: #{linear_then_conv_forward.10} parent=0 // pred_check_branch
    %727 = sbr.rel (%p725) target = $region21
  $region20: #{linear_then_conv_forward.10} parent=0 // pred_region
    %v728 = vld [vmem:[%s3] sm:$0xff]
    %v729 = vld [vmem:[%s3 + $0x8] sm:$0xff]
    %v730 = vld [vmem:[%s3 + $0x10] sm:$0xff]
    %v731 = vld [vmem:[%s3 + $0x18] sm:$0xff]
    %v732 = vld [vmem:[%s3 + $0x20] sm:$0xff]
    %v733 = vld [vmem:[%s3 + $0x28] sm:$0xff]
    %v734 = vld [vmem:[%s3 + $0x30] sm:$0xff]
    %v735 = vld [vmem:[%s3 + $0x38] sm:$0xff]
    %v736 = vld [vmem:[%s3 + $0x40] sm:$0xff]
    %v737 = vld [vmem:[%s3 + $0x48] sm:$0xff]
    %v738 = vld [vmem:[%s3 + $0x50] sm:$0xff]
    %v739 = vld [vmem:[%s3 + $0x58] sm:$0xff]
    %v740 = vld [vmem:[%s3 + $0x60] sm:$0xff]
    %v741 = vld [vmem:[%s3 + $0x68] sm:$0xff]
    %v742 = vld [vmem:[%s3 + $0x70] sm:$0xff]
    %v743 = vld [vmem:[%s3 + $0x78] sm:$0xff]
    %v744 = vld [vmem:[%s2] sm:$0x1]
    %v746 = vlaneseq
    %v747 = vshrl.u32 %v746, 7
    %v748 = vsub.s32 0, %v747
    %v749 = vrot.slane %v744, %v748
    %v751 = vadd.f32 %v728, %v749
    %v752 = vadd.f32 %v729, %v749
    %v753 = vadd.f32 %v730, %v749
    %v754 = vadd.f32 %v731, %v749
    %v755 = vadd.f32 %v732, %v749
    %v756 = vadd.f32 %v733, %v749
    %v757 = vadd.f32 %v734, %v749
    %v758 = vadd.f32 %v735, %v749
    %v759 = vadd.f32 %v736, %v749
    %v760 = vadd.f32 %v737, %v749
    %v761 = vadd.f32 %v738, %v749
    %v762 = vadd.f32 %v739, %v749
    %v763 = vadd.f32 %v740, %v749
    %v764 = vadd.f32 %v741, %v749
    %v765 = vadd.f32 %v742, %v749
    %v766 = vadd.f32 %v743, %v749
    %v767 = vmax.f32 %v751, 0.0
    %v768 = vmax.f32 %v752, 0.0
    %v769 = vmax.f32 %v753, 0.0
    %v770 = vmax.f32 %v754, 0.0
    %v771 = vmax.f32 %v755, 0.0
    %v772 = vmax.f32 %v756, 0.0
    %v773 = vmax.f32 %v757, 0.0
    %v774 = vmax.f32 %v758, 0.0
    %v775 = vmax.f32 %v759, 0.0
    %v776 = vmax.f32 %v760, 0.0
    %v777 = vmax.f32 %v761, 0.0
    %v778 = vmax.f32 %v762, 0.0
    %v779 = vmax.f32 %v763, 0.0
    %v780 = vmax.f32 %v764, 0.0
    %v781 = vmax.f32 %v765, 0.0
    %v782 = vmax.f32 %v766, 0.0
    %783 = vst [vmem:[%s3] sm:$0xff] %v767
    %784 = vst [vmem:[%s3 + $0x8] sm:$0xff] %v768
    %785 = vst [vmem:[%s3 + $0x10] sm:$0xff] %v769
    %786 = vst [vmem:[%s3 + $0x18] sm:$0xff] %v770
    %787 = vst [vmem:[%s3 + $0x20] sm:$0xff] %v771
    %788 = vst [vmem:[%s3 + $0x28] sm:$0xff] %v772
    %789 = vst [vmem:[%s3 + $0x30] sm:$0xff] %v773
    %790 = vst [vmem:[%s3 + $0x38] sm:$0xff] %v774
    %791 = vst [vmem:[%s3 + $0x40] sm:$0xff] %v775
    %792 = vst [vmem:[%s3 + $0x48] sm:$0xff] %v776
    %793 = vst [vmem:[%s3 + $0x50] sm:$0xff] %v777
    %794 = vst [vmem:[%s3 + $0x58] sm:$0xff] %v778
    %795 = vst [vmem:[%s3 + $0x60] sm:$0xff] %v779
    %796 = vst [vmem:[%s3 + $0x68] sm:$0xff] %v780
    %797 = vst [vmem:[%s3 + $0x70] sm:$0xff] %v781
    %798 = vst [vmem:[%s3 + $0x78] sm:$0xff] %v782
  $region21: #{linear_then_conv_forward.10} parent=0 // pred_fallthru
    _
  // Predicated region
  $region22: #{linear_then_conv_forward.10} parent=0 // pred_check
    _
  $region23: #{linear_then_conv_forward.10} parent=0 // pred_check_branch
    %800 = sbr.rel (0) target = $region25
  $region24: #{linear_then_conv_forward.10} parent=0 // pred_region
    _
  $region25: #{linear_then_conv_forward.10} parent=0 // pred_fallthru
    _
  // Predicated region
  $region26: #{linear_then_conv_forward.10} parent=0 // pred_check
    _
  $region27: #{linear_then_conv_forward.10} parent=0 // pred_check_branch
    %802 = sbr.rel (0) target = $region29
  $region28: #{linear_then_conv_forward.10} parent=0 // pred_region
    _
  $region29: #{linear_then_conv_forward.10} parent=0 // pred_fallthru
    _

// kernel: linear_then_conv_forward.11
$region0: #{linear_then_conv_forward.11}
  #allocation0 [shape = 'u32[]', space=smem, size = 0x4, offset = 0x4, fixed_abs, tag = 'smem constant byte address 0x4 - core index']
  #allocation1 [shape = 'u32[144,128]{1,0:T(1,128)}', space=vmem, size = 0x12000, scoped, tag = 'internal scratch']
  %s0 = inlined_call_operand.vmem [shape: f32[8,2,4,2,50], index: 0, kind: input, shape index: {}]
  %s1 = inlined_call_operand.vmem [shape: f32[8,4,50], index: 1, kind: output, shape index: {}]
  %s2 = sld [smem:[#allocation0]]
  $region14: #{linear_then_conv_forward.11} parent=0
    _
  %s4 = ssub.s32 1, %s2
  %s5 = scalar_select 0, %s4, %s2
  // Predicated region
  $region2: #{linear_then_conv_forward.11} parent=0 // pred_check
    _
  $region3: #{linear_then_conv_forward.11} parent=0 // pred_check_branch
    %7 = sbr.rel (0) target = $region5
  $region4: #{linear_then_conv_forward.11} parent=0 // pred_region
    _
  $region5: #{linear_then_conv_forward.11} parent=0 // pred_fallthru
    _
  %v8 = vld [vmem:[%s0] sm:$0x3]
  %v9 = vld [vmem:[%s0 + $0x2] sm:$0x3]
  %v10 = vld [vmem:[%s0 + $0x4] sm:$0x3]
  %v11 = vld [vmem:[%s0 + $0x6] sm:$0x3]
  %v12 = vld [vmem:[%s0 + $0x8] sm:$0x3]
  %v13 = vld [vmem:[%s0 + $0xa] sm:$0x3]
  %v14 = vld [vmem:[%s0 + $0xc] sm:$0x3]
  %v15 = vld [vmem:[%s0 + $0xe] sm:$0x3]
  %v16 = vld [vmem:[%s0 + $0x10] sm:$0x3]
  %v17 = vld [vmem:[%s0 + $0x12] sm:$0x3]
  %v18 = vld [vmem:[%s0 + $0x14] sm:$0x3]
  %v19 = vld [vmem:[%s0 + $0x16] sm:$0x3]
  %v20 = vld [vmem:[%s0 + $0x18] sm:$0x3]
  %v21 = vld [vmem:[%s0 + $0x1a] sm:$0x3]
  %v22 = vld [vmem:[%s0 + $0x1c] sm:$0x3]
  %v23 = vld [vmem:[%s0 + $0x1e] sm:$0x3]
  %v24 = vld [vmem:[%s0 + $0x20] sm:$0x3]
  %v25 = vld [vmem:[%s0 + $0x22] sm:$0x3]
  %v26 = vld [vmem:[%s0 + $0x24] sm:$0x3]
  %v27 = vld [vmem:[%s0 + $0x26] sm:$0x3]
  %v28 = vld [vmem:[%s0 + $0x28] sm:$0x3]
  %v29 = vld [vmem:[%s0 + $0x2a] sm:$0x3]
  %v30 = vld [vmem:[%s0 + $0x2c] sm:$0x3]
  %v31 = vld [vmem:[%s0 + $0x2e] sm:$0x3]
  %v32 = vld [vmem:[%s0 + $0x30] sm:$0x3]
  %v33 = vld [vmem:[%s0 + $0x32] sm:$0x3]
  %v34 = vld [vmem:[%s0 + $0x34] sm:$0x3]
  %v35 = vld [vmem:[%s0 + $0x36] sm:$0x3]
  %v36 = vld [vmem:[%s0 + $0x38] sm:$0x3]
  %v37 = vld [vmem:[%s0 + $0x3a] sm:$0x3]
  %v38 = vld [vmem:[%s0 + $0x3c] sm:$0x3]
  %v39 = vld [vmem:[%s0 + $0x3e] sm:$0x3]
  %v40 = vld [vmem:[%s0 + $0x40] sm:$0x3]
  %v41 = vld [vmem:[%s0 + $0x42] sm:$0x3]
  %v42 = vld [vmem:[%s0 + $0x44] sm:$0x3]
  %v43 = vld [vmem:[%s0 + $0x46] sm:$0x3]
  %v44 = vld [vmem:[%s0 + $0x48] sm:$0x3]
  %v45 = vld [vmem:[%s0 + $0x4a] sm:$0x3]
  %v46 = vld [vmem:[%s0 + $0x4c] sm:$0x3]
  %v47 = vld [vmem:[%s0 + $0x4e] sm:$0x3]
  %v48 = vld [vmem:[%s0 + $0x50] sm:$0x3]
  %v49 = vld [vmem:[%s0 + $0x52] sm:$0x3]
  %v50 = vld [vmem:[%s0 + $0x54] sm:$0x3]
  %v51 = vld [vmem:[%s0 + $0x56] sm:$0x3]
  %v52 = vld [vmem:[%s0 + $0x58] sm:$0x3]
  %v53 = vld [vmem:[%s0 + $0x5a] sm:$0x3]
  %v54 = vld [vmem:[%s0 + $0x5c] sm:$0x3]
  %v55 = vld [vmem:[%s0 + $0x5e] sm:$0x3]
  %v56 = vld [vmem:[%s0 + $0x60] sm:$0x3]
  %v57 = vld [vmem:[%s0 + $0x62] sm:$0x3]
  %v58 = vld [vmem:[%s0 + $0x64] sm:$0x3]
  %v59 = vld [vmem:[%s0 + $0x66] sm:$0x3]
  %v60 = vld [vmem:[%s0 + $0x68] sm:$0x3]
  %v61 = vld [vmem:[%s0 + $0x6a] sm:$0x3]
  %v62 = vld [vmem:[%s0 + $0x6c] sm:$0x3]
  %v63 = vld [vmem:[%s0 + $0x6e] sm:$0x3]
  %v64 = vld [vmem:[%s0 + $0x70] sm:$0x3]
  %v65 = vld [vmem:[%s0 + $0x72] sm:$0x3]
  %v66 = vld [vmem:[%s0 + $0x74] sm:$0x3]
  %v67 = vld [vmem:[%s0 + $0x76] sm:$0x3]
  %v68 = vld [vmem:[%s0 + $0x78] sm:$0x3]
  %v69 = vld [vmem:[%s0 + $0x7a] sm:$0x3]
  %v70 = vld [vmem:[%s0 + $0x7c] sm:$0x3]
  %v71 = vld [vmem:[%s0 + $0x7e] sm:$0x3]
  %vm72 = vcmask 402432
  %v73 = vsel %vm72, %v8, -inf
  %v74 = vsel %vm72, %v12, -inf
  %v75 = vmax.f32 %v73, %v74
  %v76 = vsel %vm72, %v9, -inf
  %v77 = vsel %vm72, %v13, -inf
  %v78 = vmax.f32 %v76, %v77
  %v79 = vsel %vm72, %v10, -inf
  %v80 = vsel %vm72, %v14, -inf
  %v81 = vmax.f32 %v79, %v80
  %v82 = vsel %vm72, %v11, -inf
  %v83 = vsel %vm72, %v15, -inf
  %v84 = vmax.f32 %v82, %v83
  %v85 = vsel %vm72, %v16, -inf
  %v86 = vsel %vm72, %v20, -inf
  %v87 = vmax.f32 %v85, %v86
  %v88 = vsel %vm72, %v17, -inf
  %v89 = vsel %vm72, %v21, -inf
  %v90 = vmax.f32 %v88, %v89
  %v91 = vsel %vm72, %v18, -inf
  %v92 = vsel %vm72, %v22, -inf
  %v93 = vmax.f32 %v91, %v92
  %v94 = vsel %vm72, %v19, -inf
  %v95 = vsel %vm72, %v23, -inf
  %v96 = vmax.f32 %v94, %v95
  %v97 = vsel %vm72, %v24, -inf
  %v98 = vsel %vm72, %v28, -inf
  %v99 = vmax.f32 %v97, %v98
  %v100 = vsel %vm72, %v25, -inf
  %v101 = vsel %vm72, %v29, -inf
  %v102 = vmax.f32 %v100, %v101
  %v103 = vsel %vm72, %v26, -inf
  %v104 = vsel %vm72, %v30, -inf
  %v105 = vmax.f32 %v103, %v104
  %v106 = vsel %vm72, %v27, -inf
  %v107 = vsel %vm72, %v31, -inf
  %v108 = vmax.f32 %v106, %v107
  %v109 = vsel %vm72, %v32, -inf
  %v110 = vsel %vm72, %v36, -inf
  %v111 = vmax.f32 %v109, %v110
  %v112 = vsel %vm72, %v33, -inf
  %v113 = vsel %vm72, %v37, -inf
  %v114 = vmax.f32 %v112, %v113
  %v115 = vsel %vm72, %v34, -inf
  %v116 = vsel %vm72, %v38, -inf
  %v117 = vmax.f32 %v115, %v116
  %v118 = vsel %vm72, %v35, -inf
  %v119 = vsel %vm72, %v39, -inf
  %v120 = vmax.f32 %v118, %v119
  %v121 = vsel %vm72, %v40, -inf
  %v122 = vsel %vm72, %v44, -inf
  %v123 = vmax.f32 %v121, %v122
  %v124 = vsel %vm72, %v41, -inf
  %v125 = vsel %vm72, %v45, -inf
  %v126 = vmax.f32 %v124, %v125
  %v127 = vsel %vm72, %v42, -inf
  %v128 = vsel %vm72, %v46, -inf
  %v129 = vmax.f32 %v127, %v128
  %v130 = vsel %vm72, %v43, -inf
  %v131 = vsel %vm72, %v47, -inf
  %v132 = vmax.f32 %v130, %v131
  %v133 = vsel %vm72, %v48, -inf
  %v134 = vsel %vm72, %v52, -inf
  %v135 = vmax.f32 %v133, %v134
  %v136 = vsel %vm72, %v49, -inf
  %v137 = vsel %vm72, %v53, -inf
  %v138 = vmax.f32 %v136, %v137
  %v139 = vsel %vm72, %v50, -inf
  %v140 = vsel %vm72, %v54, -inf
  %v141 = vmax.f32 %v139, %v140
  %v142 = vsel %vm72, %v51, -inf
  %v143 = vsel %vm72, %v55, -inf
  %v144 = vmax.f32 %v142, %v143
  %v145 = vsel %vm72, %v56, -inf
  %v146 = vsel %vm72, %v60, -inf
  %v147 = vmax.f32 %v145, %v146
  %v148 = vsel %vm72, %v57, -inf
  %v149 = vsel %vm72, %v61, -inf
  %v150 = vmax.f32 %v148, %v149
  %v151 = vsel %vm72, %v58, -inf
  %v152 = vsel %vm72, %v62, -inf
  %v153 = vmax.f32 %v151, %v152
  %v154 = vsel %vm72, %v59, -inf
  %v155 = vsel %vm72, %v63, -inf
  %v156 = vmax.f32 %v154, %v155
  %v157 = vsel %vm72, %v64, -inf
  %v158 = vsel %vm72, %v68, -inf
  %v159 = vmax.f32 %v157, %v158
  %v160 = vsel %vm72, %v65, -inf
  %v161 = vsel %vm72, %v69, -inf
  %v162 = vmax.f32 %v160, %v161
  %v163 = vsel %vm72, %v66, -inf
  %v164 = vsel %vm72, %v70, -inf
  %v165 = vmax.f32 %v163, %v164
  %v166 = vsel %vm72, %v67, -inf
  %v167 = vsel %vm72, %v71, -inf
  %v168 = vmax.f32 %v166, %v167
  %v169 = vsel %vm72, %v75, -inf
  %v170 = vrot.slane %v169, 4
  %v171 = vmax.f32 %v169, %v170
  %v172 = vrot.slane %v171, 2
  %v173 = vmax.f32 %v171, %v172
  %v174 = vrot.slane %v173, 1
  %v175 = vmax.f32 %v173, %v174
  %v176 = vsel %vm72, %v78, -inf
  %v177 = vrot.slane %v176, 4
  %v178 = vmax.f32 %v176, %v177
  %v179 = vrot.slane %v178, 2
  %v180 = vmax.f32 %v178, %v179
  %v181 = vrot.slane %v180, 1
  %v182 = vmax.f32 %v180, %v181
  %v183 = vsel %vm72, %v81, -inf
  %v184 = vrot.slane %v183, 4
  %v185 = vmax.f32 %v183, %v184
  %v186 = vrot.slane %v185, 2
  %v187 = vmax.f32 %v185, %v186
  %v188 = vrot.slane %v187, 1
  %v189 = vmax.f32 %v187, %v188
  %v190 = vsel %vm72, %v84, -inf
  %v191 = vrot.slane %v190, 4
  %v192 = vmax.f32 %v190, %v191
  %v193 = vrot.slane %v192, 2
  %v194 = vmax.f32 %v192, %v193
  %v195 = vrot.slane %v194, 1
  %v196 = vmax.f32 %v194, %v195
  %v197 = vsel %vm72, %v87, -inf
  %v198 = vrot.slane %v197, 4
  %v199 = vmax.f32 %v197, %v198
  %v200 = vrot.slane %v199, 2
  %v201 = vmax.f32 %v199, %v200
  %v202 = vrot.slane %v201, 1
  %v203 = vmax.f32 %v201, %v202
  %v204 = vsel %vm72, %v90, -inf
  %v205 = vrot.slane %v204, 4
  %v206 = vmax.f32 %v204, %v205
  %v207 = vrot.slane %v206, 2
  %v208 = vmax.f32 %v206, %v207
  %v209 = vrot.slane %v208, 1
  %v210 = vmax.f32 %v208, %v209
  %v211 = vsel %vm72, %v93, -inf
  %v212 = vrot.slane %v211, 4
  %v213 = vmax.f32 %v211, %v212
  %v214 = vrot.slane %v213, 2
  %v215 = vmax.f32 %v213, %v214
  %v216 = vrot.slane %v215, 1
  %v217 = vmax.f32 %v215, %v216
  %v218 = vsel %vm72, %v96, -inf
  %v219 = vrot.slane %v218, 4
  %v220 = vmax.f32 %v218, %v219
  %v221 = vrot.slane %v220, 2
  %v222 = vmax.f32 %v220, %v221
  %v223 = vrot.slane %v222, 1
  %v224 = vmax.f32 %v222, %v223
  %v225 = vsel %vm72, %v99, -inf
  %v226 = vrot.slane %v225, 4
  %v227 = vmax.f32 %v225, %v226
  %v228 = vrot.slane %v227, 2
  %v229 = vmax.f32 %v227, %v228
  %v230 = vrot.slane %v229, 1
  %v231 = vmax.f32 %v229, %v230
  %v232 = vsel %vm72, %v102, -inf
  %v233 = vrot.slane %v232, 4
  %v234 = vmax.f32 %v232, %v233
  %v235 = vrot.slane %v234, 2
  %v236 = vmax.f32 %v234, %v235
  %v237 = vrot.slane %v236, 1
  %v238 = vmax.f32 %v236, %v237
  %v239 = vsel %vm72, %v105, -inf
  %v240 = vrot.slane %v239, 4
  %v241 = vmax.f32 %v239, %v240
  %v242 = vrot.slane %v241, 2
  %v243 = vmax.f32 %v241, %v242
  %v244 = vrot.slane %v243, 1
  %v245 = vmax.f32 %v243, %v244
  %v246 = vsel %vm72, %v108, -inf
  %v247 = vrot.slane %v246, 4
  %v248 = vmax.f32 %v246, %v247
  %v249 = vrot.slane %v248, 2
  %v250 = vmax.f32 %v248, %v249
  %v251 = vrot.slane %v250, 1
  %v252 = vmax.f32 %v250, %v251
  %v253 = vsel %vm72, %v111, -inf
  %v254 = vrot.slane %v253, 4
  %v255 = vmax.f32 %v253, %v254
  %v256 = vrot.slane %v255, 2
  %v257 = vmax.f32 %v255, %v256
  %v258 = vrot.slane %v257, 1
  %v259 = vmax.f32 %v257, %v258
  %v260 = vsel %vm72, %v114, -inf
  %v261 = vrot.slane %v260, 4
  %v262 = vmax.f32 %v260, %v261
  %v263 = vrot.slane %v262, 2
  %v264 = vmax.f32 %v262, %v263
  %v265 = vrot.slane %v264, 1
  %v266 = vmax.f32 %v264, %v265
  %v267 = vsel %vm72, %v117, -inf
  %v268 = vrot.slane %v267, 4
  %v269 = vmax.f32 %v267, %v268
  %v270 = vrot.slane %v269, 2
  %v271 = vmax.f32 %v269, %v270
  %v272 = vrot.slane %v271, 1
  %v273 = vmax.f32 %v271, %v272
  %v274 = vsel %vm72, %v120, -inf
  %v275 = vrot.slane %v274, 4
  %v276 = vmax.f32 %v274, %v275
  %v277 = vrot.slane %v276, 2
  %v278 = vmax.f32 %v276, %v277
  %v279 = vrot.slane %v278, 1
  %v280 = vmax.f32 %v278, %v279
  %v281 = vsel %vm72, %v123, -inf
  %v282 = vrot.slane %v281, 4
  %v283 = vmax.f32 %v281, %v282
  %v284 = vrot.slane %v283, 2
  %v285 = vmax.f32 %v283, %v284
  %v286 = vrot.slane %v285, 1
  %v287 = vmax.f32 %v285, %v286
  %v288 = vsel %vm72, %v126, -inf
  %v289 = vrot.slane %v288, 4
  %v290 = vmax.f32 %v288, %v289
  %v291 = vrot.slane %v290, 2
  %v292 = vmax.f32 %v290, %v291
  %v293 = vrot.slane %v292, 1
  %v294 = vmax.f32 %v292, %v293
  %v295 = vsel %vm72, %v129, -inf
  %v296 = vrot.slane %v295, 4
  %v297 = vmax.f32 %v295, %v296
  %v298 = vrot.slane %v297, 2
  %v299 = vmax.f32 %v297, %v298
  %v300 = vrot.slane %v299, 1
  %v301 = vmax.f32 %v299, %v300
  %v302 = vsel %vm72, %v132, -inf
  %v303 = vrot.slane %v302, 4
  %v304 = vmax.f32 %v302, %v303
  %v305 = vrot.slane %v304, 2
  %v306 = vmax.f32 %v304, %v305
  %v307 = vrot.slane %v306, 1
  %v308 = vmax.f32 %v306, %v307
  %v309 = vsel %vm72, %v135, -inf
  %v310 = vrot.slane %v309, 4
  %v311 = vmax.f32 %v309, %v310
  %v312 = vrot.slane %v311, 2
  %v313 = vmax.f32 %v311, %v312
  %v314 = vrot.slane %v313, 1
  %v315 = vmax.f32 %v313, %v314
  %v316 = vsel %vm72, %v138, -inf
  %v317 = vrot.slane %v316, 4
  %v318 = vmax.f32 %v316, %v317
  %v319 = vrot.slane %v318, 2
  %v320 = vmax.f32 %v318, %v319
  %v321 = vrot.slane %v320, 1
  %v322 = vmax.f32 %v320, %v321
  %v323 = vsel %vm72, %v141, -inf
  %v324 = vrot.slane %v323, 4
  %v325 = vmax.f32 %v323, %v324
  %v326 = vrot.slane %v325, 2
  %v327 = vmax.f32 %v325, %v326
  %v328 = vrot.slane %v327, 1
  %v329 = vmax.f32 %v327, %v328
  %v330 = vsel %vm72, %v144, -inf
  %v331 = vrot.slane %v330, 4
  %v332 = vmax.f32 %v330, %v331
  %v333 = vrot.slane %v332, 2
  %v334 = vmax.f32 %v332, %v333
  %v335 = vrot.slane %v334, 1
  %v336 = vmax.f32 %v334, %v335
  %v337 = vsel %vm72, %v147, -inf
  %v338 = vrot.slane %v337, 4
  %v339 = vmax.f32 %v337, %v338
  %v340 = vrot.slane %v339, 2
  %v341 = vmax.f32 %v339, %v340
  %v342 = vrot.slane %v341, 1
  %v343 = vmax.f32 %v341, %v342
  %v344 = vsel %vm72, %v150, -inf
  %v345 = vrot.slane %v344, 4
  %v346 = vmax.f32 %v344, %v345
  %v347 = vrot.slane %v346, 2
  %v348 = vmax.f32 %v346, %v347
  %v349 = vrot.slane %v348, 1
  %v350 = vmax.f32 %v348, %v349
  %v351 = vsel %vm72, %v153, -inf
  %v352 = vrot.slane %v351, 4
  %v353 = vmax.f32 %v351, %v352
  %v354 = vrot.slane %v353, 2
  %v355 = vmax.f32 %v353, %v354
  %v356 = vrot.slane %v355, 1
  %v357 = vmax.f32 %v355, %v356
  %v358 = vsel %vm72, %v156, -inf
  %v359 = vrot.slane %v358, 4
  %v360 = vmax.f32 %v358, %v359
  %v361 = vrot.slane %v360, 2
  %v362 = vmax.f32 %v360, %v361
  %v363 = vrot.slane %v362, 1
  %v364 = vmax.f32 %v362, %v363
  %v365 = vsel %vm72, %v159, -inf
  %v366 = vrot.slane %v365, 4
  %v367 = vmax.f32 %v365, %v366
  %v368 = vrot.slane %v367, 2
  %v369 = vmax.f32 %v367, %v368
  %v370 = vrot.slane %v369, 1
  %v371 = vmax.f32 %v369, %v370
  %v372 = vsel %vm72, %v162, -inf
  %v373 = vrot.slane %v372, 4
  %v374 = vmax.f32 %v372, %v373
  %v375 = vrot.slane %v374, 2
  %v376 = vmax.f32 %v374, %v375
  %v377 = vrot.slane %v376, 1
  %v378 = vmax.f32 %v376, %v377
  %v379 = vsel %vm72, %v165, -inf
  %v380 = vrot.slane %v379, 4
  %v381 = vmax.f32 %v379, %v380
  %v382 = vrot.slane %v381, 2
  %v383 = vmax.f32 %v381, %v382
  %v384 = vrot.slane %v383, 1
  %v385 = vmax.f32 %v383, %v384
  %v386 = vsel %vm72, %v168, -inf
  %v387 = vrot.slane %v386, 4
  %v388 = vmax.f32 %v386, %v387
  %v389 = vrot.slane %v388, 2
  %v390 = vmax.f32 %v388, %v389
  %v391 = vrot.slane %v390, 1
  %v392 = vmax.f32 %v390, %v391
  %vm425 = vcmask 1041409
  %v426 = vsel %vm425, %v182, %v175
  %vm427 = vcmask 1042434
  %v428 = vsel %vm427, %v189, %v426
  %vm429 = vcmask 1043459
  %v430 = vsel %vm429, %v196, %v428
  %v431 = vsel %vm425, %v210, %v203
  %v432 = vsel %vm427, %v217, %v431
  %v433 = vsel %vm429, %v224, %v432
  %v434 = vsel %vm425, %v238, %v231
  %v435 = vsel %vm427, %v245, %v434
  %v436 = vsel %vm429, %v252, %v435
  %v437 = vsel %vm425, %v266, %v259
  %v438 = vsel %vm427, %v273, %v437
  %v439 = vsel %vm429, %v280, %v438
  %v440 = vsel %vm425, %v294, %v287
  %v441 = vsel %vm427, %v301, %v440
  %v442 = vsel %vm429, %v308, %v441
  %v443 = vsel %vm425, %v322, %v315
  %v444 = vsel %vm427, %v329, %v443
  %v445 = vsel %vm429, %v336, %v444
  %v446 = vsel %vm425, %v350, %v343
  %v447 = vsel %vm427, %v357, %v446
  %v448 = vsel %vm429, %v364, %v447
  %v449 = vsel %vm425, %v378, %v371
  %v450 = vsel %vm427, %v385, %v449
  %v451 = vsel %vm429, %v392, %v450
  %vm460 = vcmask 404480
  %461 = vst.msk [vmem:[%s1] sm:$0xf] %vm460, %v430
  %462 = vst.msk [vmem:[%s1 + $0x4] sm:$0xf] %vm460, %v433
  %463 = vst.msk [vmem:[%s1 + $0x8] sm:$0xf] %vm460, %v436
  %464 = vst.msk [vmem:[%s1 + $0xc] sm:$0xf] %vm460, %v439
  %465 = vst.msk [vmem:[%s1 + $0x10] sm:$0xf] %vm460, %v442
  %466 = vst.msk [vmem:[%s1 + $0x14] sm:$0xf] %vm460, %v445
  %467 = vst.msk [vmem:[%s1 + $0x18] sm:$0xf] %vm460, %v448
  %468 = vst.msk [vmem:[%s1 + $0x1c] sm:$0xf] %vm460, %v451
  // Predicated region
  $region6: #{linear_then_conv_forward.11} parent=0 // pred_check
    _
  $region7: #{linear_then_conv_forward.11} parent=0 // pred_check_branch
    %470 = sbr.rel (0) target = $region9
  $region8: #{linear_then_conv_forward.11} parent=0 // pred_region
    _
  $region9: #{linear_then_conv_forward.11} parent=0 // pred_fallthru
    _
  // Predicated region
  $region10: #{linear_then_conv_forward.11} parent=0 // pred_check
    _
  $region11: #{linear_then_conv_forward.11} parent=0 // pred_check_branch
    %472 = sbr.rel (0) target = $region13
  $region12: #{linear_then_conv_forward.11} parent=0 // pred_region
    _
  $region13: #{linear_then_conv_forward.11} parent=0 // pred_fallthru
    _

// kernel: linear_then_conv_forward.12
$region0: #{linear_then_conv_forward.12}
  #allocation0 [shape = 'u32[]', space=smem, size = 0x4, offset = 0x4, fixed_abs, tag = 'smem constant byte address 0x4 - core index']
  #allocation1 [shape = 'u32[144,128]{1,0:T(1,128)}', space=vmem, size = 0x12000, scoped, tag = 'internal scratch']
  %s0 = inlined_call_operand.vmem [shape: bf16[8,896], index: 0, kind: input, shape index: {}]
  %s1 = inlined_call_operand.vmem [shape: bf16[896,512], index: 1, kind: input, shape index: {}]
  %s2 = inlined_call_operand.vmem [shape: f32[1,512], index: 2, kind: input, shape index: {}]
  %s3 = inlined_call_operand.vmem [shape: f32[8,512], index: 3, kind: output, shape index: {}]
  %s4 = sld [smem:[#allocation0]]
  $region30: #{linear_then_conv_forward.12} parent=0
    _
  %s6 = ssub.s32 1, %s4
  %s7 = scalar_select 0, %s6, %s4
  // Predicated region
  $region2: #{linear_then_conv_forward.12} parent=0 // pred_check
    _
  $region3: #{linear_then_conv_forward.12} parent=0 // pred_check_branch
    %9 = sbr.rel (0) target = $region5
  $region4: #{linear_then_conv_forward.12} parent=0 // pred_region
    _
  $region5: #{linear_then_conv_forward.12} parent=0 // pred_fallthru
    _
  // Predicated region
  $region6: #{linear_then_conv_forward.12} parent=0 // pred_check
    _
  $region7: #{linear_then_conv_forward.12} parent=0 // pred_check_branch
    %11 = sbr.rel (0) target = $region9
  $region8: #{linear_then_conv_forward.12} parent=0 // pred_region
    _
  $region9: #{linear_then_conv_forward.12} parent=0 // pred_fallthru
    _
  // Predicated region
  $region10: #{linear_then_conv_forward.12} parent=0 // pred_check
    _
  $region11: #{linear_then_conv_forward.12} parent=0 // pred_check_branch
    %13 = sbr.rel (0) target = $region13
  $region12: #{linear_then_conv_forward.12} parent=0 // pred_region
    _
  $region13: #{linear_then_conv_forward.12} parent=0 // pred_fallthru
    _
  %p15 = scmp.eq.s32.totalorder 0, 0
  // Predicated region
  $region14: #{linear_then_conv_forward.12} parent=0 // pred_check
    %p16 = pneg %p15
  $region15: #{linear_then_conv_forward.12} parent=0 // pred_check_branch
    %18 = sbr.rel (%p16) target = $region17
  $region16: #{linear_then_conv_forward.12} parent=0 // pred_region
    %19 = vst [vmem:[%s3] sm:$0xff] 0.0
    %20 = vst [vmem:[%s3 + $0x8] sm:$0xff] 0.0
    %21 = vst [vmem:[%s3 + $0x10] sm:$0xff] 0.0
    %22 = vst [vmem:[%s3 + $0x18] sm:$0xff] 0.0
  $region17: #{linear_then_conv_forward.12} parent=0 // pred_fallthru
    _
  %v23 = vld [vmem:[%s3] sm:$0xff]
  %v24 = vld [vmem:[%s3 + $0x8] sm:$0xff]
  %v25 = vld [vmem:[%s3 + $0x10] sm:$0xff]
  %v26 = vld [vmem:[%s3 + $0x18] sm:$0xff]
  %v27 = vld [vmem:[%s0] sm:$0xff]
  %v28 = vld [vmem:[%s0 + $0x8] sm:$0xff]
  %v29 = vld [vmem:[%s0 + $0x10] sm:$0xff]
  %v30 = vld [vmem:[%s0 + $0x18] sm:$0xf]
  %v31 = vld [vmem:[%s1] sm:$0xff]
  %v32 = vld [vmem:[%s1 + $0x8] sm:$0xff]
  %v33 = vld [vmem:[%s1 + $0x10] sm:$0xff]
  %v34 = vld [vmem:[%s1 + $0x18] sm:$0xff]
  %v35 = vld [vmem:[%s1 + $0x20] sm:$0xff]
  %v36 = vld [vmem:[%s1 + $0x28] sm:$0xff]
  %v37 = vld [vmem:[%s1 + $0x30] sm:$0xff]
  %v38 = vld [vmem:[%s1 + $0x38] sm:$0xff]
  %v39 = vld [vmem:[%s1 + $0x40] sm:$0xff]
  %v40 = vld [vmem:[%s1 + $0x48] sm:$0xff]
  %v41 = vld [vmem:[%s1 + $0x50] sm:$0xff]
  %v42 = vld [vmem:[%s1 + $0x58] sm:$0xff]
  %v43 = vld [vmem:[%s1 + $0x60] sm:$0xff]
  %v44 = vld [vmem:[%s1 + $0x68] sm:$0xff]
  %v45 = vld [vmem:[%s1 + $0x70] sm:$0xff]
  %v46 = vld [vmem:[%s1 + $0x78] sm:$0xff]
  %v47 = vld [vmem:[%s1 + $0x80] sm:$0xff]
  %v48 = vld [vmem:[%s1 + $0x88] sm:$0xff]
  %v49 = vld [vmem:[%s1 + $0x90] sm:$0xff]
  %v50 = vld [vmem:[%s1 + $0x98] sm:$0xff]
  %v51 = vld [vmem:[%s1 + $0xa0] sm:$0xff]
  %v52 = vld [vmem:[%s1 + $0xa8] sm:$0xff]
  %v53 = vld [vmem:[%s1 + $0xb0] sm:$0xff]
  %v54 = vld [vmem:[%s1 + $0xb8] sm:$0xff]
  %v55 = vld [vmem:[%s1 + $0xc0] sm:$0xff]
  %v56 = vld [vmem:[%s1 + $0xc8] sm:$0xff]
  %v57 = vld [vmem:[%s1 + $0xd0] sm:$0xff]
  %v58 = vld [vmem:[%s1 + $0xd8] sm:$0xff]
  %v59 = vld [vmem:[%s1 + $0xe0] sm:$0xff]
  %v60 = vld [vmem:[%s1 + $0xe8] sm:$0xff]
  %v61 = vld [vmem:[%s1 + $0xf0] sm:$0xff]
  %v62 = vld [vmem:[%s1 + $0xf8] sm:$0xff]
  %v63 = vld [vmem:[%s1 + $0x100] sm:$0xff]
  %v64 = vld [vmem:[%s1 + $0x108] sm:$0xff]
  %v65 = vld [vmem:[%s1 + $0x110] sm:$0xff]
  %v66 = vld [vmem:[%s1 + $0x118] sm:$0xff]
  %v67 = vld [vmem:[%s1 + $0x120] sm:$0xff]
  %v68 = vld [vmem:[%s1 + $0x128] sm:$0xff]
  %v69 = vld [vmem:[%s1 + $0x130] sm:$0xff]
  %v70 = vld [vmem:[%s1 + $0x138] sm:$0xff]
  %v71 = vld [vmem:[%s1 + $0x140] sm:$0xff]
  %v72 = vld [vmem:[%s1 + $0x148] sm:$0xff]
  %v73 = vld [vmem:[%s1 + $0x150] sm:$0xff]
  %v74 = vld [vmem:[%s1 + $0x158] sm:$0xff]
  %v75 = vld [vmem:[%s1 + $0x160] sm:$0xff]
  %v76 = vld [vmem:[%s1 + $0x168] sm:$0xff]
  %v77 = vld [vmem:[%s1 + $0x170] sm:$0xff]
  %v78 = vld [vmem:[%s1 + $0x178] sm:$0xff]
  %v79 = vld [vmem:[%s1 + $0x180] sm:$0xff]
  %v80 = vld [vmem:[%s1 + $0x188] sm:$0xff]
  %v81 = vld [vmem:[%s1 + $0x190] sm:$0xff]
  %v82 = vld [vmem:[%s1 + $0x198] sm:$0xff]
  %v83 = vld [vmem:[%s1 + $0x1a0] sm:$0xff]
  %v84 = vld [vmem:[%s1 + $0x1a8] sm:$0xff]
  %v85 = vld [vmem:[%s1 + $0x1b0] sm:$0xff]
  %v86 = vld [vmem:[%s1 + $0x1b8] sm:$0xff]
  %v87 = vld [vmem:[%s1 + $0x1c0] sm:$0xff]
  %v88 = vld [vmem:[%s1 + $0x1c8] sm:$0xff]
  %v89 = vld [vmem:[%s1 + $0x1d0] sm:$0xff]
  %v90 = vld [vmem:[%s1 + $0x1d8] sm:$0xff]
  %v91 = vld [vmem:[%s1 + $0x1e0] sm:$0xff]
  %v92 = vld [vmem:[%s1 + $0x1e8] sm:$0xff]
  %v93 = vld [vmem:[%s1 + $0x1f0] sm:$0xff]
  %v94 = vld [vmem:[%s1 + $0x1f8] sm:$0xff]
  %v95 = vld [vmem:[%s1 + $0x200] sm:$0xff]
  %v96 = vld [vmem:[%s1 + $0x208] sm:$0xff]
  %v97 = vld [vmem:[%s1 + $0x210] sm:$0xff]
  %v98 = vld [vmem:[%s1 + $0x218] sm:$0xff]
  %v99 = vld [vmem:[%s1 + $0x220] sm:$0xff]
  %v100 = vld [vmem:[%s1 + $0x228] sm:$0xff]
  %v101 = vld [vmem:[%s1 + $0x230] sm:$0xff]
  %v102 = vld [vmem:[%s1 + $0x238] sm:$0xff]
  %v103 = vld [vmem:[%s1 + $0x240] sm:$0xff]
  %v104 = vld [vmem:[%s1 + $0x248] sm:$0xff]
  %v105 = vld [vmem:[%s1 + $0x250] sm:$0xff]
  %v106 = vld [vmem:[%s1 + $0x258] sm:$0xff]
  %v107 = vld [vmem:[%s1 + $0x260] sm:$0xff]
  %v108 = vld [vmem:[%s1 + $0x268] sm:$0xff]
  %v109 = vld [vmem:[%s1 + $0x270] sm:$0xff]
  %v110 = vld [vmem:[%s1 + $0x278] sm:$0xff]
  %v111 = vld [vmem:[%s1 + $0x280] sm:$0xff]
  %v112 = vld [vmem:[%s1 + $0x288] sm:$0xff]
  %v113 = vld [vmem:[%s1 + $0x290] sm:$0xff]
  %v114 = vld [vmem:[%s1 + $0x298] sm:$0xff]
  %v115 = vld [vmem:[%s1 + $0x2a0] sm:$0xff]
  %v116 = vld [vmem:[%s1 + $0x2a8] sm:$0xff]
  %v117 = vld [vmem:[%s1 + $0x2b0] sm:$0xff]
  %v118 = vld [vmem:[%s1 + $0x2b8] sm:$0xff]
  %v119 = vld [vmem:[%s1 + $0x2c0] sm:$0xff]
  %v120 = vld [vmem:[%s1 + $0x2c8] sm:$0xff]
  %v121 = vld [vmem:[%s1 + $0x2d0] sm:$0xff]
  %v122 = vld [vmem:[%s1 + $0x2d8] sm:$0xff]
  %v123 = vld [vmem:[%s1 + $0x2e0] sm:$0xff]
  %v124 = vld [vmem:[%s1 + $0x2e8] sm:$0xff]
  %v125 = vld [vmem:[%s1 + $0x2f0] sm:$0xff]
  %v126 = vld [vmem:[%s1 + $0x2f8] sm:$0xff]
  %v127 = vld [vmem:[%s1 + $0x300] sm:$0xff]
  %v128 = vld [vmem:[%s1 + $0x308] sm:$0xff]
  %v129 = vld [vmem:[%s1 + $0x310] sm:$0xff]
  %v130 = vld [vmem:[%s1 + $0x318] sm:$0xff]
  %v131 = vld [vmem:[%s1 + $0x320] sm:$0xff]
  %v132 = vld [vmem:[%s1 + $0x328] sm:$0xff]
  %v133 = vld [vmem:[%s1 + $0x330] sm:$0xff]
  %v134 = vld [vmem:[%s1 + $0x338] sm:$0xff]
  %v135 = vld [vmem:[%s1 + $0x340] sm:$0xff]
  %v136 = vld [vmem:[%s1 + $0x348] sm:$0xff]
  %v137 = vld [vmem:[%s1 + $0x350] sm:$0xff]
  %v138 = vld [vmem:[%s1 + $0x358] sm:$0xff]
  %v139 = vld [vmem:[%s1 + $0x360] sm:$0xff]
  %v140 = vld [vmem:[%s1 + $0x368] sm:$0xff]
  %v141 = vld [vmem:[%s1 + $0x370] sm:$0xff]
  %v142 = vld [vmem:[%s1 + $0x378] sm:$0xff]
  %v143 = vld [vmem:[%s1 + $0x380] sm:$0xff]
  %v144 = vld [vmem:[%s1 + $0x388] sm:$0xff]
  %v145 = vld [vmem:[%s1 + $0x390] sm:$0xff]
  %v146 = vld [vmem:[%s1 + $0x398] sm:$0xff]
  %v147 = vld [vmem:[%s1 + $0x3a0] sm:$0xff]
  %v148 = vld [vmem:[%s1 + $0x3a8] sm:$0xff]
  %v149 = vld [vmem:[%s1 + $0x3b0] sm:$0xff]
  %v150 = vld [vmem:[%s1 + $0x3b8] sm:$0xff]
  %v151 = vld [vmem:[%s1 + $0x3c0] sm:$0xff]
  %v152 = vld [vmem:[%s1 + $0x3c8] sm:$0xff]
  %v153 = vld [vmem:[%s1 + $0x3d0] sm:$0xff]
  %v154 = vld [vmem:[%s1 + $0x3d8] sm:$0xff]
  %v155 = vld [vmem:[%s1 + $0x3e0] sm:$0xff]
  %v156 = vld [vmem:[%s1 + $0x3e8] sm:$0xff]
  %v157 = vld [vmem:[%s1 + $0x3f0] sm:$0xff]
  %v158 = vld [vmem:[%s1 + $0x3f8] sm:$0xff]
  %v159 = vld [vmem:[%s1 + $0x400] sm:$0xff]
  %v160 = vld [vmem:[%s1 + $0x408] sm:$0xff]
  %v161 = vld [vmem:[%s1 + $0x410] sm:$0xff]
  %v162 = vld [vmem:[%s1 + $0x418] sm:$0xff]
  %v163 = vld [vmem:[%s1 + $0x420] sm:$0xff]
  %v164 = vld [vmem:[%s1 + $0x428] sm:$0xff]
  %v165 = vld [vmem:[%s1 + $0x430] sm:$0xff]
  %v166 = vld [vmem:[%s1 + $0x438] sm:$0xff]
  %v167 = vld [vmem:[%s1 + $0x440] sm:$0xff]
  %v168 = vld [vmem:[%s1 + $0x448] sm:$0xff]
  %v169 = vld [vmem:[%s1 + $0x450] sm:$0xff]
  %v170 = vld [vmem:[%s1 + $0x458] sm:$0xff]
  %v171 = vld [vmem:[%s1 + $0x460] sm:$0xff]
  %v172 = vld [vmem:[%s1 + $0x468] sm:$0xff]
  %v173 = vld [vmem:[%s1 + $0x470] sm:$0xff]
  %v174 = vld [vmem:[%s1 + $0x478] sm:$0xff]
  %v175 = vld [vmem:[%s1 + $0x480] sm:$0xff]
  %v176 = vld [vmem:[%s1 + $0x488] sm:$0xff]
  %v177 = vld [vmem:[%s1 + $0x490] sm:$0xff]
  %v178 = vld [vmem:[%s1 + $0x498] sm:$0xff]
  %v179 = vld [vmem:[%s1 + $0x4a0] sm:$0xff]
  %v180 = vld [vmem:[%s1 + $0x4a8] sm:$0xff]
  %v181 = vld [vmem:[%s1 + $0x4b0] sm:$0xff]
  %v182 = vld [vmem:[%s1 + $0x4b8] sm:$0xff]
  %v183 = vld [vmem:[%s1 + $0x4c0] sm:$0xff]
  %v184 = vld [vmem:[%s1 + $0x4c8] sm:$0xff]
  %v185 = vld [vmem:[%s1 + $0x4d0] sm:$0xff]
  %v186 = vld [vmem:[%s1 + $0x4d8] sm:$0xff]
  %v187 = vld [vmem:[%s1 + $0x4e0] sm:$0xff]
  %v188 = vld [vmem:[%s1 + $0x4e8] sm:$0xff]
  %v189 = vld [vmem:[%s1 + $0x4f0] sm:$0xff]
  %v190 = vld [vmem:[%s1 + $0x4f8] sm:$0xff]
  %v191 = vld [vmem:[%s1 + $0x500] sm:$0xff]
  %v192 = vld [vmem:[%s1 + $0x508] sm:$0xff]
  %v193 = vld [vmem:[%s1 + $0x510] sm:$0xff]
  %v194 = vld [vmem:[%s1 + $0x518] sm:$0xff]
  %v195 = vld [vmem:[%s1 + $0x520] sm:$0xff]
  %v196 = vld [vmem:[%s1 + $0x528] sm:$0xff]
  %v197 = vld [vmem:[%s1 + $0x530] sm:$0xff]
  %v198 = vld [vmem:[%s1 + $0x538] sm:$0xff]
  %v199 = vld [vmem:[%s1 + $0x540] sm:$0xff]
  %v200 = vld [vmem:[%s1 + $0x548] sm:$0xff]
  %v201 = vld [vmem:[%s1 + $0x550] sm:$0xff]
  %v202 = vld [vmem:[%s1 + $0x558] sm:$0xff]
  %v203 = vld [vmem:[%s1 + $0x560] sm:$0xff]
  %v204 = vld [vmem:[%s1 + $0x568] sm:$0xff]
  %v205 = vld [vmem:[%s1 + $0x570] sm:$0xff]
  %v206 = vld [vmem:[%s1 + $0x578] sm:$0xff]
  %v207 = vld [vmem:[%s1 + $0x580] sm:$0xff]
  %v208 = vld [vmem:[%s1 + $0x588] sm:$0xff]
  %v209 = vld [vmem:[%s1 + $0x590] sm:$0xff]
  %v210 = vld [vmem:[%s1 + $0x598] sm:$0xff]
  %v211 = vld [vmem:[%s1 + $0x5a0] sm:$0xff]
  %v212 = vld [vmem:[%s1 + $0x5a8] sm:$0xff]
  %v213 = vld [vmem:[%s1 + $0x5b0] sm:$0xff]
  %v214 = vld [vmem:[%s1 + $0x5b8] sm:$0xff]
  %v215 = vld [vmem:[%s1 + $0x5c0] sm:$0xff]
  %v216 = vld [vmem:[%s1 + $0x5c8] sm:$0xff]
  %v217 = vld [vmem:[%s1 + $0x5d0] sm:$0xff]
  %v218 = vld [vmem:[%s1 + $0x5d8] sm:$0xff]
  %v219 = vld [vmem:[%s1 + $0x5e0] sm:$0xff]
  %v220 = vld [vmem:[%s1 + $0x5e8] sm:$0xff]
  %v221 = vld [vmem:[%s1 + $0x5f0] sm:$0xff]
  %v222 = vld [vmem:[%s1 + $0x5f8] sm:$0xff]
  %v223 = vld [vmem:[%s1 + $0x600] sm:$0xff]
  %v224 = vld [vmem:[%s1 + $0x608] sm:$0xff]
  %v225 = vld [vmem:[%s1 + $0x610] sm:$0xff]
  %v226 = vld [vmem:[%s1 + $0x618] sm:$0xff]
  %v227 = vld [vmem:[%s1 + $0x620] sm:$0xff]
  %v228 = vld [vmem:[%s1 + $0x628] sm:$0xff]
  %v229 = vld [vmem:[%s1 + $0x630] sm:$0xff]
  %v230 = vld [vmem:[%s1 + $0x638] sm:$0xff]
  %v231 = vld [vmem:[%s1 + $0x640] sm:$0xff]
  %v232 = vld [vmem:[%s1 + $0x648] sm:$0xff]
  %v233 = vld [vmem:[%s1 + $0x650] sm:$0xff]
  %v234 = vld [vmem:[%s1 + $0x658] sm:$0xff]
  %v235 = vld [vmem:[%s1 + $0x660] sm:$0xff]
  %v236 = vld [vmem:[%s1 + $0x668] sm:$0xff]
  %v237 = vld [vmem:[%s1 + $0x670] sm:$0xff]
  %v238 = vld [vmem:[%s1 + $0x678] sm:$0xff]
  %v239 = vld [vmem:[%s1 + $0x680] sm:$0xff]
  %v240 = vld [vmem:[%s1 + $0x688] sm:$0xff]
  %v241 = vld [vmem:[%s1 + $0x690] sm:$0xff]
  %v242 = vld [vmem:[%s1 + $0x698] sm:$0xff]
  %v243 = vld [vmem:[%s1 + $0x6a0] sm:$0xff]
  %v244 = vld [vmem:[%s1 + $0x6a8] sm:$0xff]
  %v245 = vld [vmem:[%s1 + $0x6b0] sm:$0xff]
  %v246 = vld [vmem:[%s1 + $0x6b8] sm:$0xff]
  %v247 = vld [vmem:[%s1 + $0x6c0] sm:$0xff]
  %v248 = vld [vmem:[%s1 + $0x6c8] sm:$0xff]
  %v249 = vld [vmem:[%s1 + $0x6d0] sm:$0xff]
  %v250 = vld [vmem:[%s1 + $0x6d8] sm:$0xff]
  %v251 = vld [vmem:[%s1 + $0x6e0] sm:$0xff]
  %v252 = vld [vmem:[%s1 + $0x6e8] sm:$0xff]
  %v253 = vld [vmem:[%s1 + $0x6f0] sm:$0xff]
  %v254 = vld [vmem:[%s1 + $0x6f8] sm:$0xff]
  %v259 = vunpack.c.l.b16 %v27
  %v260 = vunpack.c.h.b16 %v27
  %v261 = vunpack.c.l.b16 %v28
  %v262 = vunpack.c.h.b16 %v28
  %v263 = vunpack.c.l.b16 %v29
  %v264 = vunpack.c.h.b16 %v29
  %v265 = vunpack.c.l.b16 %v30
  %v266 = vpack.c.b16 %v259, %v259
  %v267 = vpack.c.b16 %v260, %v260
  %v268 = vpack.c.b16 %v261, %v261
  %v269 = vpack.c.b16 %v262, %v262
  %v270 = vpack.c.b16 %v263, %v263
  %v271 = vpack.c.b16 %v264, %v264
  %v272 = vpack.c.b16 %v265, %v265
  %v504 = vunpack.c.l.b16 %v31
  %v505 = vunpack.c.h.b16 %v31
  %v506 = vunpack.c.l.b16 %v32
  %v507 = vunpack.c.h.b16 %v32
  %v508 = vunpack.c.l.b16 %v33
  %v509 = vunpack.c.h.b16 %v33
  %v510 = vunpack.c.l.b16 %v34
  %v511 = vunpack.c.h.b16 %v34
  %v512 = vunpack.c.l.b16 %v35
  %v513 = vunpack.c.h.b16 %v35
  %v514 = vunpack.c.l.b16 %v36
  %v515 = vunpack.c.h.b16 %v36
  %v516 = vunpack.c.l.b16 %v37
  %v517 = vunpack.c.h.b16 %v37
  %v518 = vunpack.c.l.b16 %v38
  %v519 = vunpack.c.h.b16 %v38
  %v520 = vunpack.c.l.b16 %v39
  %v521 = vunpack.c.h.b16 %v39
  %v522 = vunpack.c.l.b16 %v40
  %v523 = vunpack.c.h.b16 %v40
  %v524 = vunpack.c.l.b16 %v41
  %v525 = vunpack.c.h.b16 %v41
  %v526 = vunpack.c.l.b16 %v42
  %v527 = vunpack.c.h.b16 %v42
  %v528 = vunpack.c.l.b16 %v43
  %v529 = vunpack.c.h.b16 %v43
  %v530 = vunpack.c.l.b16 %v44
  %v531 = vunpack.c.h.b16 %v44
  %v532 = vunpack.c.l.b16 %v45
  %v533 = vunpack.c.h.b16 %v45
  %v534 = vunpack.c.l.b16 %v46
  %v535 = vunpack.c.h.b16 %v46
  %v536 = vunpack.c.l.b16 %v47
  %v537 = vunpack.c.h.b16 %v47
  %v538 = vunpack.c.l.b16 %v48
  %v539 = vunpack.c.h.b16 %v48
  %v540 = vunpack.c.l.b16 %v49
  %v541 = vunpack.c.h.b16 %v49
  %v542 = vunpack.c.l.b16 %v50
  %v543 = vunpack.c.h.b16 %v50
  %v544 = vunpack.c.l.b16 %v51
  %v545 = vunpack.c.h.b16 %v51
  %v546 = vunpack.c.l.b16 %v52
  %v547 = vunpack.c.h.b16 %v52
  %v548 = vunpack.c.l.b16 %v53
  %v549 = vunpack.c.h.b16 %v53
  %v550 = vunpack.c.l.b16 %v54
  %v551 = vunpack.c.h.b16 %v54
  %v552 = vunpack.c.l.b16 %v55
  %v553 = vunpack.c.h.b16 %v55
  %v554 = vunpack.c.l.b16 %v56
  %v555 = vunpack.c.h.b16 %v56
  %v556 = vunpack.c.l.b16 %v57
  %v557 = vunpack.c.h.b16 %v57
  %v558 = vunpack.c.l.b16 %v58
  %v559 = vunpack.c.h.b16 %v58
  %v560 = vunpack.c.l.b16 %v59
  %v561 = vunpack.c.h.b16 %v59
  %v562 = vunpack.c.l.b16 %v60
  %v563 = vunpack.c.h.b16 %v60
  %v564 = vunpack.c.l.b16 %v61
  %v565 = vunpack.c.h.b16 %v61
  %v566 = vunpack.c.l.b16 %v62
  %v567 = vunpack.c.h.b16 %v62
  %v568 = vunpack.c.l.b16 %v63
  %v569 = vunpack.c.h.b16 %v63
  %v570 = vunpack.c.l.b16 %v64
  %v571 = vunpack.c.h.b16 %v64
  %v572 = vunpack.c.l.b16 %v65
  %v573 = vunpack.c.h.b16 %v65
  %v574 = vunpack.c.l.b16 %v66
  %v575 = vunpack.c.h.b16 %v66
  %v576 = vunpack.c.l.b16 %v67
  %v577 = vunpack.c.h.b16 %v67
  %v578 = vunpack.c.l.b16 %v68
  %v579 = vunpack.c.h.b16 %v68
  %v580 = vunpack.c.l.b16 %v69
  %v581 = vunpack.c.h.b16 %v69
  %v582 = vunpack.c.l.b16 %v70
  %v583 = vunpack.c.h.b16 %v70
  %v584 = vunpack.c.l.b16 %v71
  %v585 = vunpack.c.h.b16 %v71
  %v586 = vunpack.c.l.b16 %v72
  %v587 = vunpack.c.h.b16 %v72
  %v588 = vunpack.c.l.b16 %v73
  %v589 = vunpack.c.h.b16 %v73
  %v590 = vunpack.c.l.b16 %v74
  %v591 = vunpack.c.h.b16 %v74
  %v592 = vunpack.c.l.b16 %v75
  %v593 = vunpack.c.h.b16 %v75
  %v594 = vunpack.c.l.b16 %v76
  %v595 = vunpack.c.h.b16 %v76
  %v596 = vunpack.c.l.b16 %v77
  %v597 = vunpack.c.h.b16 %v77
  %v598 = vunpack.c.l.b16 %v78
  %v599 = vunpack.c.h.b16 %v78
  %v600 = vunpack.c.l.b16 %v79
  %v601 = vunpack.c.h.b16 %v79
  %v602 = vunpack.c.l.b16 %v80
  %v603 = vunpack.c.h.b16 %v80
  %v604 = vunpack.c.l.b16 %v81
  %v605 = vunpack.c.h.b16 %v81
  %v606 = vunpack.c.l.b16 %v82
  %v607 = vunpack.c.h.b16 %v82
  %v608 = vunpack.c.l.b16 %v83
  %v609 = vunpack.c.h.b16 %v83
  %v610 = vunpack.c.l.b16 %v84
  %v611 = vunpack.c.h.b16 %v84
  %v612 = vunpack.c.l.b16 %v85
  %v613 = vunpack.c.h.b16 %v85
  %v614 = vunpack.c.l.b16 %v86
  %v615 = vunpack.c.h.b16 %v86
  %v616 = vunpack.c.l.b16 %v87
  %v617 = vunpack.c.h.b16 %v87
  %v618 = vunpack.c.l.b16 %v88
  %v619 = vunpack.c.h.b16 %v88
  %v620 = vunpack.c.l.b16 %v89
  %v621 = vunpack.c.h.b16 %v89
  %v622 = vunpack.c.l.b16 %v90
  %v623 = vunpack.c.h.b16 %v90
  %v624 = vunpack.c.l.b16 %v91
  %v625 = vunpack.c.h.b16 %v91
  %v626 = vunpack.c.l.b16 %v92
  %v627 = vunpack.c.h.b16 %v92
  %v628 = vunpack.c.l.b16 %v93
  %v629 = vunpack.c.h.b16 %v93
  %v630 = vunpack.c.l.b16 %v94
  %v631 = vunpack.c.h.b16 %v94
  %v632 = vunpack.c.l.b16 %v95
  %v633 = vunpack.c.h.b16 %v95
  %v634 = vunpack.c.l.b16 %v96
  %v635 = vunpack.c.h.b16 %v96
  %v636 = vunpack.c.l.b16 %v97
  %v637 = vunpack.c.h.b16 %v97
  %v638 = vunpack.c.l.b16 %v98
  %v639 = vunpack.c.h.b16 %v98
  %v640 = vunpack.c.l.b16 %v99
  %v641 = vunpack.c.h.b16 %v99
  %v642 = vunpack.c.l.b16 %v100
  %v643 = vunpack.c.h.b16 %v100
  %v644 = vunpack.c.l.b16 %v101
  %v645 = vunpack.c.h.b16 %v101
  %v646 = vunpack.c.l.b16 %v102
  %v647 = vunpack.c.h.b16 %v102
  %v648 = vunpack.c.l.b16 %v103
  %v649 = vunpack.c.h.b16 %v103
  %v650 = vunpack.c.l.b16 %v104
  %v651 = vunpack.c.h.b16 %v104
  %v652 = vunpack.c.l.b16 %v105
  %v653 = vunpack.c.h.b16 %v105
  %v654 = vunpack.c.l.b16 %v106
  %v655 = vunpack.c.h.b16 %v106
  %v656 = vunpack.c.l.b16 %v107
  %v657 = vunpack.c.h.b16 %v107
  %v658 = vunpack.c.l.b16 %v108
  %v659 = vunpack.c.h.b16 %v108
  %v660 = vunpack.c.l.b16 %v109
  %v661 = vunpack.c.h.b16 %v109
  %v662 = vunpack.c.l.b16 %v110
  %v663 = vunpack.c.h.b16 %v110
  %v664 = vunpack.c.l.b16 %v111
  %v665 = vunpack.c.h.b16 %v111
  %v666 = vunpack.c.l.b16 %v112
  %v667 = vunpack.c.h.b16 %v112
  %v668 = vunpack.c.l.b16 %v113
  %v669 = vunpack.c.h.b16 %v113
  %v670 = vunpack.c.l.b16 %v114
  %v671 = vunpack.c.h.b16 %v114
  %v672 = vunpack.c.l.b16 %v115
  %v673 = vunpack.c.h.b16 %v115
  %v674 = vunpack.c.l.b16 %v116
  %v675 = vunpack.c.h.b16 %v116
  %v676 = vunpack.c.l.b16 %v117
  %v677 = vunpack.c.h.b16 %v117
  %v678 = vunpack.c.l.b16 %v118
  %v679 = vunpack.c.h.b16 %v118
  %v680 = vunpack.c.l.b16 %v119
  %v681 = vunpack.c.h.b16 %v119
  %v682 = vunpack.c.l.b16 %v120
  %v683 = vunpack.c.h.b16 %v120
  %v684 = vunpack.c.l.b16 %v121
  %v685 = vunpack.c.h.b16 %v121
  %v686 = vunpack.c.l.b16 %v122
  %v687 = vunpack.c.h.b16 %v122
  %v688 = vunpack.c.l.b16 %v123
  %v689 = vunpack.c.h.b16 %v123
  %v690 = vunpack.c.l.b16 %v124
  %v691 = vunpack.c.h.b16 %v124
  %v692 = vunpack.c.l.b16 %v125
  %v693 = vunpack.c.h.b16 %v125
  %v694 = vunpack.c.l.b16 %v126
  %v695 = vunpack.c.h.b16 %v126
  %v696 = vunpack.c.l.b16 %v127
  %v697 = vunpack.c.h.b16 %v127
  %v698 = vunpack.c.l.b16 %v128
  %v699 = vunpack.c.h.b16 %v128
  %v700 = vunpack.c.l.b16 %v129
  %v701 = vunpack.c.h.b16 %v129
  %v702 = vunpack.c.l.b16 %v130
  %v703 = vunpack.c.h.b16 %v130
  %v704 = vunpack.c.l.b16 %v131
  %v705 = vunpack.c.h.b16 %v131
  %v706 = vunpack.c.l.b16 %v132
  %v707 = vunpack.c.h.b16 %v132
  %v708 = vunpack.c.l.b16 %v133
  %v709 = vunpack.c.h.b16 %v133
  %v710 = vunpack.c.l.b16 %v134
  %v711 = vunpack.c.h.b16 %v134
  %v712 = vunpack.c.l.b16 %v135
  %v713 = vunpack.c.h.b16 %v135
  %v714 = vunpack.c.l.b16 %v136
  %v715 = vunpack.c.h.b16 %v136
  %v716 = vunpack.c.l.b16 %v137
  %v717 = vunpack.c.h.b16 %v137
  %v718 = vunpack.c.l.b16 %v138
  %v719 = vunpack.c.h.b16 %v138
  %v720 = vunpack.c.l.b16 %v139
  %v721 = vunpack.c.h.b16 %v139
  %v722 = vunpack.c.l.b16 %v140
  %v723 = vunpack.c.h.b16 %v140
  %v724 = vunpack.c.l.b16 %v141
  %v725 = vunpack.c.h.b16 %v141
  %v726 = vunpack.c.l.b16 %v142
  %v727 = vunpack.c.h.b16 %v142
  %v728 = vunpack.c.l.b16 %v143
  %v729 = vunpack.c.h.b16 %v143
  %v730 = vunpack.c.l.b16 %v144
  %v731 = vunpack.c.h.b16 %v144
  %v732 = vunpack.c.l.b16 %v145
  %v733 = vunpack.c.h.b16 %v145
  %v734 = vunpack.c.l.b16 %v146
  %v735 = vunpack.c.h.b16 %v146
  %v736 = vunpack.c.l.b16 %v147
  %v737 = vunpack.c.h.b16 %v147
  %v738 = vunpack.c.l.b16 %v148
  %v739 = vunpack.c.h.b16 %v148
  %v740 = vunpack.c.l.b16 %v149
  %v741 = vunpack.c.h.b16 %v149
  %v742 = vunpack.c.l.b16 %v150
  %v743 = vunpack.c.h.b16 %v150
  %v744 = vunpack.c.l.b16 %v151
  %v745 = vunpack.c.h.b16 %v151
  %v746 = vunpack.c.l.b16 %v152
  %v747 = vunpack.c.h.b16 %v152
  %v748 = vunpack.c.l.b16 %v153
  %v749 = vunpack.c.h.b16 %v153
  %v750 = vunpack.c.l.b16 %v154
  %v751 = vunpack.c.h.b16 %v154
  %v752 = vunpack.c.l.b16 %v155
  %v753 = vunpack.c.h.b16 %v155
  %v754 = vunpack.c.l.b16 %v156
  %v755 = vunpack.c.h.b16 %v156
  %v756 = vunpack.c.l.b16 %v157
  %v757 = vunpack.c.h.b16 %v157
  %v758 = vunpack.c.l.b16 %v158
  %v759 = vunpack.c.h.b16 %v158
  %v760 = vunpack.c.l.b16 %v159
  %v761 = vunpack.c.h.b16 %v159
  %v762 = vunpack.c.l.b16 %v160
  %v763 = vunpack.c.h.b16 %v160
  %v764 = vunpack.c.l.b16 %v161
  %v765 = vunpack.c.h.b16 %v161
  %v766 = vunpack.c.l.b16 %v162
  %v767 = vunpack.c.h.b16 %v162
  %v768 = vunpack.c.l.b16 %v163
  %v769 = vunpack.c.h.b16 %v163
  %v770 = vunpack.c.l.b16 %v164
  %v771 = vunpack.c.h.b16 %v164
  %v772 = vunpack.c.l.b16 %v165
  %v773 = vunpack.c.h.b16 %v165
  %v774 = vunpack.c.l.b16 %v166
  %v775 = vunpack.c.h.b16 %v166
  %v776 = vunpack.c.l.b16 %v167
  %v777 = vunpack.c.h.b16 %v167
  %v778 = vunpack.c.l.b16 %v168
  %v779 = vunpack.c.h.b16 %v168
  %v780 = vunpack.c.l.b16 %v169
  %v781 = vunpack.c.h.b16 %v169
  %v782 = vunpack.c.l.b16 %v170
  %v783 = vunpack.c.h.b16 %v170
  %v784 = vunpack.c.l.b16 %v171
  %v785 = vunpack.c.h.b16 %v171
  %v786 = vunpack.c.l.b16 %v172
  %v787 = vunpack.c.h.b16 %v172
  %v788 = vunpack.c.l.b16 %v173
  %v789 = vunpack.c.h.b16 %v173
  %v790 = vunpack.c.l.b16 %v174
  %v791 = vunpack.c.h.b16 %v174
  %v792 = vunpack.c.l.b16 %v175
  %v793 = vunpack.c.h.b16 %v175
  %v794 = vunpack.c.l.b16 %v176
  %v795 = vunpack.c.h.b16 %v176
  %v796 = vunpack.c.l.b16 %v177
  %v797 = vunpack.c.h.b16 %v177
  %v798 = vunpack.c.l.b16 %v178
  %v799 = vunpack.c.h.b16 %v178
  %v800 = vunpack.c.l.b16 %v179
  %v801 = vunpack.c.h.b16 %v179
  %v802 = vunpack.c.l.b16 %v180
  %v803 = vunpack.c.h.b16 %v180
  %v804 = vunpack.c.l.b16 %v181
  %v805 = vunpack.c.h.b16 %v181
  %v806 = vunpack.c.l.b16 %v182
  %v807 = vunpack.c.h.b16 %v182
  %v808 = vunpack.c.l.b16 %v183
  %v809 = vunpack.c.h.b16 %v183
  %v810 = vunpack.c.l.b16 %v184
  %v811 = vunpack.c.h.b16 %v184
  %v812 = vunpack.c.l.b16 %v185
  %v813 = vunpack.c.h.b16 %v185
  %v814 = vunpack.c.l.b16 %v186
  %v815 = vunpack.c.h.b16 %v186
  %v816 = vunpack.c.l.b16 %v187
  %v817 = vunpack.c.h.b16 %v187
  %v818 = vunpack.c.l.b16 %v188
  %v819 = vunpack.c.h.b16 %v188
  %v820 = vunpack.c.l.b16 %v189
  %v821 = vunpack.c.h.b16 %v189
  %v822 = vunpack.c.l.b16 %v190
  %v823 = vunpack.c.h.b16 %v190
  %v824 = vunpack.c.l.b16 %v191
  %v825 = vunpack.c.h.b16 %v191
  %v826 = vunpack.c.l.b16 %v192
  %v827 = vunpack.c.h.b16 %v192
  %v828 = vunpack.c.l.b16 %v193
  %v829 = vunpack.c.h.b16 %v193
  %v830 = vunpack.c.l.b16 %v194
  %v831 = vunpack.c.h.b16 %v194
  %v832 = vunpack.c.l.b16 %v195
  %v833 = vunpack.c.h.b16 %v195
  %v834 = vunpack.c.l.b16 %v196
  %v835 = vunpack.c.h.b16 %v196
  %v836 = vunpack.c.l.b16 %v197
  %v837 = vunpack.c.h.b16 %v197
  %v838 = vunpack.c.l.b16 %v198
  %v839 = vunpack.c.h.b16 %v198
  %v840 = vunpack.c.l.b16 %v199
  %v841 = vunpack.c.h.b16 %v199
  %v842 = vunpack.c.l.b16 %v200
  %v843 = vunpack.c.h.b16 %v200
  %v844 = vunpack.c.l.b16 %v201
  %v845 = vunpack.c.h.b16 %v201
  %v846 = vunpack.c.l.b16 %v202
  %v847 = vunpack.c.h.b16 %v202
  %v848 = vunpack.c.l.b16 %v203
  %v849 = vunpack.c.h.b16 %v203
  %v850 = vunpack.c.l.b16 %v204
  %v851 = vunpack.c.h.b16 %v204
  %v852 = vunpack.c.l.b16 %v205
  %v853 = vunpack.c.h.b16 %v205
  %v854 = vunpack.c.l.b16 %v206
  %v855 = vunpack.c.h.b16 %v206
  %v856 = vunpack.c.l.b16 %v207
  %v857 = vunpack.c.h.b16 %v207
  %v858 = vunpack.c.l.b16 %v208
  %v859 = vunpack.c.h.b16 %v208
  %v860 = vunpack.c.l.b16 %v209
  %v861 = vunpack.c.h.b16 %v209
  %v862 = vunpack.c.l.b16 %v210
  %v863 = vunpack.c.h.b16 %v210
  %v864 = vunpack.c.l.b16 %v211
  %v865 = vunpack.c.h.b16 %v211
  %v866 = vunpack.c.l.b16 %v212
  %v867 = vunpack.c.h.b16 %v212
  %v868 = vunpack.c.l.b16 %v213
  %v869 = vunpack.c.h.b16 %v213
  %v870 = vunpack.c.l.b16 %v214
  %v871 = vunpack.c.h.b16 %v214
  %v872 = vunpack.c.l.b16 %v215
  %v873 = vunpack.c.h.b16 %v215
  %v874 = vunpack.c.l.b16 %v216
  %v875 = vunpack.c.h.b16 %v216
  %v876 = vunpack.c.l.b16 %v217
  %v877 = vunpack.c.h.b16 %v217
  %v878 = vunpack.c.l.b16 %v218
  %v879 = vunpack.c.h.b16 %v218
  %v880 = vunpack.c.l.b16 %v219
  %v881 = vunpack.c.h.b16 %v219
  %v882 = vunpack.c.l.b16 %v220
  %v883 = vunpack.c.h.b16 %v220
  %v884 = vunpack.c.l.b16 %v221
  %v885 = vunpack.c.h.b16 %v221
  %v886 = vunpack.c.l.b16 %v222
  %v887 = vunpack.c.h.b16 %v222
  %v888 = vunpack.c.l.b16 %v223
  %v889 = vunpack.c.h.b16 %v223
  %v890 = vunpack.c.l.b16 %v224
  %v891 = vunpack.c.h.b16 %v224
  %v892 = vunpack.c.l.b16 %v225
  %v893 = vunpack.c.h.b16 %v225
  %v894 = vunpack.c.l.b16 %v226
  %v895 = vunpack.c.h.b16 %v226
  %v896 = vunpack.c.l.b16 %v227
  %v897 = vunpack.c.h.b16 %v227
  %v898 = vunpack.c.l.b16 %v228
  %v899 = vunpack.c.h.b16 %v228
  %v900 = vunpack.c.l.b16 %v229
  %v901 = vunpack.c.h.b16 %v229
  %v902 = vunpack.c.l.b16 %v230
  %v903 = vunpack.c.h.b16 %v230
  %v904 = vunpack.c.l.b16 %v231
  %v905 = vunpack.c.h.b16 %v231
  %v906 = vunpack.c.l.b16 %v232
  %v907 = vunpack.c.h.b16 %v232
  %v908 = vunpack.c.l.b16 %v233
  %v909 = vunpack.c.h.b16 %v233
  %v910 = vunpack.c.l.b16 %v234
  %v911 = vunpack.c.h.b16 %v234
  %v912 = vunpack.c.l.b16 %v235
  %v913 = vunpack.c.h.b16 %v235
  %v914 = vunpack.c.l.b16 %v236
  %v915 = vunpack.c.h.b16 %v236
  %v916 = vunpack.c.l.b16 %v237
  %v917 = vunpack.c.h.b16 %v237
  %v918 = vunpack.c.l.b16 %v238
  %v919 = vunpack.c.h.b16 %v238
  %v920 = vunpack.c.l.b16 %v239
  %v921 = vunpack.c.h.b16 %v239
  %v922 = vunpack.c.l.b16 %v240
  %v923 = vunpack.c.h.b16 %v240
  %v924 = vunpack.c.l.b16 %v241
  %v925 = vunpack.c.h.b16 %v241
  %v926 = vunpack.c.l.b16 %v242
  %v927 = vunpack.c.h.b16 %v242
  %v928 = vunpack.c.l.b16 %v243
  %v929 = vunpack.c.h.b16 %v243
  %v930 = vunpack.c.l.b16 %v244
  %v931 = vunpack.c.h.b16 %v244
  %v932 = vunpack.c.l.b16 %v245
  %v933 = vunpack.c.h.b16 %v245
  %v934 = vunpack.c.l.b16 %v246
  %v935 = vunpack.c.h.b16 %v246
  %v936 = vunpack.c.l.b16 %v247
  %v937 = vunpack.c.h.b16 %v247
  %v938 = vunpack.c.l.b16 %v248
  %v939 = vunpack.c.h.b16 %v248
  %v940 = vunpack.c.l.b16 %v249
  %v941 = vunpack.c.h.b16 %v249
  %v942 = vunpack.c.l.b16 %v250
  %v943 = vunpack.c.h.b16 %v250
  %v944 = vunpack.c.l.b16 %v251
  %v945 = vunpack.c.h.b16 %v251
  %v946 = vunpack.c.l.b16 %v252
  %v947 = vunpack.c.h.b16 %v252
  %v948 = vunpack.c.l.b16 %v253
  %v949 = vunpack.c.h.b16 %v253
  %v950 = vunpack.c.l.b16 %v254
  %v951 = vunpack.c.h.b16 %v254
  %v952 = vpack.c.b16 %v508, %v504
  %v953 = vpack.c.b16 %v509, %v505
  %v954 = vpack.c.b16 %v510, %v506
  %v955 = vpack.c.b16 %v511, %v507
  %v956 = vpack.c.b16 %v516, %v512
  %v957 = vpack.c.b16 %v517, %v513
  %v958 = vpack.c.b16 %v518, %v514
  %v959 = vpack.c.b16 %v519, %v515
  %v960 = vpack.c.b16 %v524, %v520
  %v961 = vpack.c.b16 %v525, %v521
  %v962 = vpack.c.b16 %v526, %v522
  %v963 = vpack.c.b16 %v527, %v523
  %v964 = vpack.c.b16 %v532, %v528
  %v965 = vpack.c.b16 %v533, %v529
  %v966 = vpack.c.b16 %v534, %v530
  %v967 = vpack.c.b16 %v535, %v531
  %v968 = vpack.c.b16 %v540, %v536
  %v969 = vpack.c.b16 %v541, %v537
  %v970 = vpack.c.b16 %v542, %v538
  %v971 = vpack.c.b16 %v543, %v539
  %v972 = vpack.c.b16 %v548, %v544
  %v973 = vpack.c.b16 %v549, %v545
  %v974 = vpack.c.b16 %v550, %v546
  %v975 = vpack.c.b16 %v551, %v547
  %v976 = vpack.c.b16 %v556, %v552
  %v977 = vpack.c.b16 %v557, %v553
  %v978 = vpack.c.b16 %v558, %v554
  %v979 = vpack.c.b16 %v559, %v555
  %v980 = vpack.c.b16 %v564, %v560
  %v981 = vpack.c.b16 %v565, %v561
  %v982 = vpack.c.b16 %v566, %v562
  %v983 = vpack.c.b16 %v567, %v563
  %v984 = vpack.c.b16 %v572, %v568
  %v985 = vpack.c.b16 %v573, %v569
  %v986 = vpack.c.b16 %v574, %v570
  %v987 = vpack.c.b16 %v575, %v571
  %v988 = vpack.c.b16 %v580, %v576
  %v989 = vpack.c.b16 %v581, %v577
  %v990 = vpack.c.b16 %v582, %v578
  %v991 = vpack.c.b16 %v583, %v579
  %v992 = vpack.c.b16 %v588, %v584
  %v993 = vpack.c.b16 %v589, %v585
  %v994 = vpack.c.b16 %v590, %v586
  %v995 = vpack.c.b16 %v591, %v587
  %v996 = vpack.c.b16 %v596, %v592
  %v997 = vpack.c.b16 %v597, %v593
  %v998 = vpack.c.b16 %v598, %v594
  %v999 = vpack.c.b16 %v599, %v595
  %v1000 = vpack.c.b16 %v604, %v600
  %v1001 = vpack.c.b16 %v605, %v601
  %v1002 = vpack.c.b16 %v606, %v602
  %v1003 = vpack.c.b16 %v607, %v603
  %v1004 = vpack.c.b16 %v612, %v608
  %v1005 = vpack.c.b16 %v613, %v609
  %v1006 = vpack.c.b16 %v614, %v610
  %v1007 = vpack.c.b16 %v615, %v611
  %v1008 = vpack.c.b16 %v620, %v616
  %v1009 = vpack.c.b16 %v621, %v617
  %v1010 = vpack.c.b16 %v622, %v618
  %v1011 = vpack.c.b16 %v623, %v619
  %v1012 = vpack.c.b16 %v628, %v624
  %v1013 = vpack.c.b16 %v629, %v625
  %v1014 = vpack.c.b16 %v630, %v626
  %v1015 = vpack.c.b16 %v631, %v627
  %v1016 = vpack.c.b16 %v636, %v632
  %v1017 = vpack.c.b16 %v637, %v633
  %v1018 = vpack.c.b16 %v638, %v634
  %v1019 = vpack.c.b16 %v639, %v635
  %v1020 = vpack.c.b16 %v644, %v640
  %v1021 = vpack.c.b16 %v645, %v641
  %v1022 = vpack.c.b16 %v646, %v642
  %v1023 = vpack.c.b16 %v647, %v643
  %v1024 = vpack.c.b16 %v652, %v648
  %v1025 = vpack.c.b16 %v653, %v649
  %v1026 = vpack.c.b16 %v654, %v650
  %v1027 = vpack.c.b16 %v655, %v651
  %v1028 = vpack.c.b16 %v660, %v656
  %v1029 = vpack.c.b16 %v661, %v657
  %v1030 = vpack.c.b16 %v662, %v658
  %v1031 = vpack.c.b16 %v663, %v659
  %v1032 = vpack.c.b16 %v668, %v664
  %v1033 = vpack.c.b16 %v669, %v665
  %v1034 = vpack.c.b16 %v670, %v666
  %v1035 = vpack.c.b16 %v671, %v667
  %v1036 = vpack.c.b16 %v676, %v672
  %v1037 = vpack.c.b16 %v677, %v673
  %v1038 = vpack.c.b16 %v678, %v674
  %v1039 = vpack.c.b16 %v679, %v675
  %v1040 = vpack.c.b16 %v684, %v680
  %v1041 = vpack.c.b16 %v685, %v681
  %v1042 = vpack.c.b16 %v686, %v682
  %v1043 = vpack.c.b16 %v687, %v683
  %v1044 = vpack.c.b16 %v692, %v688
  %v1045 = vpack.c.b16 %v693, %v689
  %v1046 = vpack.c.b16 %v694, %v690
  %v1047 = vpack.c.b16 %v695, %v691
  %v1048 = vpack.c.b16 %v700, %v696
  %v1049 = vpack.c.b16 %v701, %v697
  %v1050 = vpack.c.b16 %v702, %v698
  %v1051 = vpack.c.b16 %v703, %v699
  %v1052 = vpack.c.b16 %v708, %v704
  %v1053 = vpack.c.b16 %v709, %v705
  %v1054 = vpack.c.b16 %v710, %v706
  %v1055 = vpack.c.b16 %v711, %v707
  %v1056 = vpack.c.b16 %v716, %v712
  %v1057 = vpack.c.b16 %v717, %v713
  %v1058 = vpack.c.b16 %v718, %v714
  %v1059 = vpack.c.b16 %v719, %v715
  %v1060 = vpack.c.b16 %v724, %v720
  %v1061 = vpack.c.b16 %v725, %v721
  %v1062 = vpack.c.b16 %v726, %v722
  %v1063 = vpack.c.b16 %v727, %v723
  %v1064 = vpack.c.b16 %v732, %v728
  %v1065 = vpack.c.b16 %v733, %v729
  %v1066 = vpack.c.b16 %v734, %v730
  %v1067 = vpack.c.b16 %v735, %v731
  %v1068 = vpack.c.b16 %v740, %v736
  %v1069 = vpack.c.b16 %v741, %v737
  %v1070 = vpack.c.b16 %v742, %v738
  %v1071 = vpack.c.b16 %v743, %v739
  %v1072 = vpack.c.b16 %v748, %v744
  %v1073 = vpack.c.b16 %v749, %v745
  %v1074 = vpack.c.b16 %v750, %v746
  %v1075 = vpack.c.b16 %v751, %v747
  %v1076 = vpack.c.b16 %v756, %v752
  %v1077 = vpack.c.b16 %v757, %v753
  %v1078 = vpack.c.b16 %v758, %v754
  %v1079 = vpack.c.b16 %v759, %v755
  %v1080 = vpack.c.b16 %v764, %v760
  %v1081 = vpack.c.b16 %v765, %v761
  %v1082 = vpack.c.b16 %v766, %v762
  %v1083 = vpack.c.b16 %v767, %v763
  %v1084 = vpack.c.b16 %v772, %v768
  %v1085 = vpack.c.b16 %v773, %v769
  %v1086 = vpack.c.b16 %v774, %v770
  %v1087 = vpack.c.b16 %v775, %v771
  %v1088 = vpack.c.b16 %v780, %v776
  %v1089 = vpack.c.b16 %v781, %v777
  %v1090 = vpack.c.b16 %v782, %v778
  %v1091 = vpack.c.b16 %v783, %v779
  %v1092 = vpack.c.b16 %v788, %v784
  %v1093 = vpack.c.b16 %v789, %v785
  %v1094 = vpack.c.b16 %v790, %v786
  %v1095 = vpack.c.b16 %v791, %v787
  %v1096 = vpack.c.b16 %v796, %v792
  %v1097 = vpack.c.b16 %v797, %v793
  %v1098 = vpack.c.b16 %v798, %v794
  %v1099 = vpack.c.b16 %v799, %v795
  %v1100 = vpack.c.b16 %v804, %v800
  %v1101 = vpack.c.b16 %v805, %v801
  %v1102 = vpack.c.b16 %v806, %v802
  %v1103 = vpack.c.b16 %v807, %v803
  %v1104 = vpack.c.b16 %v812, %v808
  %v1105 = vpack.c.b16 %v813, %v809
  %v1106 = vpack.c.b16 %v814, %v810
  %v1107 = vpack.c.b16 %v815, %v811
  %v1108 = vpack.c.b16 %v820, %v816
  %v1109 = vpack.c.b16 %v821, %v817
  %v1110 = vpack.c.b16 %v822, %v818
  %v1111 = vpack.c.b16 %v823, %v819
  %v1112 = vpack.c.b16 %v828, %v824
  %v1113 = vpack.c.b16 %v829, %v825
  %v1114 = vpack.c.b16 %v830, %v826
  %v1115 = vpack.c.b16 %v831, %v827
  %v1116 = vpack.c.b16 %v836, %v832
  %v1117 = vpack.c.b16 %v837, %v833
  %v1118 = vpack.c.b16 %v838, %v834
  %v1119 = vpack.c.b16 %v839, %v835
  %v1120 = vpack.c.b16 %v844, %v840
  %v1121 = vpack.c.b16 %v845, %v841
  %v1122 = vpack.c.b16 %v846, %v842
  %v1123 = vpack.c.b16 %v847, %v843
  %v1124 = vpack.c.b16 %v852, %v848
  %v1125 = vpack.c.b16 %v853, %v849
  %v1126 = vpack.c.b16 %v854, %v850
  %v1127 = vpack.c.b16 %v855, %v851
  %v1128 = vpack.c.b16 %v860, %v856
  %v1129 = vpack.c.b16 %v861, %v857
  %v1130 = vpack.c.b16 %v862, %v858
  %v1131 = vpack.c.b16 %v863, %v859
  %v1132 = vpack.c.b16 %v868, %v864
  %v1133 = vpack.c.b16 %v869, %v865
  %v1134 = vpack.c.b16 %v870, %v866
  %v1135 = vpack.c.b16 %v871, %v867
  %v1136 = vpack.c.b16 %v876, %v872
  %v1137 = vpack.c.b16 %v877, %v873
  %v1138 = vpack.c.b16 %v878, %v874
  %v1139 = vpack.c.b16 %v879, %v875
  %v1140 = vpack.c.b16 %v884, %v880
  %v1141 = vpack.c.b16 %v885, %v881
  %v1142 = vpack.c.b16 %v886, %v882
  %v1143 = vpack.c.b16 %v887, %v883
  %v1144 = vpack.c.b16 %v892, %v888
  %v1145 = vpack.c.b16 %v893, %v889
  %v1146 = vpack.c.b16 %v894, %v890
  %v1147 = vpack.c.b16 %v895, %v891
  %v1148 = vpack.c.b16 %v900, %v896
  %v1149 = vpack.c.b16 %v901, %v897
  %v1150 = vpack.c.b16 %v902, %v898
  %v1151 = vpack.c.b16 %v903, %v899
  %v1152 = vpack.c.b16 %v908, %v904
  %v1153 = vpack.c.b16 %v909, %v905
  %v1154 = vpack.c.b16 %v910, %v906
  %v1155 = vpack.c.b16 %v911, %v907
  %v1156 = vpack.c.b16 %v916, %v912
  %v1157 = vpack.c.b16 %v917, %v913
  %v1158 = vpack.c.b16 %v918, %v914
  %v1159 = vpack.c.b16 %v919, %v915
  %v1160 = vpack.c.b16 %v924, %v920
  %v1161 = vpack.c.b16 %v925, %v921
  %v1162 = vpack.c.b16 %v926, %v922
  %v1163 = vpack.c.b16 %v927, %v923
  %v1164 = vpack.c.b16 %v932, %v928
  %v1165 = vpack.c.b16 %v933, %v929
  %v1166 = vpack.c.b16 %v934, %v930
  %v1167 = vpack.c.b16 %v935, %v931
  %v1168 = vpack.c.b16 %v940, %v936
  %v1169 = vpack.c.b16 %v941, %v937
  %v1170 = vpack.c.b16 %v942, %v938
  %v1171 = vpack.c.b16 %v943, %v939
  %v1172 = vpack.c.b16 %v948, %v944
  %v1173 = vpack.c.b16 %v949, %v945
  %v1174 = vpack.c.b16 %v950, %v946
  %v1175 = vpack.c.b16 %v951, %v947
  %1400 = vmatprep.subr.bf16.mxu0 %v953
  %1401 = vmatpush1.bf16.msra.mxu0 %v952
  %1402 = vmatprep.subr.bf16.mxu0 %v957
  %1403 = vmatpush1.bf16.msra.mxu0 %v956
  %1404 = vmatprep.subr.bf16.mxu0 %v961
  %1405 = vmatpush1.bf16.msra.mxu0 %v960
  %1406 = vmatprep.subr.bf16.mxu0 %v965
  %1407 = vmatpush1.bf16.msra.mxu0 %v964
  %1408 = vmatprep.subr.bf16.mxu0 %v969
  %1409 = vmatpush1.bf16.msra.mxu0 %v968
  %1410 = vmatprep.subr.bf16.mxu0 %v973
  %1411 = vmatpush1.bf16.msra.mxu0 %v972
  %1412 = vmatprep.subr.bf16.mxu0 %v977
  %1413 = vmatpush1.bf16.msra.mxu0 %v976
  %1414 = vmatprep.subr.bf16.mxu0 %v981
  %1415 = vmatpush1.bf16.msra.mxu0 %v980
  %1416 = vmatprep.subr.bf16.mxu0 %v985
  %1417 = vmatpush1.bf16.msra.mxu0 %v984
  %1418 = vmatprep.subr.bf16.mxu0 %v989
  %1419 = vmatpush1.bf16.msra.mxu0 %v988
  %1420 = vmatprep.subr.bf16.mxu0 %v993
  %1421 = vmatpush1.bf16.msra.mxu0 %v992
  %1422 = vmatprep.subr.bf16.mxu0 %v997
  %1423 = vmatpush1.bf16.msra.mxu0 %v996
  %1424 = vmatprep.subr.bf16.mxu0 %v1001
  %1425 = vmatpush1.bf16.msra.mxu0 %v1000
  %1426 = vmatprep.subr.bf16.mxu0 %v1005
  %1427 = vmatpush1.bf16.msra.mxu0 %v1004
  %1428 = vmatprep.subr.bf16.mxu0 %v1009
  %1429 = vmatpush1.bf16.msra.mxu0 %v1008
  %1430 = vmatprep.subr.bf16.mxu0 %v1013
  %1431 = vmatpush1.bf16.msra.mxu0 %v1012
  %1432 = vmatprep.mubr.bf16.mxu0 %v267
  %1433 = vmatmul.mubr.bf16.gmra.mrb[0].mxu0 %v266
  %v1434 = vpop.f32.mrb[0].mxu0
  %v1435 = vadd.f32 0.0, %v1434
  %v1436 = vpop.f32.mrb[0].mxu0
  %v1437 = vadd.f32 0.0, %v1436
  %v1438 = vpop.f32.mrb[0].mxu0
  %v1439 = vpop.f32.mrb[0].mxu0
  %1440 = vdwg.mxu0
  %1441 = vmatprep.subr.bf16.mxu0 %v1017
  %1442 = vmatpush1.bf16.msra.mxu0 %v1016
  %1443 = vmatprep.subr.bf16.mxu0 %v1021
  %1444 = vmatpush1.bf16.msra.mxu0 %v1020
  %1445 = vmatprep.subr.bf16.mxu0 %v1025
  %1446 = vmatpush1.bf16.msra.mxu0 %v1024
  %1447 = vmatprep.subr.bf16.mxu0 %v1029
  %1448 = vmatpush1.bf16.msra.mxu0 %v1028
  %1449 = vmatprep.subr.bf16.mxu0 %v1033
  %1450 = vmatpush1.bf16.msra.mxu0 %v1032
  %1451 = vmatprep.subr.bf16.mxu0 %v1037
  %1452 = vmatpush1.bf16.msra.mxu0 %v1036
  %1453 = vmatprep.subr.bf16.mxu0 %v1041
  %1454 = vmatpush1.bf16.msra.mxu0 %v1040
  %1455 = vmatprep.subr.bf16.mxu0 %v1045
  %1456 = vmatpush1.bf16.msra.mxu0 %v1044
  %1457 = vmatprep.subr.bf16.mxu0 %v1049
  %1458 = vmatpush1.bf16.msra.mxu0 %v1048
  %1459 = vmatprep.subr.bf16.mxu0 %v1053
  %1460 = vmatpush1.bf16.msra.mxu0 %v1052
  %1461 = vmatprep.subr.bf16.mxu0 %v1057
  %1462 = vmatpush1.bf16.msra.mxu0 %v1056
  %1463 = vmatprep.subr.bf16.mxu0 %v1061
  %1464 = vmatpush1.bf16.msra.mxu0 %v1060
  %1465 = vmatprep.subr.bf16.mxu0 %v1065
  %1466 = vmatpush1.bf16.msra.mxu0 %v1064
  %1467 = vmatprep.subr.bf16.mxu0 %v1069
  %1468 = vmatpush1.bf16.msra.mxu0 %v1068
  %1469 = vmatprep.subr.bf16.mxu0 %v1073
  %1470 = vmatpush1.bf16.msra.mxu0 %v1072
  %1471 = vmatprep.subr.bf16.mxu0 %v1077
  %1472 = vmatpush1.bf16.msra.mxu0 %v1076
  %1473 = vmatprep.mubr.bf16.mxu0 %v269
  %1474 = vmatmul.mubr.bf16.gmra.mrb[0].mxu0 %v268
  %v1475 = vpop.f32.mrb[0].mxu0
  %v1476 = vadd.f32 %v1435, %v1475
  %v1477 = vpop.f32.mrb[0].mxu0
  %v1478 = vadd.f32 %v1437, %v1477
  %v1479 = vpop.f32.mrb[0].mxu0
  %v1480 = vpop.f32.mrb[0].mxu0
  %1481 = vdwg.mxu0
  %1482 = vmatprep.subr.bf16.mxu0 %v1081
  %1483 = vmatpush1.bf16.msra.mxu0 %v1080
  %1484 = vmatprep.subr.bf16.mxu0 %v1085
  %1485 = vmatpush1.bf16.msra.mxu0 %v1084
  %1486 = vmatprep.subr.bf16.mxu0 %v1089
  %1487 = vmatpush1.bf16.msra.mxu0 %v1088
  %1488 = vmatprep.subr.bf16.mxu0 %v1093
  %1489 = vmatpush1.bf16.msra.mxu0 %v1092
  %1490 = vmatprep.subr.bf16.mxu0 %v1097
  %1491 = vmatpush1.bf16.msra.mxu0 %v1096
  %1492 = vmatprep.subr.bf16.mxu0 %v1101
  %1493 = vmatpush1.bf16.msra.mxu0 %v1100
  %1494 = vmatprep.subr.bf16.mxu0 %v1105
  %1495 = vmatpush1.bf16.msra.mxu0 %v1104
  %1496 = vmatprep.subr.bf16.mxu0 %v1109
  %1497 = vmatpush1.bf16.msra.mxu0 %v1108
  %1498 = vmatprep.subr.bf16.mxu0 %v1113
  %1499 = vmatpush1.bf16.msra.mxu0 %v1112
  %1500 = vmatprep.subr.bf16.mxu0 %v1117
  %1501 = vmatpush1.bf16.msra.mxu0 %v1116
  %1502 = vmatprep.subr.bf16.mxu0 %v1121
  %1503 = vmatpush1.bf16.msra.mxu0 %v1120
  %1504 = vmatprep.subr.bf16.mxu0 %v1125
  %1505 = vmatpush1.bf16.msra.mxu0 %v1124
  %1506 = vmatprep.subr.bf16.mxu0 %v1129
  %1507 = vmatpush1.bf16.msra.mxu0 %v1128
  %1508 = vmatprep.subr.bf16.mxu0 %v1133
  %1509 = vmatpush1.bf16.msra.mxu0 %v1132
  %1510 = vmatprep.subr.bf16.mxu0 %v1137
  %1511 = vmatpush1.bf16.msra.mxu0 %v1136
  %1512 = vmatprep.subr.bf16.mxu0 %v1141
  %1513 = vmatpush1.bf16.msra.mxu0 %v1140
  %1514 = vmatprep.mubr.bf16.mxu0 %v271
  %1515 = vmatmul.mubr.bf16.gmra.mrb[0].mxu0 %v270
  %v1516 = vpop.f32.mrb[0].mxu0
  %v1517 = vadd.f32 %v1476, %v1516
  %v1518 = vpop.f32.mrb[0].mxu0
  %v1519 = vadd.f32 %v1478, %v1518
  %v1520 = vpop.f32.mrb[0].mxu0
  %v1521 = vpop.f32.mrb[0].mxu0
  %1522 = vdwg.mxu0
  %1523 = vmatprep.subr.bf16.mxu0 %v1145
  %1524 = vmatpush1.bf16.msra.mxu0 %v1144
  %1525 = vmatprep.subr.bf16.mxu0 %v1149
  %1526 = vmatpush1.bf16.msra.mxu0 %v1148
  %1527 = vmatprep.subr.bf16.mxu0 %v1153
  %1528 = vmatpush1.bf16.msra.mxu0 %v1152
  %1529 = vmatprep.subr.bf16.mxu0 %v1157
  %1530 = vmatpush1.bf16.msra.mxu0 %v1156
  %1531 = vmatprep.subr.bf16.mxu0 %v1161
  %1532 = vmatpush1.bf16.msra.mxu0 %v1160
  %1533 = vmatprep.subr.bf16.mxu0 %v1165
  %1534 = vmatpush1.bf16.msra.mxu0 %v1164
  %1535 = vmatprep.subr.bf16.mxu0 %v1169
  %1536 = vmatpush1.bf16.msra.mxu0 %v1168
  %1537 = vmatprep.subr.bf16.mxu0 %v1173
  %1538 = vmatpush1.bf16.msra.mxu0 %v1172
  %1539 = vmatprep.subr.bf16.mxu0 0
  %1540 = vmatpush1.bf16.msra.mxu0 0
  %1541 = vmatprep.subr.bf16.mxu0 0
  %1542 = vmatpush1.bf16.msra.mxu0 0
  %1543 = vmatprep.subr.bf16.mxu0 0
  %1544 = vmatpush1.bf16.msra.mxu0 0
  %1545 = vmatprep.subr.bf16.mxu0 0
  %1546 = vmatpush1.bf16.msra.mxu0 0
  %1547 = vmatprep.subr.bf16.mxu0 0
  %1548 = vmatpush1.bf16.msra.mxu0 0
  %1549 = vmatprep.subr.bf16.mxu0 0
  %1550 = vmatpush1.bf16.msra.mxu0 0
  %1551 = vmatprep.subr.bf16.mxu0 0
  %1552 = vmatpush1.bf16.msra.mxu0 0
  %1553 = vmatprep.subr.bf16.mxu0 0
  %1554 = vmatpush1.bf16.msra.mxu0 0
  %1555 = vmatprep.mubr.bf16.mxu0 0
  %1556 = vmatmul.mubr.bf16.gmra.mrb[0].mxu0 %v272
  %v1557 = vpop.f32.mrb[0].mxu0
  %v1558 = vadd.f32 %v1517, %v1557
  %v1559 = vpop.f32.mrb[0].mxu0
  %v1560 = vadd.f32 %v1519, %v1559
  %v1561 = vpop.f32.mrb[0].mxu0
  %v1562 = vpop.f32.mrb[0].mxu0
  %1563 = vdwg.mxu0
  %1564 = vmatprep.subr.bf16.mxu0 %v955
  %1565 = vmatpush1.bf16.msra.mxu0 %v954
  %1566 = vmatprep.subr.bf16.mxu0 %v959
  %1567 = vmatpush1.bf16.msra.mxu0 %v958
  %1568 = vmatprep.subr.bf16.mxu0 %v963
  %1569 = vmatpush1.bf16.msra.mxu0 %v962
  %1570 = vmatprep.subr.bf16.mxu0 %v967
  %1571 = vmatpush1.bf16.msra.mxu0 %v966
  %1572 = vmatprep.subr.bf16.mxu0 %v971
  %1573 = vmatpush1.bf16.msra.mxu0 %v970
  %1574 = vmatprep.subr.bf16.mxu0 %v975
  %1575 = vmatpush1.bf16.msra.mxu0 %v974
  %1576 = vmatprep.subr.bf16.mxu0 %v979
  %1577 = vmatpush1.bf16.msra.mxu0 %v978
  %1578 = vmatprep.subr.bf16.mxu0 %v983
  %1579 = vmatpush1.bf16.msra.mxu0 %v982
  %1580 = vmatprep.subr.bf16.mxu0 %v987
  %1581 = vmatpush1.bf16.msra.mxu0 %v986
  %1582 = vmatprep.subr.bf16.mxu0 %v991
  %1583 = vmatpush1.bf16.msra.mxu0 %v990
  %1584 = vmatprep.subr.bf16.mxu0 %v995
  %1585 = vmatpush1.bf16.msra.mxu0 %v994
  %1586 = vmatprep.subr.bf16.mxu0 %v999
  %1587 = vmatpush1.bf16.msra.mxu0 %v998
  %1588 = vmatprep.subr.bf16.mxu0 %v1003
  %1589 = vmatpush1.bf16.msra.mxu0 %v1002
  %1590 = vmatprep.subr.bf16.mxu0 %v1007
  %1591 = vmatpush1.bf16.msra.mxu0 %v1006
  %1592 = vmatprep.subr.bf16.mxu0 %v1011
  %1593 = vmatpush1.bf16.msra.mxu0 %v1010
  %1594 = vmatprep.subr.bf16.mxu0 %v1015
  %1595 = vmatpush1.bf16.msra.mxu0 %v1014
  %1596 = vmatprep.mubr.bf16.mxu0 %v267
  %1597 = vmatmul.mubr.bf16.gmra.mrb[0].mxu0 %v266
  %v1598 = vpop.f32.mrb[0].mxu0
  %v1599 = vadd.f32 0.0, %v1598
  %v1600 = vpop.f32.mrb[0].mxu0
  %v1601 = vadd.f32 0.0, %v1600
  %v1602 = vpop.f32.mrb[0].mxu0
  %v1603 = vpop.f32.mrb[0].mxu0
  %1604 = vdwg.mxu0
  %1605 = vmatprep.subr.bf16.mxu0 %v1019
  %1606 = vmatpush1.bf16.msra.mxu0 %v1018
  %1607 = vmatprep.subr.bf16.mxu0 %v1023
  %1608 = vmatpush1.bf16.msra.mxu0 %v1022
  %1609 = vmatprep.subr.bf16.mxu0 %v1027
  %1610 = vmatpush1.bf16.msra.mxu0 %v1026
  %1611 = vmatprep.subr.bf16.mxu0 %v1031
  %1612 = vmatpush1.bf16.msra.mxu0 %v1030
  %1613 = vmatprep.subr.bf16.mxu0 %v1035
  %1614 = vmatpush1.bf16.msra.mxu0 %v1034
  %1615 = vmatprep.subr.bf16.mxu0 %v1039
  %1616 = vmatpush1.bf16.msra.mxu0 %v1038
  %1617 = vmatprep.subr.bf16.mxu0 %v1043
  %1618 = vmatpush1.bf16.msra.mxu0 %v1042
  %1619 = vmatprep.subr.bf16.mxu0 %v1047
  %1620 = vmatpush1.bf16.msra.mxu0 %v1046
  %1621 = vmatprep.subr.bf16.mxu0 %v1051
  %1622 = vmatpush1.bf16.msra.mxu0 %v1050
  %1623 = vmatprep.subr.bf16.mxu0 %v1055
  %1624 = vmatpush1.bf16.msra.mxu0 %v1054
  %1625 = vmatprep.subr.bf16.mxu0 %v1059
  %1626 = vmatpush1.bf16.msra.mxu0 %v1058
  %1627 = vmatprep.subr.bf16.mxu0 %v1063
  %1628 = vmatpush1.bf16.msra.mxu0 %v1062
  %1629 = vmatprep.subr.bf16.mxu0 %v1067
  %1630 = vmatpush1.bf16.msra.mxu0 %v1066
  %1631 = vmatprep.subr.bf16.mxu0 %v1071
  %1632 = vmatpush1.bf16.msra.mxu0 %v1070
  %1633 = vmatprep.subr.bf16.mxu0 %v1075
  %1634 = vmatpush1.bf16.msra.mxu0 %v1074
  %1635 = vmatprep.subr.bf16.mxu0 %v1079
  %1636 = vmatpush1.bf16.msra.mxu0 %v1078
  %1637 = vmatprep.mubr.bf16.mxu0 %v269
  %1638 = vmatmul.mubr.bf16.gmra.mrb[0].mxu0 %v268
  %v1639 = vpop.f32.mrb[0].mxu0
  %v1640 = vadd.f32 %v1599, %v1639
  %v1641 = vpop.f32.mrb[0].mxu0
  %v1642 = vadd.f32 %v1601, %v1641
  %v1643 = vpop.f32.mrb[0].mxu0
  %v1644 = vpop.f32.mrb[0].mxu0
  %1645 = vdwg.mxu0
  %1646 = vmatprep.subr.bf16.mxu0 %v1083
  %1647 = vmatpush1.bf16.msra.mxu0 %v1082
  %1648 = vmatprep.subr.bf16.mxu0 %v1087
  %1649 = vmatpush1.bf16.msra.mxu0 %v1086
  %1650 = vmatprep.subr.bf16.mxu0 %v1091
  %1651 = vmatpush1.bf16.msra.mxu0 %v1090
  %1652 = vmatprep.subr.bf16.mxu0 %v1095
  %1653 = vmatpush1.bf16.msra.mxu0 %v1094
  %1654 = vmatprep.subr.bf16.mxu0 %v1099
  %1655 = vmatpush1.bf16.msra.mxu0 %v1098
  %1656 = vmatprep.subr.bf16.mxu0 %v1103
  %1657 = vmatpush1.bf16.msra.mxu0 %v1102
  %1658 = vmatprep.subr.bf16.mxu0 %v1107
  %1659 = vmatpush1.bf16.msra.mxu0 %v1106
  %1660 = vmatprep.subr.bf16.mxu0 %v1111
  %1661 = vmatpush1.bf16.msra.mxu0 %v1110
  %1662 = vmatprep.subr.bf16.mxu0 %v1115
  %1663 = vmatpush1.bf16.msra.mxu0 %v1114
  %1664 = vmatprep.subr.bf16.mxu0 %v1119
  %1665 = vmatpush1.bf16.msra.mxu0 %v1118
  %1666 = vmatprep.subr.bf16.mxu0 %v1123
  %1667 = vmatpush1.bf16.msra.mxu0 %v1122
  %1668 = vmatprep.subr.bf16.mxu0 %v1127
  %1669 = vmatpush1.bf16.msra.mxu0 %v1126
  %1670 = vmatprep.subr.bf16.mxu0 %v1131
  %1671 = vmatpush1.bf16.msra.mxu0 %v1130
  %1672 = vmatprep.subr.bf16.mxu0 %v1135
  %1673 = vmatpush1.bf16.msra.mxu0 %v1134
  %1674 = vmatprep.subr.bf16.mxu0 %v1139
  %1675 = vmatpush1.bf16.msra.mxu0 %v1138
  %1676 = vmatprep.subr.bf16.mxu0 %v1143
  %1677 = vmatpush1.bf16.msra.mxu0 %v1142
  %1678 = vmatprep.mubr.bf16.mxu0 %v271
  %1679 = vmatmul.mubr.bf16.gmra.mrb[0].mxu0 %v270
  %v1680 = vpop.f32.mrb[0].mxu0
  %v1681 = vadd.f32 %v1640, %v1680
  %v1682 = vpop.f32.mrb[0].mxu0
  %v1683 = vadd.f32 %v1642, %v1682
  %v1684 = vpop.f32.mrb[0].mxu0
  %v1685 = vpop.f32.mrb[0].mxu0
  %1686 = vdwg.mxu0
  %1687 = vmatprep.subr.bf16.mxu0 %v1147
  %1688 = vmatpush1.bf16.msra.mxu0 %v1146
  %1689 = vmatprep.subr.bf16.mxu0 %v1151
  %1690 = vmatpush1.bf16.msra.mxu0 %v1150
  %1691 = vmatprep.subr.bf16.mxu0 %v1155
  %1692 = vmatpush1.bf16.msra.mxu0 %v1154
  %1693 = vmatprep.subr.bf16.mxu0 %v1159
  %1694 = vmatpush1.bf16.msra.mxu0 %v1158
  %1695 = vmatprep.subr.bf16.mxu0 %v1163
  %1696 = vmatpush1.bf16.msra.mxu0 %v1162
  %1697 = vmatprep.subr.bf16.mxu0 %v1167
  %1698 = vmatpush1.bf16.msra.mxu0 %v1166
  %1699 = vmatprep.subr.bf16.mxu0 %v1171
  %1700 = vmatpush1.bf16.msra.mxu0 %v1170
  %1701 = vmatprep.subr.bf16.mxu0 %v1175
  %1702 = vmatpush1.bf16.msra.mxu0 %v1174
  %1703 = vmatprep.subr.bf16.mxu0 0
  %1704 = vmatpush1.bf16.msra.mxu0 0
  %1705 = vmatprep.subr.bf16.mxu0 0
  %1706 = vmatpush1.bf16.msra.mxu0 0
  %1707 = vmatprep.subr.bf16.mxu0 0
  %1708 = vmatpush1.bf16.msra.mxu0 0
  %1709 = vmatprep.subr.bf16.mxu0 0
  %1710 = vmatpush1.bf16.msra.mxu0 0
  %1711 = vmatprep.subr.bf16.mxu0 0
  %1712 = vmatpush1.bf16.msra.mxu0 0
  %1713 = vmatprep.subr.bf16.mxu0 0
  %1714 = vmatpush1.bf16.msra.mxu0 0
  %1715 = vmatprep.subr.bf16.mxu0 0
  %1716 = vmatpush1.bf16.msra.mxu0 0
  %1717 = vmatprep.subr.bf16.mxu0 0
  %1718 = vmatpush1.bf16.msra.mxu0 0
  %1719 = vmatprep.mubr.bf16.mxu0 0
  %1720 = vmatmul.mubr.bf16.gmra.mrb[0].mxu0 %v272
  %v1721 = vpop.f32.mrb[0].mxu0
  %v1722 = vadd.f32 %v1681, %v1721
  %v1723 = vpop.f32.mrb[0].mxu0
  %v1724 = vadd.f32 %v1683, %v1723
  %v1725 = vpop.f32.mrb[0].mxu0
  %v1726 = vpop.f32.mrb[0].mxu0
  %1727 = vdwg.mxu0
  %v1728 = vadd.f32 %v23, %v1558
  %v1729 = vadd.f32 %v24, %v1560
  %v1730 = vadd.f32 %v25, %v1722
  %v1731 = vadd.f32 %v26, %v1724
  %1732 = vst [vmem:[%s3] sm:$0xff] %v1728
  %1733 = vst [vmem:[%s3 + $0x8] sm:$0xff] %v1729
  %1734 = vst [vmem:[%s3 + $0x10] sm:$0xff] %v1730
  %1735 = vst [vmem:[%s3 + $0x18] sm:$0xff] %v1731
  // Predicated region
  $region18: #{linear_then_conv_forward.12} parent=0 // pred_check
    %p1736 = pneg %p15
  $region19: #{linear_then_conv_forward.12} parent=0 // pred_check_branch
    %1738 = sbr.rel (%p1736) target = $region21
  $region20: #{linear_then_conv_forward.12} parent=0 // pred_region
    %v1739 = vld [vmem:[%s3] sm:$0xff]
    %v1740 = vld [vmem:[%s3 + $0x8] sm:$0xff]
    %v1741 = vld [vmem:[%s3 + $0x10] sm:$0xff]
    %v1742 = vld [vmem:[%s3 + $0x18] sm:$0xff]
    %v1743 = vld [vmem:[%s2] sm:$0xf]
    %v1745 = vlaneseq
    %v1746 = vshrl.u32 %v1745, 7
    %v1747 = vsub.s32 0, %v1746
    %v1748 = vrot.slane %v1743, %v1747
    %v1749 = vlaneseq
    %v1750 = vshrl.u32 %v1749, 7
    %v1751 = vsub.s32 1, %v1750
    %v1752 = vrot.slane %v1743, %v1751
    %v1753 = vlaneseq
    %v1754 = vshrl.u32 %v1753, 7
    %v1755 = vsub.s32 2, %v1754
    %v1756 = vrot.slane %v1743, %v1755
    %v1757 = vlaneseq
    %v1758 = vshrl.u32 %v1757, 7
    %v1759 = vsub.s32 3, %v1758
    %v1760 = vrot.slane %v1743, %v1759
    %v1765 = vadd.f32 %v1739, %v1748
    %v1766 = vadd.f32 %v1740, %v1752
    %v1767 = vadd.f32 %v1741, %v1756
    %v1768 = vadd.f32 %v1742, %v1760
    %v1769 = vmax.f32 %v1765, 0.0
    %v1770 = vmax.f32 %v1766, 0.0
    %v1771 = vmax.f32 %v1767, 0.0
    %v1772 = vmax.f32 %v1768, 0.0
    %1773 = vst [vmem:[%s3] sm:$0xff] %v1769
    %1774 = vst [vmem:[%s3 + $0x8] sm:$0xff] %v1770
    %1775 = vst [vmem:[%s3 + $0x10] sm:$0xff] %v1771
    %1776 = vst [vmem:[%s3 + $0x18] sm:$0xff] %v1772
  $region21: #{linear_then_conv_forward.12} parent=0 // pred_fallthru
    _
  // Predicated region
  $region22: #{linear_then_conv_forward.12} parent=0 // pred_check
    _
  $region23: #{linear_then_conv_forward.12} parent=0 // pred_check_branch
    %1778 = sbr.rel (0) target = $region25
  $region24: #{linear_then_conv_forward.12} parent=0 // pred_region
    _
  $region25: #{linear_then_conv_forward.12} parent=0 // pred_fallthru
    _
  // Predicated region
  $region26: #{linear_then_conv_forward.12} parent=0 // pred_check
    _
  $region27: #{linear_then_conv_forward.12} parent=0 // pred_check_branch
    %1780 = sbr.rel (0) target = $region29
  $region28: #{linear_then_conv_forward.12} parent=0 // pred_region
    _
  $region29: #{linear_then_conv_forward.12} parent=0 // pred_fallthru
    _

// kernel: linear_then_conv_forward.13
$region0: #{linear_then_conv_forward.13}
  #allocation0 [shape = 'u32[]', space=smem, size = 0x4, offset = 0x4, fixed_abs, tag = 'smem constant byte address 0x4 - core index']
  #allocation1 [shape = 'u32[144,128]{1,0:T(1,128)}', space=vmem, size = 0x12000, scoped, tag = 'internal scratch']
  %s0 = inlined_call_operand.vmem [shape: bf16[8,512], index: 0, kind: input, shape index: {}]
  %s1 = inlined_call_operand.vmem [shape: bf16[512,128], index: 1, kind: input, shape index: {}]
  %s2 = inlined_call_operand.vmem [shape: f32[1,128], index: 2, kind: input, shape index: {}]
  %s3 = inlined_call_operand.vmem [shape: f32[8,128], index: 3, kind: output, shape index: {}]
  %s4 = sld [smem:[#allocation0]]
  $region30: #{linear_then_conv_forward.13} parent=0
    _
  %s6 = ssub.s32 1, %s4
  %s7 = scalar_select 0, %s6, %s4
  // Predicated region
  $region2: #{linear_then_conv_forward.13} parent=0 // pred_check
    _
  $region3: #{linear_then_conv_forward.13} parent=0 // pred_check_branch
    %9 = sbr.rel (0) target = $region5
  $region4: #{linear_then_conv_forward.13} parent=0 // pred_region
    _
  $region5: #{linear_then_conv_forward.13} parent=0 // pred_fallthru
    _
  // Predicated region
  $region6: #{linear_then_conv_forward.13} parent=0 // pred_check
    _
  $region7: #{linear_then_conv_forward.13} parent=0 // pred_check_branch
    %11 = sbr.rel (0) target = $region9
  $region8: #{linear_then_conv_forward.13} parent=0 // pred_region
    _
  $region9: #{linear_then_conv_forward.13} parent=0 // pred_fallthru
    _
  // Predicated region
  $region10: #{linear_then_conv_forward.13} parent=0 // pred_check
    _
  $region11: #{linear_then_conv_forward.13} parent=0 // pred_check_branch
    %13 = sbr.rel (0) target = $region13
  $region12: #{linear_then_conv_forward.13} parent=0 // pred_region
    _
  $region13: #{linear_then_conv_forward.13} parent=0 // pred_fallthru
    _
  %p15 = scmp.eq.s32.totalorder 0, 0
  // Predicated region
  $region14: #{linear_then_conv_forward.13} parent=0 // pred_check
    %p16 = pneg %p15
  $region15: #{linear_then_conv_forward.13} parent=0 // pred_check_branch
    %18 = sbr.rel (%p16) target = $region17
  $region16: #{linear_then_conv_forward.13} parent=0 // pred_region
    %19 = vst [vmem:[%s3] sm:$0xff] 0.0
  $region17: #{linear_then_conv_forward.13} parent=0 // pred_fallthru
    _
  %v20 = vld [vmem:[%s3] sm:$0xff]
  %v21 = vld [vmem:[%s0] sm:$0xff]
  %v22 = vld [vmem:[%s0 + $0x8] sm:$0xff]
  %v23 = vld [vmem:[%s1] sm:$0xf]
  %v24 = vld [vmem:[%s1 + $0x4] sm:$0xf]
  %v25 = vld [vmem:[%s1 + $0x8] sm:$0xf]
  %v26 = vld [vmem:[%s1 + $0xc] sm:$0xf]
  %v27 = vld [vmem:[%s1 + $0x10] sm:$0xf]
  %v28 = vld [vmem:[%s1 + $0x14] sm:$0xf]
  %v29 = vld [vmem:[%s1 + $0x18] sm:$0xf]
  %v30 = vld [vmem:[%s1 + $0x1c] sm:$0xf]
  %v31 = vld [vmem:[%s1 + $0x20] sm:$0xf]
  %v32 = vld [vmem:[%s1 + $0x24] sm:$0xf]
  %v33 = vld [vmem:[%s1 + $0x28] sm:$0xf]
  %v34 = vld [vmem:[%s1 + $0x2c] sm:$0xf]
  %v35 = vld [vmem:[%s1 + $0x30] sm:$0xf]
  %v36 = vld [vmem:[%s1 + $0x34] sm:$0xf]
  %v37 = vld [vmem:[%s1 + $0x38] sm:$0xf]
  %v38 = vld [vmem:[%s1 + $0x3c] sm:$0xf]
  %v39 = vld [vmem:[%s1 + $0x40] sm:$0xf]
  %v40 = vld [vmem:[%s1 + $0x44] sm:$0xf]
  %v41 = vld [vmem:[%s1 + $0x48] sm:$0xf]
  %v42 = vld [vmem:[%s1 + $0x4c] sm:$0xf]
  %v43 = vld [vmem:[%s1 + $0x50] sm:$0xf]
  %v44 = vld [vmem:[%s1 + $0x54] sm:$0xf]
  %v45 = vld [vmem:[%s1 + $0x58] sm:$0xf]
  %v46 = vld [vmem:[%s1 + $0x5c] sm:$0xf]
  %v47 = vld [vmem:[%s1 + $0x60] sm:$0xf]
  %v48 = vld [vmem:[%s1 + $0x64] sm:$0xf]
  %v49 = vld [vmem:[%s1 + $0x68] sm:$0xf]
  %v50 = vld [vmem:[%s1 + $0x6c] sm:$0xf]
  %v51 = vld [vmem:[%s1 + $0x70] sm:$0xf]
  %v52 = vld [vmem:[%s1 + $0x74] sm:$0xf]
  %v53 = vld [vmem:[%s1 + $0x78] sm:$0xf]
  %v54 = vld [vmem:[%s1 + $0x7c] sm:$0xf]
  %v55 = vld [vmem:[%s1 + $0x80] sm:$0xf]
  %v56 = vld [vmem:[%s1 + $0x84] sm:$0xf]
  %v57 = vld [vmem:[%s1 + $0x88] sm:$0xf]
  %v58 = vld [vmem:[%s1 + $0x8c] sm:$0xf]
  %v59 = vld [vmem:[%s1 + $0x90] sm:$0xf]
  %v60 = vld [vmem:[%s1 + $0x94] sm:$0xf]
  %v61 = vld [vmem:[%s1 + $0x98] sm:$0xf]
  %v62 = vld [vmem:[%s1 + $0x9c] sm:$0xf]
  %v63 = vld [vmem:[%s1 + $0xa0] sm:$0xf]
  %v64 = vld [vmem:[%s1 + $0xa4] sm:$0xf]
  %v65 = vld [vmem:[%s1 + $0xa8] sm:$0xf]
  %v66 = vld [vmem:[%s1 + $0xac] sm:$0xf]
  %v67 = vld [vmem:[%s1 + $0xb0] sm:$0xf]
  %v68 = vld [vmem:[%s1 + $0xb4] sm:$0xf]
  %v69 = vld [vmem:[%s1 + $0xb8] sm:$0xf]
  %v70 = vld [vmem:[%s1 + $0xbc] sm:$0xf]
  %v71 = vld [vmem:[%s1 + $0xc0] sm:$0xf]
  %v72 = vld [vmem:[%s1 + $0xc4] sm:$0xf]
  %v73 = vld [vmem:[%s1 + $0xc8] sm:$0xf]
  %v74 = vld [vmem:[%s1 + $0xcc] sm:$0xf]
  %v75 = vld [vmem:[%s1 + $0xd0] sm:$0xf]
  %v76 = vld [vmem:[%s1 + $0xd4] sm:$0xf]
  %v77 = vld [vmem:[%s1 + $0xd8] sm:$0xf]
  %v78 = vld [vmem:[%s1 + $0xdc] sm:$0xf]
  %v79 = vld [vmem:[%s1 + $0xe0] sm:$0xf]
  %v80 = vld [vmem:[%s1 + $0xe4] sm:$0xf]
  %v81 = vld [vmem:[%s1 + $0xe8] sm:$0xf]
  %v82 = vld [vmem:[%s1 + $0xec] sm:$0xf]
  %v83 = vld [vmem:[%s1 + $0xf0] sm:$0xf]
  %v84 = vld [vmem:[%s1 + $0xf4] sm:$0xf]
  %v85 = vld [vmem:[%s1 + $0xf8] sm:$0xf]
  %v86 = vld [vmem:[%s1 + $0xfc] sm:$0xf]
  %v89 = vunpack.c.l.b16 %v21
  %v90 = vunpack.c.h.b16 %v21
  %v91 = vunpack.c.l.b16 %v22
  %v92 = vunpack.c.h.b16 %v22
  %v93 = vpack.c.b16 %v89, %v89
  %v94 = vpack.c.b16 %v90, %v90
  %v95 = vpack.c.b16 %v91, %v91
  %v96 = vpack.c.b16 %v92, %v92
  %v165 = vunpack.c.l.b16 %v23
  %v166 = vunpack.c.l.b16 %v24
  %v167 = vunpack.c.l.b16 %v25
  %v168 = vunpack.c.l.b16 %v26
  %v169 = vunpack.c.l.b16 %v27
  %v170 = vunpack.c.l.b16 %v28
  %v171 = vunpack.c.l.b16 %v29
  %v172 = vunpack.c.l.b16 %v30
  %v173 = vunpack.c.l.b16 %v31
  %v174 = vunpack.c.l.b16 %v32
  %v175 = vunpack.c.l.b16 %v33
  %v176 = vunpack.c.l.b16 %v34
  %v177 = vunpack.c.l.b16 %v35
  %v178 = vunpack.c.l.b16 %v36
  %v179 = vunpack.c.l.b16 %v37
  %v180 = vunpack.c.l.b16 %v38
  %v181 = vunpack.c.l.b16 %v39
  %v182 = vunpack.c.l.b16 %v40
  %v183 = vunpack.c.l.b16 %v41
  %v184 = vunpack.c.l.b16 %v42
  %v185 = vunpack.c.l.b16 %v43
  %v186 = vunpack.c.l.b16 %v44
  %v187 = vunpack.c.l.b16 %v45
  %v188 = vunpack.c.l.b16 %v46
  %v189 = vunpack.c.l.b16 %v47
  %v190 = vunpack.c.l.b16 %v48
  %v191 = vunpack.c.l.b16 %v49
  %v192 = vunpack.c.l.b16 %v50
  %v193 = vunpack.c.l.b16 %v51
  %v194 = vunpack.c.l.b16 %v52
  %v195 = vunpack.c.l.b16 %v53
  %v196 = vunpack.c.l.b16 %v54
  %v197 = vunpack.c.l.b16 %v55
  %v198 = vunpack.c.l.b16 %v56
  %v199 = vunpack.c.l.b16 %v57
  %v200 = vunpack.c.l.b16 %v58
  %v201 = vunpack.c.l.b16 %v59
  %v202 = vunpack.c.l.b16 %v60
  %v203 = vunpack.c.l.b16 %v61
  %v204 = vunpack.c.l.b16 %v62
  %v205 = vunpack.c.l.b16 %v63
  %v206 = vunpack.c.l.b16 %v64
  %v207 = vunpack.c.l.b16 %v65
  %v208 = vunpack.c.l.b16 %v66
  %v209 = vunpack.c.l.b16 %v67
  %v210 = vunpack.c.l.b16 %v68
  %v211 = vunpack.c.l.b16 %v69
  %v212 = vunpack.c.l.b16 %v70
  %v213 = vunpack.c.l.b16 %v71
  %v214 = vunpack.c.l.b16 %v72
  %v215 = vunpack.c.l.b16 %v73
  %v216 = vunpack.c.l.b16 %v74
  %v217 = vunpack.c.l.b16 %v75
  %v218 = vunpack.c.l.b16 %v76
  %v219 = vunpack.c.l.b16 %v77
  %v220 = vunpack.c.l.b16 %v78
  %v221 = vunpack.c.l.b16 %v79
  %v222 = vunpack.c.l.b16 %v80
  %v223 = vunpack.c.l.b16 %v81
  %v224 = vunpack.c.l.b16 %v82
  %v225 = vunpack.c.l.b16 %v83
  %v226 = vunpack.c.l.b16 %v84
  %v227 = vunpack.c.l.b16 %v85
  %v228 = vunpack.c.l.b16 %v86
  %v229 = vpack.c.b16 %v166, %v165
  %v230 = vpack.c.b16 %v168, %v167
  %v231 = vpack.c.b16 %v170, %v169
  %v232 = vpack.c.b16 %v172, %v171
  %v233 = vpack.c.b16 %v174, %v173
  %v234 = vpack.c.b16 %v176, %v175
  %v235 = vpack.c.b16 %v178, %v177
  %v236 = vpack.c.b16 %v180, %v179
  %v237 = vpack.c.b16 %v182, %v181
  %v238 = vpack.c.b16 %v184, %v183
  %v239 = vpack.c.b16 %v186, %v185
  %v240 = vpack.c.b16 %v188, %v187
  %v241 = vpack.c.b16 %v190, %v189
  %v242 = vpack.c.b16 %v192, %v191
  %v243 = vpack.c.b16 %v194, %v193
  %v244 = vpack.c.b16 %v196, %v195
  %v245 = vpack.c.b16 %v198, %v197
  %v246 = vpack.c.b16 %v200, %v199
  %v247 = vpack.c.b16 %v202, %v201
  %v248 = vpack.c.b16 %v204, %v203
  %v249 = vpack.c.b16 %v206, %v205
  %v250 = vpack.c.b16 %v208, %v207
  %v251 = vpack.c.b16 %v210, %v209
  %v252 = vpack.c.b16 %v212, %v211
  %v253 = vpack.c.b16 %v214, %v213
  %v254 = vpack.c.b16 %v216, %v215
  %v255 = vpack.c.b16 %v218, %v217
  %v256 = vpack.c.b16 %v220, %v219
  %v257 = vpack.c.b16 %v222, %v221
  %v258 = vpack.c.b16 %v224, %v223
  %v259 = vpack.c.b16 %v226, %v225
  %v260 = vpack.c.b16 %v228, %v227
  %293 = vmatprep.subr.bf16.mxu0 0
  %294 = vmatpush1.bf16.msra.mxu0 %v229
  %295 = vmatprep.subr.bf16.mxu0 0
  %296 = vmatpush1.bf16.msra.mxu0 %v230
  %297 = vmatprep.subr.bf16.mxu0 0
  %298 = vmatpush1.bf16.msra.mxu0 %v231
  %299 = vmatprep.subr.bf16.mxu0 0
  %300 = vmatpush1.bf16.msra.mxu0 %v232
  %301 = vmatprep.subr.bf16.mxu0 0
  %302 = vmatpush1.bf16.msra.mxu0 %v233
  %303 = vmatprep.subr.bf16.mxu0 0
  %304 = vmatpush1.bf16.msra.mxu0 %v234
  %305 = vmatprep.subr.bf16.mxu0 0
  %306 = vmatpush1.bf16.msra.mxu0 %v235
  %307 = vmatprep.subr.bf16.mxu0 0
  %308 = vmatpush1.bf16.msra.mxu0 %v236
  %309 = vmatprep.subr.bf16.mxu0 0
  %310 = vmatpush1.bf16.msra.mxu0 %v237
  %311 = vmatprep.subr.bf16.mxu0 0
  %312 = vmatpush1.bf16.msra.mxu0 %v238
  %313 = vmatprep.subr.bf16.mxu0 0
  %314 = vmatpush1.bf16.msra.mxu0 %v239
  %315 = vmatprep.subr.bf16.mxu0 0
  %316 = vmatpush1.bf16.msra.mxu0 %v240
  %317 = vmatprep.subr.bf16.mxu0 0
  %318 = vmatpush1.bf16.msra.mxu0 %v241
  %319 = vmatprep.subr.bf16.mxu0 0
  %320 = vmatpush1.bf16.msra.mxu0 %v242
  %321 = vmatprep.subr.bf16.mxu0 0
  %322 = vmatpush1.bf16.msra.mxu0 %v243
  %323 = vmatprep.subr.bf16.mxu0 0
  %324 = vmatpush1.bf16.msra.mxu0 %v244
  %325 = vmatprep.mubr.bf16.mxu0 %v94
  %326 = vmatmul.mubr.bf16.gmra.mrb[0].mxu0 %v93
  %v327 = vpop.f32.mrb[0].mxu0
  %v328 = vadd.f32 0.0, %v327
  %v329 = vpop.f32.mrb[0].mxu0
  %v330 = vpop.f32.mrb[0].mxu0
  %v331 = vpop.f32.mrb[0].mxu0
  %332 = vdwg.mxu0
  %333 = vmatprep.subr.bf16.mxu0 0
  %334 = vmatpush1.bf16.msra.mxu0 %v245
  %335 = vmatprep.subr.bf16.mxu0 0
  %336 = vmatpush1.bf16.msra.mxu0 %v246
  %337 = vmatprep.subr.bf16.mxu0 0
  %338 = vmatpush1.bf16.msra.mxu0 %v247
  %339 = vmatprep.subr.bf16.mxu0 0
  %340 = vmatpush1.bf16.msra.mxu0 %v248
  %341 = vmatprep.subr.bf16.mxu0 0
  %342 = vmatpush1.bf16.msra.mxu0 %v249
  %343 = vmatprep.subr.bf16.mxu0 0
  %344 = vmatpush1.bf16.msra.mxu0 %v250
  %345 = vmatprep.subr.bf16.mxu0 0
  %346 = vmatpush1.bf16.msra.mxu0 %v251
  %347 = vmatprep.subr.bf16.mxu0 0
  %348 = vmatpush1.bf16.msra.mxu0 %v252
  %349 = vmatprep.subr.bf16.mxu0 0
  %350 = vmatpush1.bf16.msra.mxu0 %v253
  %351 = vmatprep.subr.bf16.mxu0 0
  %352 = vmatpush1.bf16.msra.mxu0 %v254
  %353 = vmatprep.subr.bf16.mxu0 0
  %354 = vmatpush1.bf16.msra.mxu0 %v255
  %355 = vmatprep.subr.bf16.mxu0 0
  %356 = vmatpush1.bf16.msra.mxu0 %v256
  %357 = vmatprep.subr.bf16.mxu0 0
  %358 = vmatpush1.bf16.msra.mxu0 %v257
  %359 = vmatprep.subr.bf16.mxu0 0
  %360 = vmatpush1.bf16.msra.mxu0 %v258
  %361 = vmatprep.subr.bf16.mxu0 0
  %362 = vmatpush1.bf16.msra.mxu0 %v259
  %363 = vmatprep.subr.bf16.mxu0 0
  %364 = vmatpush1.bf16.msra.mxu0 %v260
  %365 = vmatprep.mubr.bf16.mxu0 %v96
  %366 = vmatmul.mubr.bf16.gmra.mrb[0].mxu0 %v95
  %v367 = vpop.f32.mrb[0].mxu0
  %v368 = vadd.f32 %v328, %v367
  %v369 = vpop.f32.mrb[0].mxu0
  %v370 = vpop.f32.mrb[0].mxu0
  %v371 = vpop.f32.mrb[0].mxu0
  %372 = vdwg.mxu0
  %v373 = vadd.f32 %v20, %v368
  %374 = vst [vmem:[%s3] sm:$0xff] %v373
  // Predicated region
  $region18: #{linear_then_conv_forward.13} parent=0 // pred_check
    %p375 = pneg %p15
  $region19: #{linear_then_conv_forward.13} parent=0 // pred_check_branch
    %377 = sbr.rel (%p375) target = $region21
  $region20: #{linear_then_conv_forward.13} parent=0 // pred_region
    %v378 = vld [vmem:[%s3] sm:$0xff]
    %v379 = vld [vmem:[%s2] sm:$0x1]
    %v381 = vlaneseq
    %v382 = vshrl.u32 %v381, 7
    %v383 = vsub.s32 0, %v382
    %v384 = vrot.slane %v379, %v383
    %v386 = vadd.f32 %v378, %v384
    %387 = vst [vmem:[%s3] sm:$0xff] %v386
  $region21: #{linear_then_conv_forward.13} parent=0 // pred_fallthru
    _
  // Predicated region
  $region22: #{linear_then_conv_forward.13} parent=0 // pred_check
    _
  $region23: #{linear_then_conv_forward.13} parent=0 // pred_check_branch
    %389 = sbr.rel (0) target = $region25
  $region24: #{linear_then_conv_forward.13} parent=0 // pred_region
    _
  $region25: #{linear_then_conv_forward.13} parent=0 // pred_fallthru
    _
  // Predicated region
  $region26: #{linear_then_conv_forward.13} parent=0 // pred_check
    _
  $region27: #{linear_then_conv_forward.13} parent=0 // pred_check_branch
    %391 = sbr.rel (0) target = $region29
  $region28: #{linear_then_conv_forward.13} parent=0 // pred_region
    _
  $region29: #{linear_then_conv_forward.13} parent=0 // pred_fallthru
    _

</llo_original>
